<compile_context>
chip_gen: v6e
topology: v6e:2x2x1
jax: 0.10.0
libtpu: 0.0.40
codegen_flags: <defaults>
</compile_context>

<pallas_src>
import functools

import jax
import jax.numpy as jnp
from jax import lax
from jax.experimental import pallas as pl
from jax.experimental.pallas import tpu as pltpu

_EPS = 1e-5


# ----------------------------------------------------------------------------
# In-kernel helpers (flattened spatial layout: rows = h * W + w, lanes = C)
# ----------------------------------------------------------------------------
def _col_keep_mask(m_rows, w_cols):
    """(M, 1) bool mask, False on rows whose spatial column == w_cols - 1."""
    r = lax.broadcasted_iota(jnp.int32, (m_rows, 1), 0)
    return (r % w_cols) != (w_cols - 1)


def _shifted_taps(x, w_cols):
    """For x of shape (M=H*W, C) in row-major spatial order, return
       (x, x_w, x_h, x_hw) where x_w[m]=x[h, w+1], x_h[m]=x[h+1, w],
       x_hw[m]=x[h+1, w+1], zero outside the image (the ConvT output_padding /
       boundary region).  Built entirely in VMEM: one aligned concat + masks,
       no HBM pad round trip (perf item 3)."""
    m, c = x.shape
    tail = jnp.zeros((w_cols + 1, c), x.dtype)
    xp = jnp.concatenate([x, tail], axis=0)            # (M + W + 1, C)
    keep = _col_keep_mask(m, w_cols)
    zero = jnp.zeros((), x.dtype)
    x_w = jnp.where(keep, xp[1:m + 1, :], zero)
    x_h = xp[w_cols:m + w_cols, :]
    x_hw = jnp.where(keep, xp[w_cols + 1:m + w_cols + 1, :], zero)
    return x, x_w, x_h, x_hw


def _inst_norm_relu(x, n_rows):
    """InstanceNorm (per-channel, biased variance, centered two-pass, f32)
    + ReLU.  x: (M, C) f32 where M is the full spatial extent."""
    inv_n = 1.0 / n_rows
    mean = x.sum(axis=0, keepdims=True) * inv_n          # (1, C)
    d = x - mean
    var = (d * d).sum(axis=0, keepdims=True) * inv_n
    return jnp.maximum(d * lax.rsqrt(var + _EPS), 0.0)


# ----------------------------------------------------------------------------
# Pallas kernels
# ----------------------------------------------------------------------------
def re_embed_kernel(x_ref, w_ref, b_ref, o_ref):
    # (B, hidden) @ (hidden, P*P*3) on the MXU in bf16, f32 accumulate.
    y = jnp.dot(x_ref[...].astype(jnp.bfloat16), w_ref[...],
                preferred_element_type=jnp.float32) + b_ref[...]
    o_ref[...] = y.astype(o_ref.dtype)


def stage1_kernel(x_ref, w1_ref, b1_ref, w2_ref, b2_ref, o_ref, *, width):
    """Fused ConvT(3->64, s2) + IN + ReLU + Conv1x1(64->128) + IN + ReLU.

    x_ref : (P*P, 3) bf16, flattened spatial (row = h*P + w).
    w1    : (3, 3, 3, 64) f32, flipped (ordinary-conv) layout.
    Output: (4*P*P, 128) bf16, parity planes stacked [ee; eo; oe; oo].
    """
    x = x_ref[...].astype(jnp.float32)                   # (M, 3)
    m = x.shape[0]
    x0, x_w, x_h, x_hw = _shifted_taps(x, width)
    w1 = w1_ref[...]                                     # (3, 3, 3, 64) f32
    b1 = b1_ref[...]                                     # (1, 64) f32

    def tap(t, a, b):
        # Cin=3 tap on the VPU: 3 broadcast multiply-adds (perf item 8).
        wt = w1[a, b]                                    # (3, 64)
        return (t[:, 0:1] * wt[0:1, :]
                + t[:, 1:2] * wt[1:2, :]
                + t[:, 2:3] * wt[2:3, :])

    # Sub-pixel ConvTranspose(k3, s2, p1, op1): 4 parity planes, each (M, 64).
    ee = tap(x0, 1, 1) + b1
    eo = tap(x0, 1, 0) + tap(x_w, 1, 2) + b1
    oe = tap(x0, 0, 1) + tap(x_h, 2, 1) + b1
    oo = tap(x0, 0, 0) + tap(x_w, 0, 2) + tap(x_h, 2, 0) + tap(x_hw, 2, 2) + b1

    h = jnp.concatenate([ee, eo, oe, oo], axis=0)        # (4M, 64) = full spatial
    h = _inst_norm_relu(h, 4.0 * m)                      # IN(64) + ReLU

    # Conv1x1 64->128 as ONE (4M, 64) @ (64, 128) matmul (perf item 7).
    y = jnp.dot(h.astype(jnp.bfloat16), w2_ref[...],
                preferred_element_type=jnp.float32) + b2_ref[...]
    y = _inst_norm_relu(y, 4.0 * m)                      # IN(128) + ReLU
    o_ref[...] = y.astype(o_ref.dtype)                   # bf16 store (perf item 1)


def stage2_kernel(x_ref, wx_ref, wxw_ref, wxh_ref, wxhw_ref, b_ref, o_ref, *,
                  width):
    """Fused ConvT(128->256, s2) + IN + ReLU for one output-channel block.

    x_ref : (4*P*P, 128) bf16, flattened (2P x 2P) spatial.
    Weights are pre-packed per channel block with taps concatenated along N
    (perf item 6): wx=[w11|w10|w01|w00], wxw=[w12|w02], wxh=[w21|w20], wxhw=w22.
    Output: (4 * 4*P*P, cb) bf16, parity planes stacked [ee; eo; oe; oo].
    """
    x = x_ref[...]                                       # (M, 128) bf16
    m = x.shape[0]
    x0, x_w, x_h, x_hw = _shifted_taps(x, width)
    cb = o_ref.shape[-1]
    b = b_ref[...]                                       # (1, cb) f32

    def mm(a, w_ref):
        return jnp.dot(a, w_ref[...], preferred_element_type=jnp.float32)

    y0 = mm(x0, wx_ref)                                  # (M, 4*cb)
    y1 = mm(x_w, wxw_ref)                                # (M, 2*cb)
    y2 = mm(x_h, wxh_ref)                                # (M, 2*cb)
    y3 = mm(x_hw, wxhw_ref)                              # (M, cb)

    ee = y0[:, 0 * cb:1 * cb] + b
    eo = y0[:, 1 * cb:2 * cb] + y1[:, 0 * cb:1 * cb] + b
    oe = y0[:, 2 * cb:3 * cb] + y2[:, 0 * cb:1 * cb] + b
    oo = (y0[:, 3 * cb:4 * cb] + y1[:, 1 * cb:2 * cb]
          + y2[:, 1 * cb:2 * cb] + y3 + b)

    y = jnp.concatenate([ee, eo, oe, oo], axis=0)        # (4M, cb) = full spatial
    y = _inst_norm_relu(y, 4.0 * m)                      # IN + ReLU (per channel)
    o_ref[...] = y.astype(o_ref.dtype)                   # bf16 store (perf item 2)


# ----------------------------------------------------------------------------
# pallas_call wrappers
# ----------------------------------------------------------------------------
def _vmem_limit(est_bytes):
    # Explicit scoped-VMEM budget (perf items 9/10); clamp to a safe range.
    return int(min(max(est_bytes, 32 * 1024 * 1024), 96 * 1024 * 1024))


def pallas_re_embed(x, w, b):
    bsz = x.shape[0]
    n = w.shape[1]
    return pl.pallas_call(
        re_embed_kernel,
        out_shape=jax.ShapeDtypeStruct((bsz, n), jnp.bfloat16),
    )(x, w, b)


def fused_stage1(img, w1, b1, w2, b2, patch):
    bsz, m, _ = img.shape                      # m = P*P
    c2 = w2.shape[1]
    # crude per-step VMEM budget: input + tap copies + planes + matmul outs + out
    est = int(m * 1200 + 4 * m * (64 * 8 + 128 * 12 + 128 * 4)) + (1 << 20)
    return pl.pallas_call(
        functools.partial(stage1_kernel, width=patch),
        out_shape=jax.ShapeDtypeStruct((bsz, 4 * m, c2), jnp.bfloat16),
        grid=(bsz,),
        in_specs=[
            pl.BlockSpec((None, m, 3), lambda i: (i, 0, 0)),
            pl.BlockSpec(w1.shape, lambda i: (0, 0, 0, 0)),
            pl.BlockSpec(b1.shape, lambda i: (0, 0)),
            pl.BlockSpec(w2.shape, lambda i: (0, 0)),
            pl.BlockSpec(b2.shape, lambda i: (0, 0)),
        ],
        out_specs=pl.BlockSpec((None, 4 * m, c2), lambda i: (i, 0, 0)),
        compiler_params=pltpu.CompilerParams(
            dimension_semantics=("parallel",),
            vmem_limit_bytes=_vmem_limit(est)),
    )(img, w1, b1, w2, b2)


def fused_stage2(x, w_x, w_xw, w_xh, w_xhw, b3, width):
    bsz, m2, cin = x.shape                     # m2 = (2P)^2
    nblk = w_x.shape[0]
    cb = w_x.shape[2] // 4
    cout = nblk * cb
    est = int(m2 * (12 * cin + 110 * cb) + 9 * cin * cb * 4) + (1 << 20)
    return pl.pallas_call(
        functools.partial(stage2_kernel, width=width),
        out_shape=jax.ShapeDtypeStruct((bsz, 4 * m2, cout), jnp.bfloat16),
        grid=(bsz, nblk),                      # channel blocks: perf item 9
        in_specs=[
            pl.BlockSpec((None, m2, cin), lambda i, j: (i, 0, 0)),
            pl.BlockSpec((None, cin, 4 * cb), lambda i, j: (j, 0, 0)),
            pl.BlockSpec((None, cin, 2 * cb), lambda i, j: (j, 0, 0)),
            pl.BlockSpec((None, cin, 2 * cb), lambda i, j: (j, 0, 0)),
            pl.BlockSpec((None, cin, cb), lambda i, j: (j, 0, 0)),
            pl.BlockSpec((None, 1, cb), lambda i, j: (j, 0, 0)),
        ],
        out_specs=pl.BlockSpec((None, 4 * m2, cb), lambda i, j: (i, 0, j)),
        compiler_params=pltpu.CompilerParams(
            dimension_semantics=("parallel", "parallel"),
            vmem_limit_bytes=_vmem_limit(est)),
    )(x, w_x, w_xw, w_xh, w_xhw, b3)


# ----------------------------------------------------------------------------
# One-time weight preprocessing (hoisted out of the jitted forward, item 12)
# ----------------------------------------------------------------------------
def convT_weight_to_conv(wt):
    """PyTorch ConvTranspose2d weight (Cin, Cout, kH, kW) -> equivalent ordinary
    conv weight (kH, kW, Cin, Cout) with spatially flipped taps."""
    return jnp.transpose(wt[:, :, ::-1, ::-1], (2, 3, 0, 1))


def prepare_params(params, patch_size):
    p = patch_size
    hidden = params["re_embed_w"].shape[1]

    # re_embed: permute output rows from (c, h, w) order to ((h, w), c) order so
    # the kernel output reshapes for free to (B, P*P, 3) flattened NHWC.
    w_re = (params["re_embed_w"].reshape(3, p * p, hidden)
            .transpose(1, 0, 2).reshape(p * p * 3, hidden))
    b_re = params["re_embed_b"].reshape(3, p * p).transpose(1, 0).reshape(1, -1)

    # ConvT(3->64): flipped conv layout, kept f32 (VPU taps, Cin=3).
    w1 = convT_weight_to_conv(params["ct1_w"]).astype(jnp.float32)   # (3,3,3,64)
    # Conv1x1(64->128)
    w2 = jnp.transpose(params["c2_w"][:, :, 0, 0]).astype(jnp.bfloat16)  # (64,128)

    # ConvT(128->256): flipped conv layout, taps grouped by shifted input,
    # concatenated along N, pre-blocked along output channels (items 6, 9).
    wc = convT_weight_to_conv(params["ct3_w"]).astype(jnp.bfloat16)  # (3,3,Ci,Co)
    cin, cout = wc.shape[2], wc.shape[3]
    cb = 128 if cout % 128 == 0 else cout
    nblk = cout // cb

    def blkcat(taps):
        t = jnp.concatenate([w.reshape(cin, nblk, cb) for w in taps], axis=-1)
        return jnp.transpose(t, (1, 0, 2))               # (nblk, cin, len*cb)

    return {
        "w_re": jnp.transpose(w_re).astype(jnp.bfloat16),            # (hidden, P*P*3)
        "b_re": b_re.astype(jnp.float32),                            # (1, P*P*3)
        "w1": w1,
        "b1": params["ct1_b"].reshape(1, -1).astype(jnp.float32),
        "w2": w2,
        "b2": params["c2_b"].reshape(1, -1).astype(jnp.float32),
        "w3_x": blkcat([wc[1, 1], wc[1, 0], wc[0, 1], wc[0, 0]]),    # (nblk,Ci,4cb)
        "w3_xw": blkcat([wc[1, 2], wc[0, 2]]),                       # (nblk,Ci,2cb)
        "w3_xh": blkcat([wc[2, 1], wc[2, 0]]),                       # (nblk,Ci,2cb)
        "w3_xhw": blkcat([wc[2, 2]]),                                # (nblk,Ci,cb)
        "b3": params["ct3_b"].reshape(nblk, 1, cb).astype(jnp.float32),
    }


# ----------------------------------------------------------------------------
# ViTDecoder forward
# ----------------------------------------------------------------------------
def init_params(key, patch_size, hidden_dim):
    ks = jax.random.split(key, 8)
    scale = 0.05
    out_embed = patch_size * patch_size * 3
    return {
        # nn.Linear(hidden_dim, P*P*3): weight (out, in), bias (out,)
        "re_embed_w": scale * jax.random.normal(ks[0], (out_embed, hidden_dim), jnp.float32),
        "re_embed_b": scale * jax.random.normal(ks[1], (out_embed,), jnp.float32),
        # ConvTranspose2d(3, 64, 3): weight (Cin=3, Cout=64, 3, 3)
        "ct1_w": scale * jax.random.normal(ks[2], (3, 64, 3, 3), jnp.float32),
        "ct1_b": scale * jax.random.normal(ks[3], (64,), jnp.float32),
        # Conv2d(64, 128, 1): weight (Cout=128, Cin=64, 1, 1)
        "c2_w": scale * jax.random.normal(ks[4], (128, 64, 1, 1), jnp.float32),
        "c2_b": scale * jax.random.normal(ks[5], (128,), jnp.float32),
        # ConvTranspose2d(128, 256, 3): weight (Cin=128, Cout=256, 3, 3)
        "ct3_w": scale * jax.random.normal(ks[6], (128, 256, 3, 3), jnp.float32),
        "ct3_b": scale * jax.random.normal(ks[7], (256,), jnp.float32),
    }


def vit_decoder_forward(x, prm, patch_size):
    # x: (B, hidden_dim) f32
    b = x.shape[0]
    p = patch_size

    # 1) re_embed (bf16 MXU matmul); free row-major view to (B, P*P, 3).
    y = pallas_re_embed(x, prm["w_re"], prm["b_re"])                 # (B, P*P*3) bf16
    img = y.reshape(b, p * p, 3)

    # 2) Fused ConvT(3->64,s2)+IN+ReLU + Conv1x1(64->128)+IN+ReLU.
    o1 = fused_stage1(img, prm["w1"], prm["b1"], prm["w2"], prm["b2"], p)
    c2 = o1.shape[-1]
    # parity planes -> flattened (2P x 2P) spatial; single bf16 transpose.
    h1 = (o1.reshape(b, 2, 2, p, p, c2)
            .transpose(0, 3, 1, 4, 2, 5)
            .reshape(b, 4 * p * p, c2))                              # (B, (2P)^2, 128)

    # 3) Fused ConvT(128->256,s2)+IN+ReLU, output-channel-blocked grid.
    o2 = fused_stage2(h1, prm["w3_x"], prm["w3_xw"], prm["w3_xh"],
                      prm["w3_xhw"], prm["b3"], 2 * p)               # (B, 4*(2P)^2, 256)

    # 4) parity planes -> NCHW on bf16, upcast to f32 at the very end.
    cout = o2.shape[-1]
    out = (o2.reshape(b, 2, 2, 2 * p, 2 * p, cout)
             .transpose(0, 5, 3, 1, 4, 2)
             .reshape(b, cout, 4 * p, 4 * p)
             .astype(jnp.float32))
    return out


# ----------------------------------------------------------------------------
if __name__ == "__main__":
    # Small, forward-consistent shapes: B=2, hidden_dim=32, patch_size=8.
    patch_size = 8
    hidden_dim = 32
    batch = 2

    key = jax.random.PRNGKey(0)
    k_in, k_par = jax.random.split(key)
    x = jax.random.normal(k_in, (batch, hidden_dim), jnp.float32)
    raw_params = init_params(k_par, patch_size, hidden_dim)
    prm = prepare_params(raw_params, patch_size)      # one-time weight prep

    fwd = jax.jit(functools.partial(vit_decoder_forward, patch_size=patch_size))
    out = fwd(x, prm)
    jax.block_until_ready(out)

    assert out.shape == (batch, 256, 4 * patch_size, 4 * patch_size), out.shape
    assert out.dtype == jnp.float32
    assert bool(jnp.isfinite(out).all())
    print("KERNEL_OK")
</pallas_src>

<mosaic_0001>
module attributes {stable_mosaic.version = 11 : i64} {
  func.func @re_embed_kernel(%arg0: memref<2x32xf32, #tpu.memory_space<vmem>>, %arg1: memref<32x192xbf16, #tpu.memory_space<vmem>>, %arg2: memref<1x192xf32, #tpu.memory_space<vmem>>, %arg3: memref<2x192xbf16, #tpu.memory_space<vmem>>) attributes {dimension_semantics = [], scalar_prefetch = 0 : i64, scratch_operands = 0 : i64, tpu.core_type = #tpu.core_type<tc>} {
    %c0 = arith.constant 0 : index
    %c0_0 = arith.constant 0 : index
    %0 = vector.load %arg0[%c0, %c0_0] : memref<2x32xf32, #tpu.memory_space<vmem>>, vector<2x32xf32>
    %1 = arith.truncf %0 : vector<2x32xf32> to vector<2x32xbf16>
    %c0_1 = arith.constant 0 : index
    %c0_2 = arith.constant 0 : index
    %2 = vector.load %arg1[%c0_1, %c0_2] : memref<32x192xbf16, #tpu.memory_space<vmem>>, vector<32x192xbf16>
    %cst = arith.constant dense<0.000000e+00> : vector<2x192xf32>
    %3 = tpu.matmul %1, %2, %cst {dimension_numbers = #tpu.dot_dimension_numbers<[1], [0], [0], [1], [0, 0, 1, 1], [], []>} : vector<2x32xbf16>, vector<32x192xbf16>, vector<2x192xf32> -> vector<2x192xf32>
    %c0_3 = arith.constant 0 : index
    %c0_4 = arith.constant 0 : index
    %4 = vector.load %arg2[%c0_3, %c0_4] : memref<1x192xf32, #tpu.memory_space<vmem>>, vector<1x192xf32>
    %5 = vector.broadcast %4 : vector<1x192xf32> to vector<2x192xf32>
    %6 = arith.addf %3, %5 : vector<2x192xf32>
    %7 = arith.truncf %6 : vector<2x192xf32> to vector<2x192xbf16>
    %c0_5 = arith.constant 0 : index
    %c0_6 = arith.constant 0 : index
    %8 = vector.load %arg3[%c0_5, %c0_6] : memref<2x192xbf16, #tpu.memory_space<vmem>>, vector<2x192xbf16>
    tpu.vector_store %arg3[%c0_5, %c0_6], %7 {strides = array<i32>} : memref<2x192xbf16, #tpu.memory_space<vmem>>, vector<2x192xbf16>,
    return
  }
}

module attributes {stable_mosaic.version = 11 : i64} {
  func.func @stage1_kernel(%arg0: i32, %arg1: memref<1x64x3xbf16, #tpu.memory_space<vmem>>, %arg2: memref<3x3x3x64xf32, #tpu.memory_space<vmem>>, %arg3: memref<1x64xf32, #tpu.memory_space<vmem>>, %arg4: memref<64x128xbf16, #tpu.memory_space<vmem>>, %arg5: memref<1x128xf32, #tpu.memory_space<vmem>>, %arg6: memref<1x256x128xbf16, #tpu.memory_space<vmem>>) attributes {dimension_semantics = [#tpu.dimension_semantics<parallel>], iteration_bounds = array<i64: 2>, scalar_prefetch = 0 : i64, scratch_operands = 0 : i64, tpu.core_type = #tpu.core_type<tc>, window_params = [{transform_indices = @transform_0, window_bounds = array<i64: 1, 64, 3>}, {pipeline_mode = #tpu.pipeline_mode<synchronous>, transform_indices = @transform_1, window_bounds = array<i64: 3, 3, 3, 64>}, {pipeline_mode = #tpu.pipeline_mode<synchronous>, transform_indices = @transform_2, window_bounds = array<i64: 1, 64>}, {pipeline_mode = #tpu.pipeline_mode<synchronous>, transform_indices = @transform_3, window_bounds = array<i64: 64, 128>}, {pipeline_mode = #tpu.pipeline_mode<synchronous>, transform_indices = @transform_4, window_bounds = array<i64: 1, 128>}, {transform_indices = @transform_5, window_bounds = array<i64: 1, 256, 128>}]} {
    %c0 = arith.constant 0 : index
    %c0_0 = arith.constant 0 : index
    %c0_1 = arith.constant 0 : index
    %0 = vector.load %arg1[%c0, %c0_0, %c0_1] : memref<1x64x3xbf16, #tpu.memory_space<vmem>>, vector<1x64x3xbf16>
    %1 = vector.shape_cast %0 : vector<1x64x3xbf16> to vector<64x3xbf16>
    %2 = arith.extf %1 : vector<64x3xbf16> to vector<64x3xf32>
    %cst = arith.constant 0.000000e+00 : f32
    %3 = vector.broadcast %cst : f32 to vector<9x3xf32>
    %4 = tpu.concatenate %2, %3 in 0 : vector<64x3xf32>, vector<9x3xf32> -> vector<73x3xf32>
    %5 = tpu.iota {dimensions = array<i32: 0>} : vector<64x1xi32>
    %c8_i32 = arith.constant 8 : i32
    %c0_i32 = arith.constant 0 : i32
    %6 = arith.cmpi eq, %c8_i32, %c0_i32 : i32
    %c1_i32 = arith.constant 1 : i32
    %7 = arith.select %6, %c1_i32, %c8_i32 : i32
    %8 = vector.broadcast %7 : i32 to vector<64x1xi32>
    %9 = arith.remsi %5, %8 : vector<64x1xi32>
    %c0_i32_2 = arith.constant 0 : i32
    %10 = vector.broadcast %c0_i32_2 : i32 to vector<64x1xi32>
    %11 = arith.cmpi ne, %9, %10 : vector<64x1xi32>
    %c0_i32_3 = arith.constant 0 : i32
    %12 = vector.broadcast %c0_i32_3 : i32 to vector<64x1xi32>
    %13 = arith.cmpi slt, %9, %12 : vector<64x1xi32>
    %c0_i32_4 = arith.constant 0 : i32
    %14 = arith.cmpi slt, %7, %c0_i32_4 : i32
    %15 = vector.broadcast %14 : i1 to vector<64x1xi1>
    %16 = vector.broadcast %15 : vector<64x1xi1> to vector<64x1xi1>
    %17 = arith.xori %13, %16 : vector<64x1xi1>
    %18 = arith.andi %17, %11 : vector<64x1xi1>
    %19 = vector.broadcast %7 : i32 to vector<64x1xi32>
    %20 = arith.addi %9, %19 : vector<64x1xi32>
    %21 = arith.select %18, %20, %9 : vector<64x1xi1>, vector<64x1xi32>
    %c7_i32 = arith.constant 7 : i32
    %22 = vector.broadcast %c7_i32 : i32 to vector<64x1xi32>
    %23 = arith.cmpi ne, %21, %22 : vector<64x1xi32>
    %24 = vector.extract_strided_slice %4 {offsets = [1, 0], sizes = [64, 3], strides = [1, 1]} : vector<73x3xf32> to vector<64x3xf32>
    %cst_5 = arith.constant 0.000000e+00 : f32
    %25 = vector.shape_cast %23 : vector<64x1xi1> to vector<64x1xi1>
    %26 = vector.broadcast %25 : vector<64x1xi1> to vector<64x3xi1>
    %27 = vector.broadcast %cst_5 : f32 to vector<64x3xf32>
    %28 = arith.select %26, %24, %27 : vector<64x3xi1>, vector<64x3xf32>
    %29 = vector.extract_strided_slice %4 {offsets = [8, 0], sizes = [64, 3], strides = [1, 1]} : vector<73x3xf32> to vector<64x3xf32>
    %30 = vector.extract_strided_slice %4 {offsets = [9, 0], sizes = [64, 3], strides = [1, 1]} : vector<73x3xf32> to vector<64x3xf32>
    %cst_6 = arith.constant 0.000000e+00 : f32
    %31 = vector.shape_cast %23 : vector<64x1xi1> to vector<64x1xi1>
    %32 = vector.broadcast %31 : vector<64x1xi1> to vector<64x3xi1>
    %33 = vector.broadcast %cst_6 : f32 to vector<64x3xf32>
    %34 = arith.select %32, %30, %33 : vector<64x3xi1>, vector<64x3xf32>
    %c0_7 = arith.constant 0 : index
    %c0_8 = arith.constant 0 : index
    %c0_9 = arith.constant 0 : index
    %c0_10 = arith.constant 0 : index
    %35 = vector.load %arg2[%c0_7, %c0_8, %c0_9, %c0_10] : memref<3x3x3x64xf32, #tpu.memory_space<vmem>>, vector<3x3x3x64xf32>
    %c0_11 = arith.constant 0 : index
    %c0_12 = arith.constant 0 : index
    %36 = vector.load %arg3[%c0_11, %c0_12] : memref<1x64xf32, #tpu.memory_space<vmem>>, vector<1x64xf32>
    %37 = vector.extract_strided_slice %35 {offsets = [1, 1, 0, 0], sizes = [1, 1, 3, 64], strides = [1, 1, 1, 1]} : vector<3x3x3x64xf32> to vector<1x1x3x64xf32>
    %38 = vector.shape_cast %37 : vector<1x1x3x64xf32> to vector<3x64xf32>
    %39 = vector.extract_strided_slice %2 {offsets = [0, 0], sizes = [64, 1], strides = [1, 1]} : vector<64x3xf32> to vector<64x1xf32>
    %40 = vector.extract_strided_slice %38 {offsets = [0, 0], sizes = [1, 64], strides = [1, 1]} : vector<3x64xf32> to vector<1x64xf32>
    %41 = vector.broadcast %39 : vector<64x1xf32> to vector<64x64xf32>
    %42 = vector.broadcast %40 : vector<1x64xf32> to vector<64x64xf32>
    %43 = arith.mulf %41, %42 : vector<64x64xf32>
    %44 = vector.extract_strided_slice %2 {offsets = [0, 1], sizes = [64, 1], strides = [1, 1]} : vector<64x3xf32> to vector<64x1xf32>
    %45 = vector.extract_strided_slice %38 {offsets = [1, 0], sizes = [1, 64], strides = [1, 1]} : vector<3x64xf32> to vector<1x64xf32>
    %46 = vector.broadcast %44 : vector<64x1xf32> to vector<64x64xf32>
    %47 = vector.broadcast %45 : vector<1x64xf32> to vector<64x64xf32>
    %48 = arith.mulf %46, %47 : vector<64x64xf32>
    %49 = arith.addf %43, %48 : vector<64x64xf32>
    %50 = vector.extract_strided_slice %2 {offsets = [0, 2], sizes = [64, 1], strides = [1, 1]} : vector<64x3xf32> to vector<64x1xf32>
    %51 = vector.extract_strided_slice %38 {offsets = [2, 0], sizes = [1, 64], strides = [1, 1]} : vector<3x64xf32> to vector<1x64xf32>
    %52 = vector.broadcast %50 : vector<64x1xf32> to vector<64x64xf32>
    %53 = vector.broadcast %51 : vector<1x64xf32> to vector<64x64xf32>
    %54 = arith.mulf %52, %53 : vector<64x64xf32>
    %55 = arith.addf %49, %54 : vector<64x64xf32>
    %56 = vector.broadcast %36 : vector<1x64xf32> to vector<64x64xf32>
    %57 = arith.addf %55, %56 : vector<64x64xf32>
    %58 = vector.extract_strided_slice %35 {offsets = [1, 0, 0, 0], sizes = [1, 1, 3, 64], strides = [1, 1, 1, 1]} : vector<3x3x3x64xf32> to vector<1x1x3x64xf32>
    %59 = vector.shape_cast %58 : vector<1x1x3x64xf32> to vector<3x64xf32>
    %60 = vector.extract_strided_slice %2 {offsets = [0, 0], sizes = [64, 1], strides = [1, 1]} : vector<64x3xf32> to vector<64x1xf32>
    %61 = vector.extract_strided_slice %59 {offsets = [0, 0], sizes = [1, 64], strides = [1, 1]} : vector<3x64xf32> to vector<1x64xf32>
    %62 = vector.broadcast %60 : vector<64x1xf32> to vector<64x64xf32>
    %63 = vector.broadcast %61 : vector<1x64xf32> to vector<64x64xf32>
    %64 = arith.mulf %62, %63 : vector<64x64xf32>
    %65 = vector.extract_strided_slice %2 {offsets = [0, 1], sizes = [64, 1], strides = [1, 1]} : vector<64x3xf32> to vector<64x1xf32>
    %66 = vector.extract_strided_slice %59 {offsets = [1, 0], sizes = [1, 64], strides = [1, 1]} : vector<3x64xf32> to vector<1x64xf32>
    %67 = vector.broadcast %65 : vector<64x1xf32> to vector<64x64xf32>
    %68 = vector.broadcast %66 : vector<1x64xf32> to vector<64x64xf32>
    %69 = arith.mulf %67, %68 : vector<64x64xf32>
    %70 = arith.addf %64, %69 : vector<64x64xf32>
    %71 = vector.extract_strided_slice %2 {offsets = [0, 2], sizes = [64, 1], strides = [1, 1]} : vector<64x3xf32> to vector<64x1xf32>
    %72 = vector.extract_strided_slice %59 {offsets = [2, 0], sizes = [1, 64], strides = [1, 1]} : vector<3x64xf32> to vector<1x64xf32>
    %73 = vector.broadcast %71 : vector<64x1xf32> to vector<64x64xf32>
    %74 = vector.broadcast %72 : vector<1x64xf32> to vector<64x64xf32>
    %75 = arith.mulf %73, %74 : vector<64x64xf32>
    %76 = arith.addf %70, %75 : vector<64x64xf32>
    %77 = vector.extract_strided_slice %35 {offsets = [1, 2, 0, 0], sizes = [1, 1, 3, 64], strides = [1, 1, 1, 1]} : vector<3x3x3x64xf32> to vector<1x1x3x64xf32>
    %78 = vector.shape_cast %77 : vector<1x1x3x64xf32> to vector<3x64xf32>
    %79 = vector.extract_strided_slice %28 {offsets = [0, 0], sizes = [64, 1], strides = [1, 1]} : vector<64x3xf32> to vector<64x1xf32>
    %80 = vector.extract_strided_slice %78 {offsets = [0, 0], sizes = [1, 64], strides = [1, 1]} : vector<3x64xf32> to vector<1x64xf32>
    %81 = vector.broadcast %79 : vector<64x1xf32> to vector<64x64xf32>
    %82 = vector.broadcast %80 : vector<1x64xf32> to vector<64x64xf32>
    %83 = arith.mulf %81, %82 : vector<64x64xf32>
    %84 = vector.extract_strided_slice %28 {offsets = [0, 1], sizes = [64, 1], strides = [1, 1]} : vector<64x3xf32> to vector<64x1xf32>
    %85 = vector.extract_strided_slice %78 {offsets = [1, 0], sizes = [1, 64], strides = [1, 1]} : vector<3x64xf32> to vector<1x64xf32>
    %86 = vector.broadcast %84 : vector<64x1xf32> to vector<64x64xf32>
    %87 = vector.broadcast %85 : vector<1x64xf32> to vector<64x64xf32>
    %88 = arith.mulf %86, %87 : vector<64x64xf32>
    %89 = arith.addf %83, %88 : vector<64x64xf32>
    %90 = vector.extract_strided_slice %28 {offsets = [0, 2], sizes = [64, 1], strides = [1, 1]} : vector<64x3xf32> to vector<64x1xf32>
    %91 = vector.extract_strided_slice %78 {offsets = [2, 0], sizes = [1, 64], strides = [1, 1]} : vector<3x64xf32> to vector<1x64xf32>
    %92 = vector.broadcast %90 : vector<64x1xf32> to vector<64x64xf32>
    %93 = vector.broadcast %91 : vector<1x64xf32> to vector<64x64xf32>
    %94 = arith.mulf %92, %93 : vector<64x64xf32>
    %95 = arith.addf %89, %94 : vector<64x64xf32>
    %96 = arith.addf %76, %95 : vector<64x64xf32>
    %97 = vector.broadcast %36 : vector<1x64xf32> to vector<64x64xf32>
    %98 = arith.addf %96, %97 : vector<64x64xf32>
    %99 = vector.extract_strided_slice %35 {offsets = [0, 1, 0, 0], sizes = [1, 1, 3, 64], strides = [1, 1, 1, 1]} : vector<3x3x3x64xf32> to vector<1x1x3x64xf32>
    %100 = vector.shape_cast %99 : vector<1x1x3x64xf32> to vector<3x64xf32>
    %101 = vector.extract_strided_slice %2 {offsets = [0, 0], sizes = [64, 1], strides = [1, 1]} : vector<64x3xf32> to vector<64x1xf32>
    %102 = vector.extract_strided_slice %100 {offsets = [0, 0], sizes = [1, 64], strides = [1, 1]} : vector<3x64xf32> to vector<1x64xf32>
    %103 = vector.broadcast %101 : vector<64x1xf32> to vector<64x64xf32>
    %104 = vector.broadcast %102 : vector<1x64xf32> to vector<64x64xf32>
    %105 = arith.mulf %103, %104 : vector<64x64xf32>
    %106 = vector.extract_strided_slice %2 {offsets = [0, 1], sizes = [64, 1], strides = [1, 1]} : vector<64x3xf32> to vector<64x1xf32>
    %107 = vector.extract_strided_slice %100 {offsets = [1, 0], sizes = [1, 64], strides = [1, 1]} : vector<3x64xf32> to vector<1x64xf32>
    %108 = vector.broadcast %106 : vector<64x1xf32> to vector<64x64xf32>
    %109 = vector.broadcast %107 : vector<1x64xf32> to vector<64x64xf32>
    %110 = arith.mulf %108, %109 : vector<64x64xf32>
    %111 = arith.addf %105, %110 : vector<64x64xf32>
    %112 = vector.extract_strided_slice %2 {offsets = [0, 2], sizes = [64, 1], strides = [1, 1]} : vector<64x3xf32> to vector<64x1xf32>
    %113 = vector.extract_strided_slice %100 {offsets = [2, 0], sizes = [1, 64], strides = [1, 1]} : vector<3x64xf32> to vector<1x64xf32>
    %114 = vector.broadcast %112 : vector<64x1xf32> to vector<64x64xf32>
    %115 = vector.broadcast %113 : vector<1x64xf32> to vector<64x64xf32>
    %116 = arith.mulf %114, %115 : vector<64x64xf32>
    %117 = arith.addf %111, %116 : vector<64x64xf32>
    %118 = vector.extract_strided_slice %35 {offsets = [2, 1, 0, 0], sizes = [1, 1, 3, 64], strides = [1, 1, 1, 1]} : vector<3x3x3x64xf32> to vector<1x1x3x64xf32>
    %119 = vector.shape_cast %118 : vector<1x1x3x64xf32> to vector<3x64xf32>
    %120 = vector.extract_strided_slice %29 {offsets = [0, 0], sizes = [64, 1], strides = [1, 1]} : vector<64x3xf32> to vector<64x1xf32>
    %121 = vector.extract_strided_slice %119 {offsets = [0, 0], sizes = [1, 64], strides = [1, 1]} : vector<3x64xf32> to vector<1x64xf32>
    %122 = vector.broadcast %120 : vector<64x1xf32> to vector<64x64xf32>
    %123 = vector.broadcast %121 : vector<1x64xf32> to vector<64x64xf32>
    %124 = arith.mulf %122, %123 : vector<64x64xf32>
    %125 = vector.extract_strided_slice %29 {offsets = [0, 1], sizes = [64, 1], strides = [1, 1]} : vector<64x3xf32> to vector<64x1xf32>
    %126 = vector.extract_strided_slice %119 {offsets = [1, 0], sizes = [1, 64], strides = [1, 1]} : vector<3x64xf32> to vector<1x64xf32>
    %127 = vector.broadcast %125 : vector<64x1xf32> to vector<64x64xf32>
    %128 = vector.broadcast %126 : vector<1x64xf32> to vector<64x64xf32>
    %129 = arith.mulf %127, %128 : vector<64x64xf32>
    %130 = arith.addf %124, %129 : vector<64x64xf32>
    %131 = vector.extract_strided_slice %29 {offsets = [0, 2], sizes = [64, 1], strides = [1, 1]} : vector<64x3xf32> to vector<64x1xf32>
    %132 = vector.extract_strided_slice %119 {offsets = [2, 0], sizes = [1, 64], strides = [1, 1]} : vector<3x64xf32> to vector<1x64xf32>
    %133 = vector.broadcast %131 : vector<64x1xf32> to vector<64x64xf32>
    %134 = vector.broadcast %132 : vector<1x64xf32> to vector<64x64xf32>
    %135 = arith.mulf %133, %134 : vector<64x64xf32>
    %136 = arith.addf %130, %135 : vector<64x64xf32>
    %137 = arith.addf %117, %136 : vector<64x64xf32>
    %138 = vector.broadcast %36 : vector<1x64xf32> to vector<64x64xf32>
    %139 = arith.addf %137, %138 : vector<64x64xf32>
    %140 = vector.extract_strided_slice %35 {offsets = [0, 0, 0, 0], sizes = [1, 1, 3, 64], strides = [1, 1, 1, 1]} : vector<3x3x3x64xf32> to vector<1x1x3x64xf32>
    %141 = vector.shape_cast %140 : vector<1x1x3x64xf32> to vector<3x64xf32>
    %142 = vector.extract_strided_slice %2 {offsets = [0, 0], sizes = [64, 1], strides = [1, 1]} : vector<64x3xf32> to vector<64x1xf32>
    %143 = vector.extract_strided_slice %141 {offsets = [0, 0], sizes = [1, 64], strides = [1, 1]} : vector<3x64xf32> to vector<1x64xf32>
    %144 = vector.broadcast %142 : vector<64x1xf32> to vector<64x64xf32>
    %145 = vector.broadcast %143 : vector<1x64xf32> to vector<64x64xf32>
    %146 = arith.mulf %144, %145 : vector<64x64xf32>
    %147 = vector.extract_strided_slice %2 {offsets = [0, 1], sizes = [64, 1], strides = [1, 1]} : vector<64x3xf32> to vector<64x1xf32>
    %148 = vector.extract_strided_slice %141 {offsets = [1, 0], sizes = [1, 64], strides = [1, 1]} : vector<3x64xf32> to vector<1x64xf32>
    %149 = vector.broadcast %147 : vector<64x1xf32> to vector<64x64xf32>
    %150 = vector.broadcast %148 : vector<1x64xf32> to vector<64x64xf32>
    %151 = arith.mulf %149, %150 : vector<64x64xf32>
    %152 = arith.addf %146, %151 : vector<64x64xf32>
    %153 = vector.extract_strided_slice %2 {offsets = [0, 2], sizes = [64, 1], strides = [1, 1]} : vector<64x3xf32> to vector<64x1xf32>
    %154 = vector.extract_strided_slice %141 {offsets = [2, 0], sizes = [1, 64], strides = [1, 1]} : vector<3x64xf32> to vector<1x64xf32>
    %155 = vector.broadcast %153 : vector<64x1xf32> to vector<64x64xf32>
    %156 = vector.broadcast %154 : vector<1x64xf32> to vector<64x64xf32>
    %157 = arith.mulf %155, %156 : vector<64x64xf32>
    %158 = arith.addf %152, %157 : vector<64x64xf32>
    %159 = vector.extract_strided_slice %35 {offsets = [0, 2, 0, 0], sizes = [1, 1, 3, 64], strides = [1, 1, 1, 1]} : vector<3x3x3x64xf32> to vector<1x1x3x64xf32>
    %160 = vector.shape_cast %159 : vector<1x1x3x64xf32> to vector<3x64xf32>
    %161 = vector.extract_strided_slice %28 {offsets = [0, 0], sizes = [64, 1], strides = [1, 1]} : vector<64x3xf32> to vector<64x1xf32>
    %162 = vector.extract_strided_slice %160 {offsets = [0, 0], sizes = [1, 64], strides = [1, 1]} : vector<3x64xf32> to vector<1x64xf32>
    %163 = vector.broadcast %161 : vector<64x1xf32> to vector<64x64xf32>
    %164 = vector.broadcast %162 : vector<1x64xf32> to vector<64x64xf32>
    %165 = arith.mulf %163, %164 : vector<64x64xf32>
    %166 = vector.extract_strided_slice %28 {offsets = [0, 1], sizes = [64, 1], strides = [1, 1]} : vector<64x3xf32> to vector<64x1xf32>
    %167 = vector.extract_strided_slice %160 {offsets = [1, 0], sizes = [1, 64], strides = [1, 1]} : vector<3x64xf32> to vector<1x64xf32>
    %168 = vector.broadcast %166 : vector<64x1xf32> to vector<64x64xf32>
    %169 = vector.broadcast %167 : vector<1x64xf32> to vector<64x64xf32>
    %170 = arith.mulf %168, %169 : vector<64x64xf32>
    %171 = arith.addf %165, %170 : vector<64x64xf32>
    %172 = vector.extract_strided_slice %28 {offsets = [0, 2], sizes = [64, 1], strides = [1, 1]} : vector<64x3xf32> to vector<64x1xf32>
    %173 = vector.extract_strided_slice %160 {offsets = [2, 0], sizes = [1, 64], strides = [1, 1]} : vector<3x64xf32> to vector<1x64xf32>
    %174 = vector.broadcast %172 : vector<64x1xf32> to vector<64x64xf32>
    %175 = vector.broadcast %173 : vector<1x64xf32> to vector<64x64xf32>
    %176 = arith.mulf %174, %175 : vector<64x64xf32>
    %177 = arith.addf %171, %176 : vector<64x64xf32>
    %178 = arith.addf %158, %177 : vector<64x64xf32>
    %179 = vector.extract_strided_slice %35 {offsets = [2, 0, 0, 0], sizes = [1, 1, 3, 64], strides = [1, 1, 1, 1]} : vector<3x3x3x64xf32> to vector<1x1x3x64xf32>
    %180 = vector.shape_cast %179 : vector<1x1x3x64xf32> to vector<3x64xf32>
    %181 = vector.extract_strided_slice %29 {offsets = [0, 0], sizes = [64, 1], strides = [1, 1]} : vector<64x3xf32> to vector<64x1xf32>
    %182 = vector.extract_strided_slice %180 {offsets = [0, 0], sizes = [1, 64], strides = [1, 1]} : vector<3x64xf32> to vector<1x64xf32>
    %183 = vector.broadcast %181 : vector<64x1xf32> to vector<64x64xf32>
    %184 = vector.broadcast %182 : vector<1x64xf32> to vector<64x64xf32>
    %185 = arith.mulf %183, %184 : vector<64x64xf32>
    %186 = vector.extract_strided_slice %29 {offsets = [0, 1], sizes = [64, 1], strides = [1, 1]} : vector<64x3xf32> to vector<64x1xf32>
    %187 = vector.extract_strided_slice %180 {offsets = [1, 0], sizes = [1, 64], strides = [1, 1]} : vector<3x64xf32> to vector<1x64xf32>
    %188 = vector.broadcast %186 : vector<64x1xf32> to vector<64x64xf32>
    %189 = vector.broadcast %187 : vector<1x64xf32> to vector<64x64xf32>
    %190 = arith.mulf %188, %189 : vector<64x64xf32>
    %191 = arith.addf %185, %190 : vector<64x64xf32>
    %192 = vector.extract_strided_slice %29 {offsets = [0, 2], sizes = [64, 1], strides = [1, 1]} : vector<64x3xf32> to vector<64x1xf32>
    %193 = vector.extract_strided_slice %180 {offsets = [2, 0], sizes = [1, 64], strides = [1, 1]} : vector<3x64xf32> to vector<1x64xf32>
    %194 = vector.broadcast %192 : vector<64x1xf32> to vector<64x64xf32>
    %195 = vector.broadcast %193 : vector<1x64xf32> to vector<64x64xf32>
    %196 = arith.mulf %194, %195 : vector<64x64xf32>
    %197 = arith.addf %191, %196 : vector<64x64xf32>
    %198 = arith.addf %178, %197 : vector<64x64xf32>
    %199 = vector.extract_strided_slice %35 {offsets = [2, 2, 0, 0], sizes = [1, 1, 3, 64], strides = [1, 1, 1, 1]} : vector<3x3x3x64xf32> to vector<1x1x3x64xf32>
    %200 = vector.shape_cast %199 : vector<1x1x3x64xf32> to vector<3x64xf32>
    %201 = vector.extract_strided_slice %34 {offsets = [0, 0], sizes = [64, 1], strides = [1, 1]} : vector<64x3xf32> to vector<64x1xf32>
    %202 = vector.extract_strided_slice %200 {offsets = [0, 0], sizes = [1, 64], strides = [1, 1]} : vector<3x64xf32> to vector<1x64xf32>
    %203 = vector.broadcast %201 : vector<64x1xf32> to vector<64x64xf32>
    %204 = vector.broadcast %202 : vector<1x64xf32> to vector<64x64xf32>
    %205 = arith.mulf %203, %204 : vector<64x64xf32>
    %206 = vector.extract_strided_slice %34 {offsets = [0, 1], sizes = [64, 1], strides = [1, 1]} : vector<64x3xf32> to vector<64x1xf32>
    %207 = vector.extract_strided_slice %200 {offsets = [1, 0], sizes = [1, 64], strides = [1, 1]} : vector<3x64xf32> to vector<1x64xf32>
    %208 = vector.broadcast %206 : vector<64x1xf32> to vector<64x64xf32>
    %209 = vector.broadcast %207 : vector<1x64xf32> to vector<64x64xf32>
    %210 = arith.mulf %208, %209 : vector<64x64xf32>
    %211 = arith.addf %205, %210 : vector<64x64xf32>
    %212 = vector.extract_strided_slice %34 {offsets = [0, 2], sizes = [64, 1], strides = [1, 1]} : vector<64x3xf32> to vector<64x1xf32>
    %213 = vector.extract_strided_slice %200 {offsets = [2, 0], sizes = [1, 64], strides = [1, 1]} : vector<3x64xf32> to vector<1x64xf32>
    %214 = vector.broadcast %212 : vector<64x1xf32> to vector<64x64xf32>
    %215 = vector.broadcast %213 : vector<1x64xf32> to vector<64x64xf32>
    %216 = arith.mulf %214, %215 : vector<64x64xf32>
    %217 = arith.addf %211, %216 : vector<64x64xf32>
    %218 = arith.addf %198, %217 : vector<64x64xf32>
    %219 = vector.broadcast %36 : vector<1x64xf32> to vector<64x64xf32>
    %220 = arith.addf %218, %219 : vector<64x64xf32>
    %221 = tpu.concatenate %57, %98, %139, %220 in 0 : vector<64x64xf32>, vector<64x64xf32>, vector<64x64xf32>, vector<64x64xf32> -> vector<256x64xf32>
    %cst_13 = arith.constant dense<0.000000e+00> : vector<64xf32>
    %222 = vector.multi_reduction <add>, %221, %cst_13 [0] : vector<256x64xf32> to vector<64xf32>
    %223 = vector.shape_cast %222 : vector<64xf32> to vector<1x64xf32>
    %cst_14 = arith.constant 3.906250e-03 : f32
    %224 = vector.broadcast %cst_14 : f32 to vector<1x64xf32>
    %225 = arith.mulf %223, %224 : vector<1x64xf32>
    %226 = vector.broadcast %225 : vector<1x64xf32> to vector<256x64xf32>
    %227 = arith.subf %221, %226 : vector<256x64xf32>
    %228 = arith.mulf %227, %227 : vector<256x64xf32>
    %cst_15 = arith.constant dense<0.000000e+00> : vector<64xf32>
    %229 = vector.multi_reduction <add>, %228, %cst_15 [0] : vector<256x64xf32> to vector<64xf32>
    %230 = vector.shape_cast %229 : vector<64xf32> to vector<1x64xf32>
    %cst_16 = arith.constant 3.906250e-03 : f32
    %231 = vector.broadcast %cst_16 : f32 to vector<1x64xf32>
    %232 = arith.mulf %230, %231 : vector<1x64xf32>
    %cst_17 = arith.constant 9.99999974E-6 : f32
    %233 = vector.broadcast %cst_17 : f32 to vector<1x64xf32>
    %234 = arith.addf %232, %233 : vector<1x64xf32>
    %235 = math.rsqrt %234 : vector<1x64xf32>
    %236 = vector.broadcast %235 : vector<1x64xf32> to vector<256x64xf32>
    %237 = arith.mulf %227, %236 : vector<256x64xf32>
    %cst_18 = arith.constant 0.000000e+00 : f32
    %238 = vector.broadcast %cst_18 : f32 to vector<256x64xf32>
    %239 = arith.maximumf %237, %238 : vector<256x64xf32>
    %240 = arith.truncf %239 : vector<256x64xf32> to vector<256x64xbf16>
    %c0_19 = arith.constant 0 : index
    %c0_20 = arith.constant 0 : index
    %241 = vector.load %arg4[%c0_19, %c0_20] : memref<64x128xbf16, #tpu.memory_space<vmem>>, vector<64x128xbf16>
    %cst_21 = arith.constant dense<0.000000e+00> : vector<256x128xf32>
    %242 = tpu.matmul %240, %241, %cst_21 {dimension_numbers = #tpu.dot_dimension_numbers<[1], [0], [0], [1], [0, 0, 1, 1], [], []>} : vector<256x64xbf16>, vector<64x128xbf16>, vector<256x128xf32> -> vector<256x128xf32>
    %c0_22 = arith.constant 0 : index
    %c0_23 = arith.constant 0 : index
    %243 = vector.load %arg5[%c0_22, %c0_23] : memref<1x128xf32, #tpu.memory_space<vmem>>, vector<1x128xf32>
    %244 = vector.broadcast %243 : vector<1x128xf32> to vector<256x128xf32>
    %245 = arith.addf %242, %244 : vector<256x128xf32>
    %cst_24 = arith.constant dense<0.000000e+00> : vector<128xf32>
    %246 = vector.multi_reduction <add>, %245, %cst_24 [0] : vector<256x128xf32> to vector<128xf32>
    %247 = vector.shape_cast %246 : vector<128xf32> to vector<1x128xf32>
    %cst_25 = arith.constant 3.906250e-03 : f32
    %248 = vector.broadcast %cst_25 : f32 to vector<1x128xf32>
    %249 = arith.mulf %247, %248 : vector<1x128xf32>
    %250 = vector.broadcast %249 : vector<1x128xf32> to vector<256x128xf32>
    %251 = arith.subf %245, %250 : vector<256x128xf32>
    %252 = arith.mulf %251, %251 : vector<256x128xf32>
    %cst_26 = arith.constant dense<0.000000e+00> : vector<128xf32>
    %253 = vector.multi_reduction <add>, %252, %cst_26 [0] : vector<256x128xf32> to vector<128xf32>
    %254 = vector.shape_cast %253 : vector<128xf32> to vector<1x128xf32>
    %cst_27 = arith.constant 3.906250e-03 : f32
    %255 = vector.broadcast %cst_27 : f32 to vector<1x128xf32>
    %256 = arith.mulf %254, %255 : vector<1x128xf32>
    %cst_28 = arith.constant 9.99999974E-6 : f32
    %257 = vector.broadcast %cst_28 : f32 to vector<1x128xf32>
    %258 = arith.addf %256, %257 : vector<1x128xf32>
    %259 = math.rsqrt %258 : vector<1x128xf32>
    %260 = vector.broadcast %259 : vector<1x128xf32> to vector<256x128xf32>
    %261 = arith.mulf %251, %260 : vector<256x128xf32>
    %cst_29 = arith.constant 0.000000e+00 : f32
    %262 = vector.broadcast %cst_29 : f32 to vector<256x128xf32>
    %263 = arith.maximumf %261, %262 : vector<256x128xf32>
    %264 = arith.truncf %263 : vector<256x128xf32> to vector<256x128xbf16>
    %c0_30 = arith.constant 0 : index
    %c0_31 = arith.constant 0 : index
    %c0_32 = arith.constant 0 : index
    %265 = vector.load %arg6[%c0_30, %c0_31, %c0_32] : memref<1x256x128xbf16, #tpu.memory_space<vmem>>, vector<1x256x128xbf16>
    %266 = vector.shape_cast %265 : vector<1x256x128xbf16> to vector<256x128xbf16>
    %267 = vector.shape_cast %264 : vector<256x128xbf16> to vector<1x256x128xbf16>
    tpu.vector_store %arg6[%c0_30, %c0_31, %c0_32], %267 {strides = array<i32>} : memref<1x256x128xbf16, #tpu.memory_space<vmem>>, vector<1x256x128xbf16>,
    return
  }
  func.func @transform_0(%arg0: i32) -> (i32, i32, i32) {
    %c0_i32 = arith.constant 0 : i32
    %c0_i32_0 = arith.constant 0 : i32
    %c0_i32_1 = arith.constant 0 : i32
    return %arg0, %c0_i32, %c0_i32_0 : i32, i32, i32
  }
  func.func @transform_1(%arg0: i32) -> (i32, i32, i32, i32) {
    %c0_i32 = arith.constant 0 : i32
    %c0_i32_0 = arith.constant 0 : i32
    %c0_i32_1 = arith.constant 0 : i32
    %c0_i32_2 = arith.constant 0 : i32
    %c0_i32_3 = arith.constant 0 : i32
    return %c0_i32, %c0_i32_0, %c0_i32_1, %c0_i32_2 : i32, i32, i32, i32
  }
  func.func @transform_2(%arg0: i32) -> (i32, i32) {
    %c0_i32 = arith.constant 0 : i32
    %c0_i32_0 = arith.constant 0 : i32
    %c0_i32_1 = arith.constant 0 : i32
    return %c0_i32, %c0_i32_0 : i32, i32
  }
  func.func @transform_3(%arg0: i32) -> (i32, i32) {
    %c0_i32 = arith.constant 0 : i32
    %c0_i32_0 = arith.constant 0 : i32
    %c0_i32_1 = arith.constant 0 : i32
    return %c0_i32, %c0_i32_0 : i32, i32
  }
  func.func @transform_4(%arg0: i32) -> (i32, i32) {
    %c0_i32 = arith.constant 0 : i32
    %c0_i32_0 = arith.constant 0 : i32
    %c0_i32_1 = arith.constant 0 : i32
    return %c0_i32, %c0_i32_0 : i32, i32
  }
  func.func @transform_5(%arg0: i32) -> (i32, i32, i32) {
    %c0_i32 = arith.constant 0 : i32
    %c0_i32_0 = arith.constant 0 : i32
    %c0_i32_1 = arith.constant 0 : i32
    return %arg0, %c0_i32, %c0_i32_0 : i32, i32, i32
  }
}

module attributes {stable_mosaic.version = 11 : i64} {
  func.func @stage2_kernel(%arg0: i32, %arg1: i32, %arg2: memref<1x256x128xbf16, #tpu.memory_space<vmem>>, %arg3: memref<1x128x512xbf16, #tpu.memory_space<vmem>>, %arg4: memref<1x128x256xbf16, #tpu.memory_space<vmem>>, %arg5: memref<1x128x256xbf16, #tpu.memory_space<vmem>>, %arg6: memref<1x128x128xbf16, #tpu.memory_space<vmem>>, %arg7: memref<1x1x128xf32, #tpu.memory_space<vmem>>, %arg8: memref<1x1024x128xbf16, #tpu.memory_space<vmem>>) attributes {dimension_semantics = [#tpu.dimension_semantics<parallel>, #tpu.dimension_semantics<parallel>], iteration_bounds = array<i64: 2, 2>, scalar_prefetch = 0 : i64, scratch_operands = 0 : i64, tpu.core_type = #tpu.core_type<tc>, window_params = [{transform_indices = @transform_0, window_bounds = array<i64: 1, 256, 128>}, {transform_indices = @transform_1, window_bounds = array<i64: 1, 128, 512>}, {transform_indices = @transform_2, window_bounds = array<i64: 1, 128, 256>}, {transform_indices = @transform_3, window_bounds = array<i64: 1, 128, 256>}, {transform_indices = @transform_4, window_bounds = array<i64: 1, 128, 128>}, {transform_indices = @transform_5, window_bounds = array<i64: 1, 1, 128>}, {transform_indices = @transform_6, window_bounds = array<i64: 1, 1024, 128>}]} {
    %c0 = arith.constant 0 : index
    %c0_0 = arith.constant 0 : index
    %c0_1 = arith.constant 0 : index
    %0 = vector.load %arg2[%c0, %c0_0, %c0_1] : memref<1x256x128xbf16, #tpu.memory_space<vmem>>, vector<1x256x128xbf16>
    %1 = vector.shape_cast %0 : vector<1x256x128xbf16> to vector<256x128xbf16>
    %cst = arith.constant 0.000000e+00 : bf16
    %2 = vector.broadcast %cst : bf16 to vector<17x128xbf16>
    %3 = tpu.concatenate %1, %2 in 0 : vector<256x128xbf16>, vector<17x128xbf16> -> vector<273x128xbf16>
    %4 = tpu.iota {dimensions = array<i32: 0>} : vector<256x1xi32>
    %c16_i32 = arith.constant 16 : i32
    %c0_i32 = arith.constant 0 : i32
    %5 = arith.cmpi eq, %c16_i32, %c0_i32 : i32
    %c1_i32 = arith.constant 1 : i32
    %6 = arith.select %5, %c1_i32, %c16_i32 : i32
    %7 = vector.broadcast %6 : i32 to vector<256x1xi32>
    %8 = arith.remsi %4, %7 : vector<256x1xi32>
    %c0_i32_2 = arith.constant 0 : i32
    %9 = vector.broadcast %c0_i32_2 : i32 to vector<256x1xi32>
    %10 = arith.cmpi ne, %8, %9 : vector<256x1xi32>
    %c0_i32_3 = arith.constant 0 : i32
    %11 = vector.broadcast %c0_i32_3 : i32 to vector<256x1xi32>
    %12 = arith.cmpi slt, %8, %11 : vector<256x1xi32>
    %c0_i32_4 = arith.constant 0 : i32
    %13 = arith.cmpi slt, %6, %c0_i32_4 : i32
    %14 = vector.broadcast %13 : i1 to vector<256x1xi1>
    %15 = vector.broadcast %14 : vector<256x1xi1> to vector<256x1xi1>
    %16 = arith.xori %12, %15 : vector<256x1xi1>
    %17 = arith.andi %16, %10 : vector<256x1xi1>
    %18 = vector.broadcast %6 : i32 to vector<256x1xi32>
    %19 = arith.addi %8, %18 : vector<256x1xi32>
    %20 = arith.select %17, %19, %8 : vector<256x1xi1>, vector<256x1xi32>
    %c15_i32 = arith.constant 15 : i32
    %21 = vector.broadcast %c15_i32 : i32 to vector<256x1xi32>
    %22 = arith.cmpi ne, %20, %21 : vector<256x1xi32>
    %23 = vector.extract_strided_slice %3 {offsets = [1, 0], sizes = [256, 128], strides = [1, 1]} : vector<273x128xbf16> to vector<256x128xbf16>
    %cst_5 = arith.constant 0.000000e+00 : bf16
    %24 = vector.shape_cast %22 : vector<256x1xi1> to vector<256x1xi1>
    %25 = vector.broadcast %24 : vector<256x1xi1> to vector<256x128xi1>
    %26 = vector.broadcast %cst_5 : bf16 to vector<256x128xbf16>
    %27 = arith.select %25, %23, %26 : vector<256x128xi1>, vector<256x128xbf16>
    %28 = vector.extract_strided_slice %3 {offsets = [16, 0], sizes = [256, 128], strides = [1, 1]} : vector<273x128xbf16> to vector<256x128xbf16>
    %29 = vector.extract_strided_slice %3 {offsets = [17, 0], sizes = [256, 128], strides = [1, 1]} : vector<273x128xbf16> to vector<256x128xbf16>
    %cst_6 = arith.constant 0.000000e+00 : bf16
    %30 = vector.shape_cast %22 : vector<256x1xi1> to vector<256x1xi1>
    %31 = vector.broadcast %30 : vector<256x1xi1> to vector<256x128xi1>
    %32 = vector.broadcast %cst_6 : bf16 to vector<256x128xbf16>
    %33 = arith.select %31, %29, %32 : vector<256x128xi1>, vector<256x128xbf16>
    %c0_7 = arith.constant 0 : index
    %c0_8 = arith.constant 0 : index
    %c0_9 = arith.constant 0 : index
    %34 = vector.load %arg7[%c0_7, %c0_8, %c0_9] : memref<1x1x128xf32, #tpu.memory_space<vmem>>, vector<1x1x128xf32>
    %35 = vector.shape_cast %34 : vector<1x1x128xf32> to vector<1x128xf32>
    %c0_10 = arith.constant 0 : index
    %c0_11 = arith.constant 0 : index
    %c0_12 = arith.constant 0 : index
    %36 = vector.load %arg3[%c0_10, %c0_11, %c0_12] : memref<1x128x512xbf16, #tpu.memory_space<vmem>>, vector<1x128x512xbf16>
    %37 = vector.shape_cast %36 : vector<1x128x512xbf16> to vector<128x512xbf16>
    %cst_13 = arith.constant dense<0.000000e+00> : vector<256x512xf32>
    %38 = tpu.matmul %1, %37, %cst_13 {dimension_numbers = #tpu.dot_dimension_numbers<[1], [0], [0], [1], [0, 0, 1, 1], [], []>} : vector<256x128xbf16>, vector<128x512xbf16>, vector<256x512xf32> -> vector<256x512xf32>
    %c0_14 = arith.constant 0 : index
    %c0_15 = arith.constant 0 : index
    %c0_16 = arith.constant 0 : index
    %39 = vector.load %arg4[%c0_14, %c0_15, %c0_16] : memref<1x128x256xbf16, #tpu.memory_space<vmem>>, vector<1x128x256xbf16>
    %40 = vector.shape_cast %39 : vector<1x128x256xbf16> to vector<128x256xbf16>
    %cst_17 = arith.constant dense<0.000000e+00> : vector<256x256xf32>
    %41 = tpu.matmul %27, %40, %cst_17 {dimension_numbers = #tpu.dot_dimension_numbers<[1], [0], [0], [1], [0, 0, 1, 1], [], []>} : vector<256x128xbf16>, vector<128x256xbf16>, vector<256x256xf32> -> vector<256x256xf32>
    %c0_18 = arith.constant 0 : index
    %c0_19 = arith.constant 0 : index
    %c0_20 = arith.constant 0 : index
    %42 = vector.load %arg5[%c0_18, %c0_19, %c0_20] : memref<1x128x256xbf16, #tpu.memory_space<vmem>>, vector<1x128x256xbf16>
    %43 = vector.shape_cast %42 : vector<1x128x256xbf16> to vector<128x256xbf16>
    %cst_21 = arith.constant dense<0.000000e+00> : vector<256x256xf32>
    %44 = tpu.matmul %28, %43, %cst_21 {dimension_numbers = #tpu.dot_dimension_numbers<[1], [0], [0], [1], [0, 0, 1, 1], [], []>} : vector<256x128xbf16>, vector<128x256xbf16>, vector<256x256xf32> -> vector<256x256xf32>
    %c0_22 = arith.constant 0 : index
    %c0_23 = arith.constant 0 : index
    %c0_24 = arith.constant 0 : index
    %45 = vector.load %arg6[%c0_22, %c0_23, %c0_24] : memref<1x128x128xbf16, #tpu.memory_space<vmem>>, vector<1x128x128xbf16>
    %46 = vector.shape_cast %45 : vector<1x128x128xbf16> to vector<128x128xbf16>
    %cst_25 = arith.constant dense<0.000000e+00> : vector<256x128xf32>
    %47 = tpu.matmul %33, %46, %cst_25 {dimension_numbers = #tpu.dot_dimension_numbers<[1], [0], [0], [1], [0, 0, 1, 1], [], []>} : vector<256x128xbf16>, vector<128x128xbf16>, vector<256x128xf32> -> vector<256x128xf32>
    %48 = vector.extract_strided_slice %38 {offsets = [0, 0], sizes = [256, 128], strides = [1, 1]} : vector<256x512xf32> to vector<256x128xf32>
    %49 = vector.broadcast %35 : vector<1x128xf32> to vector<256x128xf32>
    %50 = arith.addf %48, %49 : vector<256x128xf32>
    %51 = vector.extract_strided_slice %38 {offsets = [0, 128], sizes = [256, 128], strides = [1, 1]} : vector<256x512xf32> to vector<256x128xf32>
    %52 = vector.extract_strided_slice %41 {offsets = [0, 0], sizes = [256, 128], strides = [1, 1]} : vector<256x256xf32> to vector<256x128xf32>
    %53 = arith.addf %51, %52 : vector<256x128xf32>
    %54 = vector.broadcast %35 : vector<1x128xf32> to vector<256x128xf32>
    %55 = arith.addf %53, %54 : vector<256x128xf32>
    %56 = vector.extract_strided_slice %38 {offsets = [0, 256], sizes = [256, 128], strides = [1, 1]} : vector<256x512xf32> to vector<256x128xf32>
    %57 = vector.extract_strided_slice %44 {offsets = [0, 0], sizes = [256, 128], strides = [1, 1]} : vector<256x256xf32> to vector<256x128xf32>
    %58 = arith.addf %56, %57 : vector<256x128xf32>
    %59 = vector.broadcast %35 : vector<1x128xf32> to vector<256x128xf32>
    %60 = arith.addf %58, %59 : vector<256x128xf32>
    %61 = vector.extract_strided_slice %38 {offsets = [0, 384], sizes = [256, 128], strides = [1, 1]} : vector<256x512xf32> to vector<256x128xf32>
    %62 = vector.extract_strided_slice %41 {offsets = [0, 128], sizes = [256, 128], strides = [1, 1]} : vector<256x256xf32> to vector<256x128xf32>
    %63 = arith.addf %61, %62 : vector<256x128xf32>
    %64 = vector.extract_strided_slice %44 {offsets = [0, 128], sizes = [256, 128], strides = [1, 1]} : vector<256x256xf32> to vector<256x128xf32>
    %65 = arith.addf %63, %64 : vector<256x128xf32>
    %66 = arith.addf %65, %47 : vector<256x128xf32>
    %67 = vector.broadcast %35 : vector<1x128xf32> to vector<256x128xf32>
    %68 = arith.addf %66, %67 : vector<256x128xf32>
    %69 = tpu.concatenate %50, %55, %60, %68 in 0 : vector<256x128xf32>, vector<256x128xf32>, vector<256x128xf32>, vector<256x128xf32> -> vector<1024x128xf32>
    %cst_26 = arith.constant dense<0.000000e+00> : vector<128xf32>
    %70 = vector.multi_reduction <add>, %69, %cst_26 [0] : vector<1024x128xf32> to vector<128xf32>
    %71 = vector.shape_cast %70 : vector<128xf32> to vector<1x128xf32>
    %cst_27 = arith.constant 9.765625E-4 : f32
    %72 = vector.broadcast %cst_27 : f32 to vector<1x128xf32>
    %73 = arith.mulf %71, %72 : vector<1x128xf32>
    %74 = vector.broadcast %73 : vector<1x128xf32> to vector<1024x128xf32>
    %75 = arith.subf %69, %74 : vector<1024x128xf32>
    %76 = arith.mulf %75, %75 : vector<1024x128xf32>
    %cst_28 = arith.constant dense<0.000000e+00> : vector<128xf32>
    %77 = vector.multi_reduction <add>, %76, %cst_28 [0] : vector<1024x128xf32> to vector<128xf32>
    %78 = vector.shape_cast %77 : vector<128xf32> to vector<1x128xf32>
    %cst_29 = arith.constant 9.765625E-4 : f32
    %79 = vector.broadcast %cst_29 : f32 to vector<1x128xf32>
    %80 = arith.mulf %78, %79 : vector<1x128xf32>
    %cst_30 = arith.constant 9.99999974E-6 : f32
    %81 = vector.broadcast %cst_30 : f32 to vector<1x128xf32>
    %82 = arith.addf %80, %81 : vector<1x128xf32>
    %83 = math.rsqrt %82 : vector<1x128xf32>
    %84 = vector.broadcast %83 : vector<1x128xf32> to vector<1024x128xf32>
    %85 = arith.mulf %75, %84 : vector<1024x128xf32>
    %cst_31 = arith.constant 0.000000e+00 : f32
    %86 = vector.broadcast %cst_31 : f32 to vector<1024x128xf32>
    %87 = arith.maximumf %85, %86 : vector<1024x128xf32>
    %88 = arith.truncf %87 : vector<1024x128xf32> to vector<1024x128xbf16>
    %c0_32 = arith.constant 0 : index
    %c0_33 = arith.constant 0 : index
    %c0_34 = arith.constant 0 : index
    %89 = vector.load %arg8[%c0_32, %c0_33, %c0_34] : memref<1x1024x128xbf16, #tpu.memory_space<vmem>>, vector<1x1024x128xbf16>
    %90 = vector.shape_cast %89 : vector<1x1024x128xbf16> to vector<1024x128xbf16>
    %91 = vector.shape_cast %88 : vector<1024x128xbf16> to vector<1x1024x128xbf16>
    tpu.vector_store %arg8[%c0_32, %c0_33, %c0_34], %91 {strides = array<i32>} : memref<1x1024x128xbf16, #tpu.memory_space<vmem>>, vector<1x1024x128xbf16>,
    return
  }
  func.func @transform_0(%arg0: i32, %arg1: i32) -> (i32, i32, i32) {
    %c0_i32 = arith.constant 0 : i32
    %c0_i32_0 = arith.constant 0 : i32
    %c0_i32_1 = arith.constant 0 : i32
    return %arg0, %c0_i32, %c0_i32_0 : i32, i32, i32
  }
  func.func @transform_1(%arg0: i32, %arg1: i32) -> (i32, i32, i32) {
    %c0_i32 = arith.constant 0 : i32
    %c0_i32_0 = arith.constant 0 : i32
    %c0_i32_1 = arith.constant 0 : i32
    return %arg1, %c0_i32, %c0_i32_0 : i32, i32, i32
  }
  func.func @transform_2(%arg0: i32, %arg1: i32) -> (i32, i32, i32) {
    %c0_i32 = arith.constant 0 : i32
    %c0_i32_0 = arith.constant 0 : i32
    %c0_i32_1 = arith.constant 0 : i32
    return %arg1, %c0_i32, %c0_i32_0 : i32, i32, i32
  }
  func.func @transform_3(%arg0: i32, %arg1: i32) -> (i32, i32, i32) {
    %c0_i32 = arith.constant 0 : i32
    %c0_i32_0 = arith.constant 0 : i32
    %c0_i32_1 = arith.constant 0 : i32
    return %arg1, %c0_i32, %c0_i32_0 : i32, i32, i32
  }
  func.func @transform_4(%arg0: i32, %arg1: i32) -> (i32, i32, i32) {
    %c0_i32 = arith.constant 0 : i32
    %c0_i32_0 = arith.constant 0 : i32
    %c0_i32_1 = arith.constant 0 : i32
    return %arg1, %c0_i32, %c0_i32_0 : i32, i32, i32
  }
  func.func @transform_5(%arg0: i32, %arg1: i32) -> (i32, i32, i32) {
    %c0_i32 = arith.constant 0 : i32
    %c0_i32_0 = arith.constant 0 : i32
    %c0_i32_1 = arith.constant 0 : i32
    return %arg1, %c0_i32, %c0_i32_0 : i32, i32, i32
  }
  func.func @transform_6(%arg0: i32, %arg1: i32) -> (i32, i32, i32) {
    %c0_i32 = arith.constant 0 : i32
    %c0_i32_0 = arith.constant 0 : i32
    return %arg0, %c0_i32, %arg1 : i32, i32, i32
  }
}

</mosaic_0001>

<llo_original>
// kernel: vit_decoder_forward.3
$region0: #{vit_decoder_forward.3}
  #allocation0 [shape = 'u32[]', space=smem, size = 0x4, offset = 0x4, fixed_abs, tag = 'smem constant byte address 0x4 - core index']
  #allocation1 [shape = 'u32[144,128]{1,0:T(1,128)}', space=vmem, size = 0x12000, scoped, tag = 'internal scratch']
  %s0 = inlined_call_operand.hbm [shape: f32[2,32], index: 0, kind: input, shape index: {}]
  %s1 = inlined_call_operand.hbm [shape: bf16[32,192], index: 1, kind: input, shape index: {}]
  %s2 = inlined_call_operand.hbm [shape: f32[1,192], index: 2, kind: input, shape index: {}]
  %s3 = inlined_call_operand.vmem [shape: bf16[2,192], index: 3, kind: output, shape index: {}]
  %s4 = sld [smem:[#allocation0]]
  $region34: #{vit_decoder_forward.3} parent=0
    _
  %s6 = ssub.s32 1, %s4
  %s7 = scalar_select 0, %s6, %s4
  $region1: #{vit_decoder_forward.3} parent=0
    #allocation2 [shape = 'u8[1024]{0}', space=vmem, size = 0x400, scoped, tag = 'input window, operand 0, single buffered']
    #allocation3 [shape = 's32[1]{0}', space=sflag, size = 0x4, scoped, tag = 'scoped memory for vit_decoder_forward.3']
    #allocation4 [shape = 'u8[16384]{0}', space=vmem, size = 0x4000, scoped, tag = 'input window, operand 1, single buffered']
    #allocation5 [shape = 's32[1]{0}', space=sflag, size = 0x4, scoped, tag = 'scoped memory for vit_decoder_forward.3']
    #allocation6 [shape = 'u8[1024]{0}', space=vmem, size = 0x400, scoped, tag = 'input window, operand 2, single buffered']
    %8 = vsyncpa [#allocation3], 0
    %9 = vsyncpa [#allocation5], 0
    // Predicated region
    $region2: #{vit_decoder_forward.3} parent=1 // pred_check
      _
    $region3: #{vit_decoder_forward.3} parent=1 // pred_check_branch
      %11 = sbr.rel (0) target = $region5
    $region4: #{vit_decoder_forward.3} parent=1 // pred_region
      %s13 = ssub.s32 32, 32
      %14 = vsyncadd [#allocation3], %s13
      %s16 = sshll.u32 [#allocation2], 4
      %s17 = int_to_ptr.vmem [resolvable:$true] %s16
      %19 = dma.hbm_to_vmem [thread:$0]  %s0, 32, %s17, [#allocation3]
    $region5: #{vit_decoder_forward.3} parent=1 // pred_fallthru
      _
    // Predicated region
    $region6: #{vit_decoder_forward.3} parent=1 // pred_check
      _
    $region7: #{vit_decoder_forward.3} parent=1 // pred_check_branch
      %21 = sbr.rel (0) target = $region9
    $region8: #{vit_decoder_forward.3} parent=1 // pred_region
      %s23 = ssub.s32 512, 512
      %24 = vsyncadd [#allocation5], %s23
      %s25 = sshll.u32 [#allocation4], 4
      %s26 = int_to_ptr.vmem [resolvable:$true] %s25
      %31 = dma.hbm_to_vmem [thread:$0]  %s1, 512, %s26, [#allocation5], 128, 128, 8
    $region9: #{vit_decoder_forward.3} parent=1 // pred_fallthru
      _
    // Predicated region
    $region10: #{vit_decoder_forward.3} parent=1 // pred_check
      _
    $region11: #{vit_decoder_forward.3} parent=1 // pred_check_branch
      %33 = sbr.rel (0) target = $region13
    $region12: #{vit_decoder_forward.3} parent=1 // pred_region
      %s35 = ssub.s32 32, 32
      %36 = vsyncadd [#allocation5], %s35
      %s38 = sshll.u32 [#allocation6], 4
      %s39 = int_to_ptr.vmem [resolvable:$true] %s38
      %41 = dma.hbm_to_vmem [thread:$0]  %s2, 32, %s39, [#allocation5]
    $region13: #{vit_decoder_forward.3} parent=1 // pred_fallthru
      _
    // Predicated region
    $region14: #{vit_decoder_forward.3} parent=1 // pred_check
      _
    $region15: #{vit_decoder_forward.3} parent=1 // pred_check_branch
      %43 = sbr.rel (0) target = $region17
    $region16: #{vit_decoder_forward.3} parent=1 // pred_region
      %44 = dma.done [#allocation3], 32
    $region17: #{vit_decoder_forward.3} parent=1 // pred_fallthru
      _
    // Predicated region
    $region18: #{vit_decoder_forward.3} parent=1 // pred_check
      _
    $region19: #{vit_decoder_forward.3} parent=1 // pred_check_branch
      %46 = sbr.rel (0) target = $region21
    $region20: #{vit_decoder_forward.3} parent=1 // pred_region
      %47 = dma.done [#allocation5], 512
    $region21: #{vit_decoder_forward.3} parent=1 // pred_fallthru
      _
    // Predicated region
    $region22: #{vit_decoder_forward.3} parent=1 // pred_check
      _
    $region23: #{vit_decoder_forward.3} parent=1 // pred_check_branch
      %49 = sbr.rel (0) target = $region25
    $region24: #{vit_decoder_forward.3} parent=1 // pred_region
      %50 = dma.done [#allocation5], 32
    $region25: #{vit_decoder_forward.3} parent=1 // pred_fallthru
      _
    %v52 = vld [vmem:[#allocation2] sm:$0x3]
    %v53 = vpack.c.bf16 %v52, %v52
    %v54 = vld [vmem:[#allocation4] sm:$0xff]
    %v55 = vld [vmem:[#allocation4 + $0x8] sm:$0xff]
    %v56 = vld [vmem:[#allocation4 + $0x10] sm:$0xff]
    %v57 = vld [vmem:[#allocation4 + $0x18] sm:$0xff]
    %v58 = vld [vmem:[#allocation6] sm:$0x3]
    %v60 = vlaneseq
    %v61 = vshrl.u32 %v60, 7
    %v62 = vsub.s32 0, %v61
    %v63 = vrot.slane %v58, %v62
    %v64 = vlaneseq
    %v65 = vshrl.u32 %v64, 7
    %v66 = vsub.s32 1, %v65
    %v67 = vrot.slane %v58, %v66
    %v74 = vunpack.c.l.b16 %v54
    %v75 = vunpack.c.h.b16 %v54
    %v76 = vunpack.c.l.b16 %v55
    %v77 = vunpack.c.h.b16 %v55
    %v78 = vunpack.c.l.b16 %v56
    %v79 = vunpack.c.h.b16 %v56
    %v80 = vunpack.c.l.b16 %v57
    %v81 = vunpack.c.h.b16 %v57
    %v82 = vpack.c.b16 %v76, %v74
    %v83 = vpack.c.b16 %v77, %v75
    %v84 = vpack.c.b16 %v80, %v78
    %v85 = vpack.c.b16 %v81, %v79
    %vm90 = vcmask 261120
    %v92 = vsel %vm90, %v53, 0
    %94 = vmatprep.subr.bf16.mxu0 0
    %95 = vmatpush1.bf16.msra.mxu0 0
    %96 = vmatprep.subr.bf16.mxu0 0
    %97 = vmatpush1.bf16.msra.mxu0 0
    %98 = vmatprep.subr.bf16.mxu0 0
    %99 = vmatpush1.bf16.msra.mxu0 0
    %100 = vmatprep.subr.bf16.mxu0 0
    %101 = vmatpush1.bf16.msra.mxu0 0
    %102 = vmatprep.subr.bf16.mxu0 0
    %103 = vmatpush1.bf16.msra.mxu0 0
    %104 = vmatprep.subr.bf16.mxu0 0
    %105 = vmatpush1.bf16.msra.mxu0 0
    %106 = vmatprep.subr.bf16.mxu0 %v85
    %107 = vmatpush1.bf16.msra.mxu0 %v84
    %108 = vmatprep.subr.bf16.mxu0 %v83
    %109 = vmatpush1.bf16.msra.mxu0 %v82
    %110 = vmatprep.subr.bf16.mxu0 0
    %111 = vmatpush2.bf16.msra.mxu0 0
    %112 = vmatprep.subr.bf16.mxu0 0
    %113 = vmatpush2.bf16.msra.mxu0 0
    %114 = vmatprep.subr.bf16.mxu0 0
    %115 = vmatpush2.bf16.msra.mxu0 0
    %116 = vmatprep.subr.bf16.mxu0 0
    %117 = vmatpush2.bf16.msra.mxu0 0
    %118 = vmatprep.subr.bf16.mxu0 0
    %119 = vmatpush2.bf16.msra.mxu0 0
    %120 = vmatprep.subr.bf16.mxu0 0
    %121 = vmatpush2.bf16.msra.mxu0 0
    %122 = vmatprep.subr.bf16.mxu0 0
    %123 = vmatpush2.bf16.msra.mxu0 0
    %124 = vmatprep.subr.bf16.mxu0 0
    %125 = vmatpush2.bf16.msra.mxu0 0
    %126 = vmatprep.mubr.bf16.mxu0 0
    %127 = vmatmul.mubr.bf16.gmra.mxu0 %v92
    %v128 = vpop.f32.mrf.mxu0
    %v129 = vadd.f32 %v63, %v128
    %v130 = vpop.f32.mrf.mxu0
    %v131 = vadd.f32 %v67, %v130
    %v132 = vpop.f32.mrf.mxu0
    %v133 = vpop.f32.mrf.mxu0
    %134 = vdwg.mxu0
    %v135 = vpack.c.bf16 %v129, %v129
    %v136 = vpack.c.bf16 %v131, %v131
    %v139 = vcombine.low %v135, %v136
    %v141 = vunpack.c.l.s4 1966171168
    %v142 = vunpack.c.0.s8 %v141
    %v143 = vlaneseq
    %v144 = vshrl.u32 %v143, 7
    %v145 = vsub.s32 %v142, %v144
    %v146 = vrot.slane %v139, %v145
    %v148 = vunpack.c.l.s4 1966171168
    %v149 = vunpack.c.0.s8 %v148
    %v150 = vlaneseq
    %v151 = vshrl.u32 %v150, 7
    %v152 = vsub.s32 %v149, %v151
    %v153 = vrot.slane %v146, %v152
    %vm155 = vcmask 1040384
    %vm156 = vcmask 517121
    %vm157 = vmor %vm156, %vm155
    %158 = vst.msk [vmem:[%s3] sm:$0x3] %vm157, %v153
    // Predicated region
    $region26: #{vit_decoder_forward.3} parent=1 // pred_check
      _
    $region27: #{vit_decoder_forward.3} parent=1 // pred_check_branch
      %160 = sbr.rel (0) target = $region29
    $region28: #{vit_decoder_forward.3} parent=1 // pred_region
      _
    $region29: #{vit_decoder_forward.3} parent=1 // pred_fallthru
      _
    // Predicated region
    $region30: #{vit_decoder_forward.3} parent=1 // pred_check
      _
    $region31: #{vit_decoder_forward.3} parent=1 // pred_check_branch
      %162 = sbr.rel (0) target = $region33
    $region32: #{vit_decoder_forward.3} parent=1 // pred_region
      _
    $region33: #{vit_decoder_forward.3} parent=1 // pred_fallthru
      _
    %163 = vsyncpa [#allocation3], 1
    %164 = vsyncpa [#allocation5], 1

// kernel: vit_decoder_forward.4
$region0: #{vit_decoder_forward.4}
  #allocation0 [shape = 'u32[]', space=smem, size = 0x4, offset = 0x4, fixed_abs, tag = 'smem constant byte address 0x4 - core index']
  #allocation1 [shape = 'u32[144,128]{1,0:T(1,128)}', space=vmem, size = 0x12000, scoped, tag = 'internal scratch']
  %s0 = inlined_call_operand.vmem [shape: bf16[2,64,3], index: 0, kind: input, shape index: {}]
  %s1 = inlined_call_operand.hbm [shape: f32[3,3,3,64], index: 1, kind: input, shape index: {}]
  %s2 = inlined_call_operand.hbm [shape: f32[1,64], index: 2, kind: input, shape index: {}]
  %s3 = inlined_call_operand.hbm [shape: bf16[64,128], index: 3, kind: input, shape index: {}]
  %s4 = inlined_call_operand.hbm [shape: f32[1,128], index: 4, kind: input, shape index: {}]
  %s5 = inlined_call_operand.vmem [shape: bf16[2,256,128], index: 5, kind: output, shape index: {}]
  %s6 = sld [smem:[#allocation0]]
  $region69: #{vit_decoder_forward.4} parent=0
    _
  %s8 = ssub.s32 1, %s6
  %s9 = scalar_select 0, %s8, %s6
  $region1: #{vit_decoder_forward.4} parent=0
    #allocation2 [shape = 'u8[18432]{0}', space=vmem, size = 0x4800, scoped, tag = 'input window, operand 1, single buffered']
    #allocation3 [shape = 's32[2]{0}', space=sflag, size = 0x8, scoped, tag = 'scoped memory for vit_decoder_forward.4']
    #allocation4 [shape = 'u8[512]{0}', space=vmem, size = 0x400, scoped, tag = 'input window, operand 2, single buffered']
    #allocation5 [shape = 's32[1]{0}', space=sflag, size = 0x4, scoped, tag = 'scoped memory for vit_decoder_forward.4']
    #allocation6 [shape = 'u8[16384]{0}', space=vmem, size = 0x4000, scoped, tag = 'input window, operand 3, single buffered']
    #allocation7 [shape = 'u8[512]{0}', space=vmem, size = 0x400, scoped, tag = 'input window, operand 4, single buffered']
    #allocation8 [shape = 's32[1]{0}', space=sflag, size = 0x4, scoped, tag = 'scoped memory for vit_decoder_forward.4']
    %10 = vsyncpa [#allocation3], 0
    %11 = vsyncpa [#allocation5], 0
    %12 = vsyncpa [#allocation8], 0
    loop: start=0, step=1, limit=4
    $region2: #{vit_decoder_forward.4} parent=1 // loop_pre_header
      _
    $region3: #{vit_decoder_forward.4} parent=1 // loop_header
      %s14 = sphi 0, %s18
      %p15 = scmp.ge.s32.totalorder %s14, 4
      %s24 = sphi 0, %s26
      %s27 = sphi 0, %s24
      %s28 = sphi 0, %s27
      %s44 = sphi 0, %s28
      %s48 = sphi 0, %s48
      %s50 = sphi 0, %s48
      %s51 = sphi 0, %s50
      %s65 = sphi 0, %s51
      %s69 = sphi 0, %s69
      %s71 = sphi 0, %s69
      %s72 = sphi 0, %s71
      %s86 = sphi 0, %s72
      %s90 = sphi 0, %s90
      %s92 = sphi 0, %s90
      %s93 = sphi 0, %s92
      %s107 = sphi 0, %s93
      %s111 = sphi 0, %s111
      %s113 = sphi 0, %s111
      %s114 = sphi 0, %s113
      %s128 = sphi 0, %s114
      %s134 = sphi 0, %s136
      %s137 = sphi 0, %s134
      %s138 = sphi 0, %s137
      %s154 = sphi 0, %s138
    $region4: #{vit_decoder_forward.4} parent=1 // loop_header_branch
      %17 = sbr.rel (%p15) target = $region8
    $region5: #{vit_decoder_forward.4} parent=1 // loop_body
      %s19 = ssub.s32 %s14, 1
      %s20 = ssub.s32 %s14, 2
      %s21 = sadd.s32 %s14, 1
      %s22 = ssub.s32 %s14, %s21
      %p23 = scmp.eq.s32.totalorder %s22, 0
      %s25 = sadd.s32 %s24, 1
      %s26 = scalar_select %p23, %s24, %s25
      %p29 = pneg %p23
      %p30 = scmp.eq.s32.totalorder %s14, 1
      %p31 = por %p29, %p30
      %p32 = scmp.ne.s32.totalorder %s24, %s27
      %p33 = scmp.eq.s32.totalorder %s14, 0
      %p34 = por %p32, %p33
      %p35 = scmp.ne.s32.totalorder %s24, %s27
      %p36 = scmp.eq.s32.totalorder %s19, 1
      %p37 = por %p35, %p36
      %p38 = scmp.ne.s32.totalorder %s27, %s28
      %p39 = scmp.eq.s32.totalorder %s19, 0
      %p40 = por %p38, %p39
      %p41 = scmp.ne.s32.totalorder %s27, %s28
      %p42 = scmp.eq.s32.totalorder %s20, 1
      %p43 = por %p41, %p42
      %p45 = scmp.ne.s32.totalorder %s28, %s44
      %p46 = scmp.eq.s32.totalorder %s20, 0
      %p47 = por %p45, %p46
      %s49 = sadd.s32 %s48, 1
      %p52 = scmp.eq.s32.totalorder %s14, 1
      %p53 = scmp.ne.s32.totalorder %s48, %s50
      %p54 = scmp.eq.s32.totalorder %s14, 0
      %p55 = por %p53, %p54
      %p56 = scmp.ne.s32.totalorder %s48, %s50
      %p57 = scmp.eq.s32.totalorder %s19, 1
      %p58 = por %p56, %p57
      %p59 = scmp.ne.s32.totalorder %s50, %s51
      %p60 = scmp.eq.s32.totalorder %s19, 0
      %p61 = por %p59, %p60
      %p62 = scmp.ne.s32.totalorder %s50, %s51
      %p63 = scmp.eq.s32.totalorder %s20, 1
      %p64 = por %p62, %p63
      %p66 = scmp.ne.s32.totalorder %s51, %s65
      %p67 = scmp.eq.s32.totalorder %s20, 0
      %p68 = por %p66, %p67
      %s70 = sadd.s32 %s69, 1
      %p73 = scmp.eq.s32.totalorder %s14, 1
      %p74 = scmp.ne.s32.totalorder %s69, %s71
      %p75 = scmp.eq.s32.totalorder %s14, 0
      %p76 = por %p74, %p75
      %p77 = scmp.ne.s32.totalorder %s69, %s71
      %p78 = scmp.eq.s32.totalorder %s19, 1
      %p79 = por %p77, %p78
      %p80 = scmp.ne.s32.totalorder %s71, %s72
      %p81 = scmp.eq.s32.totalorder %s19, 0
      %p82 = por %p80, %p81
      %p83 = scmp.ne.s32.totalorder %s71, %s72
      %p84 = scmp.eq.s32.totalorder %s20, 1
      %p85 = por %p83, %p84
      %p87 = scmp.ne.s32.totalorder %s72, %s86
      %p88 = scmp.eq.s32.totalorder %s20, 0
      %p89 = por %p87, %p88
      %s91 = sadd.s32 %s90, 1
      %p94 = scmp.eq.s32.totalorder %s14, 1
      %p95 = scmp.ne.s32.totalorder %s90, %s92
      %p96 = scmp.eq.s32.totalorder %s14, 0
      %p97 = por %p95, %p96
      %p98 = scmp.ne.s32.totalorder %s90, %s92
      %p99 = scmp.eq.s32.totalorder %s19, 1
      %p100 = por %p98, %p99
      %p101 = scmp.ne.s32.totalorder %s92, %s93
      %p102 = scmp.eq.s32.totalorder %s19, 0
      %p103 = por %p101, %p102
      %p104 = scmp.ne.s32.totalorder %s92, %s93
      %p105 = scmp.eq.s32.totalorder %s20, 1
      %p106 = por %p104, %p105
      %p108 = scmp.ne.s32.totalorder %s93, %s107
      %p109 = scmp.eq.s32.totalorder %s20, 0
      %p110 = por %p108, %p109
      %s112 = sadd.s32 %s111, 1
      %p115 = scmp.eq.s32.totalorder %s14, 1
      %p116 = scmp.ne.s32.totalorder %s111, %s113
      %p117 = scmp.eq.s32.totalorder %s14, 0
      %p118 = por %p116, %p117
      %p119 = scmp.ne.s32.totalorder %s111, %s113
      %p120 = scmp.eq.s32.totalorder %s19, 1
      %p121 = por %p119, %p120
      %p122 = scmp.ne.s32.totalorder %s113, %s114
      %p123 = scmp.eq.s32.totalorder %s19, 0
      %p124 = por %p122, %p123
      %p125 = scmp.ne.s32.totalorder %s113, %s114
      %p126 = scmp.eq.s32.totalorder %s20, 1
      %p127 = por %p125, %p126
      %p129 = scmp.ne.s32.totalorder %s114, %s128
      %p130 = scmp.eq.s32.totalorder %s20, 0
      %p131 = por %p129, %p130
      %s132 = ssub.s32 %s14, %s21
      %p133 = scmp.eq.s32.totalorder %s132, 0
      %s135 = sadd.s32 %s134, 1
      %s136 = scalar_select %p133, %s134, %s135
      %p139 = pneg %p133
      %p140 = scmp.eq.s32.totalorder %s14, 1
      %p141 = por %p139, %p140
      %p142 = scmp.ne.s32.totalorder %s134, %s137
      %p143 = scmp.eq.s32.totalorder %s14, 0
      %p144 = por %p142, %p143
      %p145 = scmp.ne.s32.totalorder %s134, %s137
      %p146 = scmp.eq.s32.totalorder %s19, 1
      %p147 = por %p145, %p146
      %p148 = scmp.ne.s32.totalorder %s137, %s138
      %p149 = scmp.eq.s32.totalorder %s19, 0
      %p150 = por %p148, %p149
      %p151 = scmp.ne.s32.totalorder %s137, %s138
      %p152 = scmp.eq.s32.totalorder %s20, 1
      %p153 = por %p151, %p152
      %p155 = scmp.ne.s32.totalorder %s138, %s154
      %p156 = scmp.eq.s32.totalorder %s20, 0
      %p157 = por %p155, %p156
      %p158 = scmp.le.s32.totalorder 1, %s14
      %p159 = scmp.lt.s32.totalorder %s14, 3
      %p160 = pnand %p158, %p159
      %p161 = pneg %p160
      // Predicated region
      $region9: #{vit_decoder_forward.4} parent=5 // pred_check
        _
      $region10: #{vit_decoder_forward.4} parent=5 // pred_check_branch
        %163 = sbr.rel (%p160) target = $region12
      $region11: #{vit_decoder_forward.4} parent=5 // pred_region
        %s164 = ssub.s32 %s14, 1
        // Predicated region
        $region13: #{vit_decoder_forward.4} parent=11 // pred_check
          %p165 = pneg %p61
        $region14: #{vit_decoder_forward.4} parent=11 // pred_check_branch
          %167 = sbr.rel (%p165) target = $region16
        $region15: #{vit_decoder_forward.4} parent=11 // pred_region
          %s169 = ssub.s32 576, 576
          %170 = vsyncadd [#allocation3], %s169
          %s171 = sshll.u32 [#allocation2], 4
          %s172 = int_to_ptr.vmem [resolvable:$true] %s171
          %177 = dma.hbm_to_vmem [thread:$0]  %s1, 576, %s172, [#allocation3], 64, 64, 4
        $region16: #{vit_decoder_forward.4} parent=11 // pred_fallthru
          _
        // Predicated region
        $region17: #{vit_decoder_forward.4} parent=11 // pred_check
          %p178 = pneg %p82
        $region18: #{vit_decoder_forward.4} parent=11 // pred_check_branch
          %180 = sbr.rel (%p178) target = $region20
        $region19: #{vit_decoder_forward.4} parent=11 // pred_region
          %s182 = ssub.s32 16, 16
          %183 = vsyncadd [#allocation5], %s182
          %s185 = sshll.u32 [#allocation4], 4
          %s186 = int_to_ptr.vmem [resolvable:$true] %s185
          %188 = dma.hbm_to_vmem [thread:$0]  %s2, 16, %s186, [#allocation5]
        $region20: #{vit_decoder_forward.4} parent=11 // pred_fallthru
          _
        // Predicated region
        $region21: #{vit_decoder_forward.4} parent=11 // pred_check
          %p189 = pneg %p103
        $region22: #{vit_decoder_forward.4} parent=11 // pred_check_branch
          %191 = sbr.rel (%p189) target = $region24
        $region23: #{vit_decoder_forward.4} parent=11 // pred_region
          %s193 = ssub.s32 512, 512
          %194 = vsyncadd [#allocation5], %s193
          %s195 = sshll.u32 [#allocation6], 4
          %s196 = int_to_ptr.vmem [resolvable:$true] %s195
          %201 = dma.hbm_to_vmem [thread:$0]  %s3, 512, %s196, [#allocation5], 64, 64, 4
        $region24: #{vit_decoder_forward.4} parent=11 // pred_fallthru
          _
        // Predicated region
        $region25: #{vit_decoder_forward.4} parent=11 // pred_check
          %p202 = pneg %p124
        $region26: #{vit_decoder_forward.4} parent=11 // pred_check_branch
          %204 = sbr.rel (%p202) target = $region28
        $region27: #{vit_decoder_forward.4} parent=11 // pred_region
          %s206 = ssub.s32 16, 16
          %207 = vsyncadd [#allocation8], %s206
          %s209 = sshll.u32 [#allocation7], 4
          %s210 = int_to_ptr.vmem [resolvable:$true] %s209
          %212 = dma.hbm_to_vmem [thread:$0]  %s4, 16, %s210, [#allocation8]
        $region28: #{vit_decoder_forward.4} parent=11 // pred_fallthru
          _
      $region12: #{vit_decoder_forward.4} parent=5 // pred_fallthru
        _
      %p213 = scmp.lt.s32.totalorder %s14, 2
      // Predicated region
      $region29: #{vit_decoder_forward.4} parent=5 // pred_check
        %p214 = pneg %p213
      $region30: #{vit_decoder_forward.4} parent=5 // pred_check_branch
        %216 = sbr.rel (%p214) target = $region32
      $region31: #{vit_decoder_forward.4} parent=5 // pred_region
        // Predicated region
        $region33: #{vit_decoder_forward.4} parent=31 // pred_check
          %p217 = pneg %p34
        $region34: #{vit_decoder_forward.4} parent=31 // pred_check_branch
          %219 = sbr.rel (%p217) target = $region36
        $region35: #{vit_decoder_forward.4} parent=31 // pred_region
          %p220 = scmp.lt.s32.totalorder %s14, 1
          %s221 = scalar_select %p220, %s14, 1
          %s222 = smul.addr %s221, 8
          %s223 = smul.addr %s222, 4
          %s224 = scalar_lea.vmem %s0, %s223
        $region36: #{vit_decoder_forward.4} parent=31 // pred_fallthru
          _
      $region32: #{vit_decoder_forward.4} parent=5 // pred_fallthru
        _
      %p225 = scmp.le.s32.totalorder 1, %s14
      %p226 = scmp.lt.s32.totalorder %s14, 3
      %p227 = pnand %p225, %p226
      %p228 = pneg %p227
      // Predicated region
      $region37: #{vit_decoder_forward.4} parent=5 // pred_check
        _
      $region38: #{vit_decoder_forward.4} parent=5 // pred_check_branch
        %230 = sbr.rel (%p227) target = $region40
      $region39: #{vit_decoder_forward.4} parent=5 // pred_region
        %s231 = ssub.s32 %s14, 1
        // Predicated region
        $region41: #{vit_decoder_forward.4} parent=39 // pred_check
          %p232 = pneg %p61
        $region42: #{vit_decoder_forward.4} parent=39 // pred_check_branch
          %234 = sbr.rel (%p232) target = $region44
        $region43: #{vit_decoder_forward.4} parent=39 // pred_region
          %235 = dma.done [#allocation3], 576
        $region44: #{vit_decoder_forward.4} parent=39 // pred_fallthru
          _
        // Predicated region
        $region45: #{vit_decoder_forward.4} parent=39 // pred_check
          %p236 = pneg %p82
        $region46: #{vit_decoder_forward.4} parent=39 // pred_check_branch
          %238 = sbr.rel (%p236) target = $region48
        $region47: #{vit_decoder_forward.4} parent=39 // pred_region
          %239 = dma.done [#allocation5], 16
        $region48: #{vit_decoder_forward.4} parent=39 // pred_fallthru
          _
        // Predicated region
        $region49: #{vit_decoder_forward.4} parent=39 // pred_check
          %p240 = pneg %p103
        $region50: #{vit_decoder_forward.4} parent=39 // pred_check_branch
          %242 = sbr.rel (%p240) target = $region52
        $region51: #{vit_decoder_forward.4} parent=39 // pred_region
          %243 = dma.done [#allocation5], 512
        $region52: #{vit_decoder_forward.4} parent=39 // pred_fallthru
          _
        // Predicated region
        $region53: #{vit_decoder_forward.4} parent=39 // pred_check
          %p244 = pneg %p124
        $region54: #{vit_decoder_forward.4} parent=39 // pred_check_branch
          %246 = sbr.rel (%p244) target = $region56
        $region55: #{vit_decoder_forward.4} parent=39 // pred_region
          %247 = dma.done [#allocation8], 16
        $region56: #{vit_decoder_forward.4} parent=39 // pred_fallthru
          _
        %p248 = scmp.lt.s32.totalorder %s19, 1
        %s249 = scalar_select %p248, %s19, 1
        %s250 = smul.addr %s249, 8
        %s251 = smul.addr %s250, 4
        %s252 = scalar_lea.vmem %s0, %s251
        %p253 = pneg %p40
        %p254 = pneg %p37
        %p255 = pneg %p61
        %p256 = pneg %p58
        %p257 = pneg %p82
        %p258 = pneg %p79
        %p259 = pneg %p103
        %p260 = pneg %p100
        %p261 = pneg %p124
        %p262 = pneg %p121
        %p263 = pneg %p150
        %p264 = pneg %p147
        %p265 = scmp.lt.s32.totalorder %s19, 1
        %s266 = scalar_select %p265, %s19, 1
        %s267 = smul.addr %s266, 32
        %s268 = smul.addr %s267, 4
        %s269 = scalar_lea.vmem %s5, %s268
        %p270 = scmp.lt.s32.totalorder %s19, 1
        %s271 = scalar_select %p270, %s19, 1
        %s272 = smul.addr %s271, 8
        %s273 = smul.addr %s272, 4
        %s274 = scalar_lea.vmem %s0, %s273
        %p275 = scmp.lt.s32.totalorder %s19, 1
        %s276 = scalar_select %p275, %s19, 1
        %s277 = smul.addr %s276, 32
        %s278 = smul.addr %s277, 4
        %s279 = scalar_lea.vmem %s5, %s278
        %v281 = vld [vmem:[%s274] sm:$0xf]
        %v282 = vld [vmem:[%s274 + $0x4] sm:$0xf]
        %v283 = vld [vmem:[%s274 + $0x8] sm:$0xf]
        %v284 = vld [vmem:[%s274 + $0xc] sm:$0xf]
        %v285 = vld [vmem:[%s274 + $0x10] sm:$0xf]
        %v286 = vld [vmem:[%s274 + $0x14] sm:$0xf]
        %v287 = vld [vmem:[%s274 + $0x18] sm:$0xf]
        %v288 = vld [vmem:[%s274 + $0x1c] sm:$0xf]
        %v289 = vunpack.c.l.bf16 %v281
        %v290 = vunpack.c.l.bf16 %v282
        %v291 = vunpack.c.l.bf16 %v283
        %v292 = vunpack.c.l.bf16 %v284
        %v293 = vunpack.c.l.bf16 %v285
        %v294 = vunpack.c.l.bf16 %v286
        %v295 = vunpack.c.l.bf16 %v287
        %v296 = vunpack.c.l.bf16 %v288
        %v297 = vlaneseq
        %v298 = vshrl.u32 %v297, 7
        %v299 = vadd.s32 %v298, 8
        %v300 = vadd.s32 %v298, 16
        %v301 = vadd.s32 %v298, 24
        %v302 = vadd.s32 %v298, 32
        %v303 = vadd.s32 %v298, 40
        %v304 = vadd.s32 %v298, 48
        %v305 = vadd.s32 %v298, 56
        %vm306 = vcmp.lt.s32.totalorder %v298, 0
        %v307 = vsub.s32 0, %v298
        %v308 = vsel %vm306, %v307, %v298
        %v309 = vshrl.u32 %v308, 3
        %v310 = vand.u32 %v308, 7
        %v311 = vsub.s32 0, %v310
        %v312 = vsel %vm306, %v311, %v310
        %vm313 = vcmp.lt.s32.totalorder %v299, 0
        %v314 = vsub.s32 0, %v299
        %v315 = vsel %vm313, %v314, %v299
        %v316 = vshrl.u32 %v315, 3
        %v317 = vand.u32 %v315, 7
        %v318 = vsub.s32 0, %v317
        %v319 = vsel %vm313, %v318, %v317
        %vm320 = vcmp.lt.s32.totalorder %v300, 0
        %v321 = vsub.s32 0, %v300
        %v322 = vsel %vm320, %v321, %v300
        %v323 = vshrl.u32 %v322, 3
        %v324 = vand.u32 %v322, 7
        %v325 = vsub.s32 0, %v324
        %v326 = vsel %vm320, %v325, %v324
        %vm327 = vcmp.lt.s32.totalorder %v301, 0
        %v328 = vsub.s32 0, %v301
        %v329 = vsel %vm327, %v328, %v301
        %v330 = vshrl.u32 %v329, 3
        %v331 = vand.u32 %v329, 7
        %v332 = vsub.s32 0, %v331
        %v333 = vsel %vm327, %v332, %v331
        %vm334 = vcmp.lt.s32.totalorder %v302, 0
        %v335 = vsub.s32 0, %v302
        %v336 = vsel %vm334, %v335, %v302
        %v337 = vshrl.u32 %v336, 3
        %v338 = vand.u32 %v336, 7
        %v339 = vsub.s32 0, %v338
        %v340 = vsel %vm334, %v339, %v338
        %vm341 = vcmp.lt.s32.totalorder %v303, 0
        %v342 = vsub.s32 0, %v303
        %v343 = vsel %vm341, %v342, %v303
        %v344 = vshrl.u32 %v343, 3
        %v345 = vand.u32 %v343, 7
        %v346 = vsub.s32 0, %v345
        %v347 = vsel %vm341, %v346, %v345
        %vm348 = vcmp.lt.s32.totalorder %v304, 0
        %v349 = vsub.s32 0, %v304
        %v350 = vsel %vm348, %v349, %v304
        %v351 = vshrl.u32 %v350, 3
        %v352 = vand.u32 %v350, 7
        %v353 = vsub.s32 0, %v352
        %v354 = vsel %vm348, %v353, %v352
        %vm355 = vcmp.lt.s32.totalorder %v305, 0
        %v356 = vsub.s32 0, %v305
        %v357 = vsel %vm355, %v356, %v305
        %v358 = vshrl.u32 %v357, 3
        %v359 = vand.u32 %v357, 7
        %v360 = vsub.s32 0, %v359
        %v361 = vsel %vm355, %v360, %v359
        %vm362 = vcmp.ne.s32.totalorder %v312, 0
        %vm363 = vcmp.ne.s32.totalorder %v319, 0
        %vm364 = vcmp.ne.s32.totalorder %v326, 0
        %vm365 = vcmp.ne.s32.totalorder %v333, 0
        %vm366 = vcmp.ne.s32.totalorder %v340, 0
        %vm367 = vcmp.ne.s32.totalorder %v347, 0
        %vm368 = vcmp.ne.s32.totalorder %v354, 0
        %vm369 = vcmp.ne.s32.totalorder %v361, 0
        %vm370 = vcmp.lt.s32.totalorder %v312, 0
        %vm371 = vcmp.lt.s32.totalorder %v319, 0
        %vm372 = vcmp.lt.s32.totalorder %v326, 0
        %vm373 = vcmp.lt.s32.totalorder %v333, 0
        %vm374 = vcmp.lt.s32.totalorder %v340, 0
        %vm375 = vcmp.lt.s32.totalorder %v347, 0
        %vm376 = vcmp.lt.s32.totalorder %v354, 0
        %vm377 = vcmp.lt.s32.totalorder %v361, 0
        %vm378 = vmand %vm370, %vm362
        %vm379 = vmand %vm371, %vm363
        %vm380 = vmand %vm372, %vm364
        %vm381 = vmand %vm373, %vm365
        %vm382 = vmand %vm374, %vm366
        %vm383 = vmand %vm375, %vm367
        %vm384 = vmand %vm376, %vm368
        %vm385 = vmand %vm377, %vm369
        %v386 = vadd.s32 %v312, 8
        %v387 = vadd.s32 %v319, 8
        %v388 = vadd.s32 %v326, 8
        %v389 = vadd.s32 %v333, 8
        %v390 = vadd.s32 %v340, 8
        %v391 = vadd.s32 %v347, 8
        %v392 = vadd.s32 %v354, 8
        %v393 = vadd.s32 %v361, 8
        %v394 = vsel %vm378, %v386, %v312
        %v395 = vsel %vm379, %v387, %v319
        %v396 = vsel %vm380, %v388, %v326
        %v397 = vsel %vm381, %v389, %v333
        %v398 = vsel %vm382, %v390, %v340
        %v399 = vsel %vm383, %v391, %v347
        %v400 = vsel %vm384, %v392, %v354
        %v401 = vsel %vm385, %v393, %v361
        %vm402 = vcmp.ne.s32.totalorder %v394, 7
        %vm403 = vcmp.ne.s32.totalorder %v395, 7
        %vm404 = vcmp.ne.s32.totalorder %v396, 7
        %vm405 = vcmp.ne.s32.totalorder %v397, 7
        %vm406 = vcmp.ne.s32.totalorder %v398, 7
        %vm407 = vcmp.ne.s32.totalorder %v399, 7
        %vm408 = vcmp.ne.s32.totalorder %v400, 7
        %vm409 = vcmp.ne.s32.totalorder %v401, 7
        %v410 = vsel %vm402, 1, 0
        %v411 = vsel %vm403, 1, 0
        %v412 = vsel %vm404, 1, 0
        %v413 = vsel %vm405, 1, 0
        %v414 = vsel %vm406, 1, 0
        %v415 = vsel %vm407, 1, 0
        %v416 = vsel %vm408, 1, 0
        %v417 = vsel %vm409, 1, 0
        %vm418 = vcmp.eq.s32.totalorder %v410, 1
        %vm419 = vcmp.eq.s32.totalorder %v411, 1
        %vm420 = vcmp.eq.s32.totalorder %v412, 1
        %vm421 = vcmp.eq.s32.totalorder %v413, 1
        %vm422 = vcmp.eq.s32.totalorder %v414, 1
        %vm423 = vcmp.eq.s32.totalorder %v415, 1
        %vm424 = vcmp.eq.s32.totalorder %v416, 1
        %vm425 = vcmp.eq.s32.totalorder %v417, 1
        %vm435 = vcmask 1046528
        %v436 = vrot.slane %v289, 1
        %v437 = vrot.slane %v290, 1
        %v438 = vsel %vm435, %v436, %v437
        %v439 = vrot.slane %v291, 1
        %v440 = vsel %vm435, %v437, %v439
        %v441 = vrot.slane %v292, 1
        %v442 = vsel %vm435, %v439, %v441
        %v443 = vrot.slane %v293, 1
        %v444 = vsel %vm435, %v441, %v443
        %v445 = vrot.slane %v294, 1
        %v446 = vsel %vm435, %v443, %v445
        %v447 = vrot.slane %v295, 1
        %v448 = vsel %vm435, %v445, %v447
        %v449 = vrot.slane %v296, 1
        %v450 = vsel %vm435, %v447, %v449
        %v451 = vrot.slane 0.0, 1
        %v452 = vsel %vm435, %v449, %v451
        %v461 = vsel %vm418, %v438, 0.0
        %v462 = vsel %vm419, %v440, 0.0
        %v463 = vsel %vm420, %v442, 0.0
        %v464 = vsel %vm421, %v444, 0.0
        %v465 = vsel %vm422, %v446, 0.0
        %v466 = vsel %vm423, %v448, 0.0
        %v467 = vsel %vm424, %v450, 0.0
        %v468 = vsel %vm425, %v452, 0.0
        %v469 = vsel %vm435, %v451, %v451
        %v471 = vsel %vm418, %v440, 0.0
        %v472 = vsel %vm419, %v442, 0.0
        %v473 = vsel %vm420, %v444, 0.0
        %v474 = vsel %vm421, %v446, 0.0
        %v475 = vsel %vm422, %v448, 0.0
        %v476 = vsel %vm423, %v450, 0.0
        %v477 = vsel %vm424, %v452, 0.0
        %v478 = vsel %vm425, %v469, 0.0
        %v479 = vld [vmem:[#allocation2] sm:$0x7]
        %v480 = vld [vmem:[#allocation2 + $0x4] sm:$0x7]
        %v481 = vld [vmem:[#allocation2 + $0x8] sm:$0x7]
        %v482 = vld [vmem:[#allocation2 + $0xc] sm:$0x7]
        %v483 = vld [vmem:[#allocation2 + $0x10] sm:$0x7]
        %v484 = vld [vmem:[#allocation2 + $0x14] sm:$0x7]
        %v485 = vld [vmem:[#allocation2 + $0x18] sm:$0x7]
        %v486 = vld [vmem:[#allocation2 + $0x1c] sm:$0x7]
        %v487 = vld [vmem:[#allocation2 + $0x20] sm:$0x7]
        %v488 = vld [vmem:[#allocation4] sm:$0x1]
        %489 = vset.pattern.permute.xlu0 0
        %490 = vperm.xlu0 %489, %v289
        %v491 = vpop.permute.xlu0 %490
        %493 = vset.pattern.permute.xlu0 0
        %494 = vperm.xlu0 %493, %v290
        %v495 = vpop.permute.xlu0 %494
        %497 = vset.pattern.permute.xlu0 0
        %498 = vperm.xlu0 %497, %v291
        %v499 = vpop.permute.xlu0 %498
        %501 = vset.pattern.permute.xlu0 0
        %502 = vperm.xlu0 %501, %v292
        %v503 = vpop.permute.xlu0 %502
        %505 = vset.pattern.permute.xlu0 0
        %506 = vperm.xlu0 %505, %v293
        %v507 = vpop.permute.xlu0 %506
        %509 = vset.pattern.permute.xlu0 0
        %510 = vperm.xlu0 %509, %v294
        %v511 = vpop.permute.xlu0 %510
        %513 = vset.pattern.permute.xlu0 0
        %514 = vperm.xlu0 %513, %v295
        %v515 = vpop.permute.xlu0 %514
        %517 = vset.pattern.permute.xlu0 0
        %518 = vperm.xlu0 %517, %v296
        %v519 = vpop.permute.xlu0 %518
        %v521 = vlaneseq
        %v522 = vshrl.u32 %v521, 7
        %v523 = vsub.s32 0, %v522
        %v524 = vrot.slane %v483, %v523
        %v525 = vmul.f32 %v491, %v524
        %v526 = vmul.f32 %v495, %v524
        %v527 = vmul.f32 %v499, %v524
        %v528 = vmul.f32 %v503, %v524
        %v529 = vmul.f32 %v507, %v524
        %v530 = vmul.f32 %v511, %v524
        %v531 = vmul.f32 %v515, %v524
        %v532 = vmul.f32 %v519, %v524
        %533 = vset.pattern.permute.xlu0 1
        %534 = vperm.xlu0 %533, %v289
        %v535 = vpop.permute.xlu0 %534
        %537 = vset.pattern.permute.xlu0 1
        %538 = vperm.xlu0 %537, %v290
        %v539 = vpop.permute.xlu0 %538
        %541 = vset.pattern.permute.xlu0 1
        %542 = vperm.xlu0 %541, %v291
        %v543 = vpop.permute.xlu0 %542
        %545 = vset.pattern.permute.xlu0 1
        %546 = vperm.xlu0 %545, %v292
        %v547 = vpop.permute.xlu0 %546
        %549 = vset.pattern.permute.xlu0 1
        %550 = vperm.xlu0 %549, %v293
        %v551 = vpop.permute.xlu0 %550
        %553 = vset.pattern.permute.xlu0 1
        %554 = vperm.xlu0 %553, %v294
        %v555 = vpop.permute.xlu0 %554
        %557 = vset.pattern.permute.xlu0 1
        %558 = vperm.xlu0 %557, %v295
        %v559 = vpop.permute.xlu0 %558
        %561 = vset.pattern.permute.xlu0 1
        %562 = vperm.xlu0 %561, %v296
        %v563 = vpop.permute.xlu0 %562
        %v565 = vlaneseq
        %v566 = vshrl.u32 %v565, 7
        %v567 = vsub.s32 1, %v566
        %v568 = vrot.slane %v483, %v567
        %v569 = vmul.f32 %v535, %v568
        %v570 = vmul.f32 %v539, %v568
        %v571 = vmul.f32 %v543, %v568
        %v572 = vmul.f32 %v547, %v568
        %v573 = vmul.f32 %v551, %v568
        %v574 = vmul.f32 %v555, %v568
        %v575 = vmul.f32 %v559, %v568
        %v576 = vmul.f32 %v563, %v568
        %v577 = vadd.f32 %v525, %v569
        %v578 = vadd.f32 %v526, %v570
        %v579 = vadd.f32 %v527, %v571
        %v580 = vadd.f32 %v528, %v572
        %v581 = vadd.f32 %v529, %v573
        %v582 = vadd.f32 %v530, %v574
        %v583 = vadd.f32 %v531, %v575
        %v584 = vadd.f32 %v532, %v576
        %585 = vset.pattern.permute.xlu0 2
        %586 = vperm.xlu0 %585, %v289
        %v587 = vpop.permute.xlu0 %586
        %589 = vset.pattern.permute.xlu0 2
        %590 = vperm.xlu0 %589, %v290
        %v591 = vpop.permute.xlu0 %590
        %593 = vset.pattern.permute.xlu0 2
        %594 = vperm.xlu0 %593, %v291
        %v595 = vpop.permute.xlu0 %594
        %597 = vset.pattern.permute.xlu0 2
        %598 = vperm.xlu0 %597, %v292
        %v599 = vpop.permute.xlu0 %598
        %601 = vset.pattern.permute.xlu0 2
        %602 = vperm.xlu0 %601, %v293
        %v603 = vpop.permute.xlu0 %602
        %605 = vset.pattern.permute.xlu0 2
        %606 = vperm.xlu0 %605, %v294
        %v607 = vpop.permute.xlu0 %606
        %609 = vset.pattern.permute.xlu0 2
        %610 = vperm.xlu0 %609, %v295
        %v611 = vpop.permute.xlu0 %610
        %613 = vset.pattern.permute.xlu0 2
        %614 = vperm.xlu0 %613, %v296
        %v615 = vpop.permute.xlu0 %614
        %v617 = vlaneseq
        %v618 = vshrl.u32 %v617, 7
        %v619 = vsub.s32 2, %v618
        %v620 = vrot.slane %v483, %v619
        %v621 = vmul.f32 %v587, %v620
        %v622 = vmul.f32 %v591, %v620
        %v623 = vmul.f32 %v595, %v620
        %v624 = vmul.f32 %v599, %v620
        %v625 = vmul.f32 %v603, %v620
        %v626 = vmul.f32 %v607, %v620
        %v627 = vmul.f32 %v611, %v620
        %v628 = vmul.f32 %v615, %v620
        %v629 = vadd.f32 %v577, %v621
        %v630 = vadd.f32 %v578, %v622
        %v631 = vadd.f32 %v579, %v623
        %v632 = vadd.f32 %v580, %v624
        %v633 = vadd.f32 %v581, %v625
        %v634 = vadd.f32 %v582, %v626
        %v635 = vadd.f32 %v583, %v627
        %v636 = vadd.f32 %v584, %v628
        %v638 = vlaneseq
        %v639 = vshrl.u32 %v638, 7
        %v640 = vsub.s32 0, %v639
        %v641 = vrot.slane %v488, %v640
        %v643 = vadd.f32 %v629, %v641
        %v644 = vadd.f32 %v630, %v641
        %v645 = vadd.f32 %v631, %v641
        %v646 = vadd.f32 %v632, %v641
        %v647 = vadd.f32 %v633, %v641
        %v648 = vadd.f32 %v634, %v641
        %v649 = vadd.f32 %v635, %v641
        %v650 = vadd.f32 %v636, %v641
        %v651 = vlaneseq
        %v652 = vshrl.u32 %v651, 7
        %v653 = vsub.s32 0, %v652
        %v654 = vrot.slane %v482, %v653
        %v655 = vmul.f32 %v491, %v654
        %v656 = vmul.f32 %v495, %v654
        %v657 = vmul.f32 %v499, %v654
        %v658 = vmul.f32 %v503, %v654
        %v659 = vmul.f32 %v507, %v654
        %v660 = vmul.f32 %v511, %v654
        %v661 = vmul.f32 %v515, %v654
        %v662 = vmul.f32 %v519, %v654
        %v663 = vlaneseq
        %v664 = vshrl.u32 %v663, 7
        %v665 = vsub.s32 1, %v664
        %v666 = vrot.slane %v482, %v665
        %v667 = vmul.f32 %v535, %v666
        %v668 = vmul.f32 %v539, %v666
        %v669 = vmul.f32 %v543, %v666
        %v670 = vmul.f32 %v547, %v666
        %v671 = vmul.f32 %v551, %v666
        %v672 = vmul.f32 %v555, %v666
        %v673 = vmul.f32 %v559, %v666
        %v674 = vmul.f32 %v563, %v666
        %v675 = vadd.f32 %v655, %v667
        %v676 = vadd.f32 %v656, %v668
        %v677 = vadd.f32 %v657, %v669
        %v678 = vadd.f32 %v658, %v670
        %v679 = vadd.f32 %v659, %v671
        %v680 = vadd.f32 %v660, %v672
        %v681 = vadd.f32 %v661, %v673
        %v682 = vadd.f32 %v662, %v674
        %v683 = vlaneseq
        %v684 = vshrl.u32 %v683, 7
        %v685 = vsub.s32 2, %v684
        %v686 = vrot.slane %v482, %v685
        %v687 = vmul.f32 %v587, %v686
        %v688 = vmul.f32 %v591, %v686
        %v689 = vmul.f32 %v595, %v686
        %v690 = vmul.f32 %v599, %v686
        %v691 = vmul.f32 %v603, %v686
        %v692 = vmul.f32 %v607, %v686
        %v693 = vmul.f32 %v611, %v686
        %v694 = vmul.f32 %v615, %v686
        %v695 = vadd.f32 %v675, %v687
        %v696 = vadd.f32 %v676, %v688
        %v697 = vadd.f32 %v677, %v689
        %v698 = vadd.f32 %v678, %v690
        %v699 = vadd.f32 %v679, %v691
        %v700 = vadd.f32 %v680, %v692
        %v701 = vadd.f32 %v681, %v693
        %v702 = vadd.f32 %v682, %v694
        %704 = vset.pattern.permute.xlu0 0
        %705 = vperm.xlu0 %704, %v461
        %v706 = vpop.permute.xlu0 %705
        %709 = vset.pattern.permute.xlu0 0
        %710 = vperm.xlu0 %709, %v462
        %v711 = vpop.permute.xlu0 %710
        %714 = vset.pattern.permute.xlu0 0
        %715 = vperm.xlu0 %714, %v463
        %v716 = vpop.permute.xlu0 %715
        %719 = vset.pattern.permute.xlu0 0
        %720 = vperm.xlu0 %719, %v464
        %v721 = vpop.permute.xlu0 %720
        %724 = vset.pattern.permute.xlu0 0
        %725 = vperm.xlu0 %724, %v465
        %v726 = vpop.permute.xlu0 %725
        %729 = vset.pattern.permute.xlu0 0
        %730 = vperm.xlu0 %729, %v466
        %v731 = vpop.permute.xlu0 %730
        %734 = vset.pattern.permute.xlu0 0
        %735 = vperm.xlu0 %734, %v467
        %v736 = vpop.permute.xlu0 %735
        %739 = vset.pattern.permute.xlu0 0
        %740 = vperm.xlu0 %739, %v468
        %v741 = vpop.permute.xlu0 %740
        %v743 = vlaneseq
        %v744 = vshrl.u32 %v743, 7
        %v745 = vsub.s32 0, %v744
        %v746 = vrot.slane %v484, %v745
        %v747 = vmul.f32 %v706, %v746
        %v748 = vmul.f32 %v711, %v746
        %v749 = vmul.f32 %v716, %v746
        %v750 = vmul.f32 %v721, %v746
        %v751 = vmul.f32 %v726, %v746
        %v752 = vmul.f32 %v731, %v746
        %v753 = vmul.f32 %v736, %v746
        %v754 = vmul.f32 %v741, %v746
        %755 = vset.pattern.permute.xlu0 1
        %756 = vperm.xlu0 %755, %v461
        %v757 = vpop.permute.xlu0 %756
        %759 = vset.pattern.permute.xlu0 1
        %760 = vperm.xlu0 %759, %v462
        %v761 = vpop.permute.xlu0 %760
        %763 = vset.pattern.permute.xlu0 1
        %764 = vperm.xlu0 %763, %v463
        %v765 = vpop.permute.xlu0 %764
        %767 = vset.pattern.permute.xlu0 1
        %768 = vperm.xlu0 %767, %v464
        %v769 = vpop.permute.xlu0 %768
        %771 = vset.pattern.permute.xlu0 1
        %772 = vperm.xlu0 %771, %v465
        %v773 = vpop.permute.xlu0 %772
        %775 = vset.pattern.permute.xlu0 1
        %776 = vperm.xlu0 %775, %v466
        %v777 = vpop.permute.xlu0 %776
        %779 = vset.pattern.permute.xlu0 1
        %780 = vperm.xlu0 %779, %v467
        %v781 = vpop.permute.xlu0 %780
        %783 = vset.pattern.permute.xlu0 1
        %784 = vperm.xlu0 %783, %v468
        %v785 = vpop.permute.xlu0 %784
        %v787 = vlaneseq
        %v788 = vshrl.u32 %v787, 7
        %v789 = vsub.s32 1, %v788
        %v790 = vrot.slane %v484, %v789
        %v791 = vmul.f32 %v757, %v790
        %v792 = vmul.f32 %v761, %v790
        %v793 = vmul.f32 %v765, %v790
        %v794 = vmul.f32 %v769, %v790
        %v795 = vmul.f32 %v773, %v790
        %v796 = vmul.f32 %v777, %v790
        %v797 = vmul.f32 %v781, %v790
        %v798 = vmul.f32 %v785, %v790
        %v799 = vadd.f32 %v747, %v791
        %v800 = vadd.f32 %v748, %v792
        %v801 = vadd.f32 %v749, %v793
        %v802 = vadd.f32 %v750, %v794
        %v803 = vadd.f32 %v751, %v795
        %v804 = vadd.f32 %v752, %v796
        %v805 = vadd.f32 %v753, %v797
        %v806 = vadd.f32 %v754, %v798
        %807 = vset.pattern.permute.xlu0 2
        %808 = vperm.xlu0 %807, %v461
        %v809 = vpop.permute.xlu0 %808
        %811 = vset.pattern.permute.xlu0 2
        %812 = vperm.xlu0 %811, %v462
        %v813 = vpop.permute.xlu0 %812
        %815 = vset.pattern.permute.xlu0 2
        %816 = vperm.xlu0 %815, %v463
        %v817 = vpop.permute.xlu0 %816
        %819 = vset.pattern.permute.xlu0 2
        %820 = vperm.xlu0 %819, %v464
        %v821 = vpop.permute.xlu0 %820
        %823 = vset.pattern.permute.xlu0 2
        %824 = vperm.xlu0 %823, %v465
        %v825 = vpop.permute.xlu0 %824
        %827 = vset.pattern.permute.xlu0 2
        %828 = vperm.xlu0 %827, %v466
        %v829 = vpop.permute.xlu0 %828
        %831 = vset.pattern.permute.xlu0 2
        %832 = vperm.xlu0 %831, %v467
        %v833 = vpop.permute.xlu0 %832
        %835 = vset.pattern.permute.xlu0 2
        %836 = vperm.xlu0 %835, %v468
        %v837 = vpop.permute.xlu0 %836
        %v839 = vlaneseq
        %v840 = vshrl.u32 %v839, 7
        %v841 = vsub.s32 2, %v840
        %v842 = vrot.slane %v484, %v841
        %v843 = vmul.f32 %v809, %v842
        %v844 = vmul.f32 %v813, %v842
        %v845 = vmul.f32 %v817, %v842
        %v846 = vmul.f32 %v821, %v842
        %v847 = vmul.f32 %v825, %v842
        %v848 = vmul.f32 %v829, %v842
        %v849 = vmul.f32 %v833, %v842
        %v850 = vmul.f32 %v837, %v842
        %v851 = vadd.f32 %v799, %v843
        %v852 = vadd.f32 %v800, %v844
        %v853 = vadd.f32 %v801, %v845
        %v854 = vadd.f32 %v802, %v846
        %v855 = vadd.f32 %v803, %v847
        %v856 = vadd.f32 %v804, %v848
        %v857 = vadd.f32 %v805, %v849
        %v858 = vadd.f32 %v806, %v850
        %v859 = vadd.f32 %v695, %v851
        %v860 = vadd.f32 %v696, %v852
        %v861 = vadd.f32 %v697, %v853
        %v862 = vadd.f32 %v698, %v854
        %v863 = vadd.f32 %v699, %v855
        %v864 = vadd.f32 %v700, %v856
        %v865 = vadd.f32 %v701, %v857
        %v866 = vadd.f32 %v702, %v858
        %v867 = vadd.f32 %v859, %v641
        %v868 = vadd.f32 %v860, %v641
        %v869 = vadd.f32 %v861, %v641
        %v870 = vadd.f32 %v862, %v641
        %v871 = vadd.f32 %v863, %v641
        %v872 = vadd.f32 %v864, %v641
        %v873 = vadd.f32 %v865, %v641
        %v874 = vadd.f32 %v866, %v641
        %v875 = vlaneseq
        %v876 = vshrl.u32 %v875, 7
        %v877 = vsub.s32 0, %v876
        %v878 = vrot.slane %v480, %v877
        %v879 = vmul.f32 %v491, %v878
        %v880 = vmul.f32 %v495, %v878
        %v881 = vmul.f32 %v499, %v878
        %v882 = vmul.f32 %v503, %v878
        %v883 = vmul.f32 %v507, %v878
        %v884 = vmul.f32 %v511, %v878
        %v885 = vmul.f32 %v515, %v878
        %v886 = vmul.f32 %v519, %v878
        %v887 = vlaneseq
        %v888 = vshrl.u32 %v887, 7
        %v889 = vsub.s32 1, %v888
        %v890 = vrot.slane %v480, %v889
        %v891 = vmul.f32 %v535, %v890
        %v892 = vmul.f32 %v539, %v890
        %v893 = vmul.f32 %v543, %v890
        %v894 = vmul.f32 %v547, %v890
        %v895 = vmul.f32 %v551, %v890
        %v896 = vmul.f32 %v555, %v890
        %v897 = vmul.f32 %v559, %v890
        %v898 = vmul.f32 %v563, %v890
        %v899 = vadd.f32 %v879, %v891
        %v900 = vadd.f32 %v880, %v892
        %v901 = vadd.f32 %v881, %v893
        %v902 = vadd.f32 %v882, %v894
        %v903 = vadd.f32 %v883, %v895
        %v904 = vadd.f32 %v884, %v896
        %v905 = vadd.f32 %v885, %v897
        %v906 = vadd.f32 %v886, %v898
        %v907 = vlaneseq
        %v908 = vshrl.u32 %v907, 7
        %v909 = vsub.s32 2, %v908
        %v910 = vrot.slane %v480, %v909
        %v911 = vmul.f32 %v587, %v910
        %v912 = vmul.f32 %v591, %v910
        %v913 = vmul.f32 %v595, %v910
        %v914 = vmul.f32 %v599, %v910
        %v915 = vmul.f32 %v603, %v910
        %v916 = vmul.f32 %v607, %v910
        %v917 = vmul.f32 %v611, %v910
        %v918 = vmul.f32 %v615, %v910
        %v919 = vadd.f32 %v899, %v911
        %v920 = vadd.f32 %v900, %v912
        %v921 = vadd.f32 %v901, %v913
        %v922 = vadd.f32 %v902, %v914
        %v923 = vadd.f32 %v903, %v915
        %v924 = vadd.f32 %v904, %v916
        %v925 = vadd.f32 %v905, %v917
        %v926 = vadd.f32 %v906, %v918
        %927 = vset.pattern.permute.xlu0 0
        %928 = vperm.xlu0 %927, 0.0
        %v929 = vpop.permute.xlu0 %928
        %v931 = vlaneseq
        %v932 = vshrl.u32 %v931, 7
        %v933 = vsub.s32 0, %v932
        %v934 = vrot.slane %v486, %v933
        %v935 = vmul.f32 %v495, %v934
        %v936 = vmul.f32 %v499, %v934
        %v937 = vmul.f32 %v503, %v934
        %v938 = vmul.f32 %v507, %v934
        %v939 = vmul.f32 %v511, %v934
        %v940 = vmul.f32 %v515, %v934
        %v941 = vmul.f32 %v519, %v934
        %v942 = vmul.f32 %v929, %v934
        %943 = vset.pattern.permute.xlu0 1
        %944 = vperm.xlu0 %943, 0.0
        %v945 = vpop.permute.xlu0 %944
        %v947 = vlaneseq
        %v948 = vshrl.u32 %v947, 7
        %v949 = vsub.s32 1, %v948
        %v950 = vrot.slane %v486, %v949
        %v951 = vmul.f32 %v539, %v950
        %v952 = vmul.f32 %v543, %v950
        %v953 = vmul.f32 %v547, %v950
        %v954 = vmul.f32 %v551, %v950
        %v955 = vmul.f32 %v555, %v950
        %v956 = vmul.f32 %v559, %v950
        %v957 = vmul.f32 %v563, %v950
        %v958 = vmul.f32 %v945, %v950
        %v959 = vadd.f32 %v935, %v951
        %v960 = vadd.f32 %v936, %v952
        %v961 = vadd.f32 %v937, %v953
        %v962 = vadd.f32 %v938, %v954
        %v963 = vadd.f32 %v939, %v955
        %v964 = vadd.f32 %v940, %v956
        %v965 = vadd.f32 %v941, %v957
        %v966 = vadd.f32 %v942, %v958
        %967 = vset.pattern.permute.xlu0 2
        %968 = vperm.xlu0 %967, 0.0
        %v969 = vpop.permute.xlu0 %968
        %v971 = vlaneseq
        %v972 = vshrl.u32 %v971, 7
        %v973 = vsub.s32 2, %v972
        %v974 = vrot.slane %v486, %v973
        %v975 = vmul.f32 %v591, %v974
        %v976 = vmul.f32 %v595, %v974
        %v977 = vmul.f32 %v599, %v974
        %v978 = vmul.f32 %v603, %v974
        %v979 = vmul.f32 %v607, %v974
        %v980 = vmul.f32 %v611, %v974
        %v981 = vmul.f32 %v615, %v974
        %v982 = vmul.f32 %v969, %v974
        %v983 = vadd.f32 %v959, %v975
        %v984 = vadd.f32 %v960, %v976
        %v985 = vadd.f32 %v961, %v977
        %v986 = vadd.f32 %v962, %v978
        %v987 = vadd.f32 %v963, %v979
        %v988 = vadd.f32 %v964, %v980
        %v989 = vadd.f32 %v965, %v981
        %v990 = vadd.f32 %v966, %v982
        %v991 = vadd.f32 %v919, %v983
        %v992 = vadd.f32 %v920, %v984
        %v993 = vadd.f32 %v921, %v985
        %v994 = vadd.f32 %v922, %v986
        %v995 = vadd.f32 %v923, %v987
        %v996 = vadd.f32 %v924, %v988
        %v997 = vadd.f32 %v925, %v989
        %v998 = vadd.f32 %v926, %v990
        %v999 = vadd.f32 %v991, %v641
        %v1000 = vadd.f32 %v992, %v641
        %v1001 = vadd.f32 %v993, %v641
        %v1002 = vadd.f32 %v994, %v641
        %v1003 = vadd.f32 %v995, %v641
        %v1004 = vadd.f32 %v996, %v641
        %v1005 = vadd.f32 %v997, %v641
        %v1006 = vadd.f32 %v998, %v641
        %v1007 = vlaneseq
        %v1008 = vshrl.u32 %v1007, 7
        %v1009 = vsub.s32 0, %v1008
        %v1010 = vrot.slane %v479, %v1009
        %v1011 = vmul.f32 %v491, %v1010
        %v1012 = vmul.f32 %v495, %v1010
        %v1013 = vmul.f32 %v499, %v1010
        %v1014 = vmul.f32 %v503, %v1010
        %v1015 = vmul.f32 %v507, %v1010
        %v1016 = vmul.f32 %v511, %v1010
        %v1017 = vmul.f32 %v515, %v1010
        %v1018 = vmul.f32 %v519, %v1010
        %v1019 = vlaneseq
        %v1020 = vshrl.u32 %v1019, 7
        %v1021 = vsub.s32 1, %v1020
        %v1022 = vrot.slane %v479, %v1021
        %v1023 = vmul.f32 %v535, %v1022
        %v1024 = vmul.f32 %v539, %v1022
        %v1025 = vmul.f32 %v543, %v1022
        %v1026 = vmul.f32 %v547, %v1022
        %v1027 = vmul.f32 %v551, %v1022
        %v1028 = vmul.f32 %v555, %v1022
        %v1029 = vmul.f32 %v559, %v1022
        %v1030 = vmul.f32 %v563, %v1022
        %v1031 = vadd.f32 %v1011, %v1023
        %v1032 = vadd.f32 %v1012, %v1024
        %v1033 = vadd.f32 %v1013, %v1025
        %v1034 = vadd.f32 %v1014, %v1026
        %v1035 = vadd.f32 %v1015, %v1027
        %v1036 = vadd.f32 %v1016, %v1028
        %v1037 = vadd.f32 %v1017, %v1029
        %v1038 = vadd.f32 %v1018, %v1030
        %v1039 = vlaneseq
        %v1040 = vshrl.u32 %v1039, 7
        %v1041 = vsub.s32 2, %v1040
        %v1042 = vrot.slane %v479, %v1041
        %v1043 = vmul.f32 %v587, %v1042
        %v1044 = vmul.f32 %v591, %v1042
        %v1045 = vmul.f32 %v595, %v1042
        %v1046 = vmul.f32 %v599, %v1042
        %v1047 = vmul.f32 %v603, %v1042
        %v1048 = vmul.f32 %v607, %v1042
        %v1049 = vmul.f32 %v611, %v1042
        %v1050 = vmul.f32 %v615, %v1042
        %v1051 = vadd.f32 %v1031, %v1043
        %v1052 = vadd.f32 %v1032, %v1044
        %v1053 = vadd.f32 %v1033, %v1045
        %v1054 = vadd.f32 %v1034, %v1046
        %v1055 = vadd.f32 %v1035, %v1047
        %v1056 = vadd.f32 %v1036, %v1048
        %v1057 = vadd.f32 %v1037, %v1049
        %v1058 = vadd.f32 %v1038, %v1050
        %v1059 = vlaneseq
        %v1060 = vshrl.u32 %v1059, 7
        %v1061 = vsub.s32 0, %v1060
        %v1062 = vrot.slane %v481, %v1061
        %v1063 = vmul.f32 %v706, %v1062
        %v1064 = vmul.f32 %v711, %v1062
        %v1065 = vmul.f32 %v716, %v1062
        %v1066 = vmul.f32 %v721, %v1062
        %v1067 = vmul.f32 %v726, %v1062
        %v1068 = vmul.f32 %v731, %v1062
        %v1069 = vmul.f32 %v736, %v1062
        %v1070 = vmul.f32 %v741, %v1062
        %v1071 = vlaneseq
        %v1072 = vshrl.u32 %v1071, 7
        %v1073 = vsub.s32 1, %v1072
        %v1074 = vrot.slane %v481, %v1073
        %v1075 = vmul.f32 %v757, %v1074
        %v1076 = vmul.f32 %v761, %v1074
        %v1077 = vmul.f32 %v765, %v1074
        %v1078 = vmul.f32 %v769, %v1074
        %v1079 = vmul.f32 %v773, %v1074
        %v1080 = vmul.f32 %v777, %v1074
        %v1081 = vmul.f32 %v781, %v1074
        %v1082 = vmul.f32 %v785, %v1074
        %v1083 = vadd.f32 %v1063, %v1075
        %v1084 = vadd.f32 %v1064, %v1076
        %v1085 = vadd.f32 %v1065, %v1077
        %v1086 = vadd.f32 %v1066, %v1078
        %v1087 = vadd.f32 %v1067, %v1079
        %v1088 = vadd.f32 %v1068, %v1080
        %v1089 = vadd.f32 %v1069, %v1081
        %v1090 = vadd.f32 %v1070, %v1082
        %v1091 = vlaneseq
        %v1092 = vshrl.u32 %v1091, 7
        %v1093 = vsub.s32 2, %v1092
        %v1094 = vrot.slane %v481, %v1093
        %v1095 = vmul.f32 %v809, %v1094
        %v1096 = vmul.f32 %v813, %v1094
        %v1097 = vmul.f32 %v817, %v1094
        %v1098 = vmul.f32 %v821, %v1094
        %v1099 = vmul.f32 %v825, %v1094
        %v1100 = vmul.f32 %v829, %v1094
        %v1101 = vmul.f32 %v833, %v1094
        %v1102 = vmul.f32 %v837, %v1094
        %v1103 = vadd.f32 %v1083, %v1095
        %v1104 = vadd.f32 %v1084, %v1096
        %v1105 = vadd.f32 %v1085, %v1097
        %v1106 = vadd.f32 %v1086, %v1098
        %v1107 = vadd.f32 %v1087, %v1099
        %v1108 = vadd.f32 %v1088, %v1100
        %v1109 = vadd.f32 %v1089, %v1101
        %v1110 = vadd.f32 %v1090, %v1102
        %v1111 = vadd.f32 %v1051, %v1103
        %v1112 = vadd.f32 %v1052, %v1104
        %v1113 = vadd.f32 %v1053, %v1105
        %v1114 = vadd.f32 %v1054, %v1106
        %v1115 = vadd.f32 %v1055, %v1107
        %v1116 = vadd.f32 %v1056, %v1108
        %v1117 = vadd.f32 %v1057, %v1109
        %v1118 = vadd.f32 %v1058, %v1110
        %v1119 = vlaneseq
        %v1120 = vshrl.u32 %v1119, 7
        %v1121 = vsub.s32 0, %v1120
        %v1122 = vrot.slane %v485, %v1121
        %v1123 = vmul.f32 %v495, %v1122
        %v1124 = vmul.f32 %v499, %v1122
        %v1125 = vmul.f32 %v503, %v1122
        %v1126 = vmul.f32 %v507, %v1122
        %v1127 = vmul.f32 %v511, %v1122
        %v1128 = vmul.f32 %v515, %v1122
        %v1129 = vmul.f32 %v519, %v1122
        %v1130 = vmul.f32 %v929, %v1122
        %v1131 = vlaneseq
        %v1132 = vshrl.u32 %v1131, 7
        %v1133 = vsub.s32 1, %v1132
        %v1134 = vrot.slane %v485, %v1133
        %v1135 = vmul.f32 %v539, %v1134
        %v1136 = vmul.f32 %v543, %v1134
        %v1137 = vmul.f32 %v547, %v1134
        %v1138 = vmul.f32 %v551, %v1134
        %v1139 = vmul.f32 %v555, %v1134
        %v1140 = vmul.f32 %v559, %v1134
        %v1141 = vmul.f32 %v563, %v1134
        %v1142 = vmul.f32 %v945, %v1134
        %v1143 = vadd.f32 %v1123, %v1135
        %v1144 = vadd.f32 %v1124, %v1136
        %v1145 = vadd.f32 %v1125, %v1137
        %v1146 = vadd.f32 %v1126, %v1138
        %v1147 = vadd.f32 %v1127, %v1139
        %v1148 = vadd.f32 %v1128, %v1140
        %v1149 = vadd.f32 %v1129, %v1141
        %v1150 = vadd.f32 %v1130, %v1142
        %v1151 = vlaneseq
        %v1152 = vshrl.u32 %v1151, 7
        %v1153 = vsub.s32 2, %v1152
        %v1154 = vrot.slane %v485, %v1153
        %v1155 = vmul.f32 %v591, %v1154
        %v1156 = vmul.f32 %v595, %v1154
        %v1157 = vmul.f32 %v599, %v1154
        %v1158 = vmul.f32 %v603, %v1154
        %v1159 = vmul.f32 %v607, %v1154
        %v1160 = vmul.f32 %v611, %v1154
        %v1161 = vmul.f32 %v615, %v1154
        %v1162 = vmul.f32 %v969, %v1154
        %v1163 = vadd.f32 %v1143, %v1155
        %v1164 = vadd.f32 %v1144, %v1156
        %v1165 = vadd.f32 %v1145, %v1157
        %v1166 = vadd.f32 %v1146, %v1158
        %v1167 = vadd.f32 %v1147, %v1159
        %v1168 = vadd.f32 %v1148, %v1160
        %v1169 = vadd.f32 %v1149, %v1161
        %v1170 = vadd.f32 %v1150, %v1162
        %v1171 = vadd.f32 %v1111, %v1163
        %v1172 = vadd.f32 %v1112, %v1164
        %v1173 = vadd.f32 %v1113, %v1165
        %v1174 = vadd.f32 %v1114, %v1166
        %v1175 = vadd.f32 %v1115, %v1167
        %v1176 = vadd.f32 %v1116, %v1168
        %v1177 = vadd.f32 %v1117, %v1169
        %v1178 = vadd.f32 %v1118, %v1170
        %1180 = vset.pattern.permute.xlu0 0
        %1181 = vperm.xlu0 %1180, %v471
        %v1182 = vpop.permute.xlu0 %1181
        %1185 = vset.pattern.permute.xlu0 0
        %1186 = vperm.xlu0 %1185, %v472
        %v1187 = vpop.permute.xlu0 %1186
        %1190 = vset.pattern.permute.xlu0 0
        %1191 = vperm.xlu0 %1190, %v473
        %v1192 = vpop.permute.xlu0 %1191
        %1195 = vset.pattern.permute.xlu0 0
        %1196 = vperm.xlu0 %1195, %v474
        %v1197 = vpop.permute.xlu0 %1196
        %1200 = vset.pattern.permute.xlu0 0
        %1201 = vperm.xlu0 %1200, %v475
        %v1202 = vpop.permute.xlu0 %1201
        %1205 = vset.pattern.permute.xlu0 0
        %1206 = vperm.xlu0 %1205, %v476
        %v1207 = vpop.permute.xlu0 %1206
        %1210 = vset.pattern.permute.xlu0 0
        %1211 = vperm.xlu0 %1210, %v477
        %v1212 = vpop.permute.xlu0 %1211
        %1215 = vset.pattern.permute.xlu0 0
        %1216 = vperm.xlu0 %1215, %v478
        %v1217 = vpop.permute.xlu0 %1216
        %v1219 = vlaneseq
        %v1220 = vshrl.u32 %v1219, 7
        %v1221 = vsub.s32 0, %v1220
        %v1222 = vrot.slane %v487, %v1221
        %v1223 = vmul.f32 %v1182, %v1222
        %v1224 = vmul.f32 %v1187, %v1222
        %v1225 = vmul.f32 %v1192, %v1222
        %v1226 = vmul.f32 %v1197, %v1222
        %v1227 = vmul.f32 %v1202, %v1222
        %v1228 = vmul.f32 %v1207, %v1222
        %v1229 = vmul.f32 %v1212, %v1222
        %v1230 = vmul.f32 %v1217, %v1222
        %1231 = vset.pattern.permute.xlu0 1
        %1232 = vperm.xlu0 %1231, %v471
        %v1233 = vpop.permute.xlu0 %1232
        %1235 = vset.pattern.permute.xlu0 1
        %1236 = vperm.xlu0 %1235, %v472
        %v1237 = vpop.permute.xlu0 %1236
        %1239 = vset.pattern.permute.xlu0 1
        %1240 = vperm.xlu0 %1239, %v473
        %v1241 = vpop.permute.xlu0 %1240
        %1243 = vset.pattern.permute.xlu0 1
        %1244 = vperm.xlu0 %1243, %v474
        %v1245 = vpop.permute.xlu0 %1244
        %1247 = vset.pattern.permute.xlu0 1
        %1248 = vperm.xlu0 %1247, %v475
        %v1249 = vpop.permute.xlu0 %1248
        %1251 = vset.pattern.permute.xlu0 1
        %1252 = vperm.xlu0 %1251, %v476
        %v1253 = vpop.permute.xlu0 %1252
        %1255 = vset.pattern.permute.xlu0 1
        %1256 = vperm.xlu0 %1255, %v477
        %v1257 = vpop.permute.xlu0 %1256
        %1259 = vset.pattern.permute.xlu0 1
        %1260 = vperm.xlu0 %1259, %v478
        %v1261 = vpop.permute.xlu0 %1260
        %v1263 = vlaneseq
        %v1264 = vshrl.u32 %v1263, 7
        %v1265 = vsub.s32 1, %v1264
        %v1266 = vrot.slane %v487, %v1265
        %v1267 = vmul.f32 %v1233, %v1266
        %v1268 = vmul.f32 %v1237, %v1266
        %v1269 = vmul.f32 %v1241, %v1266
        %v1270 = vmul.f32 %v1245, %v1266
        %v1271 = vmul.f32 %v1249, %v1266
        %v1272 = vmul.f32 %v1253, %v1266
        %v1273 = vmul.f32 %v1257, %v1266
        %v1274 = vmul.f32 %v1261, %v1266
        %v1275 = vadd.f32 %v1223, %v1267
        %v1276 = vadd.f32 %v1224, %v1268
        %v1277 = vadd.f32 %v1225, %v1269
        %v1278 = vadd.f32 %v1226, %v1270
        %v1279 = vadd.f32 %v1227, %v1271
        %v1280 = vadd.f32 %v1228, %v1272
        %v1281 = vadd.f32 %v1229, %v1273
        %v1282 = vadd.f32 %v1230, %v1274
        %1283 = vset.pattern.permute.xlu0 2
        %1284 = vperm.xlu0 %1283, %v471
        %v1285 = vpop.permute.xlu0 %1284
        %1287 = vset.pattern.permute.xlu0 2
        %1288 = vperm.xlu0 %1287, %v472
        %v1289 = vpop.permute.xlu0 %1288
        %1291 = vset.pattern.permute.xlu0 2
        %1292 = vperm.xlu0 %1291, %v473
        %v1293 = vpop.permute.xlu0 %1292
        %1295 = vset.pattern.permute.xlu0 2
        %1296 = vperm.xlu0 %1295, %v474
        %v1297 = vpop.permute.xlu0 %1296
        %1299 = vset.pattern.permute.xlu0 2
        %1300 = vperm.xlu0 %1299, %v475
        %v1301 = vpop.permute.xlu0 %1300
        %1303 = vset.pattern.permute.xlu0 2
        %1304 = vperm.xlu0 %1303, %v476
        %v1305 = vpop.permute.xlu0 %1304
        %1307 = vset.pattern.permute.xlu0 2
        %1308 = vperm.xlu0 %1307, %v477
        %v1309 = vpop.permute.xlu0 %1308
        %1311 = vset.pattern.permute.xlu0 2
        %1312 = vperm.xlu0 %1311, %v478
        %v1313 = vpop.permute.xlu0 %1312
        %v1315 = vlaneseq
        %v1316 = vshrl.u32 %v1315, 7
        %v1317 = vsub.s32 2, %v1316
        %v1318 = vrot.slane %v487, %v1317
        %v1319 = vmul.f32 %v1285, %v1318
        %v1320 = vmul.f32 %v1289, %v1318
        %v1321 = vmul.f32 %v1293, %v1318
        %v1322 = vmul.f32 %v1297, %v1318
        %v1323 = vmul.f32 %v1301, %v1318
        %v1324 = vmul.f32 %v1305, %v1318
        %v1325 = vmul.f32 %v1309, %v1318
        %v1326 = vmul.f32 %v1313, %v1318
        %v1327 = vadd.f32 %v1275, %v1319
        %v1328 = vadd.f32 %v1276, %v1320
        %v1329 = vadd.f32 %v1277, %v1321
        %v1330 = vadd.f32 %v1278, %v1322
        %v1331 = vadd.f32 %v1279, %v1323
        %v1332 = vadd.f32 %v1280, %v1324
        %v1333 = vadd.f32 %v1281, %v1325
        %v1334 = vadd.f32 %v1282, %v1326
        %v1335 = vadd.f32 %v1171, %v1327
        %v1336 = vadd.f32 %v1172, %v1328
        %v1337 = vadd.f32 %v1173, %v1329
        %v1338 = vadd.f32 %v1174, %v1330
        %v1339 = vadd.f32 %v1175, %v1331
        %v1340 = vadd.f32 %v1176, %v1332
        %v1341 = vadd.f32 %v1177, %v1333
        %v1342 = vadd.f32 %v1178, %v1334
        %v1343 = vadd.f32 %v1335, %v641
        %v1344 = vadd.f32 %v1336, %v641
        %v1345 = vadd.f32 %v1337, %v641
        %v1346 = vadd.f32 %v1338, %v641
        %v1347 = vadd.f32 %v1339, %v641
        %v1348 = vadd.f32 %v1340, %v641
        %v1349 = vadd.f32 %v1341, %v641
        %v1350 = vadd.f32 %v1342, %v641
        %vm1351 = vcmask 523264
        %v1352 = vsel %vm1351, %v643, 0.0
        %v1353 = vsel %vm1351, %v644, 0.0
        %v1354 = vadd.f32 %v1352, %v1353
        %v1355 = vsel %vm1351, %v645, 0.0
        %v1356 = vadd.f32 %v1354, %v1355
        %v1357 = vsel %vm1351, %v646, 0.0
        %v1358 = vadd.f32 %v1356, %v1357
        %v1359 = vsel %vm1351, %v647, 0.0
        %v1360 = vadd.f32 %v1358, %v1359
        %v1361 = vsel %vm1351, %v648, 0.0
        %v1362 = vadd.f32 %v1360, %v1361
        %v1363 = vsel %vm1351, %v649, 0.0
        %v1364 = vadd.f32 %v1362, %v1363
        %v1365 = vsel %vm1351, %v650, 0.0
        %v1366 = vadd.f32 %v1364, %v1365
        %v1367 = vsel %vm1351, %v867, 0.0
        %v1368 = vadd.f32 %v1366, %v1367
        %v1369 = vsel %vm1351, %v868, 0.0
        %v1370 = vadd.f32 %v1368, %v1369
        %v1371 = vsel %vm1351, %v869, 0.0
        %v1372 = vadd.f32 %v1370, %v1371
        %v1373 = vsel %vm1351, %v870, 0.0
        %v1374 = vadd.f32 %v1372, %v1373
        %v1375 = vsel %vm1351, %v871, 0.0
        %v1376 = vadd.f32 %v1374, %v1375
        %v1377 = vsel %vm1351, %v872, 0.0
        %v1378 = vadd.f32 %v1376, %v1377
        %v1379 = vsel %vm1351, %v873, 0.0
        %v1380 = vadd.f32 %v1378, %v1379
        %v1381 = vsel %vm1351, %v874, 0.0
        %v1382 = vadd.f32 %v1380, %v1381
        %v1383 = vsel %vm1351, %v999, 0.0
        %v1384 = vadd.f32 %v1382, %v1383
        %v1385 = vsel %vm1351, %v1000, 0.0
        %v1386 = vadd.f32 %v1384, %v1385
        %v1387 = vsel %vm1351, %v1001, 0.0
        %v1388 = vadd.f32 %v1386, %v1387
        %v1389 = vsel %vm1351, %v1002, 0.0
        %v1390 = vadd.f32 %v1388, %v1389
        %v1391 = vsel %vm1351, %v1003, 0.0
        %v1392 = vadd.f32 %v1390, %v1391
        %v1393 = vsel %vm1351, %v1004, 0.0
        %v1394 = vadd.f32 %v1392, %v1393
        %v1395 = vsel %vm1351, %v1005, 0.0
        %v1396 = vadd.f32 %v1394, %v1395
        %v1397 = vsel %vm1351, %v1006, 0.0
        %v1398 = vadd.f32 %v1396, %v1397
        %v1399 = vsel %vm1351, %v1343, 0.0
        %v1400 = vadd.f32 %v1398, %v1399
        %v1401 = vsel %vm1351, %v1344, 0.0
        %v1402 = vadd.f32 %v1400, %v1401
        %v1403 = vsel %vm1351, %v1345, 0.0
        %v1404 = vadd.f32 %v1402, %v1403
        %v1405 = vsel %vm1351, %v1346, 0.0
        %v1406 = vadd.f32 %v1404, %v1405
        %v1407 = vsel %vm1351, %v1347, 0.0
        %v1408 = vadd.f32 %v1406, %v1407
        %v1409 = vsel %vm1351, %v1348, 0.0
        %v1410 = vadd.f32 %v1408, %v1409
        %v1411 = vsel %vm1351, %v1349, 0.0
        %v1412 = vadd.f32 %v1410, %v1411
        %v1413 = vsel %vm1351, %v1350, 0.0
        %v1414 = vadd.f32 %v1412, %v1413
        %v1415 = vrot.slane %v1414, 4
        %v1416 = vadd.f32 %v1414, %v1415
        %v1417 = vrot.slane %v1416, 2
        %v1418 = vadd.f32 %v1416, %v1417
        %v1419 = vrot.slane %v1418, 1
        %v1420 = vadd.f32 %v1418, %v1419
        %v1421 = vmul.f32 %v1420, 0.00390625
        %v1422 = vsub.f32 %v643, %v1421
        %v1423 = vsub.f32 %v644, %v1421
        %v1424 = vsub.f32 %v645, %v1421
        %v1425 = vsub.f32 %v646, %v1421
        %v1426 = vsub.f32 %v647, %v1421
        %v1427 = vsub.f32 %v648, %v1421
        %v1428 = vsub.f32 %v649, %v1421
        %v1429 = vsub.f32 %v650, %v1421
        %v1430 = vsub.f32 %v867, %v1421
        %v1431 = vsub.f32 %v868, %v1421
        %v1432 = vsub.f32 %v869, %v1421
        %v1433 = vsub.f32 %v870, %v1421
        %v1434 = vsub.f32 %v871, %v1421
        %v1435 = vsub.f32 %v872, %v1421
        %v1436 = vsub.f32 %v873, %v1421
        %v1437 = vsub.f32 %v874, %v1421
        %v1438 = vsub.f32 %v999, %v1421
        %v1439 = vsub.f32 %v1000, %v1421
        %v1440 = vsub.f32 %v1001, %v1421
        %v1441 = vsub.f32 %v1002, %v1421
        %v1442 = vsub.f32 %v1003, %v1421
        %v1443 = vsub.f32 %v1004, %v1421
        %v1444 = vsub.f32 %v1005, %v1421
        %v1445 = vsub.f32 %v1006, %v1421
        %v1446 = vsub.f32 %v1343, %v1421
        %v1447 = vsub.f32 %v1344, %v1421
        %v1448 = vsub.f32 %v1345, %v1421
        %v1449 = vsub.f32 %v1346, %v1421
        %v1450 = vsub.f32 %v1347, %v1421
        %v1451 = vsub.f32 %v1348, %v1421
        %v1452 = vsub.f32 %v1349, %v1421
        %v1453 = vsub.f32 %v1350, %v1421
        %v1454 = vmul.f32 %v1422, %v1422
        %v1455 = vmul.f32 %v1423, %v1423
        %v1456 = vmul.f32 %v1424, %v1424
        %v1457 = vmul.f32 %v1425, %v1425
        %v1458 = vmul.f32 %v1426, %v1426
        %v1459 = vmul.f32 %v1427, %v1427
        %v1460 = vmul.f32 %v1428, %v1428
        %v1461 = vmul.f32 %v1429, %v1429
        %v1462 = vmul.f32 %v1430, %v1430
        %v1463 = vmul.f32 %v1431, %v1431
        %v1464 = vmul.f32 %v1432, %v1432
        %v1465 = vmul.f32 %v1433, %v1433
        %v1466 = vmul.f32 %v1434, %v1434
        %v1467 = vmul.f32 %v1435, %v1435
        %v1468 = vmul.f32 %v1436, %v1436
        %v1469 = vmul.f32 %v1437, %v1437
        %v1470 = vmul.f32 %v1438, %v1438
        %v1471 = vmul.f32 %v1439, %v1439
        %v1472 = vmul.f32 %v1440, %v1440
        %v1473 = vmul.f32 %v1441, %v1441
        %v1474 = vmul.f32 %v1442, %v1442
        %v1475 = vmul.f32 %v1443, %v1443
        %v1476 = vmul.f32 %v1444, %v1444
        %v1477 = vmul.f32 %v1445, %v1445
        %v1478 = vmul.f32 %v1446, %v1446
        %v1479 = vmul.f32 %v1447, %v1447
        %v1480 = vmul.f32 %v1448, %v1448
        %v1481 = vmul.f32 %v1449, %v1449
        %v1482 = vmul.f32 %v1450, %v1450
        %v1483 = vmul.f32 %v1451, %v1451
        %v1484 = vmul.f32 %v1452, %v1452
        %v1485 = vmul.f32 %v1453, %v1453
        %v1486 = vsel %vm1351, %v1454, 0.0
        %v1487 = vsel %vm1351, %v1455, 0.0
        %v1488 = vadd.f32 %v1486, %v1487
        %v1489 = vsel %vm1351, %v1456, 0.0
        %v1490 = vadd.f32 %v1488, %v1489
        %v1491 = vsel %vm1351, %v1457, 0.0
        %v1492 = vadd.f32 %v1490, %v1491
        %v1493 = vsel %vm1351, %v1458, 0.0
        %v1494 = vadd.f32 %v1492, %v1493
        %v1495 = vsel %vm1351, %v1459, 0.0
        %v1496 = vadd.f32 %v1494, %v1495
        %v1497 = vsel %vm1351, %v1460, 0.0
        %v1498 = vadd.f32 %v1496, %v1497
        %v1499 = vsel %vm1351, %v1461, 0.0
        %v1500 = vadd.f32 %v1498, %v1499
        %v1501 = vsel %vm1351, %v1462, 0.0
        %v1502 = vadd.f32 %v1500, %v1501
        %v1503 = vsel %vm1351, %v1463, 0.0
        %v1504 = vadd.f32 %v1502, %v1503
        %v1505 = vsel %vm1351, %v1464, 0.0
        %v1506 = vadd.f32 %v1504, %v1505
        %v1507 = vsel %vm1351, %v1465, 0.0
        %v1508 = vadd.f32 %v1506, %v1507
        %v1509 = vsel %vm1351, %v1466, 0.0
        %v1510 = vadd.f32 %v1508, %v1509
        %v1511 = vsel %vm1351, %v1467, 0.0
        %v1512 = vadd.f32 %v1510, %v1511
        %v1513 = vsel %vm1351, %v1468, 0.0
        %v1514 = vadd.f32 %v1512, %v1513
        %v1515 = vsel %vm1351, %v1469, 0.0
        %v1516 = vadd.f32 %v1514, %v1515
        %v1517 = vsel %vm1351, %v1470, 0.0
        %v1518 = vadd.f32 %v1516, %v1517
        %v1519 = vsel %vm1351, %v1471, 0.0
        %v1520 = vadd.f32 %v1518, %v1519
        %v1521 = vsel %vm1351, %v1472, 0.0
        %v1522 = vadd.f32 %v1520, %v1521
        %v1523 = vsel %vm1351, %v1473, 0.0
        %v1524 = vadd.f32 %v1522, %v1523
        %v1525 = vsel %vm1351, %v1474, 0.0
        %v1526 = vadd.f32 %v1524, %v1525
        %v1527 = vsel %vm1351, %v1475, 0.0
        %v1528 = vadd.f32 %v1526, %v1527
        %v1529 = vsel %vm1351, %v1476, 0.0
        %v1530 = vadd.f32 %v1528, %v1529
        %v1531 = vsel %vm1351, %v1477, 0.0
        %v1532 = vadd.f32 %v1530, %v1531
        %v1533 = vsel %vm1351, %v1478, 0.0
        %v1534 = vadd.f32 %v1532, %v1533
        %v1535 = vsel %vm1351, %v1479, 0.0
        %v1536 = vadd.f32 %v1534, %v1535
        %v1537 = vsel %vm1351, %v1480, 0.0
        %v1538 = vadd.f32 %v1536, %v1537
        %v1539 = vsel %vm1351, %v1481, 0.0
        %v1540 = vadd.f32 %v1538, %v1539
        %v1541 = vsel %vm1351, %v1482, 0.0
        %v1542 = vadd.f32 %v1540, %v1541
        %v1543 = vsel %vm1351, %v1483, 0.0
        %v1544 = vadd.f32 %v1542, %v1543
        %v1545 = vsel %vm1351, %v1484, 0.0
        %v1546 = vadd.f32 %v1544, %v1545
        %v1547 = vsel %vm1351, %v1485, 0.0
        %v1548 = vadd.f32 %v1546, %v1547
        %v1549 = vrot.slane %v1548, 4
        %v1550 = vadd.f32 %v1548, %v1549
        %v1551 = vrot.slane %v1550, 2
        %v1552 = vadd.f32 %v1550, %v1551
        %v1553 = vrot.slane %v1552, 1
        %v1554 = vadd.f32 %v1552, %v1553
        %v1555 = vmul.f32 %v1554, 0.00390625
        %v1556 = vadd.f32 %v1555, 1e-05
        %v1557 = vrsqrt.pop %v1556
        %v1558 = vmul.f32 %v1422, %v1557
        %v1559 = vmul.f32 %v1423, %v1557
        %v1560 = vmul.f32 %v1424, %v1557
        %v1561 = vmul.f32 %v1425, %v1557
        %v1562 = vmul.f32 %v1426, %v1557
        %v1563 = vmul.f32 %v1427, %v1557
        %v1564 = vmul.f32 %v1428, %v1557
        %v1565 = vmul.f32 %v1429, %v1557
        %v1566 = vmul.f32 %v1430, %v1557
        %v1567 = vmul.f32 %v1431, %v1557
        %v1568 = vmul.f32 %v1432, %v1557
        %v1569 = vmul.f32 %v1433, %v1557
        %v1570 = vmul.f32 %v1434, %v1557
        %v1571 = vmul.f32 %v1435, %v1557
        %v1572 = vmul.f32 %v1436, %v1557
        %v1573 = vmul.f32 %v1437, %v1557
        %v1574 = vmul.f32 %v1438, %v1557
        %v1575 = vmul.f32 %v1439, %v1557
        %v1576 = vmul.f32 %v1440, %v1557
        %v1577 = vmul.f32 %v1441, %v1557
        %v1578 = vmul.f32 %v1442, %v1557
        %v1579 = vmul.f32 %v1443, %v1557
        %v1580 = vmul.f32 %v1444, %v1557
        %v1581 = vmul.f32 %v1445, %v1557
        %v1582 = vmul.f32 %v1446, %v1557
        %v1583 = vmul.f32 %v1447, %v1557
        %v1584 = vmul.f32 %v1448, %v1557
        %v1585 = vmul.f32 %v1449, %v1557
        %v1586 = vmul.f32 %v1450, %v1557
        %v1587 = vmul.f32 %v1451, %v1557
        %v1588 = vmul.f32 %v1452, %v1557
        %v1589 = vmul.f32 %v1453, %v1557
        %v1590 = vmax.f32 %v1558, 0.0
        %v1591 = vmax.f32 %v1559, 0.0
        %v1592 = vmax.f32 %v1560, 0.0
        %v1593 = vmax.f32 %v1561, 0.0
        %v1594 = vmax.f32 %v1562, 0.0
        %v1595 = vmax.f32 %v1563, 0.0
        %v1596 = vmax.f32 %v1564, 0.0
        %v1597 = vmax.f32 %v1565, 0.0
        %v1598 = vmax.f32 %v1566, 0.0
        %v1599 = vmax.f32 %v1567, 0.0
        %v1600 = vmax.f32 %v1568, 0.0
        %v1601 = vmax.f32 %v1569, 0.0
        %v1602 = vmax.f32 %v1570, 0.0
        %v1603 = vmax.f32 %v1571, 0.0
        %v1604 = vmax.f32 %v1572, 0.0
        %v1605 = vmax.f32 %v1573, 0.0
        %v1606 = vmax.f32 %v1574, 0.0
        %v1607 = vmax.f32 %v1575, 0.0
        %v1608 = vmax.f32 %v1576, 0.0
        %v1609 = vmax.f32 %v1577, 0.0
        %v1610 = vmax.f32 %v1578, 0.0
        %v1611 = vmax.f32 %v1579, 0.0
        %v1612 = vmax.f32 %v1580, 0.0
        %v1613 = vmax.f32 %v1581, 0.0
        %v1614 = vmax.f32 %v1582, 0.0
        %v1615 = vmax.f32 %v1583, 0.0
        %v1616 = vmax.f32 %v1584, 0.0
        %v1617 = vmax.f32 %v1585, 0.0
        %v1618 = vmax.f32 %v1586, 0.0
        %v1619 = vmax.f32 %v1587, 0.0
        %v1620 = vmax.f32 %v1588, 0.0
        %v1621 = vmax.f32 %v1589, 0.0
        %v1622 = vpack.c.bf16 %v1591, %v1590
        %v1623 = vpack.c.bf16 %v1593, %v1592
        %v1624 = vpack.c.bf16 %v1595, %v1594
        %v1625 = vpack.c.bf16 %v1597, %v1596
        %v1626 = vpack.c.bf16 %v1599, %v1598
        %v1627 = vpack.c.bf16 %v1601, %v1600
        %v1628 = vpack.c.bf16 %v1603, %v1602
        %v1629 = vpack.c.bf16 %v1605, %v1604
        %v1630 = vpack.c.bf16 %v1607, %v1606
        %v1631 = vpack.c.bf16 %v1609, %v1608
        %v1632 = vpack.c.bf16 %v1611, %v1610
        %v1633 = vpack.c.bf16 %v1613, %v1612
        %v1634 = vpack.c.bf16 %v1615, %v1614
        %v1635 = vpack.c.bf16 %v1617, %v1616
        %v1636 = vpack.c.bf16 %v1619, %v1618
        %v1637 = vpack.c.bf16 %v1621, %v1620
        %v1638 = vld [vmem:[#allocation6] sm:$0xf]
        %v1639 = vld [vmem:[#allocation6 + $0x4] sm:$0xf]
        %v1640 = vld [vmem:[#allocation6 + $0x8] sm:$0xf]
        %v1641 = vld [vmem:[#allocation6 + $0xc] sm:$0xf]
        %v1642 = vld [vmem:[#allocation6 + $0x10] sm:$0xf]
        %v1643 = vld [vmem:[#allocation6 + $0x14] sm:$0xf]
        %v1644 = vld [vmem:[#allocation6 + $0x18] sm:$0xf]
        %v1645 = vld [vmem:[#allocation6 + $0x1c] sm:$0xf]
        %v1646 = vld [vmem:[#allocation7] sm:$0x1]
        %v1648 = vlaneseq
        %v1649 = vshrl.u32 %v1648, 7
        %v1650 = vsub.s32 0, %v1649
        %v1651 = vrot.slane %v1646, %v1650
        %v1661 = vunpack.c.l.b16 %v1638
        %v1662 = vunpack.c.l.b16 %v1639
        %v1663 = vunpack.c.l.b16 %v1640
        %v1664 = vunpack.c.l.b16 %v1641
        %v1665 = vunpack.c.l.b16 %v1642
        %v1666 = vunpack.c.l.b16 %v1643
        %v1667 = vunpack.c.l.b16 %v1644
        %v1668 = vunpack.c.l.b16 %v1645
        %v1669 = vpack.c.b16 %v1662, %v1661
        %v1670 = vpack.c.b16 %v1664, %v1663
        %v1671 = vpack.c.b16 %v1666, %v1665
        %v1672 = vpack.c.b16 %v1668, %v1667
        %v1678 = vsel %vm1351, %v1622, 0
        %v1681 = vsel %vm1351, %v1623, 0
        %v1684 = vsel %vm1351, %v1624, 0
        %v1687 = vsel %vm1351, %v1625, 0
        %v1690 = vsel %vm1351, %v1626, 0
        %v1693 = vsel %vm1351, %v1627, 0
        %v1696 = vsel %vm1351, %v1628, 0
        %v1699 = vsel %vm1351, %v1629, 0
        %v1702 = vsel %vm1351, %v1630, 0
        %v1705 = vsel %vm1351, %v1631, 0
        %v1708 = vsel %vm1351, %v1632, 0
        %v1711 = vsel %vm1351, %v1633, 0
        %v1714 = vsel %vm1351, %v1634, 0
        %v1717 = vsel %vm1351, %v1635, 0
        %v1720 = vsel %vm1351, %v1636, 0
        %v1723 = vsel %vm1351, %v1637, 0
        %1725 = vmatprep.subr.bf16.mxu0 0
        %1726 = vmatpush1.bf16.msra.mxu0 0
        %1727 = vmatprep.subr.bf16.mxu0 0
        %1728 = vmatpush1.bf16.msra.mxu0 0
        %1729 = vmatprep.subr.bf16.mxu0 0
        %1730 = vmatpush1.bf16.msra.mxu0 0
        %1731 = vmatprep.subr.bf16.mxu0 0
        %1732 = vmatpush1.bf16.msra.mxu0 0
        %1733 = vmatprep.subr.bf16.mxu0 0
        %1734 = vmatpush1.bf16.msra.mxu0 %v1672
        %1735 = vmatprep.subr.bf16.mxu0 0
        %1736 = vmatpush1.bf16.msra.mxu0 %v1671
        %1737 = vmatprep.subr.bf16.mxu0 0
        %1738 = vmatpush1.bf16.msra.mxu0 %v1670
        %1739 = vmatprep.subr.bf16.mxu0 0
        %1740 = vmatpush1.bf16.msra.mxu0 %v1669
        %1741 = vmatprep.subr.bf16.mxu0 0
        %1742 = vmatpush2.bf16.msra.mxu0 0
        %1743 = vmatprep.subr.bf16.mxu0 0
        %1744 = vmatpush2.bf16.msra.mxu0 0
        %1745 = vmatprep.subr.bf16.mxu0 0
        %1746 = vmatpush2.bf16.msra.mxu0 0
        %1747 = vmatprep.subr.bf16.mxu0 0
        %1748 = vmatpush2.bf16.msra.mxu0 0
        %1749 = vmatprep.subr.bf16.mxu0 0
        %1750 = vmatpush2.bf16.msra.mxu0 0
        %1751 = vmatprep.subr.bf16.mxu0 0
        %1752 = vmatpush2.bf16.msra.mxu0 0
        %1753 = vmatprep.subr.bf16.mxu0 0
        %1754 = vmatpush2.bf16.msra.mxu0 0
        %1755 = vmatprep.subr.bf16.mxu0 0
        %1756 = vmatpush2.bf16.msra.mxu0 0
        %1757 = vmatprep.mubr.bf16.mxu0 0
        %1758 = vmatmul.mubr.bf16.gmra.mxu0 %v1678
        %v1759 = vpop.f32.mrf.mxu0
        %v1760 = vadd.f32 %v1651, %v1759
        %v1761 = vpop.f32.mrf.mxu0
        %v1762 = vpop.f32.mrf.mxu0
        %v1763 = vadd.f32 %v1651, %v1762
        %v1764 = vpop.f32.mrf.mxu0
        %1765 = vmatprep.mubr.bf16.mxu0 0
        %1766 = vmatmul.mubr.bf16.gmra.mxu0 %v1681
        %v1767 = vpop.f32.mrf.mxu0
        %v1768 = vadd.f32 %v1651, %v1767
        %v1769 = vpop.f32.mrf.mxu0
        %v1770 = vpop.f32.mrf.mxu0
        %v1771 = vadd.f32 %v1651, %v1770
        %v1772 = vpop.f32.mrf.mxu0
        %1773 = vmatprep.mubr.bf16.mxu0 0
        %1774 = vmatmul.mubr.bf16.gmra.mxu0 %v1684
        %v1775 = vpop.f32.mrf.mxu0
        %v1776 = vadd.f32 %v1651, %v1775
        %v1777 = vpop.f32.mrf.mxu0
        %v1778 = vpop.f32.mrf.mxu0
        %v1779 = vadd.f32 %v1651, %v1778
        %v1780 = vpop.f32.mrf.mxu0
        %1781 = vmatprep.mubr.bf16.mxu0 0
        %1782 = vmatmul.mubr.bf16.gmra.mxu0 %v1687
        %v1783 = vpop.f32.mrf.mxu0
        %v1784 = vadd.f32 %v1651, %v1783
        %v1785 = vpop.f32.mrf.mxu0
        %v1786 = vpop.f32.mrf.mxu0
        %v1787 = vadd.f32 %v1651, %v1786
        %v1788 = vpop.f32.mrf.mxu0
        %1789 = vmatprep.mubr.bf16.mxu0 0
        %1790 = vmatmul.mubr.bf16.gmra.mxu0 %v1690
        %v1791 = vpop.f32.mrf.mxu0
        %v1792 = vadd.f32 %v1651, %v1791
        %v1793 = vpop.f32.mrf.mxu0
        %v1794 = vpop.f32.mrf.mxu0
        %v1795 = vadd.f32 %v1651, %v1794
        %v1796 = vpop.f32.mrf.mxu0
        %1797 = vmatprep.mubr.bf16.mxu0 0
        %1798 = vmatmul.mubr.bf16.gmra.mxu0 %v1693
        %v1799 = vpop.f32.mrf.mxu0
        %v1800 = vadd.f32 %v1651, %v1799
        %v1801 = vpop.f32.mrf.mxu0
        %v1802 = vpop.f32.mrf.mxu0
        %v1803 = vadd.f32 %v1651, %v1802
        %v1804 = vpop.f32.mrf.mxu0
        %1805 = vmatprep.mubr.bf16.mxu0 0
        %1806 = vmatmul.mubr.bf16.gmra.mxu0 %v1696
        %v1807 = vpop.f32.mrf.mxu0
        %v1808 = vadd.f32 %v1651, %v1807
        %v1809 = vpop.f32.mrf.mxu0
        %v1810 = vpop.f32.mrf.mxu0
        %v1811 = vadd.f32 %v1651, %v1810
        %v1812 = vpop.f32.mrf.mxu0
        %1813 = vmatprep.mubr.bf16.mxu0 0
        %1814 = vmatmul.mubr.bf16.gmra.mxu0 %v1699
        %v1815 = vpop.f32.mrf.mxu0
        %v1816 = vadd.f32 %v1651, %v1815
        %v1817 = vpop.f32.mrf.mxu0
        %v1818 = vpop.f32.mrf.mxu0
        %v1819 = vadd.f32 %v1651, %v1818
        %v1820 = vpop.f32.mrf.mxu0
        %1821 = vmatprep.mubr.bf16.mxu0 0
        %1822 = vmatmul.mubr.bf16.gmra.mxu0 %v1702
        %v1823 = vpop.f32.mrf.mxu0
        %v1824 = vadd.f32 %v1651, %v1823
        %v1825 = vpop.f32.mrf.mxu0
        %v1826 = vpop.f32.mrf.mxu0
        %v1827 = vadd.f32 %v1651, %v1826
        %v1828 = vpop.f32.mrf.mxu0
        %1829 = vmatprep.mubr.bf16.mxu0 0
        %1830 = vmatmul.mubr.bf16.gmra.mxu0 %v1705
        %v1831 = vpop.f32.mrf.mxu0
        %v1832 = vadd.f32 %v1651, %v1831
        %v1833 = vpop.f32.mrf.mxu0
        %v1834 = vpop.f32.mrf.mxu0
        %v1835 = vadd.f32 %v1651, %v1834
        %v1836 = vpop.f32.mrf.mxu0
        %1837 = vmatprep.mubr.bf16.mxu0 0
        %1838 = vmatmul.mubr.bf16.gmra.mxu0 %v1708
        %v1839 = vpop.f32.mrf.mxu0
        %v1840 = vadd.f32 %v1651, %v1839
        %v1841 = vpop.f32.mrf.mxu0
        %v1842 = vpop.f32.mrf.mxu0
        %v1843 = vadd.f32 %v1651, %v1842
        %v1844 = vpop.f32.mrf.mxu0
        %1845 = vmatprep.mubr.bf16.mxu0 0
        %1846 = vmatmul.mubr.bf16.gmra.mxu0 %v1711
        %v1847 = vpop.f32.mrf.mxu0
        %v1848 = vadd.f32 %v1651, %v1847
        %v1849 = vpop.f32.mrf.mxu0
        %v1850 = vpop.f32.mrf.mxu0
        %v1851 = vadd.f32 %v1651, %v1850
        %v1852 = vpop.f32.mrf.mxu0
        %1853 = vmatprep.mubr.bf16.mxu0 0
        %1854 = vmatmul.mubr.bf16.gmra.mxu0 %v1714
        %v1855 = vpop.f32.mrf.mxu0
        %v1856 = vadd.f32 %v1651, %v1855
        %v1857 = vpop.f32.mrf.mxu0
        %v1858 = vpop.f32.mrf.mxu0
        %v1859 = vadd.f32 %v1651, %v1858
        %v1860 = vpop.f32.mrf.mxu0
        %1861 = vmatprep.mubr.bf16.mxu0 0
        %1862 = vmatmul.mubr.bf16.gmra.mxu0 %v1717
        %v1863 = vpop.f32.mrf.mxu0
        %v1864 = vadd.f32 %v1651, %v1863
        %v1865 = vpop.f32.mrf.mxu0
        %v1866 = vpop.f32.mrf.mxu0
        %v1867 = vadd.f32 %v1651, %v1866
        %v1868 = vpop.f32.mrf.mxu0
        %1869 = vmatprep.mubr.bf16.mxu0 0
        %1870 = vmatmul.mubr.bf16.gmra.mxu0 %v1720
        %v1871 = vpop.f32.mrf.mxu0
        %v1872 = vadd.f32 %v1651, %v1871
        %v1873 = vpop.f32.mrf.mxu0
        %v1874 = vpop.f32.mrf.mxu0
        %v1875 = vadd.f32 %v1651, %v1874
        %v1876 = vpop.f32.mrf.mxu0
        %1877 = vmatprep.mubr.bf16.mxu0 0
        %1878 = vmatmul.mubr.bf16.gmra.mxu0 %v1723
        %v1879 = vpop.f32.mrf.mxu0
        %v1880 = vadd.f32 %v1651, %v1879
        %v1881 = vpop.f32.mrf.mxu0
        %v1882 = vpop.f32.mrf.mxu0
        %v1883 = vadd.f32 %v1651, %v1882
        %v1884 = vpop.f32.mrf.mxu0
        %1885 = vdwg.mxu0
        %v1886 = vadd.f32 %v1760, %v1763
        %v1887 = vadd.f32 %v1886, %v1768
        %v1888 = vadd.f32 %v1887, %v1771
        %v1889 = vadd.f32 %v1888, %v1776
        %v1890 = vadd.f32 %v1889, %v1779
        %v1891 = vadd.f32 %v1890, %v1784
        %v1892 = vadd.f32 %v1891, %v1787
        %v1893 = vadd.f32 %v1892, %v1792
        %v1894 = vadd.f32 %v1893, %v1795
        %v1895 = vadd.f32 %v1894, %v1800
        %v1896 = vadd.f32 %v1895, %v1803
        %v1897 = vadd.f32 %v1896, %v1808
        %v1898 = vadd.f32 %v1897, %v1811
        %v1899 = vadd.f32 %v1898, %v1816
        %v1900 = vadd.f32 %v1899, %v1819
        %v1901 = vadd.f32 %v1900, %v1824
        %v1902 = vadd.f32 %v1901, %v1827
        %v1903 = vadd.f32 %v1902, %v1832
        %v1904 = vadd.f32 %v1903, %v1835
        %v1905 = vadd.f32 %v1904, %v1840
        %v1906 = vadd.f32 %v1905, %v1843
        %v1907 = vadd.f32 %v1906, %v1848
        %v1908 = vadd.f32 %v1907, %v1851
        %v1909 = vadd.f32 %v1908, %v1856
        %v1910 = vadd.f32 %v1909, %v1859
        %v1911 = vadd.f32 %v1910, %v1864
        %v1912 = vadd.f32 %v1911, %v1867
        %v1913 = vadd.f32 %v1912, %v1872
        %v1914 = vadd.f32 %v1913, %v1875
        %v1915 = vadd.f32 %v1914, %v1880
        %v1916 = vadd.f32 %v1915, %v1883
        %v1917 = vrot.slane %v1916, 4
        %v1918 = vadd.f32 %v1916, %v1917
        %v1919 = vrot.slane %v1918, 2
        %v1920 = vadd.f32 %v1918, %v1919
        %v1921 = vrot.slane %v1920, 1
        %v1922 = vadd.f32 %v1920, %v1921
        %v1923 = vmul.f32 %v1922, 0.00390625
        %v1924 = vsub.f32 %v1760, %v1923
        %v1925 = vsub.f32 %v1763, %v1923
        %v1926 = vsub.f32 %v1768, %v1923
        %v1927 = vsub.f32 %v1771, %v1923
        %v1928 = vsub.f32 %v1776, %v1923
        %v1929 = vsub.f32 %v1779, %v1923
        %v1930 = vsub.f32 %v1784, %v1923
        %v1931 = vsub.f32 %v1787, %v1923
        %v1932 = vsub.f32 %v1792, %v1923
        %v1933 = vsub.f32 %v1795, %v1923
        %v1934 = vsub.f32 %v1800, %v1923
        %v1935 = vsub.f32 %v1803, %v1923
        %v1936 = vsub.f32 %v1808, %v1923
        %v1937 = vsub.f32 %v1811, %v1923
        %v1938 = vsub.f32 %v1816, %v1923
        %v1939 = vsub.f32 %v1819, %v1923
        %v1940 = vsub.f32 %v1824, %v1923
        %v1941 = vsub.f32 %v1827, %v1923
        %v1942 = vsub.f32 %v1832, %v1923
        %v1943 = vsub.f32 %v1835, %v1923
        %v1944 = vsub.f32 %v1840, %v1923
        %v1945 = vsub.f32 %v1843, %v1923
        %v1946 = vsub.f32 %v1848, %v1923
        %v1947 = vsub.f32 %v1851, %v1923
        %v1948 = vsub.f32 %v1856, %v1923
        %v1949 = vsub.f32 %v1859, %v1923
        %v1950 = vsub.f32 %v1864, %v1923
        %v1951 = vsub.f32 %v1867, %v1923
        %v1952 = vsub.f32 %v1872, %v1923
        %v1953 = vsub.f32 %v1875, %v1923
        %v1954 = vsub.f32 %v1880, %v1923
        %v1955 = vsub.f32 %v1883, %v1923
        %v1956 = vmul.f32 %v1924, %v1924
        %v1957 = vmul.f32 %v1925, %v1925
        %v1958 = vmul.f32 %v1926, %v1926
        %v1959 = vmul.f32 %v1927, %v1927
        %v1960 = vmul.f32 %v1928, %v1928
        %v1961 = vmul.f32 %v1929, %v1929
        %v1962 = vmul.f32 %v1930, %v1930
        %v1963 = vmul.f32 %v1931, %v1931
        %v1964 = vmul.f32 %v1932, %v1932
        %v1965 = vmul.f32 %v1933, %v1933
        %v1966 = vmul.f32 %v1934, %v1934
        %v1967 = vmul.f32 %v1935, %v1935
        %v1968 = vmul.f32 %v1936, %v1936
        %v1969 = vmul.f32 %v1937, %v1937
        %v1970 = vmul.f32 %v1938, %v1938
        %v1971 = vmul.f32 %v1939, %v1939
        %v1972 = vmul.f32 %v1940, %v1940
        %v1973 = vmul.f32 %v1941, %v1941
        %v1974 = vmul.f32 %v1942, %v1942
        %v1975 = vmul.f32 %v1943, %v1943
        %v1976 = vmul.f32 %v1944, %v1944
        %v1977 = vmul.f32 %v1945, %v1945
        %v1978 = vmul.f32 %v1946, %v1946
        %v1979 = vmul.f32 %v1947, %v1947
        %v1980 = vmul.f32 %v1948, %v1948
        %v1981 = vmul.f32 %v1949, %v1949
        %v1982 = vmul.f32 %v1950, %v1950
        %v1983 = vmul.f32 %v1951, %v1951
        %v1984 = vmul.f32 %v1952, %v1952
        %v1985 = vmul.f32 %v1953, %v1953
        %v1986 = vmul.f32 %v1954, %v1954
        %v1987 = vmul.f32 %v1955, %v1955
        %v1988 = vadd.f32 %v1956, %v1957
        %v1989 = vadd.f32 %v1988, %v1958
        %v1990 = vadd.f32 %v1989, %v1959
        %v1991 = vadd.f32 %v1990, %v1960
        %v1992 = vadd.f32 %v1991, %v1961
        %v1993 = vadd.f32 %v1992, %v1962
        %v1994 = vadd.f32 %v1993, %v1963
        %v1995 = vadd.f32 %v1994, %v1964
        %v1996 = vadd.f32 %v1995, %v1965
        %v1997 = vadd.f32 %v1996, %v1966
        %v1998 = vadd.f32 %v1997, %v1967
        %v1999 = vadd.f32 %v1998, %v1968
        %v2000 = vadd.f32 %v1999, %v1969
        %v2001 = vadd.f32 %v2000, %v1970
        %v2002 = vadd.f32 %v2001, %v1971
        %v2003 = vadd.f32 %v2002, %v1972
        %v2004 = vadd.f32 %v2003, %v1973
        %v2005 = vadd.f32 %v2004, %v1974
        %v2006 = vadd.f32 %v2005, %v1975
        %v2007 = vadd.f32 %v2006, %v1976
        %v2008 = vadd.f32 %v2007, %v1977
        %v2009 = vadd.f32 %v2008, %v1978
        %v2010 = vadd.f32 %v2009, %v1979
        %v2011 = vadd.f32 %v2010, %v1980
        %v2012 = vadd.f32 %v2011, %v1981
        %v2013 = vadd.f32 %v2012, %v1982
        %v2014 = vadd.f32 %v2013, %v1983
        %v2015 = vadd.f32 %v2014, %v1984
        %v2016 = vadd.f32 %v2015, %v1985
        %v2017 = vadd.f32 %v2016, %v1986
        %v2018 = vadd.f32 %v2017, %v1987
        %v2019 = vrot.slane %v2018, 4
        %v2020 = vadd.f32 %v2018, %v2019
        %v2021 = vrot.slane %v2020, 2
        %v2022 = vadd.f32 %v2020, %v2021
        %v2023 = vrot.slane %v2022, 1
        %v2024 = vadd.f32 %v2022, %v2023
        %v2025 = vmul.f32 %v2024, 0.00390625
        %v2026 = vadd.f32 %v2025, 1e-05
        %v2027 = vrsqrt.pop %v2026
        %v2028 = vmul.f32 %v1924, %v2027
        %v2029 = vmul.f32 %v1925, %v2027
        %v2030 = vmul.f32 %v1926, %v2027
        %v2031 = vmul.f32 %v1927, %v2027
        %v2032 = vmul.f32 %v1928, %v2027
        %v2033 = vmul.f32 %v1929, %v2027
        %v2034 = vmul.f32 %v1930, %v2027
        %v2035 = vmul.f32 %v1931, %v2027
        %v2036 = vmul.f32 %v1932, %v2027
        %v2037 = vmul.f32 %v1933, %v2027
        %v2038 = vmul.f32 %v1934, %v2027
        %v2039 = vmul.f32 %v1935, %v2027
        %v2040 = vmul.f32 %v1936, %v2027
        %v2041 = vmul.f32 %v1937, %v2027
        %v2042 = vmul.f32 %v1938, %v2027
        %v2043 = vmul.f32 %v1939, %v2027
        %v2044 = vmul.f32 %v1940, %v2027
        %v2045 = vmul.f32 %v1941, %v2027
        %v2046 = vmul.f32 %v1942, %v2027
        %v2047 = vmul.f32 %v1943, %v2027
        %v2048 = vmul.f32 %v1944, %v2027
        %v2049 = vmul.f32 %v1945, %v2027
        %v2050 = vmul.f32 %v1946, %v2027
        %v2051 = vmul.f32 %v1947, %v2027
        %v2052 = vmul.f32 %v1948, %v2027
        %v2053 = vmul.f32 %v1949, %v2027
        %v2054 = vmul.f32 %v1950, %v2027
        %v2055 = vmul.f32 %v1951, %v2027
        %v2056 = vmul.f32 %v1952, %v2027
        %v2057 = vmul.f32 %v1953, %v2027
        %v2058 = vmul.f32 %v1954, %v2027
        %v2059 = vmul.f32 %v1955, %v2027
        %v2060 = vmax.f32 %v2028, 0.0
        %v2061 = vmax.f32 %v2029, 0.0
        %v2062 = vmax.f32 %v2030, 0.0
        %v2063 = vmax.f32 %v2031, 0.0
        %v2064 = vmax.f32 %v2032, 0.0
        %v2065 = vmax.f32 %v2033, 0.0
        %v2066 = vmax.f32 %v2034, 0.0
        %v2067 = vmax.f32 %v2035, 0.0
        %v2068 = vmax.f32 %v2036, 0.0
        %v2069 = vmax.f32 %v2037, 0.0
        %v2070 = vmax.f32 %v2038, 0.0
        %v2071 = vmax.f32 %v2039, 0.0
        %v2072 = vmax.f32 %v2040, 0.0
        %v2073 = vmax.f32 %v2041, 0.0
        %v2074 = vmax.f32 %v2042, 0.0
        %v2075 = vmax.f32 %v2043, 0.0
        %v2076 = vmax.f32 %v2044, 0.0
        %v2077 = vmax.f32 %v2045, 0.0
        %v2078 = vmax.f32 %v2046, 0.0
        %v2079 = vmax.f32 %v2047, 0.0
        %v2080 = vmax.f32 %v2048, 0.0
        %v2081 = vmax.f32 %v2049, 0.0
        %v2082 = vmax.f32 %v2050, 0.0
        %v2083 = vmax.f32 %v2051, 0.0
        %v2084 = vmax.f32 %v2052, 0.0
        %v2085 = vmax.f32 %v2053, 0.0
        %v2086 = vmax.f32 %v2054, 0.0
        %v2087 = vmax.f32 %v2055, 0.0
        %v2088 = vmax.f32 %v2056, 0.0
        %v2089 = vmax.f32 %v2057, 0.0
        %v2090 = vmax.f32 %v2058, 0.0
        %v2091 = vmax.f32 %v2059, 0.0
        %v2092 = vpack.c.bf16 %v2061, %v2060
        %v2093 = vpack.c.bf16 %v2063, %v2062
        %v2094 = vpack.c.bf16 %v2065, %v2064
        %v2095 = vpack.c.bf16 %v2067, %v2066
        %v2096 = vpack.c.bf16 %v2069, %v2068
        %v2097 = vpack.c.bf16 %v2071, %v2070
        %v2098 = vpack.c.bf16 %v2073, %v2072
        %v2099 = vpack.c.bf16 %v2075, %v2074
        %v2100 = vpack.c.bf16 %v2077, %v2076
        %v2101 = vpack.c.bf16 %v2079, %v2078
        %v2102 = vpack.c.bf16 %v2081, %v2080
        %v2103 = vpack.c.bf16 %v2083, %v2082
        %v2104 = vpack.c.bf16 %v2085, %v2084
        %v2105 = vpack.c.bf16 %v2087, %v2086
        %v2106 = vpack.c.bf16 %v2089, %v2088
        %v2107 = vpack.c.bf16 %v2091, %v2090
        %v2124 = vunpack.c.l.b16 %v2092
        %v2125 = vunpack.c.h.b16 %v2092
        %v2126 = vunpack.c.l.b16 %v2093
        %v2127 = vunpack.c.h.b16 %v2093
        %v2128 = vunpack.c.l.b16 %v2094
        %v2129 = vunpack.c.h.b16 %v2094
        %v2130 = vunpack.c.l.b16 %v2095
        %v2131 = vunpack.c.h.b16 %v2095
        %v2132 = vunpack.c.l.b16 %v2096
        %v2133 = vunpack.c.h.b16 %v2096
        %v2134 = vunpack.c.l.b16 %v2097
        %v2135 = vunpack.c.h.b16 %v2097
        %v2136 = vunpack.c.l.b16 %v2098
        %v2137 = vunpack.c.h.b16 %v2098
        %v2138 = vunpack.c.l.b16 %v2099
        %v2139 = vunpack.c.h.b16 %v2099
        %v2140 = vunpack.c.l.b16 %v2100
        %v2141 = vunpack.c.h.b16 %v2100
        %v2142 = vunpack.c.l.b16 %v2101
        %v2143 = vunpack.c.h.b16 %v2101
        %v2144 = vunpack.c.l.b16 %v2102
        %v2145 = vunpack.c.h.b16 %v2102
        %v2146 = vunpack.c.l.b16 %v2103
        %v2147 = vunpack.c.h.b16 %v2103
        %v2148 = vunpack.c.l.b16 %v2104
        %v2149 = vunpack.c.h.b16 %v2104
        %v2150 = vunpack.c.l.b16 %v2105
        %v2151 = vunpack.c.h.b16 %v2105
        %v2152 = vunpack.c.l.b16 %v2106
        %v2153 = vunpack.c.h.b16 %v2106
        %v2154 = vunpack.c.l.b16 %v2107
        %v2155 = vunpack.c.h.b16 %v2107
        %v2156 = vpack.c.b16 %v2124, %v2124
        %v2157 = vpack.c.b16 %v2125, %v2125
        %v2158 = vpack.c.b16 %v2126, %v2126
        %v2159 = vpack.c.b16 %v2127, %v2127
        %v2160 = vpack.c.b16 %v2128, %v2128
        %v2161 = vpack.c.b16 %v2129, %v2129
        %v2162 = vpack.c.b16 %v2130, %v2130
        %v2163 = vpack.c.b16 %v2131, %v2131
        %v2164 = vpack.c.b16 %v2132, %v2132
        %v2165 = vpack.c.b16 %v2133, %v2133
        %v2166 = vpack.c.b16 %v2134, %v2134
        %v2167 = vpack.c.b16 %v2135, %v2135
        %v2168 = vpack.c.b16 %v2136, %v2136
        %v2169 = vpack.c.b16 %v2137, %v2137
        %v2170 = vpack.c.b16 %v2138, %v2138
        %v2171 = vpack.c.b16 %v2139, %v2139
        %v2172 = vpack.c.b16 %v2140, %v2140
        %v2173 = vpack.c.b16 %v2141, %v2141
        %v2174 = vpack.c.b16 %v2142, %v2142
        %v2175 = vpack.c.b16 %v2143, %v2143
        %v2176 = vpack.c.b16 %v2144, %v2144
        %v2177 = vpack.c.b16 %v2145, %v2145
        %v2178 = vpack.c.b16 %v2146, %v2146
        %v2179 = vpack.c.b16 %v2147, %v2147
        %v2180 = vpack.c.b16 %v2148, %v2148
        %v2181 = vpack.c.b16 %v2149, %v2149
        %v2182 = vpack.c.b16 %v2150, %v2150
        %v2183 = vpack.c.b16 %v2151, %v2151
        %v2184 = vpack.c.b16 %v2152, %v2152
        %v2185 = vpack.c.b16 %v2153, %v2153
        %v2186 = vpack.c.b16 %v2154, %v2154
        %v2187 = vpack.c.b16 %v2155, %v2155
        %2220 = vst [vmem:[%s279] sm:$0xf] %v2156
        %2221 = vst [vmem:[%s279 + $0x4] sm:$0xf] %v2157
        %2222 = vst [vmem:[%s279 + $0x8] sm:$0xf] %v2158
        %2223 = vst [vmem:[%s279 + $0xc] sm:$0xf] %v2159
        %2224 = vst [vmem:[%s279 + $0x10] sm:$0xf] %v2160
        %2225 = vst [vmem:[%s279 + $0x14] sm:$0xf] %v2161
        %2226 = vst [vmem:[%s279 + $0x18] sm:$0xf] %v2162
        %2227 = vst [vmem:[%s279 + $0x1c] sm:$0xf] %v2163
        %2228 = vst [vmem:[%s279 + $0x20] sm:$0xf] %v2164
        %2229 = vst [vmem:[%s279 + $0x24] sm:$0xf] %v2165
        %2230 = vst [vmem:[%s279 + $0x28] sm:$0xf] %v2166
        %2231 = vst [vmem:[%s279 + $0x2c] sm:$0xf] %v2167
        %2232 = vst [vmem:[%s279 + $0x30] sm:$0xf] %v2168
        %2233 = vst [vmem:[%s279 + $0x34] sm:$0xf] %v2169
        %2234 = vst [vmem:[%s279 + $0x38] sm:$0xf] %v2170
        %2235 = vst [vmem:[%s279 + $0x3c] sm:$0xf] %v2171
        %2236 = vst [vmem:[%s279 + $0x40] sm:$0xf] %v2172
        %2237 = vst [vmem:[%s279 + $0x44] sm:$0xf] %v2173
        %2238 = vst [vmem:[%s279 + $0x48] sm:$0xf] %v2174
        %2239 = vst [vmem:[%s279 + $0x4c] sm:$0xf] %v2175
        %2240 = vst [vmem:[%s279 + $0x50] sm:$0xf] %v2176
        %2241 = vst [vmem:[%s279 + $0x54] sm:$0xf] %v2177
        %2242 = vst [vmem:[%s279 + $0x58] sm:$0xf] %v2178
        %2243 = vst [vmem:[%s279 + $0x5c] sm:$0xf] %v2179
        %2244 = vst [vmem:[%s279 + $0x60] sm:$0xf] %v2180
        %2245 = vst [vmem:[%s279 + $0x64] sm:$0xf] %v2181
        %2246 = vst [vmem:[%s279 + $0x68] sm:$0xf] %v2182
        %2247 = vst [vmem:[%s279 + $0x6c] sm:$0xf] %v2183
        %2248 = vst [vmem:[%s279 + $0x70] sm:$0xf] %v2184
        %2249 = vst [vmem:[%s279 + $0x74] sm:$0xf] %v2185
        %2250 = vst [vmem:[%s279 + $0x78] sm:$0xf] %v2186
        %2251 = vst [vmem:[%s279 + $0x7c] sm:$0xf] %v2187
        %p2252 = scmp.lt.s32.totalorder %s19, 1
        %s2253 = scalar_select %p2252, %s19, 1
        %s2254 = smul.addr %s2253, 32
        %s2255 = smul.addr %s2254, 4
        %s2256 = scalar_lea.vmem %s5, %s2255
        // Predicated region
        $region57: #{vit_decoder_forward.4} parent=39 // pred_check
          %p2257 = pneg %p147
        $region58: #{vit_decoder_forward.4} parent=39 // pred_check_branch
          %2259 = sbr.rel (%p2257) target = $region60
        $region59: #{vit_decoder_forward.4} parent=39 // pred_region
          _
        $region60: #{vit_decoder_forward.4} parent=39 // pred_fallthru
          _
      $region40: #{vit_decoder_forward.4} parent=5 // pred_fallthru
        _
      %p2260 = scmp.le.s32.totalorder 2, %s14
      // Predicated region
      $region61: #{vit_decoder_forward.4} parent=5 // pred_check
        %p2261 = pneg %p2260
      $region62: #{vit_decoder_forward.4} parent=5 // pred_check_branch
        %2263 = sbr.rel (%p2261) target = $region64
      $region63: #{vit_decoder_forward.4} parent=5 // pred_region
        %s2264 = ssub.s32 %s14, 2
        // Predicated region
        $region65: #{vit_decoder_forward.4} parent=63 // pred_check
          %p2265 = pneg %p153
        $region66: #{vit_decoder_forward.4} parent=63 // pred_check_branch
          %2267 = sbr.rel (%p2265) target = $region68
        $region67: #{vit_decoder_forward.4} parent=63 // pred_region
          %p2268 = scmp.lt.s32.totalorder %s20, 1
          %s2269 = scalar_select %p2268, %s20, 1
          %s2270 = smul.addr %s2269, 32
          %s2271 = smul.addr %s2270, 4
          %s2272 = scalar_lea.vmem %s5, %s2271
        $region68: #{vit_decoder_forward.4} parent=63 // pred_fallthru
          _
      $region64: #{vit_decoder_forward.4} parent=5 // pred_fallthru
        _
    $region6: #{vit_decoder_forward.4} parent=1 // loop_footer
      %s18 = sadd.s32 1, %s14
    $region7: #{vit_decoder_forward.4} parent=1 // loop_footer_branch
      %13 = sbr.rel target = $region3
    $region8: #{vit_decoder_forward.4} parent=1 // loop_exit
      _
    %2273 = vsyncpa [#allocation3], 1
    %s2274 = scalar_lea.sflag [#allocation3], 1
    %2275 = vsyncpa %s2274, 1
    %2276 = vsyncpa [#allocation5], 1
    %2277 = vsyncpa [#allocation8], 1

// kernel: vit_decoder_forward.5
$region0: #{vit_decoder_forward.5}
  #allocation0 [shape = 'u32[]', space=smem, size = 0x4, offset = 0x4, fixed_abs, tag = 'smem constant byte address 0x4 - core index']
  #allocation1 [shape = 'u32[144,128]{1,0:T(1,128)}', space=vmem, size = 0x12000, scoped, tag = 'internal scratch']
  %s0 = inlined_call_operand.vmem [shape: bf16[2,256,128], index: 0, kind: input, shape index: {}]
  %s1 = inlined_call_operand.hbm [shape: bf16[2,128,512], index: 1, kind: input, shape index: {}]
  %s2 = inlined_call_operand.hbm [shape: bf16[2,128,256], index: 2, kind: input, shape index: {}]
  %s3 = inlined_call_operand.hbm [shape: bf16[2,128,256], index: 3, kind: input, shape index: {}]
  %s4 = inlined_call_operand.hbm [shape: bf16[2,128,128], index: 4, kind: input, shape index: {}]
  %s5 = inlined_call_operand.hbm [shape: f32[2,1,128], index: 5, kind: input, shape index: {}]
  %s6 = inlined_call_operand.vmem [shape: bf16[2,1024,256], index: 6, kind: output, shape index: {}]
  %s7 = sld [smem:[#allocation0]]
  $region114: #{vit_decoder_forward.5} parent=0
    _
  %s9 = ssub.s32 1, %s7
  %s10 = scalar_select 0, %s9, %s7
  $region1: #{vit_decoder_forward.5} parent=0
    #allocation2 [shape = 'u8[262144]{0}', space=vmem, size = 0x40000, scoped, tag = 'input window, operand 1']
    #allocation3 [shape = 's32[2]{0}', space=sflag, size = 0x8, scoped, tag = 'scoped memory for vit_decoder_forward.5']
    #allocation4 [shape = 'u8[131072]{0}', space=vmem, size = 0x20000, scoped, tag = 'input window, operand 2']
    #allocation5 [shape = 's32[2]{0}', space=sflag, size = 0x8, scoped, tag = 'scoped memory for vit_decoder_forward.5']
    #allocation6 [shape = 'u8[131072]{0}', space=vmem, size = 0x20000, scoped, tag = 'input window, operand 3']
    #allocation7 [shape = 'u8[65536]{0}', space=vmem, size = 0x10000, scoped, tag = 'input window, operand 4']
    #allocation8 [shape = 's32[2]{0}', space=sflag, size = 0x8, scoped, tag = 'scoped memory for vit_decoder_forward.5']
    #allocation9 [shape = 'u8[1024]{0}', space=vmem, size = 0x400, scoped, tag = 'input window, operand 5']
    #allocation10 [shape = 'u8[524288]{0}', space=vmem, size = 0x80000, scoped, tag = 'output window, operand 0']
    %11 = vsyncpa [#allocation3], 0
    %s12 = scalar_lea.sflag [#allocation3], 1
    %13 = vsyncpa %s12, 0
    %14 = vsyncpa [#allocation5], 0
    %s15 = scalar_lea.sflag [#allocation5], 1
    %16 = vsyncpa %s15, 0
    %17 = vsyncpa [#allocation8], 0
    %s18 = scalar_lea.sflag [#allocation8], 1
    %19 = vsyncpa %s18, 0
    loop: start=0, step=1, limit=6
    $region2: #{vit_decoder_forward.5} parent=1 // loop_pre_header
      _
    $region3: #{vit_decoder_forward.5} parent=1 // loop_header
      %s21 = sphi 0, %s25
      %p22 = scmp.ge.s32.totalorder %s21, 6
      %s28 = sphi 0, %s40
      %s29 = sphi 0, %s36
      %s30 = sphi 0, %s28
      %s31 = sphi 0, %s29
      %s32 = sphi 0, %s30
      %s33 = sphi 0, %s31
      %s43 = sphi 0, %s45
      %s46 = sphi 0, %s43
      %s47 = sphi 0, %s46
      %s63 = sphi 0, %s47
      %s69 = sphi 0, %s71
      %s72 = sphi 0, %s69
      %s73 = sphi 0, %s72
      %s89 = sphi 0, %s73
      %s95 = sphi 0, %s97
      %s98 = sphi 0, %s95
      %s99 = sphi 0, %s98
      %s115 = sphi 0, %s99
      %s121 = sphi 0, %s123
      %s124 = sphi 0, %s121
      %s125 = sphi 0, %s124
      %s141 = sphi 0, %s125
      %s147 = sphi 0, %s149
      %s150 = sphi 0, %s147
      %s151 = sphi 0, %s150
      %s167 = sphi 0, %s151
      %s173 = sphi 0, %s175
      %s176 = sphi 0, %s173
      %s177 = sphi 0, %s176
      %s193 = sphi 0, %s177
      %s201 = sphi 0, %s203
      %s204 = sphi 0, %s201
      %s205 = sphi 0, %s204
      %s221 = sphi 0, %s205
    $region4: #{vit_decoder_forward.5} parent=1 // loop_header_branch
      %24 = sbr.rel (%p22) target = $region8
    $region5: #{vit_decoder_forward.5} parent=1 // loop_body
      %s26 = ssub.s32 %s21, 1
      %s27 = ssub.s32 %s21, 2
      %s34 = sadd.s32 1, %s29
      %p35 = scmp.ge.s32.totalorder %s34, 2
      %s36 = scalar_select %p35, 0, %s34
      %s37 = sadd.s32 1, %s28
      %s38 = scalar_select %p35, %s37, %s28
      %p39 = scmp.ge.s32.totalorder %s38, 2
      %s40 = scalar_select %p39, 0, %s38
      %s41 = ssub.s32 %s28, %s40
      %p42 = scmp.eq.s32.totalorder %s41, 0
      %s44 = sadd.s32 %s43, 1
      %s45 = scalar_select %p42, %s43, %s44
      %p48 = pneg %p42
      %p49 = scmp.eq.s32.totalorder %s21, 3
      %p50 = por %p48, %p49
      %p51 = scmp.ne.s32.totalorder %s43, %s46
      %p52 = scmp.eq.s32.totalorder %s21, 0
      %p53 = por %p51, %p52
      %p54 = scmp.ne.s32.totalorder %s43, %s46
      %p55 = scmp.eq.s32.totalorder %s26, 3
      %p56 = por %p54, %p55
      %p57 = scmp.ne.s32.totalorder %s46, %s47
      %p58 = scmp.eq.s32.totalorder %s26, 0
      %p59 = por %p57, %p58
      %p60 = scmp.ne.s32.totalorder %s46, %s47
      %p61 = scmp.eq.s32.totalorder %s27, 3
      %p62 = por %p60, %p61
      %p64 = scmp.ne.s32.totalorder %s47, %s63
      %p65 = scmp.eq.s32.totalorder %s27, 0
      %p66 = por %p64, %p65
      %s67 = ssub.s32 %s29, %s36
      %p68 = scmp.eq.s32.totalorder %s67, 0
      %s70 = sadd.s32 %s69, 1
      %s71 = scalar_select %p68, %s69, %s70
      %p74 = pneg %p68
      %p75 = scmp.eq.s32.totalorder %s21, 3
      %p76 = por %p74, %p75
      %p77 = scmp.ne.s32.totalorder %s69, %s72
      %p78 = scmp.eq.s32.totalorder %s21, 0
      %p79 = por %p77, %p78
      %p80 = scmp.ne.s32.totalorder %s69, %s72
      %p81 = scmp.eq.s32.totalorder %s26, 3
      %p82 = por %p80, %p81
      %p83 = scmp.ne.s32.totalorder %s72, %s73
      %p84 = scmp.eq.s32.totalorder %s26, 0
      %p85 = por %p83, %p84
      %p86 = scmp.ne.s32.totalorder %s72, %s73
      %p87 = scmp.eq.s32.totalorder %s27, 3
      %p88 = por %p86, %p87
      %p90 = scmp.ne.s32.totalorder %s73, %s89
      %p91 = scmp.eq.s32.totalorder %s27, 0
      %p92 = por %p90, %p91
      %s93 = ssub.s32 %s29, %s36
      %p94 = scmp.eq.s32.totalorder %s93, 0
      %s96 = sadd.s32 %s95, 1
      %s97 = scalar_select %p94, %s95, %s96
      %p100 = pneg %p94
      %p101 = scmp.eq.s32.totalorder %s21, 3
      %p102 = por %p100, %p101
      %p103 = scmp.ne.s32.totalorder %s95, %s98
      %p104 = scmp.eq.s32.totalorder %s21, 0
      %p105 = por %p103, %p104
      %p106 = scmp.ne.s32.totalorder %s95, %s98
      %p107 = scmp.eq.s32.totalorder %s26, 3
      %p108 = por %p106, %p107
      %p109 = scmp.ne.s32.totalorder %s98, %s99
      %p110 = scmp.eq.s32.totalorder %s26, 0
      %p111 = por %p109, %p110
      %p112 = scmp.ne.s32.totalorder %s98, %s99
      %p113 = scmp.eq.s32.totalorder %s27, 3
      %p114 = por %p112, %p113
      %p116 = scmp.ne.s32.totalorder %s99, %s115
      %p117 = scmp.eq.s32.totalorder %s27, 0
      %p118 = por %p116, %p117
      %s119 = ssub.s32 %s29, %s36
      %p120 = scmp.eq.s32.totalorder %s119, 0
      %s122 = sadd.s32 %s121, 1
      %s123 = scalar_select %p120, %s121, %s122
      %p126 = pneg %p120
      %p127 = scmp.eq.s32.totalorder %s21, 3
      %p128 = por %p126, %p127
      %p129 = scmp.ne.s32.totalorder %s121, %s124
      %p130 = scmp.eq.s32.totalorder %s21, 0
      %p131 = por %p129, %p130
      %p132 = scmp.ne.s32.totalorder %s121, %s124
      %p133 = scmp.eq.s32.totalorder %s26, 3
      %p134 = por %p132, %p133
      %p135 = scmp.ne.s32.totalorder %s124, %s125
      %p136 = scmp.eq.s32.totalorder %s26, 0
      %p137 = por %p135, %p136
      %p138 = scmp.ne.s32.totalorder %s124, %s125
      %p139 = scmp.eq.s32.totalorder %s27, 3
      %p140 = por %p138, %p139
      %p142 = scmp.ne.s32.totalorder %s125, %s141
      %p143 = scmp.eq.s32.totalorder %s27, 0
      %p144 = por %p142, %p143
      %s145 = ssub.s32 %s29, %s36
      %p146 = scmp.eq.s32.totalorder %s145, 0
      %s148 = sadd.s32 %s147, 1
      %s149 = scalar_select %p146, %s147, %s148
      %p152 = pneg %p146
      %p153 = scmp.eq.s32.totalorder %s21, 3
      %p154 = por %p152, %p153
      %p155 = scmp.ne.s32.totalorder %s147, %s150
      %p156 = scmp.eq.s32.totalorder %s21, 0
      %p157 = por %p155, %p156
      %p158 = scmp.ne.s32.totalorder %s147, %s150
      %p159 = scmp.eq.s32.totalorder %s26, 3
      %p160 = por %p158, %p159
      %p161 = scmp.ne.s32.totalorder %s150, %s151
      %p162 = scmp.eq.s32.totalorder %s26, 0
      %p163 = por %p161, %p162
      %p164 = scmp.ne.s32.totalorder %s150, %s151
      %p165 = scmp.eq.s32.totalorder %s27, 3
      %p166 = por %p164, %p165
      %p168 = scmp.ne.s32.totalorder %s151, %s167
      %p169 = scmp.eq.s32.totalorder %s27, 0
      %p170 = por %p168, %p169
      %s171 = ssub.s32 %s29, %s36
      %p172 = scmp.eq.s32.totalorder %s171, 0
      %s174 = sadd.s32 %s173, 1
      %s175 = scalar_select %p172, %s173, %s174
      %p178 = pneg %p172
      %p179 = scmp.eq.s32.totalorder %s21, 3
      %p180 = por %p178, %p179
      %p181 = scmp.ne.s32.totalorder %s173, %s176
      %p182 = scmp.eq.s32.totalorder %s21, 0
      %p183 = por %p181, %p182
      %p184 = scmp.ne.s32.totalorder %s173, %s176
      %p185 = scmp.eq.s32.totalorder %s26, 3
      %p186 = por %p184, %p185
      %p187 = scmp.ne.s32.totalorder %s176, %s177
      %p188 = scmp.eq.s32.totalorder %s26, 0
      %p189 = por %p187, %p188
      %p190 = scmp.ne.s32.totalorder %s176, %s177
      %p191 = scmp.eq.s32.totalorder %s27, 3
      %p192 = por %p190, %p191
      %p194 = scmp.ne.s32.totalorder %s177, %s193
      %p195 = scmp.eq.s32.totalorder %s27, 0
      %p196 = por %p194, %p195
      %s197 = ssub.s32 %s28, %s40
      %s198 = ssub.s32 %s29, %s36
      %s199 = sor.u32 %s197, %s198
      %p200 = scmp.eq.s32.totalorder %s199, 0
      %s202 = sadd.s32 %s201, 1
      %s203 = scalar_select %p200, %s201, %s202
      %p206 = pneg %p200
      %p207 = scmp.eq.s32.totalorder %s21, 3
      %p208 = por %p206, %p207
      %p209 = scmp.ne.s32.totalorder %s201, %s204
      %p210 = scmp.eq.s32.totalorder %s21, 0
      %p211 = por %p209, %p210
      %p212 = scmp.ne.s32.totalorder %s201, %s204
      %p213 = scmp.eq.s32.totalorder %s26, 3
      %p214 = por %p212, %p213
      %p215 = scmp.ne.s32.totalorder %s204, %s205
      %p216 = scmp.eq.s32.totalorder %s26, 0
      %p217 = por %p215, %p216
      %p218 = scmp.ne.s32.totalorder %s204, %s205
      %p219 = scmp.eq.s32.totalorder %s27, 3
      %p220 = por %p218, %p219
      %p222 = scmp.ne.s32.totalorder %s205, %s221
      %p223 = scmp.eq.s32.totalorder %s27, 0
      %p224 = por %p222, %p223
      %p225 = scmp.le.s32.totalorder 1, %s21
      %p226 = scmp.lt.s32.totalorder %s21, 5
      %p227 = pnand %p225, %p226
      %p228 = pneg %p227
      // Predicated region
      $region9: #{vit_decoder_forward.5} parent=5 // pred_check
        _
      $region10: #{vit_decoder_forward.5} parent=5 // pred_check_branch
        %230 = sbr.rel (%p227) target = $region12
      $region11: #{vit_decoder_forward.5} parent=5 // pred_region
        %s231 = ssub.s32 %s21, 1
      $region12: #{vit_decoder_forward.5} parent=5 // pred_fallthru
        _
      %p232 = scmp.lt.s32.totalorder %s21, 4
      // Predicated region
      $region13: #{vit_decoder_forward.5} parent=5 // pred_check
        %p233 = pneg %p232
      $region14: #{vit_decoder_forward.5} parent=5 // pred_check_branch
        %235 = sbr.rel (%p233) target = $region16
      $region15: #{vit_decoder_forward.5} parent=5 // pred_region
        // Predicated region
        $region17: #{vit_decoder_forward.5} parent=15 // pred_check
          %p236 = pneg %p53
        $region18: #{vit_decoder_forward.5} parent=15 // pred_check_branch
          %238 = sbr.rel (%p236) target = $region20
        $region19: #{vit_decoder_forward.5} parent=15 // pred_region
          %p239 = scmp.lt.s32.totalorder %s28, 1
          %s240 = scalar_select %p239, %s28, 1
          %s241 = smul.addr %s240, 32
          %s242 = smul.addr %s241, 4
          %s243 = scalar_lea.vmem %s0, %s242
        $region20: #{vit_decoder_forward.5} parent=15 // pred_fallthru
          _
        // Predicated region
        $region21: #{vit_decoder_forward.5} parent=15 // pred_check
          %p244 = pneg %p79
        $region22: #{vit_decoder_forward.5} parent=15 // pred_check_branch
          %246 = sbr.rel (%p244) target = $region24
        $region23: #{vit_decoder_forward.5} parent=15 // pred_region
          %s247 = sand.u32 %s69, 1
          %s248 = scalar_lea.sflag [#allocation3], %s247
          %s249 = sand.u32 %s69, 1
          %s250 = smul.addr %s249, 256
          %s251 = scalar_lea.vmem [#allocation2], %s250
          %s253 = ssub.s32 4096, 4096
          %254 = vsyncadd %s248, %s253
          %s255 = smul.addr %s29, 64
          %s256 = smul.addr %s255, 64
          %s257 = scalar_lea.hbm %s1, %s256
          %s258 = sshll.u32 %s251, 4
          %s259 = int_to_ptr.vmem [resolvable:$true] %s258
          %264 = dma.hbm_to_vmem [thread:$0]  %s257, 4096, %s259, %s248, 256, 256, 16
        $region24: #{vit_decoder_forward.5} parent=15 // pred_fallthru
          _
        // Predicated region
        $region25: #{vit_decoder_forward.5} parent=15 // pred_check
          %p265 = pneg %p105
        $region26: #{vit_decoder_forward.5} parent=15 // pred_check_branch
          %267 = sbr.rel (%p265) target = $region28
        $region27: #{vit_decoder_forward.5} parent=15 // pred_region
          %s268 = sand.u32 %s21, 1
          %s269 = scalar_lea.sflag [#allocation5], %s268
          %s270 = sand.u32 %s95, 1
          %s271 = smul.addr %s270, 128
          %s272 = scalar_lea.vmem [#allocation4], %s271
          %s274 = ssub.s32 2048, 2048
          %275 = vsyncadd %s269, %s274
          %s276 = smul.addr %s29, 32
          %s277 = smul.addr %s276, 64
          %s278 = scalar_lea.hbm %s2, %s277
          %s279 = sshll.u32 %s272, 4
          %s280 = int_to_ptr.vmem [resolvable:$true] %s279
          %285 = dma.hbm_to_vmem [thread:$0]  %s278, 2048, %s280, %s269, 128, 128, 8
        $region28: #{vit_decoder_forward.5} parent=15 // pred_fallthru
          _
        // Predicated region
        $region29: #{vit_decoder_forward.5} parent=15 // pred_check
          %p286 = pneg %p131
        $region30: #{vit_decoder_forward.5} parent=15 // pred_check_branch
          %288 = sbr.rel (%p286) target = $region32
        $region31: #{vit_decoder_forward.5} parent=15 // pred_region
          %s289 = sand.u32 %s21, 1
          %s290 = scalar_lea.sflag [#allocation5], %s289
          %s291 = sand.u32 %s121, 1
          %s292 = smul.addr %s291, 128
          %s293 = scalar_lea.vmem [#allocation6], %s292
          %s295 = ssub.s32 2048, 2048
          %296 = vsyncadd %s290, %s295
          %s297 = smul.addr %s29, 32
          %s298 = smul.addr %s297, 64
          %s299 = scalar_lea.hbm %s3, %s298
          %s300 = sshll.u32 %s293, 4
          %s301 = int_to_ptr.vmem [resolvable:$true] %s300
          %306 = dma.hbm_to_vmem [thread:$0]  %s299, 2048, %s301, %s290, 128, 128, 8
        $region32: #{vit_decoder_forward.5} parent=15 // pred_fallthru
          _
        // Predicated region
        $region33: #{vit_decoder_forward.5} parent=15 // pred_check
          %p307 = pneg %p157
        $region34: #{vit_decoder_forward.5} parent=15 // pred_check_branch
          %309 = sbr.rel (%p307) target = $region36
        $region35: #{vit_decoder_forward.5} parent=15 // pred_region
          %s310 = sand.u32 %s21, 1
          %s311 = scalar_lea.sflag [#allocation8], %s310
          %s312 = sand.u32 %s147, 1
          %s313 = smul.addr %s312, 64
          %s314 = scalar_lea.vmem [#allocation7], %s313
          %s316 = ssub.s32 1024, 1024
          %317 = vsyncadd %s311, %s316
          %s318 = smul.addr %s29, 16
          %s319 = smul.addr %s318, 64
          %s320 = scalar_lea.hbm %s4, %s319
          %s321 = sshll.u32 %s314, 4
          %s322 = int_to_ptr.vmem [resolvable:$true] %s321
          %327 = dma.hbm_to_vmem [thread:$0]  %s320, 1024, %s322, %s311, 64, 64, 4
        $region36: #{vit_decoder_forward.5} parent=15 // pred_fallthru
          _
        // Predicated region
        $region37: #{vit_decoder_forward.5} parent=15 // pred_check
          %p328 = pneg %p183
        $region38: #{vit_decoder_forward.5} parent=15 // pred_check_branch
          %330 = sbr.rel (%p328) target = $region40
        $region39: #{vit_decoder_forward.5} parent=15 // pred_region
          %s331 = sand.u32 %s21, 1
          %s332 = scalar_lea.sflag [#allocation8], %s331
          %s333 = sand.u32 %s173, 1
          %s334 = scalar_lea.vmem [#allocation9], %s333
          %s336 = ssub.s32 16, 16
          %337 = vsyncadd %s332, %s336
          %s338 = smul.addr %s29, 16
          %s339 = scalar_lea.hbm %s5, %s338
          %s341 = sshll.u32 %s334, 4
          %s342 = int_to_ptr.vmem [resolvable:$true] %s341
          %344 = dma.hbm_to_vmem [thread:$0]  %s339, 16, %s342, %s332
        $region40: #{vit_decoder_forward.5} parent=15 // pred_fallthru
          _
      $region16: #{vit_decoder_forward.5} parent=5 // pred_fallthru
        _
      %p345 = scmp.le.s32.totalorder 1, %s21
      %p346 = scmp.lt.s32.totalorder %s21, 5
      %p347 = pnand %p345, %p346
      %p348 = pneg %p347
      // Predicated region
      $region41: #{vit_decoder_forward.5} parent=5 // pred_check
        _
      $region42: #{vit_decoder_forward.5} parent=5 // pred_check_branch
        %350 = sbr.rel (%p347) target = $region44
      $region43: #{vit_decoder_forward.5} parent=5 // pred_region
        %s351 = ssub.s32 %s21, 1
        %s352 = sand.u32 %s72, 1
        %s353 = scalar_lea.sflag [#allocation3], %s352
        %s354 = sand.u32 %s72, 1
        %s355 = smul.addr %s354, 256
        %s356 = scalar_lea.vmem [#allocation2], %s355
        // Predicated region
        $region45: #{vit_decoder_forward.5} parent=43 // pred_check
          %p357 = pneg %p85
        $region46: #{vit_decoder_forward.5} parent=43 // pred_check_branch
          %359 = sbr.rel (%p357) target = $region48
        $region47: #{vit_decoder_forward.5} parent=43 // pred_region
          %360 = dma.done %s353, 4096
        $region48: #{vit_decoder_forward.5} parent=43 // pred_fallthru
          _
        %s361 = sand.u32 %s26, 1
        %s362 = scalar_lea.sflag [#allocation5], %s361
        %s363 = sand.u32 %s98, 1
        %s364 = smul.addr %s363, 128
        %s365 = scalar_lea.vmem [#allocation4], %s364
        // Predicated region
        $region49: #{vit_decoder_forward.5} parent=43 // pred_check
          %p366 = pneg %p111
        $region50: #{vit_decoder_forward.5} parent=43 // pred_check_branch
          %368 = sbr.rel (%p366) target = $region52
        $region51: #{vit_decoder_forward.5} parent=43 // pred_region
          %369 = dma.done %s362, 2048
        $region52: #{vit_decoder_forward.5} parent=43 // pred_fallthru
          _
        %s370 = sand.u32 %s26, 1
        %s371 = scalar_lea.sflag [#allocation5], %s370
        %s372 = sand.u32 %s124, 1
        %s373 = smul.addr %s372, 128
        %s374 = scalar_lea.vmem [#allocation6], %s373
        // Predicated region
        $region53: #{vit_decoder_forward.5} parent=43 // pred_check
          %p375 = pneg %p137
        $region54: #{vit_decoder_forward.5} parent=43 // pred_check_branch
          %377 = sbr.rel (%p375) target = $region56
        $region55: #{vit_decoder_forward.5} parent=43 // pred_region
          %378 = dma.done %s371, 2048
        $region56: #{vit_decoder_forward.5} parent=43 // pred_fallthru
          _
        %s379 = sand.u32 %s26, 1
        %s380 = scalar_lea.sflag [#allocation8], %s379
        %s381 = sand.u32 %s150, 1
        %s382 = smul.addr %s381, 64
        %s383 = scalar_lea.vmem [#allocation7], %s382
        // Predicated region
        $region57: #{vit_decoder_forward.5} parent=43 // pred_check
          %p384 = pneg %p163
        $region58: #{vit_decoder_forward.5} parent=43 // pred_check_branch
          %386 = sbr.rel (%p384) target = $region60
        $region59: #{vit_decoder_forward.5} parent=43 // pred_region
          %387 = dma.done %s380, 1024
        $region60: #{vit_decoder_forward.5} parent=43 // pred_fallthru
          _
        %s388 = sand.u32 %s26, 1
        %s389 = scalar_lea.sflag [#allocation8], %s388
        %s390 = sand.u32 %s176, 1
        %s391 = scalar_lea.vmem [#allocation9], %s390
        // Predicated region
        $region61: #{vit_decoder_forward.5} parent=43 // pred_check
          %p392 = pneg %p189
        $region62: #{vit_decoder_forward.5} parent=43 // pred_check_branch
          %394 = sbr.rel (%p392) target = $region64
        $region63: #{vit_decoder_forward.5} parent=43 // pred_region
          %395 = dma.done %s389, 16
        $region64: #{vit_decoder_forward.5} parent=43 // pred_fallthru
          _
        %p396 = scmp.lt.s32.totalorder %s30, 1
        %s397 = scalar_select %p396, %s30, 1
        %s398 = smul.addr %s397, 32
        %s399 = smul.addr %s398, 4
        %s400 = scalar_lea.vmem %s0, %s399
        %p401 = pneg %p59
        %p402 = pneg %p56
        %s403 = sand.u32 %s72, 1
        %s404 = scalar_lea.sflag [#allocation3], %s403
        %s405 = sand.u32 %s72, 1
        %s406 = smul.addr %s405, 256
        %s407 = scalar_lea.vmem [#allocation2], %s406
        %p408 = pneg %p85
        %p409 = pneg %p82
        %s410 = sand.u32 %s26, 1
        %s411 = scalar_lea.sflag [#allocation5], %s410
        %s412 = sand.u32 %s98, 1
        %s413 = smul.addr %s412, 128
        %s414 = scalar_lea.vmem [#allocation4], %s413
        %p415 = pneg %p111
        %p416 = pneg %p108
        %s417 = sand.u32 %s26, 1
        %s418 = scalar_lea.sflag [#allocation5], %s417
        %s419 = sand.u32 %s124, 1
        %s420 = smul.addr %s419, 128
        %s421 = scalar_lea.vmem [#allocation6], %s420
        %p422 = pneg %p137
        %p423 = pneg %p134
        %s424 = sand.u32 %s26, 1
        %s425 = scalar_lea.sflag [#allocation8], %s424
        %s426 = sand.u32 %s150, 1
        %s427 = smul.addr %s426, 64
        %s428 = scalar_lea.vmem [#allocation7], %s427
        %p429 = pneg %p163
        %p430 = pneg %p160
        %s431 = sand.u32 %s26, 1
        %s432 = scalar_lea.sflag [#allocation8], %s431
        %s433 = sand.u32 %s176, 1
        %s434 = scalar_lea.vmem [#allocation9], %s433
        %p435 = pneg %p189
        %p436 = pneg %p186
        %p437 = pneg %p217
        %p438 = pneg %p214
        %s439 = sand.u32 %s204, 1
        %s440 = sand.u32 %s204, 1
        %s441 = smul.addr %s440, 512
        %s442 = scalar_lea.vmem [#allocation10], %s441
        %p443 = scmp.lt.s32.totalorder %s30, 1
        %s444 = scalar_select %p443, %s30, 1
        %s445 = smul.addr %s444, 32
        %s446 = smul.addr %s445, 4
        %s447 = scalar_lea.vmem %s0, %s446
        %v451 = vld [vmem:[%s447] sm:$0xf]
        %v452 = vld [vmem:[%s447 + $0x4] sm:$0xf]
        %v453 = vld [vmem:[%s447 + $0x8] sm:$0xf]
        %v454 = vld [vmem:[%s447 + $0xc] sm:$0xf]
        %v455 = vld [vmem:[%s447 + $0x10] sm:$0xf]
        %v456 = vld [vmem:[%s447 + $0x14] sm:$0xf]
        %v457 = vld [vmem:[%s447 + $0x18] sm:$0xf]
        %v458 = vld [vmem:[%s447 + $0x1c] sm:$0xf]
        %v459 = vld [vmem:[%s447 + $0x20] sm:$0xf]
        %v460 = vld [vmem:[%s447 + $0x24] sm:$0xf]
        %v461 = vld [vmem:[%s447 + $0x28] sm:$0xf]
        %v462 = vld [vmem:[%s447 + $0x2c] sm:$0xf]
        %v463 = vld [vmem:[%s447 + $0x30] sm:$0xf]
        %v464 = vld [vmem:[%s447 + $0x34] sm:$0xf]
        %v465 = vld [vmem:[%s447 + $0x38] sm:$0xf]
        %v466 = vld [vmem:[%s447 + $0x3c] sm:$0xf]
        %v467 = vld [vmem:[%s447 + $0x40] sm:$0xf]
        %v468 = vld [vmem:[%s447 + $0x44] sm:$0xf]
        %v469 = vld [vmem:[%s447 + $0x48] sm:$0xf]
        %v470 = vld [vmem:[%s447 + $0x4c] sm:$0xf]
        %v471 = vld [vmem:[%s447 + $0x50] sm:$0xf]
        %v472 = vld [vmem:[%s447 + $0x54] sm:$0xf]
        %v473 = vld [vmem:[%s447 + $0x58] sm:$0xf]
        %v474 = vld [vmem:[%s447 + $0x5c] sm:$0xf]
        %v475 = vld [vmem:[%s447 + $0x60] sm:$0xf]
        %v476 = vld [vmem:[%s447 + $0x64] sm:$0xf]
        %v477 = vld [vmem:[%s447 + $0x68] sm:$0xf]
        %v478 = vld [vmem:[%s447 + $0x6c] sm:$0xf]
        %v479 = vld [vmem:[%s447 + $0x70] sm:$0xf]
        %v480 = vld [vmem:[%s447 + $0x74] sm:$0xf]
        %v481 = vld [vmem:[%s447 + $0x78] sm:$0xf]
        %v482 = vld [vmem:[%s447 + $0x7c] sm:$0xf]
        %v515 = vunpack.c.l.b16 %v451
        %v516 = vunpack.c.l.b16 %v452
        %v517 = vunpack.c.l.b16 %v453
        %v518 = vunpack.c.l.b16 %v454
        %v519 = vunpack.c.l.b16 %v455
        %v520 = vunpack.c.l.b16 %v456
        %v521 = vunpack.c.l.b16 %v457
        %v522 = vunpack.c.l.b16 %v458
        %v523 = vunpack.c.l.b16 %v459
        %v524 = vunpack.c.l.b16 %v460
        %v525 = vunpack.c.l.b16 %v461
        %v526 = vunpack.c.l.b16 %v462
        %v527 = vunpack.c.l.b16 %v463
        %v528 = vunpack.c.l.b16 %v464
        %v529 = vunpack.c.l.b16 %v465
        %v530 = vunpack.c.l.b16 %v466
        %v531 = vunpack.c.l.b16 %v467
        %v532 = vunpack.c.l.b16 %v468
        %v533 = vunpack.c.l.b16 %v469
        %v534 = vunpack.c.l.b16 %v470
        %v535 = vunpack.c.l.b16 %v471
        %v536 = vunpack.c.l.b16 %v472
        %v537 = vunpack.c.l.b16 %v473
        %v538 = vunpack.c.l.b16 %v474
        %v539 = vunpack.c.l.b16 %v475
        %v540 = vunpack.c.l.b16 %v476
        %v541 = vunpack.c.l.b16 %v477
        %v542 = vunpack.c.l.b16 %v478
        %v543 = vunpack.c.l.b16 %v479
        %v544 = vunpack.c.l.b16 %v480
        %v545 = vunpack.c.l.b16 %v481
        %v546 = vunpack.c.l.b16 %v482
        %v547 = vpack.c.b16 %v516, %v515
        %v548 = vpack.c.b16 %v518, %v517
        %v549 = vpack.c.b16 %v520, %v519
        %v550 = vpack.c.b16 %v522, %v521
        %v551 = vpack.c.b16 %v524, %v523
        %v552 = vpack.c.b16 %v526, %v525
        %v553 = vpack.c.b16 %v528, %v527
        %v554 = vpack.c.b16 %v530, %v529
        %v555 = vpack.c.b16 %v532, %v531
        %v556 = vpack.c.b16 %v534, %v533
        %v557 = vpack.c.b16 %v536, %v535
        %v558 = vpack.c.b16 %v538, %v537
        %v559 = vpack.c.b16 %v540, %v539
        %v560 = vpack.c.b16 %v542, %v541
        %v561 = vpack.c.b16 %v544, %v543
        %v562 = vpack.c.b16 %v546, %v545
        %v579 = vlaneseq
        %v580 = vshrl.u32 %v579, 7
        %v581 = vadd.s32 %v580, 8
        %v582 = vadd.s32 %v580, 16
        %v583 = vadd.s32 %v580, 24
        %v584 = vadd.s32 %v580, 32
        %v585 = vadd.s32 %v580, 40
        %v586 = vadd.s32 %v580, 48
        %v587 = vadd.s32 %v580, 56
        %v588 = vadd.s32 %v580, 64
        %v589 = vadd.s32 %v580, 72
        %v590 = vadd.s32 %v580, 80
        %v591 = vadd.s32 %v580, 88
        %v592 = vadd.s32 %v580, 96
        %v593 = vadd.s32 %v580, 104
        %v594 = vadd.s32 %v580, 112
        %v595 = vadd.s32 %v580, 120
        %v596 = vadd.s32 %v580, 128
        %v597 = vadd.s32 %v580, 136
        %v598 = vadd.s32 %v580, 144
        %v599 = vadd.s32 %v580, 152
        %v600 = vadd.s32 %v580, 160
        %v601 = vadd.s32 %v580, 168
        %v602 = vadd.s32 %v580, 176
        %v603 = vadd.s32 %v580, 184
        %v604 = vadd.s32 %v580, 192
        %v605 = vadd.s32 %v580, 200
        %v606 = vadd.s32 %v580, 208
        %v607 = vadd.s32 %v580, 216
        %v608 = vadd.s32 %v580, 224
        %v609 = vadd.s32 %v580, 232
        %v610 = vadd.s32 %v580, 240
        %v611 = vadd.s32 %v580, 248
        %vm612 = vcmp.lt.s32.totalorder %v580, 0
        %v613 = vsub.s32 0, %v580
        %v614 = vsel %vm612, %v613, %v580
        %v615 = vshrl.u32 %v614, 4
        %v616 = vand.u32 %v614, 15
        %v617 = vsub.s32 0, %v616
        %v618 = vsel %vm612, %v617, %v616
        %vm619 = vcmp.lt.s32.totalorder %v581, 0
        %v620 = vsub.s32 0, %v581
        %v621 = vsel %vm619, %v620, %v581
        %v622 = vshrl.u32 %v621, 4
        %v623 = vand.u32 %v621, 15
        %v624 = vsub.s32 0, %v623
        %v625 = vsel %vm619, %v624, %v623
        %vm626 = vcmp.lt.s32.totalorder %v582, 0
        %v627 = vsub.s32 0, %v582
        %v628 = vsel %vm626, %v627, %v582
        %v629 = vshrl.u32 %v628, 4
        %v630 = vand.u32 %v628, 15
        %v631 = vsub.s32 0, %v630
        %v632 = vsel %vm626, %v631, %v630
        %vm633 = vcmp.lt.s32.totalorder %v583, 0
        %v634 = vsub.s32 0, %v583
        %v635 = vsel %vm633, %v634, %v583
        %v636 = vshrl.u32 %v635, 4
        %v637 = vand.u32 %v635, 15
        %v638 = vsub.s32 0, %v637
        %v639 = vsel %vm633, %v638, %v637
        %vm640 = vcmp.lt.s32.totalorder %v584, 0
        %v641 = vsub.s32 0, %v584
        %v642 = vsel %vm640, %v641, %v584
        %v643 = vshrl.u32 %v642, 4
        %v644 = vand.u32 %v642, 15
        %v645 = vsub.s32 0, %v644
        %v646 = vsel %vm640, %v645, %v644
        %vm647 = vcmp.lt.s32.totalorder %v585, 0
        %v648 = vsub.s32 0, %v585
        %v649 = vsel %vm647, %v648, %v585
        %v650 = vshrl.u32 %v649, 4
        %v651 = vand.u32 %v649, 15
        %v652 = vsub.s32 0, %v651
        %v653 = vsel %vm647, %v652, %v651
        %vm654 = vcmp.lt.s32.totalorder %v586, 0
        %v655 = vsub.s32 0, %v586
        %v656 = vsel %vm654, %v655, %v586
        %v657 = vshrl.u32 %v656, 4
        %v658 = vand.u32 %v656, 15
        %v659 = vsub.s32 0, %v658
        %v660 = vsel %vm654, %v659, %v658
        %vm661 = vcmp.lt.s32.totalorder %v587, 0
        %v662 = vsub.s32 0, %v587
        %v663 = vsel %vm661, %v662, %v587
        %v664 = vshrl.u32 %v663, 4
        %v665 = vand.u32 %v663, 15
        %v666 = vsub.s32 0, %v665
        %v667 = vsel %vm661, %v666, %v665
        %vm668 = vcmp.lt.s32.totalorder %v588, 0
        %v669 = vsub.s32 0, %v588
        %v670 = vsel %vm668, %v669, %v588
        %v671 = vshrl.u32 %v670, 4
        %v672 = vand.u32 %v670, 15
        %v673 = vsub.s32 0, %v672
        %v674 = vsel %vm668, %v673, %v672
        %vm675 = vcmp.lt.s32.totalorder %v589, 0
        %v676 = vsub.s32 0, %v589
        %v677 = vsel %vm675, %v676, %v589
        %v678 = vshrl.u32 %v677, 4
        %v679 = vand.u32 %v677, 15
        %v680 = vsub.s32 0, %v679
        %v681 = vsel %vm675, %v680, %v679
        %vm682 = vcmp.lt.s32.totalorder %v590, 0
        %v683 = vsub.s32 0, %v590
        %v684 = vsel %vm682, %v683, %v590
        %v685 = vshrl.u32 %v684, 4
        %v686 = vand.u32 %v684, 15
        %v687 = vsub.s32 0, %v686
        %v688 = vsel %vm682, %v687, %v686
        %vm689 = vcmp.lt.s32.totalorder %v591, 0
        %v690 = vsub.s32 0, %v591
        %v691 = vsel %vm689, %v690, %v591
        %v692 = vshrl.u32 %v691, 4
        %v693 = vand.u32 %v691, 15
        %v694 = vsub.s32 0, %v693
        %v695 = vsel %vm689, %v694, %v693
        %vm696 = vcmp.lt.s32.totalorder %v592, 0
        %v697 = vsub.s32 0, %v592
        %v698 = vsel %vm696, %v697, %v592
        %v699 = vshrl.u32 %v698, 4
        %v700 = vand.u32 %v698, 15
        %v701 = vsub.s32 0, %v700
        %v702 = vsel %vm696, %v701, %v700
        %vm703 = vcmp.lt.s32.totalorder %v593, 0
        %v704 = vsub.s32 0, %v593
        %v705 = vsel %vm703, %v704, %v593
        %v706 = vshrl.u32 %v705, 4
        %v707 = vand.u32 %v705, 15
        %v708 = vsub.s32 0, %v707
        %v709 = vsel %vm703, %v708, %v707
        %vm710 = vcmp.lt.s32.totalorder %v594, 0
        %v711 = vsub.s32 0, %v594
        %v712 = vsel %vm710, %v711, %v594
        %v713 = vshrl.u32 %v712, 4
        %v714 = vand.u32 %v712, 15
        %v715 = vsub.s32 0, %v714
        %v716 = vsel %vm710, %v715, %v714
        %vm717 = vcmp.lt.s32.totalorder %v595, 0
        %v718 = vsub.s32 0, %v595
        %v719 = vsel %vm717, %v718, %v595
        %v720 = vshrl.u32 %v719, 4
        %v721 = vand.u32 %v719, 15
        %v722 = vsub.s32 0, %v721
        %v723 = vsel %vm717, %v722, %v721
        %vm724 = vcmp.lt.s32.totalorder %v596, 0
        %v725 = vsub.s32 0, %v596
        %v726 = vsel %vm724, %v725, %v596
        %v727 = vshrl.u32 %v726, 4
        %v728 = vand.u32 %v726, 15
        %v729 = vsub.s32 0, %v728
        %v730 = vsel %vm724, %v729, %v728
        %vm731 = vcmp.lt.s32.totalorder %v597, 0
        %v732 = vsub.s32 0, %v597
        %v733 = vsel %vm731, %v732, %v597
        %v734 = vshrl.u32 %v733, 4
        %v735 = vand.u32 %v733, 15
        %v736 = vsub.s32 0, %v735
        %v737 = vsel %vm731, %v736, %v735
        %vm738 = vcmp.lt.s32.totalorder %v598, 0
        %v739 = vsub.s32 0, %v598
        %v740 = vsel %vm738, %v739, %v598
        %v741 = vshrl.u32 %v740, 4
        %v742 = vand.u32 %v740, 15
        %v743 = vsub.s32 0, %v742
        %v744 = vsel %vm738, %v743, %v742
        %vm745 = vcmp.lt.s32.totalorder %v599, 0
        %v746 = vsub.s32 0, %v599
        %v747 = vsel %vm745, %v746, %v599
        %v748 = vshrl.u32 %v747, 4
        %v749 = vand.u32 %v747, 15
        %v750 = vsub.s32 0, %v749
        %v751 = vsel %vm745, %v750, %v749
        %vm752 = vcmp.lt.s32.totalorder %v600, 0
        %v753 = vsub.s32 0, %v600
        %v754 = vsel %vm752, %v753, %v600
        %v755 = vshrl.u32 %v754, 4
        %v756 = vand.u32 %v754, 15
        %v757 = vsub.s32 0, %v756
        %v758 = vsel %vm752, %v757, %v756
        %vm759 = vcmp.lt.s32.totalorder %v601, 0
        %v760 = vsub.s32 0, %v601
        %v761 = vsel %vm759, %v760, %v601
        %v762 = vshrl.u32 %v761, 4
        %v763 = vand.u32 %v761, 15
        %v764 = vsub.s32 0, %v763
        %v765 = vsel %vm759, %v764, %v763
        %vm766 = vcmp.lt.s32.totalorder %v602, 0
        %v767 = vsub.s32 0, %v602
        %v768 = vsel %vm766, %v767, %v602
        %v769 = vshrl.u32 %v768, 4
        %v770 = vand.u32 %v768, 15
        %v771 = vsub.s32 0, %v770
        %v772 = vsel %vm766, %v771, %v770
        %vm773 = vcmp.lt.s32.totalorder %v603, 0
        %v774 = vsub.s32 0, %v603
        %v775 = vsel %vm773, %v774, %v603
        %v776 = vshrl.u32 %v775, 4
        %v777 = vand.u32 %v775, 15
        %v778 = vsub.s32 0, %v777
        %v779 = vsel %vm773, %v778, %v777
        %vm780 = vcmp.lt.s32.totalorder %v604, 0
        %v781 = vsub.s32 0, %v604
        %v782 = vsel %vm780, %v781, %v604
        %v783 = vshrl.u32 %v782, 4
        %v784 = vand.u32 %v782, 15
        %v785 = vsub.s32 0, %v784
        %v786 = vsel %vm780, %v785, %v784
        %vm787 = vcmp.lt.s32.totalorder %v605, 0
        %v788 = vsub.s32 0, %v605
        %v789 = vsel %vm787, %v788, %v605
        %v790 = vshrl.u32 %v789, 4
        %v791 = vand.u32 %v789, 15
        %v792 = vsub.s32 0, %v791
        %v793 = vsel %vm787, %v792, %v791
        %vm794 = vcmp.lt.s32.totalorder %v606, 0
        %v795 = vsub.s32 0, %v606
        %v796 = vsel %vm794, %v795, %v606
        %v797 = vshrl.u32 %v796, 4
        %v798 = vand.u32 %v796, 15
        %v799 = vsub.s32 0, %v798
        %v800 = vsel %vm794, %v799, %v798
        %vm801 = vcmp.lt.s32.totalorder %v607, 0
        %v802 = vsub.s32 0, %v607
        %v803 = vsel %vm801, %v802, %v607
        %v804 = vshrl.u32 %v803, 4
        %v805 = vand.u32 %v803, 15
        %v806 = vsub.s32 0, %v805
        %v807 = vsel %vm801, %v806, %v805
        %vm808 = vcmp.lt.s32.totalorder %v608, 0
        %v809 = vsub.s32 0, %v608
        %v810 = vsel %vm808, %v809, %v608
        %v811 = vshrl.u32 %v810, 4
        %v812 = vand.u32 %v810, 15
        %v813 = vsub.s32 0, %v812
        %v814 = vsel %vm808, %v813, %v812
        %vm815 = vcmp.lt.s32.totalorder %v609, 0
        %v816 = vsub.s32 0, %v609
        %v817 = vsel %vm815, %v816, %v609
        %v818 = vshrl.u32 %v817, 4
        %v819 = vand.u32 %v817, 15
        %v820 = vsub.s32 0, %v819
        %v821 = vsel %vm815, %v820, %v819
        %vm822 = vcmp.lt.s32.totalorder %v610, 0
        %v823 = vsub.s32 0, %v610
        %v824 = vsel %vm822, %v823, %v610
        %v825 = vshrl.u32 %v824, 4
        %v826 = vand.u32 %v824, 15
        %v827 = vsub.s32 0, %v826
        %v828 = vsel %vm822, %v827, %v826
        %vm829 = vcmp.lt.s32.totalorder %v611, 0
        %v830 = vsub.s32 0, %v611
        %v831 = vsel %vm829, %v830, %v611
        %v832 = vshrl.u32 %v831, 4
        %v833 = vand.u32 %v831, 15
        %v834 = vsub.s32 0, %v833
        %v835 = vsel %vm829, %v834, %v833
        %vm836 = vcmp.ne.s32.totalorder %v618, 0
        %vm837 = vcmp.ne.s32.totalorder %v625, 0
        %vm838 = vcmp.ne.s32.totalorder %v632, 0
        %vm839 = vcmp.ne.s32.totalorder %v639, 0
        %vm840 = vcmp.ne.s32.totalorder %v646, 0
        %vm841 = vcmp.ne.s32.totalorder %v653, 0
        %vm842 = vcmp.ne.s32.totalorder %v660, 0
        %vm843 = vcmp.ne.s32.totalorder %v667, 0
        %vm844 = vcmp.ne.s32.totalorder %v674, 0
        %vm845 = vcmp.ne.s32.totalorder %v681, 0
        %vm846 = vcmp.ne.s32.totalorder %v688, 0
        %vm847 = vcmp.ne.s32.totalorder %v695, 0
        %vm848 = vcmp.ne.s32.totalorder %v702, 0
        %vm849 = vcmp.ne.s32.totalorder %v709, 0
        %vm850 = vcmp.ne.s32.totalorder %v716, 0
        %vm851 = vcmp.ne.s32.totalorder %v723, 0
        %vm852 = vcmp.ne.s32.totalorder %v730, 0
        %vm853 = vcmp.ne.s32.totalorder %v737, 0
        %vm854 = vcmp.ne.s32.totalorder %v744, 0
        %vm855 = vcmp.ne.s32.totalorder %v751, 0
        %vm856 = vcmp.ne.s32.totalorder %v758, 0
        %vm857 = vcmp.ne.s32.totalorder %v765, 0
        %vm858 = vcmp.ne.s32.totalorder %v772, 0
        %vm859 = vcmp.ne.s32.totalorder %v779, 0
        %vm860 = vcmp.ne.s32.totalorder %v786, 0
        %vm861 = vcmp.ne.s32.totalorder %v793, 0
        %vm862 = vcmp.ne.s32.totalorder %v800, 0
        %vm863 = vcmp.ne.s32.totalorder %v807, 0
        %vm864 = vcmp.ne.s32.totalorder %v814, 0
        %vm865 = vcmp.ne.s32.totalorder %v821, 0
        %vm866 = vcmp.ne.s32.totalorder %v828, 0
        %vm867 = vcmp.ne.s32.totalorder %v835, 0
        %vm868 = vcmp.lt.s32.totalorder %v618, 0
        %vm869 = vcmp.lt.s32.totalorder %v625, 0
        %vm870 = vcmp.lt.s32.totalorder %v632, 0
        %vm871 = vcmp.lt.s32.totalorder %v639, 0
        %vm872 = vcmp.lt.s32.totalorder %v646, 0
        %vm873 = vcmp.lt.s32.totalorder %v653, 0
        %vm874 = vcmp.lt.s32.totalorder %v660, 0
        %vm875 = vcmp.lt.s32.totalorder %v667, 0
        %vm876 = vcmp.lt.s32.totalorder %v674, 0
        %vm877 = vcmp.lt.s32.totalorder %v681, 0
        %vm878 = vcmp.lt.s32.totalorder %v688, 0
        %vm879 = vcmp.lt.s32.totalorder %v695, 0
        %vm880 = vcmp.lt.s32.totalorder %v702, 0
        %vm881 = vcmp.lt.s32.totalorder %v709, 0
        %vm882 = vcmp.lt.s32.totalorder %v716, 0
        %vm883 = vcmp.lt.s32.totalorder %v723, 0
        %vm884 = vcmp.lt.s32.totalorder %v730, 0
        %vm885 = vcmp.lt.s32.totalorder %v737, 0
        %vm886 = vcmp.lt.s32.totalorder %v744, 0
        %vm887 = vcmp.lt.s32.totalorder %v751, 0
        %vm888 = vcmp.lt.s32.totalorder %v758, 0
        %vm889 = vcmp.lt.s32.totalorder %v765, 0
        %vm890 = vcmp.lt.s32.totalorder %v772, 0
        %vm891 = vcmp.lt.s32.totalorder %v779, 0
        %vm892 = vcmp.lt.s32.totalorder %v786, 0
        %vm893 = vcmp.lt.s32.totalorder %v793, 0
        %vm894 = vcmp.lt.s32.totalorder %v800, 0
        %vm895 = vcmp.lt.s32.totalorder %v807, 0
        %vm896 = vcmp.lt.s32.totalorder %v814, 0
        %vm897 = vcmp.lt.s32.totalorder %v821, 0
        %vm898 = vcmp.lt.s32.totalorder %v828, 0
        %vm899 = vcmp.lt.s32.totalorder %v835, 0
        %vm900 = vmand %vm868, %vm836
        %vm901 = vmand %vm869, %vm837
        %vm902 = vmand %vm870, %vm838
        %vm903 = vmand %vm871, %vm839
        %vm904 = vmand %vm872, %vm840
        %vm905 = vmand %vm873, %vm841
        %vm906 = vmand %vm874, %vm842
        %vm907 = vmand %vm875, %vm843
        %vm908 = vmand %vm876, %vm844
        %vm909 = vmand %vm877, %vm845
        %vm910 = vmand %vm878, %vm846
        %vm911 = vmand %vm879, %vm847
        %vm912 = vmand %vm880, %vm848
        %vm913 = vmand %vm881, %vm849
        %vm914 = vmand %vm882, %vm850
        %vm915 = vmand %vm883, %vm851
        %vm916 = vmand %vm884, %vm852
        %vm917 = vmand %vm885, %vm853
        %vm918 = vmand %vm886, %vm854
        %vm919 = vmand %vm887, %vm855
        %vm920 = vmand %vm888, %vm856
        %vm921 = vmand %vm889, %vm857
        %vm922 = vmand %vm890, %vm858
        %vm923 = vmand %vm891, %vm859
        %vm924 = vmand %vm892, %vm860
        %vm925 = vmand %vm893, %vm861
        %vm926 = vmand %vm894, %vm862
        %vm927 = vmand %vm895, %vm863
        %vm928 = vmand %vm896, %vm864
        %vm929 = vmand %vm897, %vm865
        %vm930 = vmand %vm898, %vm866
        %vm931 = vmand %vm899, %vm867
        %v932 = vadd.s32 %v618, 16
        %v933 = vadd.s32 %v625, 16
        %v934 = vadd.s32 %v632, 16
        %v935 = vadd.s32 %v639, 16
        %v936 = vadd.s32 %v646, 16
        %v937 = vadd.s32 %v653, 16
        %v938 = vadd.s32 %v660, 16
        %v939 = vadd.s32 %v667, 16
        %v940 = vadd.s32 %v674, 16
        %v941 = vadd.s32 %v681, 16
        %v942 = vadd.s32 %v688, 16
        %v943 = vadd.s32 %v695, 16
        %v944 = vadd.s32 %v702, 16
        %v945 = vadd.s32 %v709, 16
        %v946 = vadd.s32 %v716, 16
        %v947 = vadd.s32 %v723, 16
        %v948 = vadd.s32 %v730, 16
        %v949 = vadd.s32 %v737, 16
        %v950 = vadd.s32 %v744, 16
        %v951 = vadd.s32 %v751, 16
        %v952 = vadd.s32 %v758, 16
        %v953 = vadd.s32 %v765, 16
        %v954 = vadd.s32 %v772, 16
        %v955 = vadd.s32 %v779, 16
        %v956 = vadd.s32 %v786, 16
        %v957 = vadd.s32 %v793, 16
        %v958 = vadd.s32 %v800, 16
        %v959 = vadd.s32 %v807, 16
        %v960 = vadd.s32 %v814, 16
        %v961 = vadd.s32 %v821, 16
        %v962 = vadd.s32 %v828, 16
        %v963 = vadd.s32 %v835, 16
        %v964 = vsel %vm900, %v932, %v618
        %v965 = vsel %vm901, %v933, %v625
        %v966 = vsel %vm902, %v934, %v632
        %v967 = vsel %vm903, %v935, %v639
        %v968 = vsel %vm904, %v936, %v646
        %v969 = vsel %vm905, %v937, %v653
        %v970 = vsel %vm906, %v938, %v660
        %v971 = vsel %vm907, %v939, %v667
        %v972 = vsel %vm908, %v940, %v674
        %v973 = vsel %vm909, %v941, %v681
        %v974 = vsel %vm910, %v942, %v688
        %v975 = vsel %vm911, %v943, %v695
        %v976 = vsel %vm912, %v944, %v702
        %v977 = vsel %vm913, %v945, %v709
        %v978 = vsel %vm914, %v946, %v716
        %v979 = vsel %vm915, %v947, %v723
        %v980 = vsel %vm916, %v948, %v730
        %v981 = vsel %vm917, %v949, %v737
        %v982 = vsel %vm918, %v950, %v744
        %v983 = vsel %vm919, %v951, %v751
        %v984 = vsel %vm920, %v952, %v758
        %v985 = vsel %vm921, %v953, %v765
        %v986 = vsel %vm922, %v954, %v772
        %v987 = vsel %vm923, %v955, %v779
        %v988 = vsel %vm924, %v956, %v786
        %v989 = vsel %vm925, %v957, %v793
        %v990 = vsel %vm926, %v958, %v800
        %v991 = vsel %vm927, %v959, %v807
        %v992 = vsel %vm928, %v960, %v814
        %v993 = vsel %vm929, %v961, %v821
        %v994 = vsel %vm930, %v962, %v828
        %v995 = vsel %vm931, %v963, %v835
        %vm996 = vcmp.ne.s32.totalorder %v964, 15
        %vm997 = vcmp.ne.s32.totalorder %v965, 15
        %vm998 = vcmp.ne.s32.totalorder %v966, 15
        %vm999 = vcmp.ne.s32.totalorder %v967, 15
        %vm1000 = vcmp.ne.s32.totalorder %v968, 15
        %vm1001 = vcmp.ne.s32.totalorder %v969, 15
        %vm1002 = vcmp.ne.s32.totalorder %v970, 15
        %vm1003 = vcmp.ne.s32.totalorder %v971, 15
        %vm1004 = vcmp.ne.s32.totalorder %v972, 15
        %vm1005 = vcmp.ne.s32.totalorder %v973, 15
        %vm1006 = vcmp.ne.s32.totalorder %v974, 15
        %vm1007 = vcmp.ne.s32.totalorder %v975, 15
        %vm1008 = vcmp.ne.s32.totalorder %v976, 15
        %vm1009 = vcmp.ne.s32.totalorder %v977, 15
        %vm1010 = vcmp.ne.s32.totalorder %v978, 15
        %vm1011 = vcmp.ne.s32.totalorder %v979, 15
        %vm1012 = vcmp.ne.s32.totalorder %v980, 15
        %vm1013 = vcmp.ne.s32.totalorder %v981, 15
        %vm1014 = vcmp.ne.s32.totalorder %v982, 15
        %vm1015 = vcmp.ne.s32.totalorder %v983, 15
        %vm1016 = vcmp.ne.s32.totalorder %v984, 15
        %vm1017 = vcmp.ne.s32.totalorder %v985, 15
        %vm1018 = vcmp.ne.s32.totalorder %v986, 15
        %vm1019 = vcmp.ne.s32.totalorder %v987, 15
        %vm1020 = vcmp.ne.s32.totalorder %v988, 15
        %vm1021 = vcmp.ne.s32.totalorder %v989, 15
        %vm1022 = vcmp.ne.s32.totalorder %v990, 15
        %vm1023 = vcmp.ne.s32.totalorder %v991, 15
        %vm1024 = vcmp.ne.s32.totalorder %v992, 15
        %vm1025 = vcmp.ne.s32.totalorder %v993, 15
        %vm1026 = vcmp.ne.s32.totalorder %v994, 15
        %vm1027 = vcmp.ne.s32.totalorder %v995, 15
        %v1028 = vsel %vm996, 1, 0
        %v1029 = vsel %vm997, 1, 0
        %v1030 = vsel %vm998, 1, 0
        %v1031 = vsel %vm999, 1, 0
        %v1032 = vsel %vm1000, 1, 0
        %v1033 = vsel %vm1001, 1, 0
        %v1034 = vsel %vm1002, 1, 0
        %v1035 = vsel %vm1003, 1, 0
        %v1036 = vsel %vm1004, 1, 0
        %v1037 = vsel %vm1005, 1, 0
        %v1038 = vsel %vm1006, 1, 0
        %v1039 = vsel %vm1007, 1, 0
        %v1040 = vsel %vm1008, 1, 0
        %v1041 = vsel %vm1009, 1, 0
        %v1042 = vsel %vm1010, 1, 0
        %v1043 = vsel %vm1011, 1, 0
        %v1044 = vsel %vm1012, 1, 0
        %v1045 = vsel %vm1013, 1, 0
        %v1046 = vsel %vm1014, 1, 0
        %v1047 = vsel %vm1015, 1, 0
        %v1048 = vsel %vm1016, 1, 0
        %v1049 = vsel %vm1017, 1, 0
        %v1050 = vsel %vm1018, 1, 0
        %v1051 = vsel %vm1019, 1, 0
        %v1052 = vsel %vm1020, 1, 0
        %v1053 = vsel %vm1021, 1, 0
        %v1054 = vsel %vm1022, 1, 0
        %v1055 = vsel %vm1023, 1, 0
        %v1056 = vsel %vm1024, 1, 0
        %v1057 = vsel %vm1025, 1, 0
        %v1058 = vsel %vm1026, 1, 0
        %v1059 = vsel %vm1027, 1, 0
        %vm1060 = vcmp.eq.s32.totalorder %v1028, 1
        %vm1061 = vcmp.eq.s32.totalorder %v1029, 1
        %vm1062 = vcmp.eq.s32.totalorder %v1030, 1
        %vm1063 = vcmp.eq.s32.totalorder %v1031, 1
        %vm1064 = vcmp.eq.s32.totalorder %v1032, 1
        %vm1065 = vcmp.eq.s32.totalorder %v1033, 1
        %vm1066 = vcmp.eq.s32.totalorder %v1034, 1
        %vm1067 = vcmp.eq.s32.totalorder %v1035, 1
        %vm1068 = vcmp.eq.s32.totalorder %v1036, 1
        %vm1069 = vcmp.eq.s32.totalorder %v1037, 1
        %vm1070 = vcmp.eq.s32.totalorder %v1038, 1
        %vm1071 = vcmp.eq.s32.totalorder %v1039, 1
        %vm1072 = vcmp.eq.s32.totalorder %v1040, 1
        %vm1073 = vcmp.eq.s32.totalorder %v1041, 1
        %vm1074 = vcmp.eq.s32.totalorder %v1042, 1
        %vm1075 = vcmp.eq.s32.totalorder %v1043, 1
        %vm1076 = vcmp.eq.s32.totalorder %v1044, 1
        %vm1077 = vcmp.eq.s32.totalorder %v1045, 1
        %vm1078 = vcmp.eq.s32.totalorder %v1046, 1
        %vm1079 = vcmp.eq.s32.totalorder %v1047, 1
        %vm1080 = vcmp.eq.s32.totalorder %v1048, 1
        %vm1081 = vcmp.eq.s32.totalorder %v1049, 1
        %vm1082 = vcmp.eq.s32.totalorder %v1050, 1
        %vm1083 = vcmp.eq.s32.totalorder %v1051, 1
        %vm1084 = vcmp.eq.s32.totalorder %v1052, 1
        %vm1085 = vcmp.eq.s32.totalorder %v1053, 1
        %vm1086 = vcmp.eq.s32.totalorder %v1054, 1
        %vm1087 = vcmp.eq.s32.totalorder %v1055, 1
        %vm1088 = vcmp.eq.s32.totalorder %v1056, 1
        %vm1089 = vcmp.eq.s32.totalorder %v1057, 1
        %vm1090 = vcmp.eq.s32.totalorder %v1058, 1
        %vm1091 = vcmp.eq.s32.totalorder %v1059, 1
        %vm1092 = vmpackc.low %vm1060, %vm1060
        %vm1093 = vmpackc.low %vm1061, %vm1061
        %vm1094 = vmpackc.low %vm1062, %vm1062
        %vm1095 = vmpackc.low %vm1063, %vm1063
        %vm1096 = vmpackc.low %vm1064, %vm1064
        %vm1097 = vmpackc.low %vm1065, %vm1065
        %vm1098 = vmpackc.low %vm1066, %vm1066
        %vm1099 = vmpackc.low %vm1067, %vm1067
        %vm1100 = vmpackc.low %vm1068, %vm1068
        %vm1101 = vmpackc.low %vm1069, %vm1069
        %vm1102 = vmpackc.low %vm1070, %vm1070
        %vm1103 = vmpackc.low %vm1071, %vm1071
        %vm1104 = vmpackc.low %vm1072, %vm1072
        %vm1105 = vmpackc.low %vm1073, %vm1073
        %vm1106 = vmpackc.low %vm1074, %vm1074
        %vm1107 = vmpackc.low %vm1075, %vm1075
        %vm1108 = vmpackc.low %vm1076, %vm1076
        %vm1109 = vmpackc.low %vm1077, %vm1077
        %vm1110 = vmpackc.low %vm1078, %vm1078
        %vm1111 = vmpackc.low %vm1079, %vm1079
        %vm1112 = vmpackc.low %vm1080, %vm1080
        %vm1113 = vmpackc.low %vm1081, %vm1081
        %vm1114 = vmpackc.low %vm1082, %vm1082
        %vm1115 = vmpackc.low %vm1083, %vm1083
        %vm1116 = vmpackc.low %vm1084, %vm1084
        %vm1117 = vmpackc.low %vm1085, %vm1085
        %vm1118 = vmpackc.low %vm1086, %vm1086
        %vm1119 = vmpackc.low %vm1087, %vm1087
        %vm1120 = vmpackc.low %vm1088, %vm1088
        %vm1121 = vmpackc.low %vm1089, %vm1089
        %vm1122 = vmpackc.low %vm1090, %vm1090
        %vm1123 = vmpackc.low %vm1091, %vm1091
        %v1124 = vsel %vm1092, 65537, 0
        %v1125 = vsel %vm1093, 65537, 0
        %v1126 = vsel %vm1094, 65537, 0
        %v1127 = vsel %vm1095, 65537, 0
        %v1128 = vsel %vm1096, 65537, 0
        %v1129 = vsel %vm1097, 65537, 0
        %v1130 = vsel %vm1098, 65537, 0
        %v1131 = vsel %vm1099, 65537, 0
        %v1132 = vsel %vm1100, 65537, 0
        %v1133 = vsel %vm1101, 65537, 0
        %v1134 = vsel %vm1102, 65537, 0
        %v1135 = vsel %vm1103, 65537, 0
        %v1136 = vsel %vm1104, 65537, 0
        %v1137 = vsel %vm1105, 65537, 0
        %v1138 = vsel %vm1106, 65537, 0
        %v1139 = vsel %vm1107, 65537, 0
        %v1140 = vsel %vm1108, 65537, 0
        %v1141 = vsel %vm1109, 65537, 0
        %v1142 = vsel %vm1110, 65537, 0
        %v1143 = vsel %vm1111, 65537, 0
        %v1144 = vsel %vm1112, 65537, 0
        %v1145 = vsel %vm1113, 65537, 0
        %v1146 = vsel %vm1114, 65537, 0
        %v1147 = vsel %vm1115, 65537, 0
        %v1148 = vsel %vm1116, 65537, 0
        %v1149 = vsel %vm1117, 65537, 0
        %v1150 = vsel %vm1118, 65537, 0
        %v1151 = vsel %vm1119, 65537, 0
        %v1152 = vsel %vm1120, 65537, 0
        %v1153 = vsel %vm1121, 65537, 0
        %v1154 = vsel %vm1122, 65537, 0
        %v1155 = vsel %vm1123, 65537, 0
        %v1156 = vunpack.c.l.b16 %v1124
        %v1157 = vunpack.c.l.b16 %v1125
        %v1158 = vunpack.c.l.b16 %v1126
        %v1159 = vunpack.c.l.b16 %v1127
        %v1160 = vunpack.c.l.b16 %v1128
        %v1161 = vunpack.c.l.b16 %v1129
        %v1162 = vunpack.c.l.b16 %v1130
        %v1163 = vunpack.c.l.b16 %v1131
        %v1164 = vunpack.c.l.b16 %v1132
        %v1165 = vunpack.c.l.b16 %v1133
        %v1166 = vunpack.c.l.b16 %v1134
        %v1167 = vunpack.c.l.b16 %v1135
        %v1168 = vunpack.c.l.b16 %v1136
        %v1169 = vunpack.c.l.b16 %v1137
        %v1170 = vunpack.c.l.b16 %v1138
        %v1171 = vunpack.c.l.b16 %v1139
        %v1172 = vunpack.c.l.b16 %v1140
        %v1173 = vunpack.c.l.b16 %v1141
        %v1174 = vunpack.c.l.b16 %v1142
        %v1175 = vunpack.c.l.b16 %v1143
        %v1176 = vunpack.c.l.b16 %v1144
        %v1177 = vunpack.c.l.b16 %v1145
        %v1178 = vunpack.c.l.b16 %v1146
        %v1179 = vunpack.c.l.b16 %v1147
        %v1180 = vunpack.c.l.b16 %v1148
        %v1181 = vunpack.c.l.b16 %v1149
        %v1182 = vunpack.c.l.b16 %v1150
        %v1183 = vunpack.c.l.b16 %v1151
        %v1184 = vunpack.c.l.b16 %v1152
        %v1185 = vunpack.c.l.b16 %v1153
        %v1186 = vunpack.c.l.b16 %v1154
        %v1187 = vunpack.c.l.b16 %v1155
        %v1188 = vpack.c.b16 %v1157, %v1156
        %v1189 = vpack.c.b16 %v1159, %v1158
        %v1190 = vpack.c.b16 %v1161, %v1160
        %v1191 = vpack.c.b16 %v1163, %v1162
        %v1192 = vpack.c.b16 %v1165, %v1164
        %v1193 = vpack.c.b16 %v1167, %v1166
        %v1194 = vpack.c.b16 %v1169, %v1168
        %v1195 = vpack.c.b16 %v1171, %v1170
        %v1196 = vpack.c.b16 %v1173, %v1172
        %v1197 = vpack.c.b16 %v1175, %v1174
        %v1198 = vpack.c.b16 %v1177, %v1176
        %v1199 = vpack.c.b16 %v1179, %v1178
        %v1200 = vpack.c.b16 %v1181, %v1180
        %v1201 = vpack.c.b16 %v1183, %v1182
        %v1202 = vpack.c.b16 %v1185, %v1184
        %v1203 = vpack.c.b16 %v1187, %v1186
        %vm1204 = vsmask.f32 256
        %v1206 = vshrl.u32 %v1188, 16
        %v1208 = vrot.slane %v1206, 7
        %v1209 = vshll.u32 %v1188, 16
        %v1211 = vor.u32 %v1208, %v1209
        %v1213 = vshrl.u32 %v1189, 16
        %v1215 = vrot.slane %v1213, 7
        %v1216 = vshll.u32 %v1189, 16
        %v1218 = vor.u32 %v1215, %v1216
        %v1219 = vsel %vm1204, %v1208, %v1218
        %v1221 = vshrl.u32 %v1190, 16
        %v1223 = vrot.slane %v1221, 7
        %v1224 = vshll.u32 %v1190, 16
        %v1226 = vor.u32 %v1223, %v1224
        %v1227 = vsel %vm1204, %v1215, %v1226
        %v1229 = vshrl.u32 %v1191, 16
        %v1231 = vrot.slane %v1229, 7
        %v1232 = vshll.u32 %v1191, 16
        %v1234 = vor.u32 %v1231, %v1232
        %v1235 = vsel %vm1204, %v1223, %v1234
        %v1237 = vshrl.u32 %v1192, 16
        %v1239 = vrot.slane %v1237, 7
        %v1240 = vshll.u32 %v1192, 16
        %v1242 = vor.u32 %v1239, %v1240
        %v1243 = vsel %vm1204, %v1231, %v1242
        %v1245 = vshrl.u32 %v1193, 16
        %v1247 = vrot.slane %v1245, 7
        %v1248 = vshll.u32 %v1193, 16
        %v1250 = vor.u32 %v1247, %v1248
        %v1251 = vsel %vm1204, %v1239, %v1250
        %v1253 = vshrl.u32 %v1194, 16
        %v1255 = vrot.slane %v1253, 7
        %v1256 = vshll.u32 %v1194, 16
        %v1258 = vor.u32 %v1255, %v1256
        %v1259 = vsel %vm1204, %v1247, %v1258
        %v1261 = vshrl.u32 %v1195, 16
        %v1263 = vrot.slane %v1261, 7
        %v1264 = vshll.u32 %v1195, 16
        %v1266 = vor.u32 %v1263, %v1264
        %v1267 = vsel %vm1204, %v1255, %v1266
        %v1269 = vshrl.u32 %v1196, 16
        %v1271 = vrot.slane %v1269, 7
        %v1272 = vshll.u32 %v1196, 16
        %v1274 = vor.u32 %v1271, %v1272
        %v1275 = vsel %vm1204, %v1263, %v1274
        %v1277 = vshrl.u32 %v1197, 16
        %v1279 = vrot.slane %v1277, 7
        %v1280 = vshll.u32 %v1197, 16
        %v1282 = vor.u32 %v1279, %v1280
        %v1283 = vsel %vm1204, %v1271, %v1282
        %v1285 = vshrl.u32 %v1198, 16
        %v1287 = vrot.slane %v1285, 7
        %v1288 = vshll.u32 %v1198, 16
        %v1290 = vor.u32 %v1287, %v1288
        %v1291 = vsel %vm1204, %v1279, %v1290
        %v1293 = vshrl.u32 %v1199, 16
        %v1295 = vrot.slane %v1293, 7
        %v1296 = vshll.u32 %v1199, 16
        %v1298 = vor.u32 %v1295, %v1296
        %v1299 = vsel %vm1204, %v1287, %v1298
        %v1301 = vshrl.u32 %v1200, 16
        %v1303 = vrot.slane %v1301, 7
        %v1304 = vshll.u32 %v1200, 16
        %v1306 = vor.u32 %v1303, %v1304
        %v1307 = vsel %vm1204, %v1295, %v1306
        %v1309 = vshrl.u32 %v1201, 16
        %v1311 = vrot.slane %v1309, 7
        %v1312 = vshll.u32 %v1201, 16
        %v1314 = vor.u32 %v1311, %v1312
        %v1315 = vsel %vm1204, %v1303, %v1314
        %v1317 = vshrl.u32 %v1202, 16
        %v1319 = vrot.slane %v1317, 7
        %v1320 = vshll.u32 %v1202, 16
        %v1322 = vor.u32 %v1319, %v1320
        %v1323 = vsel %vm1204, %v1311, %v1322
        %v1325 = vshrl.u32 %v1203, 16
        %v1327 = vrot.slane %v1325, 7
        %v1328 = vshll.u32 %v1203, 16
        %v1330 = vor.u32 %v1327, %v1328
        %v1331 = vsel %vm1204, %v1319, %v1330
        %vm1332 = vcmp.ne.s16.totalorder %v1211, 0
        %vm1333 = vcmp.ne.s16.totalorder %v1219, 0
        %vm1334 = vcmp.ne.s16.totalorder %v1227, 0
        %vm1335 = vcmp.ne.s16.totalorder %v1235, 0
        %vm1336 = vcmp.ne.s16.totalorder %v1243, 0
        %vm1337 = vcmp.ne.s16.totalorder %v1251, 0
        %vm1338 = vcmp.ne.s16.totalorder %v1259, 0
        %vm1339 = vcmp.ne.s16.totalorder %v1267, 0
        %vm1340 = vcmp.ne.s16.totalorder %v1275, 0
        %vm1341 = vcmp.ne.s16.totalorder %v1283, 0
        %vm1342 = vcmp.ne.s16.totalorder %v1291, 0
        %vm1343 = vcmp.ne.s16.totalorder %v1299, 0
        %vm1344 = vcmp.ne.s16.totalorder %v1307, 0
        %vm1345 = vcmp.ne.s16.totalorder %v1315, 0
        %vm1346 = vcmp.ne.s16.totalorder %v1323, 0
        %vm1347 = vcmp.ne.s16.totalorder %v1331, 0
        %v1348 = vsel %vm1332, %v547, 0
        %v1349 = vsel %vm1333, %v548, 0
        %v1350 = vsel %vm1334, %v549, 0
        %v1351 = vsel %vm1335, %v550, 0
        %v1352 = vsel %vm1336, %v551, 0
        %v1353 = vsel %vm1337, %v552, 0
        %v1354 = vsel %vm1338, %v553, 0
        %v1355 = vsel %vm1339, %v554, 0
        %v1356 = vsel %vm1340, %v555, 0
        %v1357 = vsel %vm1341, %v556, 0
        %v1358 = vsel %vm1342, %v557, 0
        %v1359 = vsel %vm1343, %v558, 0
        %v1360 = vsel %vm1344, %v559, 0
        %v1361 = vsel %vm1345, %v560, 0
        %v1362 = vsel %vm1346, %v561, 0
        %v1363 = vsel %vm1347, %v562, 0
        %v1364 = vsel %vm1332, %v548, 0
        %v1365 = vsel %vm1333, %v549, 0
        %v1366 = vsel %vm1334, %v550, 0
        %v1367 = vsel %vm1335, %v551, 0
        %v1368 = vsel %vm1336, %v552, 0
        %v1369 = vsel %vm1337, %v553, 0
        %v1370 = vsel %vm1338, %v554, 0
        %v1371 = vsel %vm1339, %v555, 0
        %v1372 = vsel %vm1340, %v556, 0
        %v1373 = vsel %vm1341, %v557, 0
        %v1374 = vsel %vm1342, %v558, 0
        %v1375 = vsel %vm1343, %v559, 0
        %v1376 = vsel %vm1344, %v560, 0
        %v1377 = vsel %vm1345, %v561, 0
        %v1378 = vsel %vm1346, %v562, 0
        %v1379 = vld [vmem:[%s391] sm:$0x1]
        %v1380 = vld [vmem:[%s356] sm:$0xff]
        %v1381 = vld [vmem:[%s356 + $0x8] sm:$0xff]
        %v1382 = vld [vmem:[%s356 + $0x10] sm:$0xff]
        %v1383 = vld [vmem:[%s356 + $0x18] sm:$0xff]
        %v1384 = vld [vmem:[%s356 + $0x20] sm:$0xff]
        %v1385 = vld [vmem:[%s356 + $0x28] sm:$0xff]
        %v1386 = vld [vmem:[%s356 + $0x30] sm:$0xff]
        %v1387 = vld [vmem:[%s356 + $0x38] sm:$0xff]
        %v1388 = vld [vmem:[%s356 + $0x40] sm:$0xff]
        %v1389 = vld [vmem:[%s356 + $0x48] sm:$0xff]
        %v1390 = vld [vmem:[%s356 + $0x50] sm:$0xff]
        %v1391 = vld [vmem:[%s356 + $0x58] sm:$0xff]
        %v1392 = vld [vmem:[%s356 + $0x60] sm:$0xff]
        %v1393 = vld [vmem:[%s356 + $0x68] sm:$0xff]
        %v1394 = vld [vmem:[%s356 + $0x70] sm:$0xff]
        %v1395 = vld [vmem:[%s356 + $0x78] sm:$0xff]
        %v1396 = vld [vmem:[%s356 + $0x80] sm:$0xff]
        %v1397 = vld [vmem:[%s356 + $0x88] sm:$0xff]
        %v1398 = vld [vmem:[%s356 + $0x90] sm:$0xff]
        %v1399 = vld [vmem:[%s356 + $0x98] sm:$0xff]
        %v1400 = vld [vmem:[%s356 + $0xa0] sm:$0xff]
        %v1401 = vld [vmem:[%s356 + $0xa8] sm:$0xff]
        %v1402 = vld [vmem:[%s356 + $0xb0] sm:$0xff]
        %v1403 = vld [vmem:[%s356 + $0xb8] sm:$0xff]
        %v1404 = vld [vmem:[%s356 + $0xc0] sm:$0xff]
        %v1405 = vld [vmem:[%s356 + $0xc8] sm:$0xff]
        %v1406 = vld [vmem:[%s356 + $0xd0] sm:$0xff]
        %v1407 = vld [vmem:[%s356 + $0xd8] sm:$0xff]
        %v1408 = vld [vmem:[%s356 + $0xe0] sm:$0xff]
        %v1409 = vld [vmem:[%s356 + $0xe8] sm:$0xff]
        %v1410 = vld [vmem:[%s356 + $0xf0] sm:$0xff]
        %v1411 = vld [vmem:[%s356 + $0xf8] sm:$0xff]
        %v1444 = vunpack.c.l.b16 %v1380
        %v1445 = vunpack.c.h.b16 %v1380
        %v1446 = vunpack.c.l.b16 %v1381
        %v1447 = vunpack.c.h.b16 %v1381
        %v1448 = vunpack.c.l.b16 %v1382
        %v1449 = vunpack.c.h.b16 %v1382
        %v1450 = vunpack.c.l.b16 %v1383
        %v1451 = vunpack.c.h.b16 %v1383
        %v1452 = vunpack.c.l.b16 %v1384
        %v1453 = vunpack.c.h.b16 %v1384
        %v1454 = vunpack.c.l.b16 %v1385
        %v1455 = vunpack.c.h.b16 %v1385
        %v1456 = vunpack.c.l.b16 %v1386
        %v1457 = vunpack.c.h.b16 %v1386
        %v1458 = vunpack.c.l.b16 %v1387
        %v1459 = vunpack.c.h.b16 %v1387
        %v1460 = vunpack.c.l.b16 %v1388
        %v1461 = vunpack.c.h.b16 %v1388
        %v1462 = vunpack.c.l.b16 %v1389
        %v1463 = vunpack.c.h.b16 %v1389
        %v1464 = vunpack.c.l.b16 %v1390
        %v1465 = vunpack.c.h.b16 %v1390
        %v1466 = vunpack.c.l.b16 %v1391
        %v1467 = vunpack.c.h.b16 %v1391
        %v1468 = vunpack.c.l.b16 %v1392
        %v1469 = vunpack.c.h.b16 %v1392
        %v1470 = vunpack.c.l.b16 %v1393
        %v1471 = vunpack.c.h.b16 %v1393
        %v1472 = vunpack.c.l.b16 %v1394
        %v1473 = vunpack.c.h.b16 %v1394
        %v1474 = vunpack.c.l.b16 %v1395
        %v1475 = vunpack.c.h.b16 %v1395
        %v1476 = vunpack.c.l.b16 %v1396
        %v1477 = vunpack.c.h.b16 %v1396
        %v1478 = vunpack.c.l.b16 %v1397
        %v1479 = vunpack.c.h.b16 %v1397
        %v1480 = vunpack.c.l.b16 %v1398
        %v1481 = vunpack.c.h.b16 %v1398
        %v1482 = vunpack.c.l.b16 %v1399
        %v1483 = vunpack.c.h.b16 %v1399
        %v1484 = vunpack.c.l.b16 %v1400
        %v1485 = vunpack.c.h.b16 %v1400
        %v1486 = vunpack.c.l.b16 %v1401
        %v1487 = vunpack.c.h.b16 %v1401
        %v1488 = vunpack.c.l.b16 %v1402
        %v1489 = vunpack.c.h.b16 %v1402
        %v1490 = vunpack.c.l.b16 %v1403
        %v1491 = vunpack.c.h.b16 %v1403
        %v1492 = vunpack.c.l.b16 %v1404
        %v1493 = vunpack.c.h.b16 %v1404
        %v1494 = vunpack.c.l.b16 %v1405
        %v1495 = vunpack.c.h.b16 %v1405
        %v1496 = vunpack.c.l.b16 %v1406
        %v1497 = vunpack.c.h.b16 %v1406
        %v1498 = vunpack.c.l.b16 %v1407
        %v1499 = vunpack.c.h.b16 %v1407
        %v1500 = vunpack.c.l.b16 %v1408
        %v1501 = vunpack.c.h.b16 %v1408
        %v1502 = vunpack.c.l.b16 %v1409
        %v1503 = vunpack.c.h.b16 %v1409
        %v1504 = vunpack.c.l.b16 %v1410
        %v1505 = vunpack.c.h.b16 %v1410
        %v1506 = vunpack.c.l.b16 %v1411
        %v1507 = vunpack.c.h.b16 %v1411
        %v1508 = vpack.c.b16 %v1448, %v1444
        %v1509 = vpack.c.b16 %v1449, %v1445
        %v1510 = vpack.c.b16 %v1450, %v1446
        %v1511 = vpack.c.b16 %v1451, %v1447
        %v1512 = vpack.c.b16 %v1456, %v1452
        %v1513 = vpack.c.b16 %v1457, %v1453
        %v1514 = vpack.c.b16 %v1458, %v1454
        %v1515 = vpack.c.b16 %v1459, %v1455
        %v1516 = vpack.c.b16 %v1464, %v1460
        %v1517 = vpack.c.b16 %v1465, %v1461
        %v1518 = vpack.c.b16 %v1466, %v1462
        %v1519 = vpack.c.b16 %v1467, %v1463
        %v1520 = vpack.c.b16 %v1472, %v1468
        %v1521 = vpack.c.b16 %v1473, %v1469
        %v1522 = vpack.c.b16 %v1474, %v1470
        %v1523 = vpack.c.b16 %v1475, %v1471
        %v1524 = vpack.c.b16 %v1480, %v1476
        %v1525 = vpack.c.b16 %v1481, %v1477
        %v1526 = vpack.c.b16 %v1482, %v1478
        %v1527 = vpack.c.b16 %v1483, %v1479
        %v1528 = vpack.c.b16 %v1488, %v1484
        %v1529 = vpack.c.b16 %v1489, %v1485
        %v1530 = vpack.c.b16 %v1490, %v1486
        %v1531 = vpack.c.b16 %v1491, %v1487
        %v1532 = vpack.c.b16 %v1496, %v1492
        %v1533 = vpack.c.b16 %v1497, %v1493
        %v1534 = vpack.c.b16 %v1498, %v1494
        %v1535 = vpack.c.b16 %v1499, %v1495
        %v1536 = vpack.c.b16 %v1504, %v1500
        %v1537 = vpack.c.b16 %v1505, %v1501
        %v1538 = vpack.c.b16 %v1506, %v1502
        %v1539 = vpack.c.b16 %v1507, %v1503
        %1572 = vmatprep.subr.bf16.mxu0 %v1537
        %1573 = vmatpush1.bf16.msra.mxu0 %v1536
        %1574 = vmatprep.subr.bf16.mxu0 %v1533
        %1575 = vmatpush1.bf16.msra.mxu0 %v1532
        %1576 = vmatprep.subr.bf16.mxu0 %v1529
        %1577 = vmatpush1.bf16.msra.mxu0 %v1528
        %1578 = vmatprep.subr.bf16.mxu0 %v1525
        %1579 = vmatpush1.bf16.msra.mxu0 %v1524
        %1580 = vmatprep.subr.bf16.mxu0 %v1521
        %1581 = vmatpush1.bf16.msra.mxu0 %v1520
        %1582 = vmatprep.subr.bf16.mxu0 %v1517
        %1583 = vmatpush1.bf16.msra.mxu0 %v1516
        %1584 = vmatprep.subr.bf16.mxu0 %v1513
        %1585 = vmatpush1.bf16.msra.mxu0 %v1512
        %1586 = vmatprep.subr.bf16.mxu0 %v1509
        %1587 = vmatpush1.bf16.msra.mxu0 %v1508
        %1588 = vmatprep.subr.bf16.mxu0 0
        %1589 = vmatpush2.bf16.msra.mxu0 0
        %1590 = vmatprep.subr.bf16.mxu0 0
        %1591 = vmatpush2.bf16.msra.mxu0 0
        %1592 = vmatprep.subr.bf16.mxu0 0
        %1593 = vmatpush2.bf16.msra.mxu0 0
        %1594 = vmatprep.subr.bf16.mxu0 0
        %1595 = vmatpush2.bf16.msra.mxu0 0
        %1596 = vmatprep.subr.bf16.mxu0 0
        %1597 = vmatpush2.bf16.msra.mxu0 0
        %1598 = vmatprep.subr.bf16.mxu0 0
        %1599 = vmatpush2.bf16.msra.mxu0 0
        %1600 = vmatprep.subr.bf16.mxu0 0
        %1601 = vmatpush2.bf16.msra.mxu0 0
        %1602 = vmatprep.subr.bf16.mxu0 0
        %1603 = vmatpush2.bf16.msra.mxu0 0
        %1604 = vmatprep.mubr.bf16.mxu0 0
        %1605 = vmatmul.mubr.bf16.gmra.mxu0 %v547
        %v1606 = vpop.f32.mrf.mxu0
        %v1607 = vadd.f32 0.0, %v1606
        %v1608 = vpop.f32.mrf.mxu0
        %v1609 = vadd.f32 0.0, %v1608
        %v1610 = vpop.f32.mrf.mxu0
        %v1611 = vadd.f32 0.0, %v1610
        %v1612 = vpop.f32.mrf.mxu0
        %v1613 = vadd.f32 0.0, %v1612
        %1614 = vmatprep.mubr.bf16.mxu0 0
        %1615 = vmatmul.mubr.bf16.gmra.mxu0 %v548
        %v1616 = vpop.f32.mrf.mxu0
        %v1617 = vadd.f32 0.0, %v1616
        %v1618 = vpop.f32.mrf.mxu0
        %v1619 = vadd.f32 0.0, %v1618
        %v1620 = vpop.f32.mrf.mxu0
        %v1621 = vadd.f32 0.0, %v1620
        %v1622 = vpop.f32.mrf.mxu0
        %v1623 = vadd.f32 0.0, %v1622
        %1624 = vmatprep.mubr.bf16.mxu0 0
        %1625 = vmatmul.mubr.bf16.gmra.mxu0 %v549
        %v1626 = vpop.f32.mrf.mxu0
        %v1627 = vadd.f32 0.0, %v1626
        %v1628 = vpop.f32.mrf.mxu0
        %v1629 = vadd.f32 0.0, %v1628
        %v1630 = vpop.f32.mrf.mxu0
        %v1631 = vadd.f32 0.0, %v1630
        %v1632 = vpop.f32.mrf.mxu0
        %v1633 = vadd.f32 0.0, %v1632
        %1634 = vmatprep.mubr.bf16.mxu0 0
        %1635 = vmatmul.mubr.bf16.gmra.mxu0 %v550
        %v1636 = vpop.f32.mrf.mxu0
        %v1637 = vadd.f32 0.0, %v1636
        %v1638 = vpop.f32.mrf.mxu0
        %v1639 = vadd.f32 0.0, %v1638
        %v1640 = vpop.f32.mrf.mxu0
        %v1641 = vadd.f32 0.0, %v1640
        %v1642 = vpop.f32.mrf.mxu0
        %v1643 = vadd.f32 0.0, %v1642
        %1644 = vmatprep.mubr.bf16.mxu0 0
        %1645 = vmatmul.mubr.bf16.gmra.mxu0 %v551
        %v1646 = vpop.f32.mrf.mxu0
        %v1647 = vadd.f32 0.0, %v1646
        %v1648 = vpop.f32.mrf.mxu0
        %v1649 = vadd.f32 0.0, %v1648
        %v1650 = vpop.f32.mrf.mxu0
        %v1651 = vadd.f32 0.0, %v1650
        %v1652 = vpop.f32.mrf.mxu0
        %v1653 = vadd.f32 0.0, %v1652
        %1654 = vmatprep.mubr.bf16.mxu0 0
        %1655 = vmatmul.mubr.bf16.gmra.mxu0 %v552
        %v1656 = vpop.f32.mrf.mxu0
        %v1657 = vadd.f32 0.0, %v1656
        %v1658 = vpop.f32.mrf.mxu0
        %v1659 = vadd.f32 0.0, %v1658
        %v1660 = vpop.f32.mrf.mxu0
        %v1661 = vadd.f32 0.0, %v1660
        %v1662 = vpop.f32.mrf.mxu0
        %v1663 = vadd.f32 0.0, %v1662
        %1664 = vmatprep.mubr.bf16.mxu0 0
        %1665 = vmatmul.mubr.bf16.gmra.mxu0 %v553
        %v1666 = vpop.f32.mrf.mxu0
        %v1667 = vadd.f32 0.0, %v1666
        %v1668 = vpop.f32.mrf.mxu0
        %v1669 = vadd.f32 0.0, %v1668
        %v1670 = vpop.f32.mrf.mxu0
        %v1671 = vadd.f32 0.0, %v1670
        %v1672 = vpop.f32.mrf.mxu0
        %v1673 = vadd.f32 0.0, %v1672
        %1674 = vmatprep.mubr.bf16.mxu0 0
        %1675 = vmatmul.mubr.bf16.gmra.mxu0 %v554
        %v1676 = vpop.f32.mrf.mxu0
        %v1677 = vadd.f32 0.0, %v1676
        %v1678 = vpop.f32.mrf.mxu0
        %v1679 = vadd.f32 0.0, %v1678
        %v1680 = vpop.f32.mrf.mxu0
        %v1681 = vadd.f32 0.0, %v1680
        %v1682 = vpop.f32.mrf.mxu0
        %v1683 = vadd.f32 0.0, %v1682
        %1684 = vmatprep.mubr.bf16.mxu0 0
        %1685 = vmatmul.mubr.bf16.gmra.mxu0 %v555
        %v1686 = vpop.f32.mrf.mxu0
        %v1687 = vadd.f32 0.0, %v1686
        %v1688 = vpop.f32.mrf.mxu0
        %v1689 = vadd.f32 0.0, %v1688
        %v1690 = vpop.f32.mrf.mxu0
        %v1691 = vadd.f32 0.0, %v1690
        %v1692 = vpop.f32.mrf.mxu0
        %v1693 = vadd.f32 0.0, %v1692
        %1694 = vmatprep.mubr.bf16.mxu0 0
        %1695 = vmatmul.mubr.bf16.gmra.mxu0 %v556
        %v1696 = vpop.f32.mrf.mxu0
        %v1697 = vadd.f32 0.0, %v1696
        %v1698 = vpop.f32.mrf.mxu0
        %v1699 = vadd.f32 0.0, %v1698
        %v1700 = vpop.f32.mrf.mxu0
        %v1701 = vadd.f32 0.0, %v1700
        %v1702 = vpop.f32.mrf.mxu0
        %v1703 = vadd.f32 0.0, %v1702
        %1704 = vmatprep.mubr.bf16.mxu0 0
        %1705 = vmatmul.mubr.bf16.gmra.mxu0 %v557
        %v1706 = vpop.f32.mrf.mxu0
        %v1707 = vadd.f32 0.0, %v1706
        %v1708 = vpop.f32.mrf.mxu0
        %v1709 = vadd.f32 0.0, %v1708
        %v1710 = vpop.f32.mrf.mxu0
        %v1711 = vadd.f32 0.0, %v1710
        %v1712 = vpop.f32.mrf.mxu0
        %v1713 = vadd.f32 0.0, %v1712
        %1714 = vmatprep.mubr.bf16.mxu0 0
        %1715 = vmatmul.mubr.bf16.gmra.mxu0 %v558
        %v1716 = vpop.f32.mrf.mxu0
        %v1717 = vadd.f32 0.0, %v1716
        %v1718 = vpop.f32.mrf.mxu0
        %v1719 = vadd.f32 0.0, %v1718
        %v1720 = vpop.f32.mrf.mxu0
        %v1721 = vadd.f32 0.0, %v1720
        %v1722 = vpop.f32.mrf.mxu0
        %v1723 = vadd.f32 0.0, %v1722
        %1724 = vmatprep.mubr.bf16.mxu0 0
        %1725 = vmatmul.mubr.bf16.gmra.mxu0 %v559
        %v1726 = vpop.f32.mrf.mxu0
        %v1727 = vadd.f32 0.0, %v1726
        %v1728 = vpop.f32.mrf.mxu0
        %v1729 = vadd.f32 0.0, %v1728
        %v1730 = vpop.f32.mrf.mxu0
        %v1731 = vadd.f32 0.0, %v1730
        %v1732 = vpop.f32.mrf.mxu0
        %v1733 = vadd.f32 0.0, %v1732
        %1734 = vmatprep.mubr.bf16.mxu0 0
        %1735 = vmatmul.mubr.bf16.gmra.mxu0 %v560
        %v1736 = vpop.f32.mrf.mxu0
        %v1737 = vadd.f32 0.0, %v1736
        %v1738 = vpop.f32.mrf.mxu0
        %v1739 = vadd.f32 0.0, %v1738
        %v1740 = vpop.f32.mrf.mxu0
        %v1741 = vadd.f32 0.0, %v1740
        %v1742 = vpop.f32.mrf.mxu0
        %v1743 = vadd.f32 0.0, %v1742
        %1744 = vmatprep.mubr.bf16.mxu0 0
        %1745 = vmatmul.mubr.bf16.gmra.mxu0 %v561
        %v1746 = vpop.f32.mrf.mxu0
        %v1747 = vadd.f32 0.0, %v1746
        %v1748 = vpop.f32.mrf.mxu0
        %v1749 = vadd.f32 0.0, %v1748
        %v1750 = vpop.f32.mrf.mxu0
        %v1751 = vadd.f32 0.0, %v1750
        %v1752 = vpop.f32.mrf.mxu0
        %v1753 = vadd.f32 0.0, %v1752
        %1754 = vmatprep.mubr.bf16.mxu0 0
        %1755 = vmatmul.mubr.bf16.gmra.mxu0 %v562
        %v1756 = vpop.f32.mrf.mxu0
        %v1757 = vadd.f32 0.0, %v1756
        %v1758 = vpop.f32.mrf.mxu0
        %v1759 = vadd.f32 0.0, %v1758
        %v1760 = vpop.f32.mrf.mxu0
        %v1761 = vadd.f32 0.0, %v1760
        %v1762 = vpop.f32.mrf.mxu0
        %v1763 = vadd.f32 0.0, %v1762
        %1764 = vdwg.mxu0
        %1765 = vmatprep.subr.bf16.mxu0 %v1539
        %1766 = vmatpush1.bf16.msra.mxu0 %v1538
        %1767 = vmatprep.subr.bf16.mxu0 %v1535
        %1768 = vmatpush1.bf16.msra.mxu0 %v1534
        %1769 = vmatprep.subr.bf16.mxu0 %v1531
        %1770 = vmatpush1.bf16.msra.mxu0 %v1530
        %1771 = vmatprep.subr.bf16.mxu0 %v1527
        %1772 = vmatpush1.bf16.msra.mxu0 %v1526
        %1773 = vmatprep.subr.bf16.mxu0 %v1523
        %1774 = vmatpush1.bf16.msra.mxu0 %v1522
        %1775 = vmatprep.subr.bf16.mxu0 %v1519
        %1776 = vmatpush1.bf16.msra.mxu0 %v1518
        %1777 = vmatprep.subr.bf16.mxu0 %v1515
        %1778 = vmatpush1.bf16.msra.mxu0 %v1514
        %1779 = vmatprep.subr.bf16.mxu0 %v1511
        %1780 = vmatpush1.bf16.msra.mxu0 %v1510
        %1781 = vmatprep.subr.bf16.mxu0 0
        %1782 = vmatpush2.bf16.msra.mxu0 0
        %1783 = vmatprep.subr.bf16.mxu0 0
        %1784 = vmatpush2.bf16.msra.mxu0 0
        %1785 = vmatprep.subr.bf16.mxu0 0
        %1786 = vmatpush2.bf16.msra.mxu0 0
        %1787 = vmatprep.subr.bf16.mxu0 0
        %1788 = vmatpush2.bf16.msra.mxu0 0
        %1789 = vmatprep.subr.bf16.mxu0 0
        %1790 = vmatpush2.bf16.msra.mxu0 0
        %1791 = vmatprep.subr.bf16.mxu0 0
        %1792 = vmatpush2.bf16.msra.mxu0 0
        %1793 = vmatprep.subr.bf16.mxu0 0
        %1794 = vmatpush2.bf16.msra.mxu0 0
        %1795 = vmatprep.subr.bf16.mxu0 0
        %1796 = vmatpush2.bf16.msra.mxu0 0
        %1797 = vmatprep.mubr.bf16.mxu0 0
        %1798 = vmatmul.mubr.bf16.gmra.mxu0 %v547
        %v1799 = vpop.f32.mrf.mxu0
        %v1800 = vadd.f32 0.0, %v1799
        %v1801 = vpop.f32.mrf.mxu0
        %v1802 = vadd.f32 0.0, %v1801
        %v1803 = vpop.f32.mrf.mxu0
        %v1804 = vadd.f32 0.0, %v1803
        %v1805 = vpop.f32.mrf.mxu0
        %v1806 = vadd.f32 0.0, %v1805
        %1807 = vmatprep.mubr.bf16.mxu0 0
        %1808 = vmatmul.mubr.bf16.gmra.mxu0 %v548
        %v1809 = vpop.f32.mrf.mxu0
        %v1810 = vadd.f32 0.0, %v1809
        %v1811 = vpop.f32.mrf.mxu0
        %v1812 = vadd.f32 0.0, %v1811
        %v1813 = vpop.f32.mrf.mxu0
        %v1814 = vadd.f32 0.0, %v1813
        %v1815 = vpop.f32.mrf.mxu0
        %v1816 = vadd.f32 0.0, %v1815
        %1817 = vmatprep.mubr.bf16.mxu0 0
        %1818 = vmatmul.mubr.bf16.gmra.mxu0 %v549
        %v1819 = vpop.f32.mrf.mxu0
        %v1820 = vadd.f32 0.0, %v1819
        %v1821 = vpop.f32.mrf.mxu0
        %v1822 = vadd.f32 0.0, %v1821
        %v1823 = vpop.f32.mrf.mxu0
        %v1824 = vadd.f32 0.0, %v1823
        %v1825 = vpop.f32.mrf.mxu0
        %v1826 = vadd.f32 0.0, %v1825
        %1827 = vmatprep.mubr.bf16.mxu0 0
        %1828 = vmatmul.mubr.bf16.gmra.mxu0 %v550
        %v1829 = vpop.f32.mrf.mxu0
        %v1830 = vadd.f32 0.0, %v1829
        %v1831 = vpop.f32.mrf.mxu0
        %v1832 = vadd.f32 0.0, %v1831
        %v1833 = vpop.f32.mrf.mxu0
        %v1834 = vadd.f32 0.0, %v1833
        %v1835 = vpop.f32.mrf.mxu0
        %v1836 = vadd.f32 0.0, %v1835
        %1837 = vmatprep.mubr.bf16.mxu0 0
        %1838 = vmatmul.mubr.bf16.gmra.mxu0 %v551
        %v1839 = vpop.f32.mrf.mxu0
        %v1840 = vadd.f32 0.0, %v1839
        %v1841 = vpop.f32.mrf.mxu0
        %v1842 = vadd.f32 0.0, %v1841
        %v1843 = vpop.f32.mrf.mxu0
        %v1844 = vadd.f32 0.0, %v1843
        %v1845 = vpop.f32.mrf.mxu0
        %v1846 = vadd.f32 0.0, %v1845
        %1847 = vmatprep.mubr.bf16.mxu0 0
        %1848 = vmatmul.mubr.bf16.gmra.mxu0 %v552
        %v1849 = vpop.f32.mrf.mxu0
        %v1850 = vadd.f32 0.0, %v1849
        %v1851 = vpop.f32.mrf.mxu0
        %v1852 = vadd.f32 0.0, %v1851
        %v1853 = vpop.f32.mrf.mxu0
        %v1854 = vadd.f32 0.0, %v1853
        %v1855 = vpop.f32.mrf.mxu0
        %v1856 = vadd.f32 0.0, %v1855
        %1857 = vmatprep.mubr.bf16.mxu0 0
        %1858 = vmatmul.mubr.bf16.gmra.mxu0 %v553
        %v1859 = vpop.f32.mrf.mxu0
        %v1860 = vadd.f32 0.0, %v1859
        %v1861 = vpop.f32.mrf.mxu0
        %v1862 = vadd.f32 0.0, %v1861
        %v1863 = vpop.f32.mrf.mxu0
        %v1864 = vadd.f32 0.0, %v1863
        %v1865 = vpop.f32.mrf.mxu0
        %v1866 = vadd.f32 0.0, %v1865
        %1867 = vmatprep.mubr.bf16.mxu0 0
        %1868 = vmatmul.mubr.bf16.gmra.mxu0 %v554
        %v1869 = vpop.f32.mrf.mxu0
        %v1870 = vadd.f32 0.0, %v1869
        %v1871 = vpop.f32.mrf.mxu0
        %v1872 = vadd.f32 0.0, %v1871
        %v1873 = vpop.f32.mrf.mxu0
        %v1874 = vadd.f32 0.0, %v1873
        %v1875 = vpop.f32.mrf.mxu0
        %v1876 = vadd.f32 0.0, %v1875
        %1877 = vmatprep.mubr.bf16.mxu0 0
        %1878 = vmatmul.mubr.bf16.gmra.mxu0 %v555
        %v1879 = vpop.f32.mrf.mxu0
        %v1880 = vadd.f32 0.0, %v1879
        %v1881 = vpop.f32.mrf.mxu0
        %v1882 = vadd.f32 0.0, %v1881
        %v1883 = vpop.f32.mrf.mxu0
        %v1884 = vadd.f32 0.0, %v1883
        %v1885 = vpop.f32.mrf.mxu0
        %v1886 = vadd.f32 0.0, %v1885
        %1887 = vmatprep.mubr.bf16.mxu0 0
        %1888 = vmatmul.mubr.bf16.gmra.mxu0 %v556
        %v1889 = vpop.f32.mrf.mxu0
        %v1890 = vadd.f32 0.0, %v1889
        %v1891 = vpop.f32.mrf.mxu0
        %v1892 = vadd.f32 0.0, %v1891
        %v1893 = vpop.f32.mrf.mxu0
        %v1894 = vadd.f32 0.0, %v1893
        %v1895 = vpop.f32.mrf.mxu0
        %v1896 = vadd.f32 0.0, %v1895
        %1897 = vmatprep.mubr.bf16.mxu0 0
        %1898 = vmatmul.mubr.bf16.gmra.mxu0 %v557
        %v1899 = vpop.f32.mrf.mxu0
        %v1900 = vadd.f32 0.0, %v1899
        %v1901 = vpop.f32.mrf.mxu0
        %v1902 = vadd.f32 0.0, %v1901
        %v1903 = vpop.f32.mrf.mxu0
        %v1904 = vadd.f32 0.0, %v1903
        %v1905 = vpop.f32.mrf.mxu0
        %v1906 = vadd.f32 0.0, %v1905
        %1907 = vmatprep.mubr.bf16.mxu0 0
        %1908 = vmatmul.mubr.bf16.gmra.mxu0 %v558
        %v1909 = vpop.f32.mrf.mxu0
        %v1910 = vadd.f32 0.0, %v1909
        %v1911 = vpop.f32.mrf.mxu0
        %v1912 = vadd.f32 0.0, %v1911
        %v1913 = vpop.f32.mrf.mxu0
        %v1914 = vadd.f32 0.0, %v1913
        %v1915 = vpop.f32.mrf.mxu0
        %v1916 = vadd.f32 0.0, %v1915
        %1917 = vmatprep.mubr.bf16.mxu0 0
        %1918 = vmatmul.mubr.bf16.gmra.mxu0 %v559
        %v1919 = vpop.f32.mrf.mxu0
        %v1920 = vadd.f32 0.0, %v1919
        %v1921 = vpop.f32.mrf.mxu0
        %v1922 = vadd.f32 0.0, %v1921
        %v1923 = vpop.f32.mrf.mxu0
        %v1924 = vadd.f32 0.0, %v1923
        %v1925 = vpop.f32.mrf.mxu0
        %v1926 = vadd.f32 0.0, %v1925
        %1927 = vmatprep.mubr.bf16.mxu0 0
        %1928 = vmatmul.mubr.bf16.gmra.mxu0 %v560
        %v1929 = vpop.f32.mrf.mxu0
        %v1930 = vadd.f32 0.0, %v1929
        %v1931 = vpop.f32.mrf.mxu0
        %v1932 = vadd.f32 0.0, %v1931
        %v1933 = vpop.f32.mrf.mxu0
        %v1934 = vadd.f32 0.0, %v1933
        %v1935 = vpop.f32.mrf.mxu0
        %v1936 = vadd.f32 0.0, %v1935
        %1937 = vmatprep.mubr.bf16.mxu0 0
        %1938 = vmatmul.mubr.bf16.gmra.mxu0 %v561
        %v1939 = vpop.f32.mrf.mxu0
        %v1940 = vadd.f32 0.0, %v1939
        %v1941 = vpop.f32.mrf.mxu0
        %v1942 = vadd.f32 0.0, %v1941
        %v1943 = vpop.f32.mrf.mxu0
        %v1944 = vadd.f32 0.0, %v1943
        %v1945 = vpop.f32.mrf.mxu0
        %v1946 = vadd.f32 0.0, %v1945
        %1947 = vmatprep.mubr.bf16.mxu0 0
        %1948 = vmatmul.mubr.bf16.gmra.mxu0 %v562
        %v1949 = vpop.f32.mrf.mxu0
        %v1950 = vadd.f32 0.0, %v1949
        %v1951 = vpop.f32.mrf.mxu0
        %v1952 = vadd.f32 0.0, %v1951
        %v1953 = vpop.f32.mrf.mxu0
        %v1954 = vadd.f32 0.0, %v1953
        %v1955 = vpop.f32.mrf.mxu0
        %v1956 = vadd.f32 0.0, %v1955
        %1957 = vdwg.mxu0
        %v1958 = vld [vmem:[%s365] sm:$0xff]
        %v1959 = vld [vmem:[%s365 + $0x8] sm:$0xff]
        %v1960 = vld [vmem:[%s365 + $0x10] sm:$0xff]
        %v1961 = vld [vmem:[%s365 + $0x18] sm:$0xff]
        %v1962 = vld [vmem:[%s365 + $0x20] sm:$0xff]
        %v1963 = vld [vmem:[%s365 + $0x28] sm:$0xff]
        %v1964 = vld [vmem:[%s365 + $0x30] sm:$0xff]
        %v1965 = vld [vmem:[%s365 + $0x38] sm:$0xff]
        %v1966 = vld [vmem:[%s365 + $0x40] sm:$0xff]
        %v1967 = vld [vmem:[%s365 + $0x48] sm:$0xff]
        %v1968 = vld [vmem:[%s365 + $0x50] sm:$0xff]
        %v1969 = vld [vmem:[%s365 + $0x58] sm:$0xff]
        %v1970 = vld [vmem:[%s365 + $0x60] sm:$0xff]
        %v1971 = vld [vmem:[%s365 + $0x68] sm:$0xff]
        %v1972 = vld [vmem:[%s365 + $0x70] sm:$0xff]
        %v1973 = vld [vmem:[%s365 + $0x78] sm:$0xff]
        %vm1974 = vsmask.f32 7424
        %v1976 = vshrl.u32 %v1348, 16
        %v1978 = vshll.u32 %v1348, 16
        %v1980 = vrot.slane %v1978, 1
        %v1981 = vor.u32 %v1976, %v1980
        %v1983 = vshll.u32 %v1349, 16
        %v1985 = vrot.slane %v1983, 1
        %v1986 = vsel %vm1974, %v1981, %v1985
        %v1987 = vshrl.u32 %v1349, 16
        %v1989 = vor.u32 %v1987, %v1985
        %v1991 = vshll.u32 %v1350, 16
        %v1993 = vrot.slane %v1991, 1
        %v1994 = vsel %vm1974, %v1989, %v1993
        %v1995 = vshrl.u32 %v1350, 16
        %v1997 = vor.u32 %v1995, %v1993
        %v1999 = vshll.u32 %v1351, 16
        %v2001 = vrot.slane %v1999, 1
        %v2002 = vsel %vm1974, %v1997, %v2001
        %v2003 = vshrl.u32 %v1351, 16
        %v2005 = vor.u32 %v2003, %v2001
        %v2007 = vshll.u32 %v1352, 16
        %v2009 = vrot.slane %v2007, 1
        %v2010 = vsel %vm1974, %v2005, %v2009
        %v2011 = vshrl.u32 %v1352, 16
        %v2013 = vor.u32 %v2011, %v2009
        %v2015 = vshll.u32 %v1353, 16
        %v2017 = vrot.slane %v2015, 1
        %v2018 = vsel %vm1974, %v2013, %v2017
        %v2019 = vshrl.u32 %v1353, 16
        %v2021 = vor.u32 %v2019, %v2017
        %v2023 = vshll.u32 %v1354, 16
        %v2025 = vrot.slane %v2023, 1
        %v2026 = vsel %vm1974, %v2021, %v2025
        %v2027 = vshrl.u32 %v1354, 16
        %v2029 = vor.u32 %v2027, %v2025
        %v2031 = vshll.u32 %v1355, 16
        %v2033 = vrot.slane %v2031, 1
        %v2034 = vsel %vm1974, %v2029, %v2033
        %v2035 = vshrl.u32 %v1355, 16
        %v2037 = vor.u32 %v2035, %v2033
        %v2039 = vshll.u32 %v1356, 16
        %v2041 = vrot.slane %v2039, 1
        %v2042 = vsel %vm1974, %v2037, %v2041
        %v2043 = vshrl.u32 %v1356, 16
        %v2045 = vor.u32 %v2043, %v2041
        %v2047 = vshll.u32 %v1357, 16
        %v2049 = vrot.slane %v2047, 1
        %v2050 = vsel %vm1974, %v2045, %v2049
        %v2051 = vshrl.u32 %v1357, 16
        %v2053 = vor.u32 %v2051, %v2049
        %v2055 = vshll.u32 %v1358, 16
        %v2057 = vrot.slane %v2055, 1
        %v2058 = vsel %vm1974, %v2053, %v2057
        %v2059 = vshrl.u32 %v1358, 16
        %v2061 = vor.u32 %v2059, %v2057
        %v2063 = vshll.u32 %v1359, 16
        %v2065 = vrot.slane %v2063, 1
        %v2066 = vsel %vm1974, %v2061, %v2065
        %v2067 = vshrl.u32 %v1359, 16
        %v2069 = vor.u32 %v2067, %v2065
        %v2071 = vshll.u32 %v1360, 16
        %v2073 = vrot.slane %v2071, 1
        %v2074 = vsel %vm1974, %v2069, %v2073
        %v2075 = vshrl.u32 %v1360, 16
        %v2077 = vor.u32 %v2075, %v2073
        %v2079 = vshll.u32 %v1361, 16
        %v2081 = vrot.slane %v2079, 1
        %v2082 = vsel %vm1974, %v2077, %v2081
        %v2083 = vshrl.u32 %v1361, 16
        %v2085 = vor.u32 %v2083, %v2081
        %v2087 = vshll.u32 %v1362, 16
        %v2089 = vrot.slane %v2087, 1
        %v2090 = vsel %vm1974, %v2085, %v2089
        %v2091 = vshrl.u32 %v1362, 16
        %v2093 = vor.u32 %v2091, %v2089
        %v2095 = vshll.u32 %v1363, 16
        %v2097 = vrot.slane %v2095, 1
        %v2098 = vsel %vm1974, %v2093, %v2097
        %v2099 = vshrl.u32 %v1363, 16
        %v2101 = vor.u32 %v2099, %v2097
        %v2103 = vshll.u32 0, 16
        %v2105 = vrot.slane %v2103, 1
        %v2106 = vsel %vm1974, %v2101, %v2105
        %v2139 = vunpack.c.l.b16 %v1958
        %v2140 = vunpack.c.h.b16 %v1958
        %v2141 = vunpack.c.l.b16 %v1959
        %v2142 = vunpack.c.h.b16 %v1959
        %v2143 = vunpack.c.l.b16 %v1960
        %v2144 = vunpack.c.h.b16 %v1960
        %v2145 = vunpack.c.l.b16 %v1961
        %v2146 = vunpack.c.h.b16 %v1961
        %v2147 = vunpack.c.l.b16 %v1962
        %v2148 = vunpack.c.h.b16 %v1962
        %v2149 = vunpack.c.l.b16 %v1963
        %v2150 = vunpack.c.h.b16 %v1963
        %v2151 = vunpack.c.l.b16 %v1964
        %v2152 = vunpack.c.h.b16 %v1964
        %v2153 = vunpack.c.l.b16 %v1965
        %v2154 = vunpack.c.h.b16 %v1965
        %v2155 = vunpack.c.l.b16 %v1966
        %v2156 = vunpack.c.h.b16 %v1966
        %v2157 = vunpack.c.l.b16 %v1967
        %v2158 = vunpack.c.h.b16 %v1967
        %v2159 = vunpack.c.l.b16 %v1968
        %v2160 = vunpack.c.h.b16 %v1968
        %v2161 = vunpack.c.l.b16 %v1969
        %v2162 = vunpack.c.h.b16 %v1969
        %v2163 = vunpack.c.l.b16 %v1970
        %v2164 = vunpack.c.h.b16 %v1970
        %v2165 = vunpack.c.l.b16 %v1971
        %v2166 = vunpack.c.h.b16 %v1971
        %v2167 = vunpack.c.l.b16 %v1972
        %v2168 = vunpack.c.h.b16 %v1972
        %v2169 = vunpack.c.l.b16 %v1973
        %v2170 = vunpack.c.h.b16 %v1973
        %v2171 = vpack.c.b16 %v2141, %v2139
        %v2172 = vpack.c.b16 %v2142, %v2140
        %v2173 = vpack.c.b16 %v2145, %v2143
        %v2174 = vpack.c.b16 %v2146, %v2144
        %v2175 = vpack.c.b16 %v2149, %v2147
        %v2176 = vpack.c.b16 %v2150, %v2148
        %v2177 = vpack.c.b16 %v2153, %v2151
        %v2178 = vpack.c.b16 %v2154, %v2152
        %v2179 = vpack.c.b16 %v2157, %v2155
        %v2180 = vpack.c.b16 %v2158, %v2156
        %v2181 = vpack.c.b16 %v2161, %v2159
        %v2182 = vpack.c.b16 %v2162, %v2160
        %v2183 = vpack.c.b16 %v2165, %v2163
        %v2184 = vpack.c.b16 %v2166, %v2164
        %v2185 = vpack.c.b16 %v2169, %v2167
        %v2186 = vpack.c.b16 %v2170, %v2168
        %2203 = vmatprep.subr.bf16.mxu0 %v2186
        %2204 = vmatpush1.bf16.msra.mxu0 %v2185
        %2205 = vmatprep.subr.bf16.mxu0 %v2184
        %2206 = vmatpush1.bf16.msra.mxu0 %v2183
        %2207 = vmatprep.subr.bf16.mxu0 %v2182
        %2208 = vmatpush1.bf16.msra.mxu0 %v2181
        %2209 = vmatprep.subr.bf16.mxu0 %v2180
        %2210 = vmatpush1.bf16.msra.mxu0 %v2179
        %2211 = vmatprep.subr.bf16.mxu0 %v2178
        %2212 = vmatpush1.bf16.msra.mxu0 %v2177
        %2213 = vmatprep.subr.bf16.mxu0 %v2176
        %2214 = vmatpush1.bf16.msra.mxu0 %v2175
        %2215 = vmatprep.subr.bf16.mxu0 %v2174
        %2216 = vmatpush1.bf16.msra.mxu0 %v2173
        %2217 = vmatprep.subr.bf16.mxu0 %v2172
        %2218 = vmatpush1.bf16.msra.mxu0 %v2171
        %2219 = vmatprep.subr.bf16.mxu0 0
        %2220 = vmatpush2.bf16.msra.mxu0 0
        %2221 = vmatprep.subr.bf16.mxu0 0
        %2222 = vmatpush2.bf16.msra.mxu0 0
        %2223 = vmatprep.subr.bf16.mxu0 0
        %2224 = vmatpush2.bf16.msra.mxu0 0
        %2225 = vmatprep.subr.bf16.mxu0 0
        %2226 = vmatpush2.bf16.msra.mxu0 0
        %2227 = vmatprep.subr.bf16.mxu0 0
        %2228 = vmatpush2.bf16.msra.mxu0 0
        %2229 = vmatprep.subr.bf16.mxu0 0
        %2230 = vmatpush2.bf16.msra.mxu0 0
        %2231 = vmatprep.subr.bf16.mxu0 0
        %2232 = vmatpush2.bf16.msra.mxu0 0
        %2233 = vmatprep.subr.bf16.mxu0 0
        %2234 = vmatpush2.bf16.msra.mxu0 0
        %2235 = vmatprep.mubr.bf16.mxu0 0
        %2236 = vmatmul.mubr.bf16.gmra.mxu0 %v1986
        %v2237 = vpop.f32.mrf.mxu0
        %v2238 = vadd.f32 0.0, %v2237
        %v2239 = vpop.f32.mrf.mxu0
        %v2240 = vadd.f32 0.0, %v2239
        %v2241 = vpop.f32.mrf.mxu0
        %v2242 = vadd.f32 0.0, %v2241
        %v2243 = vpop.f32.mrf.mxu0
        %v2244 = vadd.f32 0.0, %v2243
        %2245 = vmatprep.mubr.bf16.mxu0 0
        %2246 = vmatmul.mubr.bf16.gmra.mxu0 %v1994
        %v2247 = vpop.f32.mrf.mxu0
        %v2248 = vadd.f32 0.0, %v2247
        %v2249 = vpop.f32.mrf.mxu0
        %v2250 = vadd.f32 0.0, %v2249
        %v2251 = vpop.f32.mrf.mxu0
        %v2252 = vadd.f32 0.0, %v2251
        %v2253 = vpop.f32.mrf.mxu0
        %v2254 = vadd.f32 0.0, %v2253
        %2255 = vmatprep.mubr.bf16.mxu0 0
        %2256 = vmatmul.mubr.bf16.gmra.mxu0 %v2002
        %v2257 = vpop.f32.mrf.mxu0
        %v2258 = vadd.f32 0.0, %v2257
        %v2259 = vpop.f32.mrf.mxu0
        %v2260 = vadd.f32 0.0, %v2259
        %v2261 = vpop.f32.mrf.mxu0
        %v2262 = vadd.f32 0.0, %v2261
        %v2263 = vpop.f32.mrf.mxu0
        %v2264 = vadd.f32 0.0, %v2263
        %2265 = vmatprep.mubr.bf16.mxu0 0
        %2266 = vmatmul.mubr.bf16.gmra.mxu0 %v2010
        %v2267 = vpop.f32.mrf.mxu0
        %v2268 = vadd.f32 0.0, %v2267
        %v2269 = vpop.f32.mrf.mxu0
        %v2270 = vadd.f32 0.0, %v2269
        %v2271 = vpop.f32.mrf.mxu0
        %v2272 = vadd.f32 0.0, %v2271
        %v2273 = vpop.f32.mrf.mxu0
        %v2274 = vadd.f32 0.0, %v2273
        %2275 = vmatprep.mubr.bf16.mxu0 0
        %2276 = vmatmul.mubr.bf16.gmra.mxu0 %v2018
        %v2277 = vpop.f32.mrf.mxu0
        %v2278 = vadd.f32 0.0, %v2277
        %v2279 = vpop.f32.mrf.mxu0
        %v2280 = vadd.f32 0.0, %v2279
        %v2281 = vpop.f32.mrf.mxu0
        %v2282 = vadd.f32 0.0, %v2281
        %v2283 = vpop.f32.mrf.mxu0
        %v2284 = vadd.f32 0.0, %v2283
        %2285 = vmatprep.mubr.bf16.mxu0 0
        %2286 = vmatmul.mubr.bf16.gmra.mxu0 %v2026
        %v2287 = vpop.f32.mrf.mxu0
        %v2288 = vadd.f32 0.0, %v2287
        %v2289 = vpop.f32.mrf.mxu0
        %v2290 = vadd.f32 0.0, %v2289
        %v2291 = vpop.f32.mrf.mxu0
        %v2292 = vadd.f32 0.0, %v2291
        %v2293 = vpop.f32.mrf.mxu0
        %v2294 = vadd.f32 0.0, %v2293
        %2295 = vmatprep.mubr.bf16.mxu0 0
        %2296 = vmatmul.mubr.bf16.gmra.mxu0 %v2034
        %v2297 = vpop.f32.mrf.mxu0
        %v2298 = vadd.f32 0.0, %v2297
        %v2299 = vpop.f32.mrf.mxu0
        %v2300 = vadd.f32 0.0, %v2299
        %v2301 = vpop.f32.mrf.mxu0
        %v2302 = vadd.f32 0.0, %v2301
        %v2303 = vpop.f32.mrf.mxu0
        %v2304 = vadd.f32 0.0, %v2303
        %2305 = vmatprep.mubr.bf16.mxu0 0
        %2306 = vmatmul.mubr.bf16.gmra.mxu0 %v2042
        %v2307 = vpop.f32.mrf.mxu0
        %v2308 = vadd.f32 0.0, %v2307
        %v2309 = vpop.f32.mrf.mxu0
        %v2310 = vadd.f32 0.0, %v2309
        %v2311 = vpop.f32.mrf.mxu0
        %v2312 = vadd.f32 0.0, %v2311
        %v2313 = vpop.f32.mrf.mxu0
        %v2314 = vadd.f32 0.0, %v2313
        %2315 = vmatprep.mubr.bf16.mxu0 0
        %2316 = vmatmul.mubr.bf16.gmra.mxu0 %v2050
        %v2317 = vpop.f32.mrf.mxu0
        %v2318 = vadd.f32 0.0, %v2317
        %v2319 = vpop.f32.mrf.mxu0
        %v2320 = vadd.f32 0.0, %v2319
        %v2321 = vpop.f32.mrf.mxu0
        %v2322 = vadd.f32 0.0, %v2321
        %v2323 = vpop.f32.mrf.mxu0
        %v2324 = vadd.f32 0.0, %v2323
        %2325 = vmatprep.mubr.bf16.mxu0 0
        %2326 = vmatmul.mubr.bf16.gmra.mxu0 %v2058
        %v2327 = vpop.f32.mrf.mxu0
        %v2328 = vadd.f32 0.0, %v2327
        %v2329 = vpop.f32.mrf.mxu0
        %v2330 = vadd.f32 0.0, %v2329
        %v2331 = vpop.f32.mrf.mxu0
        %v2332 = vadd.f32 0.0, %v2331
        %v2333 = vpop.f32.mrf.mxu0
        %v2334 = vadd.f32 0.0, %v2333
        %2335 = vmatprep.mubr.bf16.mxu0 0
        %2336 = vmatmul.mubr.bf16.gmra.mxu0 %v2066
        %v2337 = vpop.f32.mrf.mxu0
        %v2338 = vadd.f32 0.0, %v2337
        %v2339 = vpop.f32.mrf.mxu0
        %v2340 = vadd.f32 0.0, %v2339
        %v2341 = vpop.f32.mrf.mxu0
        %v2342 = vadd.f32 0.0, %v2341
        %v2343 = vpop.f32.mrf.mxu0
        %v2344 = vadd.f32 0.0, %v2343
        %2345 = vmatprep.mubr.bf16.mxu0 0
        %2346 = vmatmul.mubr.bf16.gmra.mxu0 %v2074
        %v2347 = vpop.f32.mrf.mxu0
        %v2348 = vadd.f32 0.0, %v2347
        %v2349 = vpop.f32.mrf.mxu0
        %v2350 = vadd.f32 0.0, %v2349
        %v2351 = vpop.f32.mrf.mxu0
        %v2352 = vadd.f32 0.0, %v2351
        %v2353 = vpop.f32.mrf.mxu0
        %v2354 = vadd.f32 0.0, %v2353
        %2355 = vmatprep.mubr.bf16.mxu0 0
        %2356 = vmatmul.mubr.bf16.gmra.mxu0 %v2082
        %v2357 = vpop.f32.mrf.mxu0
        %v2358 = vadd.f32 0.0, %v2357
        %v2359 = vpop.f32.mrf.mxu0
        %v2360 = vadd.f32 0.0, %v2359
        %v2361 = vpop.f32.mrf.mxu0
        %v2362 = vadd.f32 0.0, %v2361
        %v2363 = vpop.f32.mrf.mxu0
        %v2364 = vadd.f32 0.0, %v2363
        %2365 = vmatprep.mubr.bf16.mxu0 0
        %2366 = vmatmul.mubr.bf16.gmra.mxu0 %v2090
        %v2367 = vpop.f32.mrf.mxu0
        %v2368 = vadd.f32 0.0, %v2367
        %v2369 = vpop.f32.mrf.mxu0
        %v2370 = vadd.f32 0.0, %v2369
        %v2371 = vpop.f32.mrf.mxu0
        %v2372 = vadd.f32 0.0, %v2371
        %v2373 = vpop.f32.mrf.mxu0
        %v2374 = vadd.f32 0.0, %v2373
        %2375 = vmatprep.mubr.bf16.mxu0 0
        %2376 = vmatmul.mubr.bf16.gmra.mxu0 %v2098
        %v2377 = vpop.f32.mrf.mxu0
        %v2378 = vadd.f32 0.0, %v2377
        %v2379 = vpop.f32.mrf.mxu0
        %v2380 = vadd.f32 0.0, %v2379
        %v2381 = vpop.f32.mrf.mxu0
        %v2382 = vadd.f32 0.0, %v2381
        %v2383 = vpop.f32.mrf.mxu0
        %v2384 = vadd.f32 0.0, %v2383
        %2385 = vmatprep.mubr.bf16.mxu0 0
        %2386 = vmatmul.mubr.bf16.gmra.mxu0 %v2106
        %v2387 = vpop.f32.mrf.mxu0
        %v2388 = vadd.f32 0.0, %v2387
        %v2389 = vpop.f32.mrf.mxu0
        %v2390 = vadd.f32 0.0, %v2389
        %v2391 = vpop.f32.mrf.mxu0
        %v2392 = vadd.f32 0.0, %v2391
        %v2393 = vpop.f32.mrf.mxu0
        %v2394 = vadd.f32 0.0, %v2393
        %2395 = vdwg.mxu0
        %v2396 = vld [vmem:[%s374] sm:$0xff]
        %v2397 = vld [vmem:[%s374 + $0x8] sm:$0xff]
        %v2398 = vld [vmem:[%s374 + $0x10] sm:$0xff]
        %v2399 = vld [vmem:[%s374 + $0x18] sm:$0xff]
        %v2400 = vld [vmem:[%s374 + $0x20] sm:$0xff]
        %v2401 = vld [vmem:[%s374 + $0x28] sm:$0xff]
        %v2402 = vld [vmem:[%s374 + $0x30] sm:$0xff]
        %v2403 = vld [vmem:[%s374 + $0x38] sm:$0xff]
        %v2404 = vld [vmem:[%s374 + $0x40] sm:$0xff]
        %v2405 = vld [vmem:[%s374 + $0x48] sm:$0xff]
        %v2406 = vld [vmem:[%s374 + $0x50] sm:$0xff]
        %v2407 = vld [vmem:[%s374 + $0x58] sm:$0xff]
        %v2408 = vld [vmem:[%s374 + $0x60] sm:$0xff]
        %v2409 = vld [vmem:[%s374 + $0x68] sm:$0xff]
        %v2410 = vld [vmem:[%s374 + $0x70] sm:$0xff]
        %v2411 = vld [vmem:[%s374 + $0x78] sm:$0xff]
        %v2428 = vunpack.c.l.b16 %v2396
        %v2429 = vunpack.c.h.b16 %v2396
        %v2430 = vunpack.c.l.b16 %v2397
        %v2431 = vunpack.c.h.b16 %v2397
        %v2432 = vunpack.c.l.b16 %v2398
        %v2433 = vunpack.c.h.b16 %v2398
        %v2434 = vunpack.c.l.b16 %v2399
        %v2435 = vunpack.c.h.b16 %v2399
        %v2436 = vunpack.c.l.b16 %v2400
        %v2437 = vunpack.c.h.b16 %v2400
        %v2438 = vunpack.c.l.b16 %v2401
        %v2439 = vunpack.c.h.b16 %v2401
        %v2440 = vunpack.c.l.b16 %v2402
        %v2441 = vunpack.c.h.b16 %v2402
        %v2442 = vunpack.c.l.b16 %v2403
        %v2443 = vunpack.c.h.b16 %v2403
        %v2444 = vunpack.c.l.b16 %v2404
        %v2445 = vunpack.c.h.b16 %v2404
        %v2446 = vunpack.c.l.b16 %v2405
        %v2447 = vunpack.c.h.b16 %v2405
        %v2448 = vunpack.c.l.b16 %v2406
        %v2449 = vunpack.c.h.b16 %v2406
        %v2450 = vunpack.c.l.b16 %v2407
        %v2451 = vunpack.c.h.b16 %v2407
        %v2452 = vunpack.c.l.b16 %v2408
        %v2453 = vunpack.c.h.b16 %v2408
        %v2454 = vunpack.c.l.b16 %v2409
        %v2455 = vunpack.c.h.b16 %v2409
        %v2456 = vunpack.c.l.b16 %v2410
        %v2457 = vunpack.c.h.b16 %v2410
        %v2458 = vunpack.c.l.b16 %v2411
        %v2459 = vunpack.c.h.b16 %v2411
        %v2460 = vpack.c.b16 %v2430, %v2428
        %v2461 = vpack.c.b16 %v2431, %v2429
        %v2462 = vpack.c.b16 %v2434, %v2432
        %v2463 = vpack.c.b16 %v2435, %v2433
        %v2464 = vpack.c.b16 %v2438, %v2436
        %v2465 = vpack.c.b16 %v2439, %v2437
        %v2466 = vpack.c.b16 %v2442, %v2440
        %v2467 = vpack.c.b16 %v2443, %v2441
        %v2468 = vpack.c.b16 %v2446, %v2444
        %v2469 = vpack.c.b16 %v2447, %v2445
        %v2470 = vpack.c.b16 %v2450, %v2448
        %v2471 = vpack.c.b16 %v2451, %v2449
        %v2472 = vpack.c.b16 %v2454, %v2452
        %v2473 = vpack.c.b16 %v2455, %v2453
        %v2474 = vpack.c.b16 %v2458, %v2456
        %v2475 = vpack.c.b16 %v2459, %v2457
        %2492 = vmatprep.subr.bf16.mxu0 %v2475
        %2493 = vmatpush1.bf16.msra.mxu0 %v2474
        %2494 = vmatprep.subr.bf16.mxu0 %v2473
        %2495 = vmatpush1.bf16.msra.mxu0 %v2472
        %2496 = vmatprep.subr.bf16.mxu0 %v2471
        %2497 = vmatpush1.bf16.msra.mxu0 %v2470
        %2498 = vmatprep.subr.bf16.mxu0 %v2469
        %2499 = vmatpush1.bf16.msra.mxu0 %v2468
        %2500 = vmatprep.subr.bf16.mxu0 %v2467
        %2501 = vmatpush1.bf16.msra.mxu0 %v2466
        %2502 = vmatprep.subr.bf16.mxu0 %v2465
        %2503 = vmatpush1.bf16.msra.mxu0 %v2464
        %2504 = vmatprep.subr.bf16.mxu0 %v2463
        %2505 = vmatpush1.bf16.msra.mxu0 %v2462
        %2506 = vmatprep.subr.bf16.mxu0 %v2461
        %2507 = vmatpush1.bf16.msra.mxu0 %v2460
        %2508 = vmatprep.subr.bf16.mxu0 0
        %2509 = vmatpush2.bf16.msra.mxu0 0
        %2510 = vmatprep.subr.bf16.mxu0 0
        %2511 = vmatpush2.bf16.msra.mxu0 0
        %2512 = vmatprep.subr.bf16.mxu0 0
        %2513 = vmatpush2.bf16.msra.mxu0 0
        %2514 = vmatprep.subr.bf16.mxu0 0
        %2515 = vmatpush2.bf16.msra.mxu0 0
        %2516 = vmatprep.subr.bf16.mxu0 0
        %2517 = vmatpush2.bf16.msra.mxu0 0
        %2518 = vmatprep.subr.bf16.mxu0 0
        %2519 = vmatpush2.bf16.msra.mxu0 0
        %2520 = vmatprep.subr.bf16.mxu0 0
        %2521 = vmatpush2.bf16.msra.mxu0 0
        %2522 = vmatprep.subr.bf16.mxu0 0
        %2523 = vmatpush2.bf16.msra.mxu0 0
        %2524 = vmatprep.mubr.bf16.mxu0 0
        %2525 = vmatmul.mubr.bf16.gmra.mxu0 %v548
        %v2526 = vpop.f32.mrf.mxu0
        %v2527 = vadd.f32 0.0, %v2526
        %v2528 = vpop.f32.mrf.mxu0
        %v2529 = vadd.f32 0.0, %v2528
        %v2530 = vpop.f32.mrf.mxu0
        %v2531 = vadd.f32 0.0, %v2530
        %v2532 = vpop.f32.mrf.mxu0
        %v2533 = vadd.f32 0.0, %v2532
        %2534 = vmatprep.mubr.bf16.mxu0 0
        %2535 = vmatmul.mubr.bf16.gmra.mxu0 %v549
        %v2536 = vpop.f32.mrf.mxu0
        %v2537 = vadd.f32 0.0, %v2536
        %v2538 = vpop.f32.mrf.mxu0
        %v2539 = vadd.f32 0.0, %v2538
        %v2540 = vpop.f32.mrf.mxu0
        %v2541 = vadd.f32 0.0, %v2540
        %v2542 = vpop.f32.mrf.mxu0
        %v2543 = vadd.f32 0.0, %v2542
        %2544 = vmatprep.mubr.bf16.mxu0 0
        %2545 = vmatmul.mubr.bf16.gmra.mxu0 %v550
        %v2546 = vpop.f32.mrf.mxu0
        %v2547 = vadd.f32 0.0, %v2546
        %v2548 = vpop.f32.mrf.mxu0
        %v2549 = vadd.f32 0.0, %v2548
        %v2550 = vpop.f32.mrf.mxu0
        %v2551 = vadd.f32 0.0, %v2550
        %v2552 = vpop.f32.mrf.mxu0
        %v2553 = vadd.f32 0.0, %v2552
        %2554 = vmatprep.mubr.bf16.mxu0 0
        %2555 = vmatmul.mubr.bf16.gmra.mxu0 %v551
        %v2556 = vpop.f32.mrf.mxu0
        %v2557 = vadd.f32 0.0, %v2556
        %v2558 = vpop.f32.mrf.mxu0
        %v2559 = vadd.f32 0.0, %v2558
        %v2560 = vpop.f32.mrf.mxu0
        %v2561 = vadd.f32 0.0, %v2560
        %v2562 = vpop.f32.mrf.mxu0
        %v2563 = vadd.f32 0.0, %v2562
        %2564 = vmatprep.mubr.bf16.mxu0 0
        %2565 = vmatmul.mubr.bf16.gmra.mxu0 %v552
        %v2566 = vpop.f32.mrf.mxu0
        %v2567 = vadd.f32 0.0, %v2566
        %v2568 = vpop.f32.mrf.mxu0
        %v2569 = vadd.f32 0.0, %v2568
        %v2570 = vpop.f32.mrf.mxu0
        %v2571 = vadd.f32 0.0, %v2570
        %v2572 = vpop.f32.mrf.mxu0
        %v2573 = vadd.f32 0.0, %v2572
        %2574 = vmatprep.mubr.bf16.mxu0 0
        %2575 = vmatmul.mubr.bf16.gmra.mxu0 %v553
        %v2576 = vpop.f32.mrf.mxu0
        %v2577 = vadd.f32 0.0, %v2576
        %v2578 = vpop.f32.mrf.mxu0
        %v2579 = vadd.f32 0.0, %v2578
        %v2580 = vpop.f32.mrf.mxu0
        %v2581 = vadd.f32 0.0, %v2580
        %v2582 = vpop.f32.mrf.mxu0
        %v2583 = vadd.f32 0.0, %v2582
        %2584 = vmatprep.mubr.bf16.mxu0 0
        %2585 = vmatmul.mubr.bf16.gmra.mxu0 %v554
        %v2586 = vpop.f32.mrf.mxu0
        %v2587 = vadd.f32 0.0, %v2586
        %v2588 = vpop.f32.mrf.mxu0
        %v2589 = vadd.f32 0.0, %v2588
        %v2590 = vpop.f32.mrf.mxu0
        %v2591 = vadd.f32 0.0, %v2590
        %v2592 = vpop.f32.mrf.mxu0
        %v2593 = vadd.f32 0.0, %v2592
        %2594 = vmatprep.mubr.bf16.mxu0 0
        %2595 = vmatmul.mubr.bf16.gmra.mxu0 %v555
        %v2596 = vpop.f32.mrf.mxu0
        %v2597 = vadd.f32 0.0, %v2596
        %v2598 = vpop.f32.mrf.mxu0
        %v2599 = vadd.f32 0.0, %v2598
        %v2600 = vpop.f32.mrf.mxu0
        %v2601 = vadd.f32 0.0, %v2600
        %v2602 = vpop.f32.mrf.mxu0
        %v2603 = vadd.f32 0.0, %v2602
        %2604 = vmatprep.mubr.bf16.mxu0 0
        %2605 = vmatmul.mubr.bf16.gmra.mxu0 %v556
        %v2606 = vpop.f32.mrf.mxu0
        %v2607 = vadd.f32 0.0, %v2606
        %v2608 = vpop.f32.mrf.mxu0
        %v2609 = vadd.f32 0.0, %v2608
        %v2610 = vpop.f32.mrf.mxu0
        %v2611 = vadd.f32 0.0, %v2610
        %v2612 = vpop.f32.mrf.mxu0
        %v2613 = vadd.f32 0.0, %v2612
        %2614 = vmatprep.mubr.bf16.mxu0 0
        %2615 = vmatmul.mubr.bf16.gmra.mxu0 %v557
        %v2616 = vpop.f32.mrf.mxu0
        %v2617 = vadd.f32 0.0, %v2616
        %v2618 = vpop.f32.mrf.mxu0
        %v2619 = vadd.f32 0.0, %v2618
        %v2620 = vpop.f32.mrf.mxu0
        %v2621 = vadd.f32 0.0, %v2620
        %v2622 = vpop.f32.mrf.mxu0
        %v2623 = vadd.f32 0.0, %v2622
        %2624 = vmatprep.mubr.bf16.mxu0 0
        %2625 = vmatmul.mubr.bf16.gmra.mxu0 %v558
        %v2626 = vpop.f32.mrf.mxu0
        %v2627 = vadd.f32 0.0, %v2626
        %v2628 = vpop.f32.mrf.mxu0
        %v2629 = vadd.f32 0.0, %v2628
        %v2630 = vpop.f32.mrf.mxu0
        %v2631 = vadd.f32 0.0, %v2630
        %v2632 = vpop.f32.mrf.mxu0
        %v2633 = vadd.f32 0.0, %v2632
        %2634 = vmatprep.mubr.bf16.mxu0 0
        %2635 = vmatmul.mubr.bf16.gmra.mxu0 %v559
        %v2636 = vpop.f32.mrf.mxu0
        %v2637 = vadd.f32 0.0, %v2636
        %v2638 = vpop.f32.mrf.mxu0
        %v2639 = vadd.f32 0.0, %v2638
        %v2640 = vpop.f32.mrf.mxu0
        %v2641 = vadd.f32 0.0, %v2640
        %v2642 = vpop.f32.mrf.mxu0
        %v2643 = vadd.f32 0.0, %v2642
        %2644 = vmatprep.mubr.bf16.mxu0 0
        %2645 = vmatmul.mubr.bf16.gmra.mxu0 %v560
        %v2646 = vpop.f32.mrf.mxu0
        %v2647 = vadd.f32 0.0, %v2646
        %v2648 = vpop.f32.mrf.mxu0
        %v2649 = vadd.f32 0.0, %v2648
        %v2650 = vpop.f32.mrf.mxu0
        %v2651 = vadd.f32 0.0, %v2650
        %v2652 = vpop.f32.mrf.mxu0
        %v2653 = vadd.f32 0.0, %v2652
        %2654 = vmatprep.mubr.bf16.mxu0 0
        %2655 = vmatmul.mubr.bf16.gmra.mxu0 %v561
        %v2656 = vpop.f32.mrf.mxu0
        %v2657 = vadd.f32 0.0, %v2656
        %v2658 = vpop.f32.mrf.mxu0
        %v2659 = vadd.f32 0.0, %v2658
        %v2660 = vpop.f32.mrf.mxu0
        %v2661 = vadd.f32 0.0, %v2660
        %v2662 = vpop.f32.mrf.mxu0
        %v2663 = vadd.f32 0.0, %v2662
        %2664 = vmatprep.mubr.bf16.mxu0 0
        %2665 = vmatmul.mubr.bf16.gmra.mxu0 %v562
        %v2666 = vpop.f32.mrf.mxu0
        %v2667 = vadd.f32 0.0, %v2666
        %v2668 = vpop.f32.mrf.mxu0
        %v2669 = vadd.f32 0.0, %v2668
        %v2670 = vpop.f32.mrf.mxu0
        %v2671 = vadd.f32 0.0, %v2670
        %v2672 = vpop.f32.mrf.mxu0
        %v2673 = vadd.f32 0.0, %v2672
        %2674 = vmatprep.mubr.bf16.mxu0 0
        %2675 = vmatmul.mubr.bf16.gmra.mxu0 0
        %v2676 = vpop.f32.mrf.mxu0
        %v2677 = vadd.f32 0.0, %v2676
        %v2678 = vpop.f32.mrf.mxu0
        %v2679 = vadd.f32 0.0, %v2678
        %v2680 = vpop.f32.mrf.mxu0
        %v2681 = vadd.f32 0.0, %v2680
        %v2682 = vpop.f32.mrf.mxu0
        %v2683 = vadd.f32 0.0, %v2682
        %2684 = vdwg.mxu0
        %v2685 = vld [vmem:[%s383] sm:$0xf]
        %v2686 = vld [vmem:[%s383 + $0x4] sm:$0xf]
        %v2687 = vld [vmem:[%s383 + $0x8] sm:$0xf]
        %v2688 = vld [vmem:[%s383 + $0xc] sm:$0xf]
        %v2689 = vld [vmem:[%s383 + $0x10] sm:$0xf]
        %v2690 = vld [vmem:[%s383 + $0x14] sm:$0xf]
        %v2691 = vld [vmem:[%s383 + $0x18] sm:$0xf]
        %v2692 = vld [vmem:[%s383 + $0x1c] sm:$0xf]
        %v2693 = vld [vmem:[%s383 + $0x20] sm:$0xf]
        %v2694 = vld [vmem:[%s383 + $0x24] sm:$0xf]
        %v2695 = vld [vmem:[%s383 + $0x28] sm:$0xf]
        %v2696 = vld [vmem:[%s383 + $0x2c] sm:$0xf]
        %v2697 = vld [vmem:[%s383 + $0x30] sm:$0xf]
        %v2698 = vld [vmem:[%s383 + $0x34] sm:$0xf]
        %v2699 = vld [vmem:[%s383 + $0x38] sm:$0xf]
        %v2700 = vld [vmem:[%s383 + $0x3c] sm:$0xf]
        %v2702 = vshrl.u32 %v1364, 16
        %v2704 = vshll.u32 %v1364, 16
        %v2706 = vrot.slane %v2704, 1
        %v2707 = vor.u32 %v2702, %v2706
        %v2709 = vshll.u32 %v1365, 16
        %v2711 = vrot.slane %v2709, 1
        %v2712 = vsel %vm1974, %v2707, %v2711
        %v2713 = vshrl.u32 %v1365, 16
        %v2715 = vor.u32 %v2713, %v2711
        %v2717 = vshll.u32 %v1366, 16
        %v2719 = vrot.slane %v2717, 1
        %v2720 = vsel %vm1974, %v2715, %v2719
        %v2721 = vshrl.u32 %v1366, 16
        %v2723 = vor.u32 %v2721, %v2719
        %v2725 = vshll.u32 %v1367, 16
        %v2727 = vrot.slane %v2725, 1
        %v2728 = vsel %vm1974, %v2723, %v2727
        %v2729 = vshrl.u32 %v1367, 16
        %v2731 = vor.u32 %v2729, %v2727
        %v2733 = vshll.u32 %v1368, 16
        %v2735 = vrot.slane %v2733, 1
        %v2736 = vsel %vm1974, %v2731, %v2735
        %v2737 = vshrl.u32 %v1368, 16
        %v2739 = vor.u32 %v2737, %v2735
        %v2741 = vshll.u32 %v1369, 16
        %v2743 = vrot.slane %v2741, 1
        %v2744 = vsel %vm1974, %v2739, %v2743
        %v2745 = vshrl.u32 %v1369, 16
        %v2747 = vor.u32 %v2745, %v2743
        %v2749 = vshll.u32 %v1370, 16
        %v2751 = vrot.slane %v2749, 1
        %v2752 = vsel %vm1974, %v2747, %v2751
        %v2753 = vshrl.u32 %v1370, 16
        %v2755 = vor.u32 %v2753, %v2751
        %v2757 = vshll.u32 %v1371, 16
        %v2759 = vrot.slane %v2757, 1
        %v2760 = vsel %vm1974, %v2755, %v2759
        %v2761 = vshrl.u32 %v1371, 16
        %v2763 = vor.u32 %v2761, %v2759
        %v2765 = vshll.u32 %v1372, 16
        %v2767 = vrot.slane %v2765, 1
        %v2768 = vsel %vm1974, %v2763, %v2767
        %v2769 = vshrl.u32 %v1372, 16
        %v2771 = vor.u32 %v2769, %v2767
        %v2773 = vshll.u32 %v1373, 16
        %v2775 = vrot.slane %v2773, 1
        %v2776 = vsel %vm1974, %v2771, %v2775
        %v2777 = vshrl.u32 %v1373, 16
        %v2779 = vor.u32 %v2777, %v2775
        %v2781 = vshll.u32 %v1374, 16
        %v2783 = vrot.slane %v2781, 1
        %v2784 = vsel %vm1974, %v2779, %v2783
        %v2785 = vshrl.u32 %v1374, 16
        %v2787 = vor.u32 %v2785, %v2783
        %v2789 = vshll.u32 %v1375, 16
        %v2791 = vrot.slane %v2789, 1
        %v2792 = vsel %vm1974, %v2787, %v2791
        %v2793 = vshrl.u32 %v1375, 16
        %v2795 = vor.u32 %v2793, %v2791
        %v2797 = vshll.u32 %v1376, 16
        %v2799 = vrot.slane %v2797, 1
        %v2800 = vsel %vm1974, %v2795, %v2799
        %v2801 = vshrl.u32 %v1376, 16
        %v2803 = vor.u32 %v2801, %v2799
        %v2805 = vshll.u32 %v1377, 16
        %v2807 = vrot.slane %v2805, 1
        %v2808 = vsel %vm1974, %v2803, %v2807
        %v2809 = vshrl.u32 %v1377, 16
        %v2811 = vor.u32 %v2809, %v2807
        %v2813 = vshll.u32 %v1378, 16
        %v2815 = vrot.slane %v2813, 1
        %v2816 = vsel %vm1974, %v2811, %v2815
        %v2817 = vshrl.u32 %v1378, 16
        %v2819 = vor.u32 %v2817, %v2815
        %v2820 = vsel %vm1974, %v2819, %v2105
        %v2821 = vshrl.u32 0, 16
        %v2823 = vor.u32 %v2821, %v2105
        %v2824 = vsel %vm1974, %v2823, %v2105
        %v2857 = vunpack.c.l.b16 %v2685
        %v2858 = vunpack.c.l.b16 %v2686
        %v2859 = vunpack.c.l.b16 %v2687
        %v2860 = vunpack.c.l.b16 %v2688
        %v2861 = vunpack.c.l.b16 %v2689
        %v2862 = vunpack.c.l.b16 %v2690
        %v2863 = vunpack.c.l.b16 %v2691
        %v2864 = vunpack.c.l.b16 %v2692
        %v2865 = vunpack.c.l.b16 %v2693
        %v2866 = vunpack.c.l.b16 %v2694
        %v2867 = vunpack.c.l.b16 %v2695
        %v2868 = vunpack.c.l.b16 %v2696
        %v2869 = vunpack.c.l.b16 %v2697
        %v2870 = vunpack.c.l.b16 %v2698
        %v2871 = vunpack.c.l.b16 %v2699
        %v2872 = vunpack.c.l.b16 %v2700
        %v2873 = vpack.c.b16 %v2858, %v2857
        %v2874 = vpack.c.b16 %v2860, %v2859
        %v2875 = vpack.c.b16 %v2862, %v2861
        %v2876 = vpack.c.b16 %v2864, %v2863
        %v2877 = vpack.c.b16 %v2866, %v2865
        %v2878 = vpack.c.b16 %v2868, %v2867
        %v2879 = vpack.c.b16 %v2870, %v2869
        %v2880 = vpack.c.b16 %v2872, %v2871
        %2889 = vmatprep.subr.bf16.mxu0 0
        %2890 = vmatpush1.bf16.msra.mxu0 %v2880
        %2891 = vmatprep.subr.bf16.mxu0 0
        %2892 = vmatpush1.bf16.msra.mxu0 %v2879
        %2893 = vmatprep.subr.bf16.mxu0 0
        %2894 = vmatpush1.bf16.msra.mxu0 %v2878
        %2895 = vmatprep.subr.bf16.mxu0 0
        %2896 = vmatpush1.bf16.msra.mxu0 %v2877
        %2897 = vmatprep.subr.bf16.mxu0 0
        %2898 = vmatpush1.bf16.msra.mxu0 %v2876
        %2899 = vmatprep.subr.bf16.mxu0 0
        %2900 = vmatpush1.bf16.msra.mxu0 %v2875
        %2901 = vmatprep.subr.bf16.mxu0 0
        %2902 = vmatpush1.bf16.msra.mxu0 %v2874
        %2903 = vmatprep.subr.bf16.mxu0 0
        %2904 = vmatpush1.bf16.msra.mxu0 %v2873
        %2905 = vmatprep.subr.bf16.mxu0 0
        %2906 = vmatpush2.bf16.msra.mxu0 0
        %2907 = vmatprep.subr.bf16.mxu0 0
        %2908 = vmatpush2.bf16.msra.mxu0 0
        %2909 = vmatprep.subr.bf16.mxu0 0
        %2910 = vmatpush2.bf16.msra.mxu0 0
        %2911 = vmatprep.subr.bf16.mxu0 0
        %2912 = vmatpush2.bf16.msra.mxu0 0
        %2913 = vmatprep.subr.bf16.mxu0 0
        %2914 = vmatpush2.bf16.msra.mxu0 0
        %2915 = vmatprep.subr.bf16.mxu0 0
        %2916 = vmatpush2.bf16.msra.mxu0 0
        %2917 = vmatprep.subr.bf16.mxu0 0
        %2918 = vmatpush2.bf16.msra.mxu0 0
        %2919 = vmatprep.subr.bf16.mxu0 0
        %2920 = vmatpush2.bf16.msra.mxu0 0
        %2921 = vmatprep.mubr.bf16.mxu0 0
        %2922 = vmatmul.mubr.bf16.gmra.mxu0 %v2712
        %v2923 = vpop.f32.mrf.mxu0
        %v2924 = vadd.f32 0.0, %v2923
        %v2925 = vpop.f32.mrf.mxu0
        %v2926 = vpop.f32.mrf.mxu0
        %v2927 = vadd.f32 0.0, %v2926
        %v2928 = vpop.f32.mrf.mxu0
        %2929 = vmatprep.mubr.bf16.mxu0 0
        %2930 = vmatmul.mubr.bf16.gmra.mxu0 %v2720
        %v2931 = vpop.f32.mrf.mxu0
        %v2932 = vadd.f32 0.0, %v2931
        %v2933 = vpop.f32.mrf.mxu0
        %v2934 = vpop.f32.mrf.mxu0
        %v2935 = vadd.f32 0.0, %v2934
        %v2936 = vpop.f32.mrf.mxu0
        %2937 = vmatprep.mubr.bf16.mxu0 0
        %2938 = vmatmul.mubr.bf16.gmra.mxu0 %v2728
        %v2939 = vpop.f32.mrf.mxu0
        %v2940 = vadd.f32 0.0, %v2939
        %v2941 = vpop.f32.mrf.mxu0
        %v2942 = vpop.f32.mrf.mxu0
        %v2943 = vadd.f32 0.0, %v2942
        %v2944 = vpop.f32.mrf.mxu0
        %2945 = vmatprep.mubr.bf16.mxu0 0
        %2946 = vmatmul.mubr.bf16.gmra.mxu0 %v2736
        %v2947 = vpop.f32.mrf.mxu0
        %v2948 = vadd.f32 0.0, %v2947
        %v2949 = vpop.f32.mrf.mxu0
        %v2950 = vpop.f32.mrf.mxu0
        %v2951 = vadd.f32 0.0, %v2950
        %v2952 = vpop.f32.mrf.mxu0
        %2953 = vmatprep.mubr.bf16.mxu0 0
        %2954 = vmatmul.mubr.bf16.gmra.mxu0 %v2744
        %v2955 = vpop.f32.mrf.mxu0
        %v2956 = vadd.f32 0.0, %v2955
        %v2957 = vpop.f32.mrf.mxu0
        %v2958 = vpop.f32.mrf.mxu0
        %v2959 = vadd.f32 0.0, %v2958
        %v2960 = vpop.f32.mrf.mxu0
        %2961 = vmatprep.mubr.bf16.mxu0 0
        %2962 = vmatmul.mubr.bf16.gmra.mxu0 %v2752
        %v2963 = vpop.f32.mrf.mxu0
        %v2964 = vadd.f32 0.0, %v2963
        %v2965 = vpop.f32.mrf.mxu0
        %v2966 = vpop.f32.mrf.mxu0
        %v2967 = vadd.f32 0.0, %v2966
        %v2968 = vpop.f32.mrf.mxu0
        %2969 = vmatprep.mubr.bf16.mxu0 0
        %2970 = vmatmul.mubr.bf16.gmra.mxu0 %v2760
        %v2971 = vpop.f32.mrf.mxu0
        %v2972 = vadd.f32 0.0, %v2971
        %v2973 = vpop.f32.mrf.mxu0
        %v2974 = vpop.f32.mrf.mxu0
        %v2975 = vadd.f32 0.0, %v2974
        %v2976 = vpop.f32.mrf.mxu0
        %2977 = vmatprep.mubr.bf16.mxu0 0
        %2978 = vmatmul.mubr.bf16.gmra.mxu0 %v2768
        %v2979 = vpop.f32.mrf.mxu0
        %v2980 = vadd.f32 0.0, %v2979
        %v2981 = vpop.f32.mrf.mxu0
        %v2982 = vpop.f32.mrf.mxu0
        %v2983 = vadd.f32 0.0, %v2982
        %v2984 = vpop.f32.mrf.mxu0
        %2985 = vmatprep.mubr.bf16.mxu0 0
        %2986 = vmatmul.mubr.bf16.gmra.mxu0 %v2776
        %v2987 = vpop.f32.mrf.mxu0
        %v2988 = vadd.f32 0.0, %v2987
        %v2989 = vpop.f32.mrf.mxu0
        %v2990 = vpop.f32.mrf.mxu0
        %v2991 = vadd.f32 0.0, %v2990
        %v2992 = vpop.f32.mrf.mxu0
        %2993 = vmatprep.mubr.bf16.mxu0 0
        %2994 = vmatmul.mubr.bf16.gmra.mxu0 %v2784
        %v2995 = vpop.f32.mrf.mxu0
        %v2996 = vadd.f32 0.0, %v2995
        %v2997 = vpop.f32.mrf.mxu0
        %v2998 = vpop.f32.mrf.mxu0
        %v2999 = vadd.f32 0.0, %v2998
        %v3000 = vpop.f32.mrf.mxu0
        %3001 = vmatprep.mubr.bf16.mxu0 0
        %3002 = vmatmul.mubr.bf16.gmra.mxu0 %v2792
        %v3003 = vpop.f32.mrf.mxu0
        %v3004 = vadd.f32 0.0, %v3003
        %v3005 = vpop.f32.mrf.mxu0
        %v3006 = vpop.f32.mrf.mxu0
        %v3007 = vadd.f32 0.0, %v3006
        %v3008 = vpop.f32.mrf.mxu0
        %3009 = vmatprep.mubr.bf16.mxu0 0
        %3010 = vmatmul.mubr.bf16.gmra.mxu0 %v2800
        %v3011 = vpop.f32.mrf.mxu0
        %v3012 = vadd.f32 0.0, %v3011
        %v3013 = vpop.f32.mrf.mxu0
        %v3014 = vpop.f32.mrf.mxu0
        %v3015 = vadd.f32 0.0, %v3014
        %v3016 = vpop.f32.mrf.mxu0
        %3017 = vmatprep.mubr.bf16.mxu0 0
        %3018 = vmatmul.mubr.bf16.gmra.mxu0 %v2808
        %v3019 = vpop.f32.mrf.mxu0
        %v3020 = vadd.f32 0.0, %v3019
        %v3021 = vpop.f32.mrf.mxu0
        %v3022 = vpop.f32.mrf.mxu0
        %v3023 = vadd.f32 0.0, %v3022
        %v3024 = vpop.f32.mrf.mxu0
        %3025 = vmatprep.mubr.bf16.mxu0 0
        %3026 = vmatmul.mubr.bf16.gmra.mxu0 %v2816
        %v3027 = vpop.f32.mrf.mxu0
        %v3028 = vadd.f32 0.0, %v3027
        %v3029 = vpop.f32.mrf.mxu0
        %v3030 = vpop.f32.mrf.mxu0
        %v3031 = vadd.f32 0.0, %v3030
        %v3032 = vpop.f32.mrf.mxu0
        %3033 = vmatprep.mubr.bf16.mxu0 0
        %3034 = vmatmul.mubr.bf16.gmra.mxu0 %v2820
        %v3035 = vpop.f32.mrf.mxu0
        %v3036 = vadd.f32 0.0, %v3035
        %v3037 = vpop.f32.mrf.mxu0
        %v3038 = vpop.f32.mrf.mxu0
        %v3039 = vadd.f32 0.0, %v3038
        %v3040 = vpop.f32.mrf.mxu0
        %3041 = vmatprep.mubr.bf16.mxu0 0
        %3042 = vmatmul.mubr.bf16.gmra.mxu0 %v2824
        %v3043 = vpop.f32.mrf.mxu0
        %v3044 = vadd.f32 0.0, %v3043
        %v3045 = vpop.f32.mrf.mxu0
        %v3046 = vpop.f32.mrf.mxu0
        %v3047 = vadd.f32 0.0, %v3046
        %v3048 = vpop.f32.mrf.mxu0
        %3049 = vdwg.mxu0
        %v3051 = vlaneseq
        %v3052 = vshrl.u32 %v3051, 7
        %v3053 = vsub.s32 0, %v3052
        %v3054 = vrot.slane %v1379, %v3053
        %v3056 = vadd.f32 %v1607, %v3054
        %v3057 = vadd.f32 %v1611, %v3054
        %v3058 = vadd.f32 %v1617, %v3054
        %v3059 = vadd.f32 %v1621, %v3054
        %v3060 = vadd.f32 %v1627, %v3054
        %v3061 = vadd.f32 %v1631, %v3054
        %v3062 = vadd.f32 %v1637, %v3054
        %v3063 = vadd.f32 %v1641, %v3054
        %v3064 = vadd.f32 %v1647, %v3054
        %v3065 = vadd.f32 %v1651, %v3054
        %v3066 = vadd.f32 %v1657, %v3054
        %v3067 = vadd.f32 %v1661, %v3054
        %v3068 = vadd.f32 %v1667, %v3054
        %v3069 = vadd.f32 %v1671, %v3054
        %v3070 = vadd.f32 %v1677, %v3054
        %v3071 = vadd.f32 %v1681, %v3054
        %v3072 = vadd.f32 %v1687, %v3054
        %v3073 = vadd.f32 %v1691, %v3054
        %v3074 = vadd.f32 %v1697, %v3054
        %v3075 = vadd.f32 %v1701, %v3054
        %v3076 = vadd.f32 %v1707, %v3054
        %v3077 = vadd.f32 %v1711, %v3054
        %v3078 = vadd.f32 %v1717, %v3054
        %v3079 = vadd.f32 %v1721, %v3054
        %v3080 = vadd.f32 %v1727, %v3054
        %v3081 = vadd.f32 %v1731, %v3054
        %v3082 = vadd.f32 %v1737, %v3054
        %v3083 = vadd.f32 %v1741, %v3054
        %v3084 = vadd.f32 %v1747, %v3054
        %v3085 = vadd.f32 %v1751, %v3054
        %v3086 = vadd.f32 %v1757, %v3054
        %v3087 = vadd.f32 %v1761, %v3054
        %v3088 = vadd.f32 %v1609, %v2238
        %v3089 = vadd.f32 %v1613, %v2242
        %v3090 = vadd.f32 %v1619, %v2248
        %v3091 = vadd.f32 %v1623, %v2252
        %v3092 = vadd.f32 %v1629, %v2258
        %v3093 = vadd.f32 %v1633, %v2262
        %v3094 = vadd.f32 %v1639, %v2268
        %v3095 = vadd.f32 %v1643, %v2272
        %v3096 = vadd.f32 %v1649, %v2278
        %v3097 = vadd.f32 %v1653, %v2282
        %v3098 = vadd.f32 %v1659, %v2288
        %v3099 = vadd.f32 %v1663, %v2292
        %v3100 = vadd.f32 %v1669, %v2298
        %v3101 = vadd.f32 %v1673, %v2302
        %v3102 = vadd.f32 %v1679, %v2308
        %v3103 = vadd.f32 %v1683, %v2312
        %v3104 = vadd.f32 %v1689, %v2318
        %v3105 = vadd.f32 %v1693, %v2322
        %v3106 = vadd.f32 %v1699, %v2328
        %v3107 = vadd.f32 %v1703, %v2332
        %v3108 = vadd.f32 %v1709, %v2338
        %v3109 = vadd.f32 %v1713, %v2342
        %v3110 = vadd.f32 %v1719, %v2348
        %v3111 = vadd.f32 %v1723, %v2352
        %v3112 = vadd.f32 %v1729, %v2358
        %v3113 = vadd.f32 %v1733, %v2362
        %v3114 = vadd.f32 %v1739, %v2368
        %v3115 = vadd.f32 %v1743, %v2372
        %v3116 = vadd.f32 %v1749, %v2378
        %v3117 = vadd.f32 %v1753, %v2382
        %v3118 = vadd.f32 %v1759, %v2388
        %v3119 = vadd.f32 %v1763, %v2392
        %v3120 = vadd.f32 %v3088, %v3054
        %v3121 = vadd.f32 %v3089, %v3054
        %v3122 = vadd.f32 %v3090, %v3054
        %v3123 = vadd.f32 %v3091, %v3054
        %v3124 = vadd.f32 %v3092, %v3054
        %v3125 = vadd.f32 %v3093, %v3054
        %v3126 = vadd.f32 %v3094, %v3054
        %v3127 = vadd.f32 %v3095, %v3054
        %v3128 = vadd.f32 %v3096, %v3054
        %v3129 = vadd.f32 %v3097, %v3054
        %v3130 = vadd.f32 %v3098, %v3054
        %v3131 = vadd.f32 %v3099, %v3054
        %v3132 = vadd.f32 %v3100, %v3054
        %v3133 = vadd.f32 %v3101, %v3054
        %v3134 = vadd.f32 %v3102, %v3054
        %v3135 = vadd.f32 %v3103, %v3054
        %v3136 = vadd.f32 %v3104, %v3054
        %v3137 = vadd.f32 %v3105, %v3054
        %v3138 = vadd.f32 %v3106, %v3054
        %v3139 = vadd.f32 %v3107, %v3054
        %v3140 = vadd.f32 %v3108, %v3054
        %v3141 = vadd.f32 %v3109, %v3054
        %v3142 = vadd.f32 %v3110, %v3054
        %v3143 = vadd.f32 %v3111, %v3054
        %v3144 = vadd.f32 %v3112, %v3054
        %v3145 = vadd.f32 %v3113, %v3054
        %v3146 = vadd.f32 %v3114, %v3054
        %v3147 = vadd.f32 %v3115, %v3054
        %v3148 = vadd.f32 %v3116, %v3054
        %v3149 = vadd.f32 %v3117, %v3054
        %v3150 = vadd.f32 %v3118, %v3054
        %v3151 = vadd.f32 %v3119, %v3054
        %v3152 = vadd.f32 %v1800, %v2527
        %v3153 = vadd.f32 %v1804, %v2531
        %v3154 = vadd.f32 %v1810, %v2537
        %v3155 = vadd.f32 %v1814, %v2541
        %v3156 = vadd.f32 %v1820, %v2547
        %v3157 = vadd.f32 %v1824, %v2551
        %v3158 = vadd.f32 %v1830, %v2557
        %v3159 = vadd.f32 %v1834, %v2561
        %v3160 = vadd.f32 %v1840, %v2567
        %v3161 = vadd.f32 %v1844, %v2571
        %v3162 = vadd.f32 %v1850, %v2577
        %v3163 = vadd.f32 %v1854, %v2581
        %v3164 = vadd.f32 %v1860, %v2587
        %v3165 = vadd.f32 %v1864, %v2591
        %v3166 = vadd.f32 %v1870, %v2597
        %v3167 = vadd.f32 %v1874, %v2601
        %v3168 = vadd.f32 %v1880, %v2607
        %v3169 = vadd.f32 %v1884, %v2611
        %v3170 = vadd.f32 %v1890, %v2617
        %v3171 = vadd.f32 %v1894, %v2621
        %v3172 = vadd.f32 %v1900, %v2627
        %v3173 = vadd.f32 %v1904, %v2631
        %v3174 = vadd.f32 %v1910, %v2637
        %v3175 = vadd.f32 %v1914, %v2641
        %v3176 = vadd.f32 %v1920, %v2647
        %v3177 = vadd.f32 %v1924, %v2651
        %v3178 = vadd.f32 %v1930, %v2657
        %v3179 = vadd.f32 %v1934, %v2661
        %v3180 = vadd.f32 %v1940, %v2667
        %v3181 = vadd.f32 %v1944, %v2671
        %v3182 = vadd.f32 %v1950, %v2677
        %v3183 = vadd.f32 %v1954, %v2681
        %v3184 = vadd.f32 %v3152, %v3054
        %v3185 = vadd.f32 %v3153, %v3054
        %v3186 = vadd.f32 %v3154, %v3054
        %v3187 = vadd.f32 %v3155, %v3054
        %v3188 = vadd.f32 %v3156, %v3054
        %v3189 = vadd.f32 %v3157, %v3054
        %v3190 = vadd.f32 %v3158, %v3054
        %v3191 = vadd.f32 %v3159, %v3054
        %v3192 = vadd.f32 %v3160, %v3054
        %v3193 = vadd.f32 %v3161, %v3054
        %v3194 = vadd.f32 %v3162, %v3054
        %v3195 = vadd.f32 %v3163, %v3054
        %v3196 = vadd.f32 %v3164, %v3054
        %v3197 = vadd.f32 %v3165, %v3054
        %v3198 = vadd.f32 %v3166, %v3054
        %v3199 = vadd.f32 %v3167, %v3054
        %v3200 = vadd.f32 %v3168, %v3054
        %v3201 = vadd.f32 %v3169, %v3054
        %v3202 = vadd.f32 %v3170, %v3054
        %v3203 = vadd.f32 %v3171, %v3054
        %v3204 = vadd.f32 %v3172, %v3054
        %v3205 = vadd.f32 %v3173, %v3054
        %v3206 = vadd.f32 %v3174, %v3054
        %v3207 = vadd.f32 %v3175, %v3054
        %v3208 = vadd.f32 %v3176, %v3054
        %v3209 = vadd.f32 %v3177, %v3054
        %v3210 = vadd.f32 %v3178, %v3054
        %v3211 = vadd.f32 %v3179, %v3054
        %v3212 = vadd.f32 %v3180, %v3054
        %v3213 = vadd.f32 %v3181, %v3054
        %v3214 = vadd.f32 %v3182, %v3054
        %v3215 = vadd.f32 %v3183, %v3054
        %v3216 = vadd.f32 %v1802, %v2240
        %v3217 = vadd.f32 %v1806, %v2244
        %v3218 = vadd.f32 %v1812, %v2250
        %v3219 = vadd.f32 %v1816, %v2254
        %v3220 = vadd.f32 %v1822, %v2260
        %v3221 = vadd.f32 %v1826, %v2264
        %v3222 = vadd.f32 %v1832, %v2270
        %v3223 = vadd.f32 %v1836, %v2274
        %v3224 = vadd.f32 %v1842, %v2280
        %v3225 = vadd.f32 %v1846, %v2284
        %v3226 = vadd.f32 %v1852, %v2290
        %v3227 = vadd.f32 %v1856, %v2294
        %v3228 = vadd.f32 %v1862, %v2300
        %v3229 = vadd.f32 %v1866, %v2304
        %v3230 = vadd.f32 %v1872, %v2310
        %v3231 = vadd.f32 %v1876, %v2314
        %v3232 = vadd.f32 %v1882, %v2320
        %v3233 = vadd.f32 %v1886, %v2324
        %v3234 = vadd.f32 %v1892, %v2330
        %v3235 = vadd.f32 %v1896, %v2334
        %v3236 = vadd.f32 %v1902, %v2340
        %v3237 = vadd.f32 %v1906, %v2344
        %v3238 = vadd.f32 %v1912, %v2350
        %v3239 = vadd.f32 %v1916, %v2354
        %v3240 = vadd.f32 %v1922, %v2360
        %v3241 = vadd.f32 %v1926, %v2364
        %v3242 = vadd.f32 %v1932, %v2370
        %v3243 = vadd.f32 %v1936, %v2374
        %v3244 = vadd.f32 %v1942, %v2380
        %v3245 = vadd.f32 %v1946, %v2384
        %v3246 = vadd.f32 %v1952, %v2390
        %v3247 = vadd.f32 %v1956, %v2394
        %v3248 = vadd.f32 %v3216, %v2529
        %v3249 = vadd.f32 %v3217, %v2533
        %v3250 = vadd.f32 %v3218, %v2539
        %v3251 = vadd.f32 %v3219, %v2543
        %v3252 = vadd.f32 %v3220, %v2549
        %v3253 = vadd.f32 %v3221, %v2553
        %v3254 = vadd.f32 %v3222, %v2559
        %v3255 = vadd.f32 %v3223, %v2563
        %v3256 = vadd.f32 %v3224, %v2569
        %v3257 = vadd.f32 %v3225, %v2573
        %v3258 = vadd.f32 %v3226, %v2579
        %v3259 = vadd.f32 %v3227, %v2583
        %v3260 = vadd.f32 %v3228, %v2589
        %v3261 = vadd.f32 %v3229, %v2593
        %v3262 = vadd.f32 %v3230, %v2599
        %v3263 = vadd.f32 %v3231, %v2603
        %v3264 = vadd.f32 %v3232, %v2609
        %v3265 = vadd.f32 %v3233, %v2613
        %v3266 = vadd.f32 %v3234, %v2619
        %v3267 = vadd.f32 %v3235, %v2623
        %v3268 = vadd.f32 %v3236, %v2629
        %v3269 = vadd.f32 %v3237, %v2633
        %v3270 = vadd.f32 %v3238, %v2639
        %v3271 = vadd.f32 %v3239, %v2643
        %v3272 = vadd.f32 %v3240, %v2649
        %v3273 = vadd.f32 %v3241, %v2653
        %v3274 = vadd.f32 %v3242, %v2659
        %v3275 = vadd.f32 %v3243, %v2663
        %v3276 = vadd.f32 %v3244, %v2669
        %v3277 = vadd.f32 %v3245, %v2673
        %v3278 = vadd.f32 %v3246, %v2679
        %v3279 = vadd.f32 %v3247, %v2683
        %v3280 = vadd.f32 %v3248, %v2924
        %v3281 = vadd.f32 %v3249, %v2927
        %v3282 = vadd.f32 %v3250, %v2932
        %v3283 = vadd.f32 %v3251, %v2935
        %v3284 = vadd.f32 %v3252, %v2940
        %v3285 = vadd.f32 %v3253, %v2943
        %v3286 = vadd.f32 %v3254, %v2948
        %v3287 = vadd.f32 %v3255, %v2951
        %v3288 = vadd.f32 %v3256, %v2956
        %v3289 = vadd.f32 %v3257, %v2959
        %v3290 = vadd.f32 %v3258, %v2964
        %v3291 = vadd.f32 %v3259, %v2967
        %v3292 = vadd.f32 %v3260, %v2972
        %v3293 = vadd.f32 %v3261, %v2975
        %v3294 = vadd.f32 %v3262, %v2980
        %v3295 = vadd.f32 %v3263, %v2983
        %v3296 = vadd.f32 %v3264, %v2988
        %v3297 = vadd.f32 %v3265, %v2991
        %v3298 = vadd.f32 %v3266, %v2996
        %v3299 = vadd.f32 %v3267, %v2999
        %v3300 = vadd.f32 %v3268, %v3004
        %v3301 = vadd.f32 %v3269, %v3007
        %v3302 = vadd.f32 %v3270, %v3012
        %v3303 = vadd.f32 %v3271, %v3015
        %v3304 = vadd.f32 %v3272, %v3020
        %v3305 = vadd.f32 %v3273, %v3023
        %v3306 = vadd.f32 %v3274, %v3028
        %v3307 = vadd.f32 %v3275, %v3031
        %v3308 = vadd.f32 %v3276, %v3036
        %v3309 = vadd.f32 %v3277, %v3039
        %v3310 = vadd.f32 %v3278, %v3044
        %v3311 = vadd.f32 %v3279, %v3047
        %v3312 = vadd.f32 %v3280, %v3054
        %v3313 = vadd.f32 %v3281, %v3054
        %v3314 = vadd.f32 %v3282, %v3054
        %v3315 = vadd.f32 %v3283, %v3054
        %v3316 = vadd.f32 %v3284, %v3054
        %v3317 = vadd.f32 %v3285, %v3054
        %v3318 = vadd.f32 %v3286, %v3054
        %v3319 = vadd.f32 %v3287, %v3054
        %v3320 = vadd.f32 %v3288, %v3054
        %v3321 = vadd.f32 %v3289, %v3054
        %v3322 = vadd.f32 %v3290, %v3054
        %v3323 = vadd.f32 %v3291, %v3054
        %v3324 = vadd.f32 %v3292, %v3054
        %v3325 = vadd.f32 %v3293, %v3054
        %v3326 = vadd.f32 %v3294, %v3054
        %v3327 = vadd.f32 %v3295, %v3054
        %v3328 = vadd.f32 %v3296, %v3054
        %v3329 = vadd.f32 %v3297, %v3054
        %v3330 = vadd.f32 %v3298, %v3054
        %v3331 = vadd.f32 %v3299, %v3054
        %v3332 = vadd.f32 %v3300, %v3054
        %v3333 = vadd.f32 %v3301, %v3054
        %v3334 = vadd.f32 %v3302, %v3054
        %v3335 = vadd.f32 %v3303, %v3054
        %v3336 = vadd.f32 %v3304, %v3054
        %v3337 = vadd.f32 %v3305, %v3054
        %v3338 = vadd.f32 %v3306, %v3054
        %v3339 = vadd.f32 %v3307, %v3054
        %v3340 = vadd.f32 %v3308, %v3054
        %v3341 = vadd.f32 %v3309, %v3054
        %v3342 = vadd.f32 %v3310, %v3054
        %v3343 = vadd.f32 %v3311, %v3054
        %v3344 = vadd.f32 %v3056, %v3057
        %v3345 = vadd.f32 %v3344, %v3058
        %v3346 = vadd.f32 %v3345, %v3059
        %v3347 = vadd.f32 %v3346, %v3060
        %v3348 = vadd.f32 %v3347, %v3061
        %v3349 = vadd.f32 %v3348, %v3062
        %v3350 = vadd.f32 %v3349, %v3063
        %v3351 = vadd.f32 %v3350, %v3064
        %v3352 = vadd.f32 %v3351, %v3065
        %v3353 = vadd.f32 %v3352, %v3066
        %v3354 = vadd.f32 %v3353, %v3067
        %v3355 = vadd.f32 %v3354, %v3068
        %v3356 = vadd.f32 %v3355, %v3069
        %v3357 = vadd.f32 %v3356, %v3070
        %v3358 = vadd.f32 %v3357, %v3071
        %v3359 = vadd.f32 %v3358, %v3072
        %v3360 = vadd.f32 %v3359, %v3073
        %v3361 = vadd.f32 %v3360, %v3074
        %v3362 = vadd.f32 %v3361, %v3075
        %v3363 = vadd.f32 %v3362, %v3076
        %v3364 = vadd.f32 %v3363, %v3077
        %v3365 = vadd.f32 %v3364, %v3078
        %v3366 = vadd.f32 %v3365, %v3079
        %v3367 = vadd.f32 %v3366, %v3080
        %v3368 = vadd.f32 %v3367, %v3081
        %v3369 = vadd.f32 %v3368, %v3082
        %v3370 = vadd.f32 %v3369, %v3083
        %v3371 = vadd.f32 %v3370, %v3084
        %v3372 = vadd.f32 %v3371, %v3085
        %v3373 = vadd.f32 %v3372, %v3086
        %v3374 = vadd.f32 %v3373, %v3087
        %v3375 = vadd.f32 %v3374, %v3120
        %v3376 = vadd.f32 %v3375, %v3121
        %v3377 = vadd.f32 %v3376, %v3122
        %v3378 = vadd.f32 %v3377, %v3123
        %v3379 = vadd.f32 %v3378, %v3124
        %v3380 = vadd.f32 %v3379, %v3125
        %v3381 = vadd.f32 %v3380, %v3126
        %v3382 = vadd.f32 %v3381, %v3127
        %v3383 = vadd.f32 %v3382, %v3128
        %v3384 = vadd.f32 %v3383, %v3129
        %v3385 = vadd.f32 %v3384, %v3130
        %v3386 = vadd.f32 %v3385, %v3131
        %v3387 = vadd.f32 %v3386, %v3132
        %v3388 = vadd.f32 %v3387, %v3133
        %v3389 = vadd.f32 %v3388, %v3134
        %v3390 = vadd.f32 %v3389, %v3135
        %v3391 = vadd.f32 %v3390, %v3136
        %v3392 = vadd.f32 %v3391, %v3137
        %v3393 = vadd.f32 %v3392, %v3138
        %v3394 = vadd.f32 %v3393, %v3139
        %v3395 = vadd.f32 %v3394, %v3140
        %v3396 = vadd.f32 %v3395, %v3141
        %v3397 = vadd.f32 %v3396, %v3142
        %v3398 = vadd.f32 %v3397, %v3143
        %v3399 = vadd.f32 %v3398, %v3144
        %v3400 = vadd.f32 %v3399, %v3145
        %v3401 = vadd.f32 %v3400, %v3146
        %v3402 = vadd.f32 %v3401, %v3147
        %v3403 = vadd.f32 %v3402, %v3148
        %v3404 = vadd.f32 %v3403, %v3149
        %v3405 = vadd.f32 %v3404, %v3150
        %v3406 = vadd.f32 %v3405, %v3151
        %v3407 = vadd.f32 %v3406, %v3184
        %v3408 = vadd.f32 %v3407, %v3185
        %v3409 = vadd.f32 %v3408, %v3186
        %v3410 = vadd.f32 %v3409, %v3187
        %v3411 = vadd.f32 %v3410, %v3188
        %v3412 = vadd.f32 %v3411, %v3189
        %v3413 = vadd.f32 %v3412, %v3190
        %v3414 = vadd.f32 %v3413, %v3191
        %v3415 = vadd.f32 %v3414, %v3192
        %v3416 = vadd.f32 %v3415, %v3193
        %v3417 = vadd.f32 %v3416, %v3194
        %v3418 = vadd.f32 %v3417, %v3195
        %v3419 = vadd.f32 %v3418, %v3196
        %v3420 = vadd.f32 %v3419, %v3197
        %v3421 = vadd.f32 %v3420, %v3198
        %v3422 = vadd.f32 %v3421, %v3199
        %v3423 = vadd.f32 %v3422, %v3200
        %v3424 = vadd.f32 %v3423, %v3201
        %v3425 = vadd.f32 %v3424, %v3202
        %v3426 = vadd.f32 %v3425, %v3203
        %v3427 = vadd.f32 %v3426, %v3204
        %v3428 = vadd.f32 %v3427, %v3205
        %v3429 = vadd.f32 %v3428, %v3206
        %v3430 = vadd.f32 %v3429, %v3207
        %v3431 = vadd.f32 %v3430, %v3208
        %v3432 = vadd.f32 %v3431, %v3209
        %v3433 = vadd.f32 %v3432, %v3210
        %v3434 = vadd.f32 %v3433, %v3211
        %v3435 = vadd.f32 %v3434, %v3212
        %v3436 = vadd.f32 %v3435, %v3213
        %v3437 = vadd.f32 %v3436, %v3214
        %v3438 = vadd.f32 %v3437, %v3215
        %v3439 = vadd.f32 %v3438, %v3312
        %v3440 = vadd.f32 %v3439, %v3313
        %v3441 = vadd.f32 %v3440, %v3314
        %v3442 = vadd.f32 %v3441, %v3315
        %v3443 = vadd.f32 %v3442, %v3316
        %v3444 = vadd.f32 %v3443, %v3317
        %v3445 = vadd.f32 %v3444, %v3318
        %v3446 = vadd.f32 %v3445, %v3319
        %v3447 = vadd.f32 %v3446, %v3320
        %v3448 = vadd.f32 %v3447, %v3321
        %v3449 = vadd.f32 %v3448, %v3322
        %v3450 = vadd.f32 %v3449, %v3323
        %v3451 = vadd.f32 %v3450, %v3324
        %v3452 = vadd.f32 %v3451, %v3325
        %v3453 = vadd.f32 %v3452, %v3326
        %v3454 = vadd.f32 %v3453, %v3327
        %v3455 = vadd.f32 %v3454, %v3328
        %v3456 = vadd.f32 %v3455, %v3329
        %v3457 = vadd.f32 %v3456, %v3330
        %v3458 = vadd.f32 %v3457, %v3331
        %v3459 = vadd.f32 %v3458, %v3332
        %v3460 = vadd.f32 %v3459, %v3333
        %v3461 = vadd.f32 %v3460, %v3334
        %v3462 = vadd.f32 %v3461, %v3335
        %v3463 = vadd.f32 %v3462, %v3336
        %v3464 = vadd.f32 %v3463, %v3337
        %v3465 = vadd.f32 %v3464, %v3338
        %v3466 = vadd.f32 %v3465, %v3339
        %v3467 = vadd.f32 %v3466, %v3340
        %v3468 = vadd.f32 %v3467, %v3341
        %v3469 = vadd.f32 %v3468, %v3342
        %v3470 = vadd.f32 %v3469, %v3343
        %v3471 = vrot.slane %v3470, 4
        %v3472 = vadd.f32 %v3470, %v3471
        %v3473 = vrot.slane %v3472, 2
        %v3474 = vadd.f32 %v3472, %v3473
        %v3475 = vrot.slane %v3474, 1
        %v3476 = vadd.f32 %v3474, %v3475
        %v3477 = vmul.f32 %v3476, 0.0009765625
        %v3478 = vsub.f32 %v3056, %v3477
        %v3479 = vsub.f32 %v3057, %v3477
        %v3480 = vsub.f32 %v3058, %v3477
        %v3481 = vsub.f32 %v3059, %v3477
        %v3482 = vsub.f32 %v3060, %v3477
        %v3483 = vsub.f32 %v3061, %v3477
        %v3484 = vsub.f32 %v3062, %v3477
        %v3485 = vsub.f32 %v3063, %v3477
        %v3486 = vsub.f32 %v3064, %v3477
        %v3487 = vsub.f32 %v3065, %v3477
        %v3488 = vsub.f32 %v3066, %v3477
        %v3489 = vsub.f32 %v3067, %v3477
        %v3490 = vsub.f32 %v3068, %v3477
        %v3491 = vsub.f32 %v3069, %v3477
        %v3492 = vsub.f32 %v3070, %v3477
        %v3493 = vsub.f32 %v3071, %v3477
        %v3494 = vsub.f32 %v3072, %v3477
        %v3495 = vsub.f32 %v3073, %v3477
        %v3496 = vsub.f32 %v3074, %v3477
        %v3497 = vsub.f32 %v3075, %v3477
        %v3498 = vsub.f32 %v3076, %v3477
        %v3499 = vsub.f32 %v3077, %v3477
        %v3500 = vsub.f32 %v3078, %v3477
        %v3501 = vsub.f32 %v3079, %v3477
        %v3502 = vsub.f32 %v3080, %v3477
        %v3503 = vsub.f32 %v3081, %v3477
        %v3504 = vsub.f32 %v3082, %v3477
        %v3505 = vsub.f32 %v3083, %v3477
        %v3506 = vsub.f32 %v3084, %v3477
        %v3507 = vsub.f32 %v3085, %v3477
        %v3508 = vsub.f32 %v3086, %v3477
        %v3509 = vsub.f32 %v3087, %v3477
        %v3510 = vsub.f32 %v3120, %v3477
        %v3511 = vsub.f32 %v3121, %v3477
        %v3512 = vsub.f32 %v3122, %v3477
        %v3513 = vsub.f32 %v3123, %v3477
        %v3514 = vsub.f32 %v3124, %v3477
        %v3515 = vsub.f32 %v3125, %v3477
        %v3516 = vsub.f32 %v3126, %v3477
        %v3517 = vsub.f32 %v3127, %v3477
        %v3518 = vsub.f32 %v3128, %v3477
        %v3519 = vsub.f32 %v3129, %v3477
        %v3520 = vsub.f32 %v3130, %v3477
        %v3521 = vsub.f32 %v3131, %v3477
        %v3522 = vsub.f32 %v3132, %v3477
        %v3523 = vsub.f32 %v3133, %v3477
        %v3524 = vsub.f32 %v3134, %v3477
        %v3525 = vsub.f32 %v3135, %v3477
        %v3526 = vsub.f32 %v3136, %v3477
        %v3527 = vsub.f32 %v3137, %v3477
        %v3528 = vsub.f32 %v3138, %v3477
        %v3529 = vsub.f32 %v3139, %v3477
        %v3530 = vsub.f32 %v3140, %v3477
        %v3531 = vsub.f32 %v3141, %v3477
        %v3532 = vsub.f32 %v3142, %v3477
        %v3533 = vsub.f32 %v3143, %v3477
        %v3534 = vsub.f32 %v3144, %v3477
        %v3535 = vsub.f32 %v3145, %v3477
        %v3536 = vsub.f32 %v3146, %v3477
        %v3537 = vsub.f32 %v3147, %v3477
        %v3538 = vsub.f32 %v3148, %v3477
        %v3539 = vsub.f32 %v3149, %v3477
        %v3540 = vsub.f32 %v3150, %v3477
        %v3541 = vsub.f32 %v3151, %v3477
        %v3542 = vsub.f32 %v3184, %v3477
        %v3543 = vsub.f32 %v3185, %v3477
        %v3544 = vsub.f32 %v3186, %v3477
        %v3545 = vsub.f32 %v3187, %v3477
        %v3546 = vsub.f32 %v3188, %v3477
        %v3547 = vsub.f32 %v3189, %v3477
        %v3548 = vsub.f32 %v3190, %v3477
        %v3549 = vsub.f32 %v3191, %v3477
        %v3550 = vsub.f32 %v3192, %v3477
        %v3551 = vsub.f32 %v3193, %v3477
        %v3552 = vsub.f32 %v3194, %v3477
        %v3553 = vsub.f32 %v3195, %v3477
        %v3554 = vsub.f32 %v3196, %v3477
        %v3555 = vsub.f32 %v3197, %v3477
        %v3556 = vsub.f32 %v3198, %v3477
        %v3557 = vsub.f32 %v3199, %v3477
        %v3558 = vsub.f32 %v3200, %v3477
        %v3559 = vsub.f32 %v3201, %v3477
        %v3560 = vsub.f32 %v3202, %v3477
        %v3561 = vsub.f32 %v3203, %v3477
        %v3562 = vsub.f32 %v3204, %v3477
        %v3563 = vsub.f32 %v3205, %v3477
        %v3564 = vsub.f32 %v3206, %v3477
        %v3565 = vsub.f32 %v3207, %v3477
        %v3566 = vsub.f32 %v3208, %v3477
        %v3567 = vsub.f32 %v3209, %v3477
        %v3568 = vsub.f32 %v3210, %v3477
        %v3569 = vsub.f32 %v3211, %v3477
        %v3570 = vsub.f32 %v3212, %v3477
        %v3571 = vsub.f32 %v3213, %v3477
        %v3572 = vsub.f32 %v3214, %v3477
        %v3573 = vsub.f32 %v3215, %v3477
        %v3574 = vsub.f32 %v3312, %v3477
        %v3575 = vsub.f32 %v3313, %v3477
        %v3576 = vsub.f32 %v3314, %v3477
        %v3577 = vsub.f32 %v3315, %v3477
        %v3578 = vsub.f32 %v3316, %v3477
        %v3579 = vsub.f32 %v3317, %v3477
        %v3580 = vsub.f32 %v3318, %v3477
        %v3581 = vsub.f32 %v3319, %v3477
        %v3582 = vsub.f32 %v3320, %v3477
        %v3583 = vsub.f32 %v3321, %v3477
        %v3584 = vsub.f32 %v3322, %v3477
        %v3585 = vsub.f32 %v3323, %v3477
        %v3586 = vsub.f32 %v3324, %v3477
        %v3587 = vsub.f32 %v3325, %v3477
        %v3588 = vsub.f32 %v3326, %v3477
        %v3589 = vsub.f32 %v3327, %v3477
        %v3590 = vsub.f32 %v3328, %v3477
        %v3591 = vsub.f32 %v3329, %v3477
        %v3592 = vsub.f32 %v3330, %v3477
        %v3593 = vsub.f32 %v3331, %v3477
        %v3594 = vsub.f32 %v3332, %v3477
        %v3595 = vsub.f32 %v3333, %v3477
        %v3596 = vsub.f32 %v3334, %v3477
        %v3597 = vsub.f32 %v3335, %v3477
        %v3598 = vsub.f32 %v3336, %v3477
        %v3599 = vsub.f32 %v3337, %v3477
        %v3600 = vsub.f32 %v3338, %v3477
        %v3601 = vsub.f32 %v3339, %v3477
        %v3602 = vsub.f32 %v3340, %v3477
        %v3603 = vsub.f32 %v3341, %v3477
        %v3604 = vsub.f32 %v3342, %v3477
        %v3605 = vsub.f32 %v3343, %v3477
        %v3606 = vmul.f32 %v3478, %v3478
        %v3607 = vmul.f32 %v3479, %v3479
        %v3608 = vmul.f32 %v3480, %v3480
        %v3609 = vmul.f32 %v3481, %v3481
        %v3610 = vmul.f32 %v3482, %v3482
        %v3611 = vmul.f32 %v3483, %v3483
        %v3612 = vmul.f32 %v3484, %v3484
        %v3613 = vmul.f32 %v3485, %v3485
        %v3614 = vmul.f32 %v3486, %v3486
        %v3615 = vmul.f32 %v3487, %v3487
        %v3616 = vmul.f32 %v3488, %v3488
        %v3617 = vmul.f32 %v3489, %v3489
        %v3618 = vmul.f32 %v3490, %v3490
        %v3619 = vmul.f32 %v3491, %v3491
        %v3620 = vmul.f32 %v3492, %v3492
        %v3621 = vmul.f32 %v3493, %v3493
        %v3622 = vmul.f32 %v3494, %v3494
        %v3623 = vmul.f32 %v3495, %v3495
        %v3624 = vmul.f32 %v3496, %v3496
        %v3625 = vmul.f32 %v3497, %v3497
        %v3626 = vmul.f32 %v3498, %v3498
        %v3627 = vmul.f32 %v3499, %v3499
        %v3628 = vmul.f32 %v3500, %v3500
        %v3629 = vmul.f32 %v3501, %v3501
        %v3630 = vmul.f32 %v3502, %v3502
        %v3631 = vmul.f32 %v3503, %v3503
        %v3632 = vmul.f32 %v3504, %v3504
        %v3633 = vmul.f32 %v3505, %v3505
        %v3634 = vmul.f32 %v3506, %v3506
        %v3635 = vmul.f32 %v3507, %v3507
        %v3636 = vmul.f32 %v3508, %v3508
        %v3637 = vmul.f32 %v3509, %v3509
        %v3638 = vmul.f32 %v3510, %v3510
        %v3639 = vmul.f32 %v3511, %v3511
        %v3640 = vmul.f32 %v3512, %v3512
        %v3641 = vmul.f32 %v3513, %v3513
        %v3642 = vmul.f32 %v3514, %v3514
        %v3643 = vmul.f32 %v3515, %v3515
        %v3644 = vmul.f32 %v3516, %v3516
        %v3645 = vmul.f32 %v3517, %v3517
        %v3646 = vmul.f32 %v3518, %v3518
        %v3647 = vmul.f32 %v3519, %v3519
        %v3648 = vmul.f32 %v3520, %v3520
        %v3649 = vmul.f32 %v3521, %v3521
        %v3650 = vmul.f32 %v3522, %v3522
        %v3651 = vmul.f32 %v3523, %v3523
        %v3652 = vmul.f32 %v3524, %v3524
        %v3653 = vmul.f32 %v3525, %v3525
        %v3654 = vmul.f32 %v3526, %v3526
        %v3655 = vmul.f32 %v3527, %v3527
        %v3656 = vmul.f32 %v3528, %v3528
        %v3657 = vmul.f32 %v3529, %v3529
        %v3658 = vmul.f32 %v3530, %v3530
        %v3659 = vmul.f32 %v3531, %v3531
        %v3660 = vmul.f32 %v3532, %v3532
        %v3661 = vmul.f32 %v3533, %v3533
        %v3662 = vmul.f32 %v3534, %v3534
        %v3663 = vmul.f32 %v3535, %v3535
        %v3664 = vmul.f32 %v3536, %v3536
        %v3665 = vmul.f32 %v3537, %v3537
        %v3666 = vmul.f32 %v3538, %v3538
        %v3667 = vmul.f32 %v3539, %v3539
        %v3668 = vmul.f32 %v3540, %v3540
        %v3669 = vmul.f32 %v3541, %v3541
        %v3670 = vmul.f32 %v3542, %v3542
        %v3671 = vmul.f32 %v3543, %v3543
        %v3672 = vmul.f32 %v3544, %v3544
        %v3673 = vmul.f32 %v3545, %v3545
        %v3674 = vmul.f32 %v3546, %v3546
        %v3675 = vmul.f32 %v3547, %v3547
        %v3676 = vmul.f32 %v3548, %v3548
        %v3677 = vmul.f32 %v3549, %v3549
        %v3678 = vmul.f32 %v3550, %v3550
        %v3679 = vmul.f32 %v3551, %v3551
        %v3680 = vmul.f32 %v3552, %v3552
        %v3681 = vmul.f32 %v3553, %v3553
        %v3682 = vmul.f32 %v3554, %v3554
        %v3683 = vmul.f32 %v3555, %v3555
        %v3684 = vmul.f32 %v3556, %v3556
        %v3685 = vmul.f32 %v3557, %v3557
        %v3686 = vmul.f32 %v3558, %v3558
        %v3687 = vmul.f32 %v3559, %v3559
        %v3688 = vmul.f32 %v3560, %v3560
        %v3689 = vmul.f32 %v3561, %v3561
        %v3690 = vmul.f32 %v3562, %v3562
        %v3691 = vmul.f32 %v3563, %v3563
        %v3692 = vmul.f32 %v3564, %v3564
        %v3693 = vmul.f32 %v3565, %v3565
        %v3694 = vmul.f32 %v3566, %v3566
        %v3695 = vmul.f32 %v3567, %v3567
        %v3696 = vmul.f32 %v3568, %v3568
        %v3697 = vmul.f32 %v3569, %v3569
        %v3698 = vmul.f32 %v3570, %v3570
        %v3699 = vmul.f32 %v3571, %v3571
        %v3700 = vmul.f32 %v3572, %v3572
        %v3701 = vmul.f32 %v3573, %v3573
        %v3702 = vmul.f32 %v3574, %v3574
        %v3703 = vmul.f32 %v3575, %v3575
        %v3704 = vmul.f32 %v3576, %v3576
        %v3705 = vmul.f32 %v3577, %v3577
        %v3706 = vmul.f32 %v3578, %v3578
        %v3707 = vmul.f32 %v3579, %v3579
        %v3708 = vmul.f32 %v3580, %v3580
        %v3709 = vmul.f32 %v3581, %v3581
        %v3710 = vmul.f32 %v3582, %v3582
        %v3711 = vmul.f32 %v3583, %v3583
        %v3712 = vmul.f32 %v3584, %v3584
        %v3713 = vmul.f32 %v3585, %v3585
        %v3714 = vmul.f32 %v3586, %v3586
        %v3715 = vmul.f32 %v3587, %v3587
        %v3716 = vmul.f32 %v3588, %v3588
        %v3717 = vmul.f32 %v3589, %v3589
        %v3718 = vmul.f32 %v3590, %v3590
        %v3719 = vmul.f32 %v3591, %v3591
        %v3720 = vmul.f32 %v3592, %v3592
        %v3721 = vmul.f32 %v3593, %v3593
        %v3722 = vmul.f32 %v3594, %v3594
        %v3723 = vmul.f32 %v3595, %v3595
        %v3724 = vmul.f32 %v3596, %v3596
        %v3725 = vmul.f32 %v3597, %v3597
        %v3726 = vmul.f32 %v3598, %v3598
        %v3727 = vmul.f32 %v3599, %v3599
        %v3728 = vmul.f32 %v3600, %v3600
        %v3729 = vmul.f32 %v3601, %v3601
        %v3730 = vmul.f32 %v3602, %v3602
        %v3731 = vmul.f32 %v3603, %v3603
        %v3732 = vmul.f32 %v3604, %v3604
        %v3733 = vmul.f32 %v3605, %v3605
        %v3734 = vadd.f32 %v3606, %v3607
        %v3735 = vadd.f32 %v3734, %v3608
        %v3736 = vadd.f32 %v3735, %v3609
        %v3737 = vadd.f32 %v3736, %v3610
        %v3738 = vadd.f32 %v3737, %v3611
        %v3739 = vadd.f32 %v3738, %v3612
        %v3740 = vadd.f32 %v3739, %v3613
        %v3741 = vadd.f32 %v3740, %v3614
        %v3742 = vadd.f32 %v3741, %v3615
        %v3743 = vadd.f32 %v3742, %v3616
        %v3744 = vadd.f32 %v3743, %v3617
        %v3745 = vadd.f32 %v3744, %v3618
        %v3746 = vadd.f32 %v3745, %v3619
        %v3747 = vadd.f32 %v3746, %v3620
        %v3748 = vadd.f32 %v3747, %v3621
        %v3749 = vadd.f32 %v3748, %v3622
        %v3750 = vadd.f32 %v3749, %v3623
        %v3751 = vadd.f32 %v3750, %v3624
        %v3752 = vadd.f32 %v3751, %v3625
        %v3753 = vadd.f32 %v3752, %v3626
        %v3754 = vadd.f32 %v3753, %v3627
        %v3755 = vadd.f32 %v3754, %v3628
        %v3756 = vadd.f32 %v3755, %v3629
        %v3757 = vadd.f32 %v3756, %v3630
        %v3758 = vadd.f32 %v3757, %v3631
        %v3759 = vadd.f32 %v3758, %v3632
        %v3760 = vadd.f32 %v3759, %v3633
        %v3761 = vadd.f32 %v3760, %v3634
        %v3762 = vadd.f32 %v3761, %v3635
        %v3763 = vadd.f32 %v3762, %v3636
        %v3764 = vadd.f32 %v3763, %v3637
        %v3765 = vadd.f32 %v3764, %v3638
        %v3766 = vadd.f32 %v3765, %v3639
        %v3767 = vadd.f32 %v3766, %v3640
        %v3768 = vadd.f32 %v3767, %v3641
        %v3769 = vadd.f32 %v3768, %v3642
        %v3770 = vadd.f32 %v3769, %v3643
        %v3771 = vadd.f32 %v3770, %v3644
        %v3772 = vadd.f32 %v3771, %v3645
        %v3773 = vadd.f32 %v3772, %v3646
        %v3774 = vadd.f32 %v3773, %v3647
        %v3775 = vadd.f32 %v3774, %v3648
        %v3776 = vadd.f32 %v3775, %v3649
        %v3777 = vadd.f32 %v3776, %v3650
        %v3778 = vadd.f32 %v3777, %v3651
        %v3779 = vadd.f32 %v3778, %v3652
        %v3780 = vadd.f32 %v3779, %v3653
        %v3781 = vadd.f32 %v3780, %v3654
        %v3782 = vadd.f32 %v3781, %v3655
        %v3783 = vadd.f32 %v3782, %v3656
        %v3784 = vadd.f32 %v3783, %v3657
        %v3785 = vadd.f32 %v3784, %v3658
        %v3786 = vadd.f32 %v3785, %v3659
        %v3787 = vadd.f32 %v3786, %v3660
        %v3788 = vadd.f32 %v3787, %v3661
        %v3789 = vadd.f32 %v3788, %v3662
        %v3790 = vadd.f32 %v3789, %v3663
        %v3791 = vadd.f32 %v3790, %v3664
        %v3792 = vadd.f32 %v3791, %v3665
        %v3793 = vadd.f32 %v3792, %v3666
        %v3794 = vadd.f32 %v3793, %v3667
        %v3795 = vadd.f32 %v3794, %v3668
        %v3796 = vadd.f32 %v3795, %v3669
        %v3797 = vadd.f32 %v3796, %v3670
        %v3798 = vadd.f32 %v3797, %v3671
        %v3799 = vadd.f32 %v3798, %v3672
        %v3800 = vadd.f32 %v3799, %v3673
        %v3801 = vadd.f32 %v3800, %v3674
        %v3802 = vadd.f32 %v3801, %v3675
        %v3803 = vadd.f32 %v3802, %v3676
        %v3804 = vadd.f32 %v3803, %v3677
        %v3805 = vadd.f32 %v3804, %v3678
        %v3806 = vadd.f32 %v3805, %v3679
        %v3807 = vadd.f32 %v3806, %v3680
        %v3808 = vadd.f32 %v3807, %v3681
        %v3809 = vadd.f32 %v3808, %v3682
        %v3810 = vadd.f32 %v3809, %v3683
        %v3811 = vadd.f32 %v3810, %v3684
        %v3812 = vadd.f32 %v3811, %v3685
        %v3813 = vadd.f32 %v3812, %v3686
        %v3814 = vadd.f32 %v3813, %v3687
        %v3815 = vadd.f32 %v3814, %v3688
        %v3816 = vadd.f32 %v3815, %v3689
        %v3817 = vadd.f32 %v3816, %v3690
        %v3818 = vadd.f32 %v3817, %v3691
        %v3819 = vadd.f32 %v3818, %v3692
        %v3820 = vadd.f32 %v3819, %v3693
        %v3821 = vadd.f32 %v3820, %v3694
        %v3822 = vadd.f32 %v3821, %v3695
        %v3823 = vadd.f32 %v3822, %v3696
        %v3824 = vadd.f32 %v3823, %v3697
        %v3825 = vadd.f32 %v3824, %v3698
        %v3826 = vadd.f32 %v3825, %v3699
        %v3827 = vadd.f32 %v3826, %v3700
        %v3828 = vadd.f32 %v3827, %v3701
        %v3829 = vadd.f32 %v3828, %v3702
        %v3830 = vadd.f32 %v3829, %v3703
        %v3831 = vadd.f32 %v3830, %v3704
        %v3832 = vadd.f32 %v3831, %v3705
        %v3833 = vadd.f32 %v3832, %v3706
        %v3834 = vadd.f32 %v3833, %v3707
        %v3835 = vadd.f32 %v3834, %v3708
        %v3836 = vadd.f32 %v3835, %v3709
        %v3837 = vadd.f32 %v3836, %v3710
        %v3838 = vadd.f32 %v3837, %v3711
        %v3839 = vadd.f32 %v3838, %v3712
        %v3840 = vadd.f32 %v3839, %v3713
        %v3841 = vadd.f32 %v3840, %v3714
        %v3842 = vadd.f32 %v3841, %v3715
        %v3843 = vadd.f32 %v3842, %v3716
        %v3844 = vadd.f32 %v3843, %v3717
        %v3845 = vadd.f32 %v3844, %v3718
        %v3846 = vadd.f32 %v3845, %v3719
        %v3847 = vadd.f32 %v3846, %v3720
        %v3848 = vadd.f32 %v3847, %v3721
        %v3849 = vadd.f32 %v3848, %v3722
        %v3850 = vadd.f32 %v3849, %v3723
        %v3851 = vadd.f32 %v3850, %v3724
        %v3852 = vadd.f32 %v3851, %v3725
        %v3853 = vadd.f32 %v3852, %v3726
        %v3854 = vadd.f32 %v3853, %v3727
        %v3855 = vadd.f32 %v3854, %v3728
        %v3856 = vadd.f32 %v3855, %v3729
        %v3857 = vadd.f32 %v3856, %v3730
        %v3858 = vadd.f32 %v3857, %v3731
        %v3859 = vadd.f32 %v3858, %v3732
        %v3860 = vadd.f32 %v3859, %v3733
        %v3861 = vrot.slane %v3860, 4
        %v3862 = vadd.f32 %v3860, %v3861
        %v3863 = vrot.slane %v3862, 2
        %v3864 = vadd.f32 %v3862, %v3863
        %v3865 = vrot.slane %v3864, 1
        %v3866 = vadd.f32 %v3864, %v3865
        %v3867 = vmul.f32 %v3866, 0.0009765625
        %v3868 = vadd.f32 %v3867, 1e-05
        %v3869 = vrsqrt.pop %v3868
        %v3870 = vmul.f32 %v3478, %v3869
        %v3871 = vmul.f32 %v3479, %v3869
        %v3872 = vmul.f32 %v3480, %v3869
        %v3873 = vmul.f32 %v3481, %v3869
        %v3874 = vmul.f32 %v3482, %v3869
        %v3875 = vmul.f32 %v3483, %v3869
        %v3876 = vmul.f32 %v3484, %v3869
        %v3877 = vmul.f32 %v3485, %v3869
        %v3878 = vmul.f32 %v3486, %v3869
        %v3879 = vmul.f32 %v3487, %v3869
        %v3880 = vmul.f32 %v3488, %v3869
        %v3881 = vmul.f32 %v3489, %v3869
        %v3882 = vmul.f32 %v3490, %v3869
        %v3883 = vmul.f32 %v3491, %v3869
        %v3884 = vmul.f32 %v3492, %v3869
        %v3885 = vmul.f32 %v3493, %v3869
        %v3886 = vmul.f32 %v3494, %v3869
        %v3887 = vmul.f32 %v3495, %v3869
        %v3888 = vmul.f32 %v3496, %v3869
        %v3889 = vmul.f32 %v3497, %v3869
        %v3890 = vmul.f32 %v3498, %v3869
        %v3891 = vmul.f32 %v3499, %v3869
        %v3892 = vmul.f32 %v3500, %v3869
        %v3893 = vmul.f32 %v3501, %v3869
        %v3894 = vmul.f32 %v3502, %v3869
        %v3895 = vmul.f32 %v3503, %v3869
        %v3896 = vmul.f32 %v3504, %v3869
        %v3897 = vmul.f32 %v3505, %v3869
        %v3898 = vmul.f32 %v3506, %v3869
        %v3899 = vmul.f32 %v3507, %v3869
        %v3900 = vmul.f32 %v3508, %v3869
        %v3901 = vmul.f32 %v3509, %v3869
        %v3902 = vmul.f32 %v3510, %v3869
        %v3903 = vmul.f32 %v3511, %v3869
        %v3904 = vmul.f32 %v3512, %v3869
        %v3905 = vmul.f32 %v3513, %v3869
        %v3906 = vmul.f32 %v3514, %v3869
        %v3907 = vmul.f32 %v3515, %v3869
        %v3908 = vmul.f32 %v3516, %v3869
        %v3909 = vmul.f32 %v3517, %v3869
        %v3910 = vmul.f32 %v3518, %v3869
        %v3911 = vmul.f32 %v3519, %v3869
        %v3912 = vmul.f32 %v3520, %v3869
        %v3913 = vmul.f32 %v3521, %v3869
        %v3914 = vmul.f32 %v3522, %v3869
        %v3915 = vmul.f32 %v3523, %v3869
        %v3916 = vmul.f32 %v3524, %v3869
        %v3917 = vmul.f32 %v3525, %v3869
        %v3918 = vmul.f32 %v3526, %v3869
        %v3919 = vmul.f32 %v3527, %v3869
        %v3920 = vmul.f32 %v3528, %v3869
        %v3921 = vmul.f32 %v3529, %v3869
        %v3922 = vmul.f32 %v3530, %v3869
        %v3923 = vmul.f32 %v3531, %v3869
        %v3924 = vmul.f32 %v3532, %v3869
        %v3925 = vmul.f32 %v3533, %v3869
        %v3926 = vmul.f32 %v3534, %v3869
        %v3927 = vmul.f32 %v3535, %v3869
        %v3928 = vmul.f32 %v3536, %v3869
        %v3929 = vmul.f32 %v3537, %v3869
        %v3930 = vmul.f32 %v3538, %v3869
        %v3931 = vmul.f32 %v3539, %v3869
        %v3932 = vmul.f32 %v3540, %v3869
        %v3933 = vmul.f32 %v3541, %v3869
        %v3934 = vmul.f32 %v3542, %v3869
        %v3935 = vmul.f32 %v3543, %v3869
        %v3936 = vmul.f32 %v3544, %v3869
        %v3937 = vmul.f32 %v3545, %v3869
        %v3938 = vmul.f32 %v3546, %v3869
        %v3939 = vmul.f32 %v3547, %v3869
        %v3940 = vmul.f32 %v3548, %v3869
        %v3941 = vmul.f32 %v3549, %v3869
        %v3942 = vmul.f32 %v3550, %v3869
        %v3943 = vmul.f32 %v3551, %v3869
        %v3944 = vmul.f32 %v3552, %v3869
        %v3945 = vmul.f32 %v3553, %v3869
        %v3946 = vmul.f32 %v3554, %v3869
        %v3947 = vmul.f32 %v3555, %v3869
        %v3948 = vmul.f32 %v3556, %v3869
        %v3949 = vmul.f32 %v3557, %v3869
        %v3950 = vmul.f32 %v3558, %v3869
        %v3951 = vmul.f32 %v3559, %v3869
        %v3952 = vmul.f32 %v3560, %v3869
        %v3953 = vmul.f32 %v3561, %v3869
        %v3954 = vmul.f32 %v3562, %v3869
        %v3955 = vmul.f32 %v3563, %v3869
        %v3956 = vmul.f32 %v3564, %v3869
        %v3957 = vmul.f32 %v3565, %v3869
        %v3958 = vmul.f32 %v3566, %v3869
        %v3959 = vmul.f32 %v3567, %v3869
        %v3960 = vmul.f32 %v3568, %v3869
        %v3961 = vmul.f32 %v3569, %v3869
        %v3962 = vmul.f32 %v3570, %v3869
        %v3963 = vmul.f32 %v3571, %v3869
        %v3964 = vmul.f32 %v3572, %v3869
        %v3965 = vmul.f32 %v3573, %v3869
        %v3966 = vmul.f32 %v3574, %v3869
        %v3967 = vmul.f32 %v3575, %v3869
        %v3968 = vmul.f32 %v3576, %v3869
        %v3969 = vmul.f32 %v3577, %v3869
        %v3970 = vmul.f32 %v3578, %v3869
        %v3971 = vmul.f32 %v3579, %v3869
        %v3972 = vmul.f32 %v3580, %v3869
        %v3973 = vmul.f32 %v3581, %v3869
        %v3974 = vmul.f32 %v3582, %v3869
        %v3975 = vmul.f32 %v3583, %v3869
        %v3976 = vmul.f32 %v3584, %v3869
        %v3977 = vmul.f32 %v3585, %v3869
        %v3978 = vmul.f32 %v3586, %v3869
        %v3979 = vmul.f32 %v3587, %v3869
        %v3980 = vmul.f32 %v3588, %v3869
        %v3981 = vmul.f32 %v3589, %v3869
        %v3982 = vmul.f32 %v3590, %v3869
        %v3983 = vmul.f32 %v3591, %v3869
        %v3984 = vmul.f32 %v3592, %v3869
        %v3985 = vmul.f32 %v3593, %v3869
        %v3986 = vmul.f32 %v3594, %v3869
        %v3987 = vmul.f32 %v3595, %v3869
        %v3988 = vmul.f32 %v3596, %v3869
        %v3989 = vmul.f32 %v3597, %v3869
        %v3990 = vmul.f32 %v3598, %v3869
        %v3991 = vmul.f32 %v3599, %v3869
        %v3992 = vmul.f32 %v3600, %v3869
        %v3993 = vmul.f32 %v3601, %v3869
        %v3994 = vmul.f32 %v3602, %v3869
        %v3995 = vmul.f32 %v3603, %v3869
        %v3996 = vmul.f32 %v3604, %v3869
        %v3997 = vmul.f32 %v3605, %v3869
        %v3998 = vmax.f32 %v3870, 0.0
        %v3999 = vmax.f32 %v3871, 0.0
        %v4000 = vmax.f32 %v3872, 0.0
        %v4001 = vmax.f32 %v3873, 0.0
        %v4002 = vmax.f32 %v3874, 0.0
        %v4003 = vmax.f32 %v3875, 0.0
        %v4004 = vmax.f32 %v3876, 0.0
        %v4005 = vmax.f32 %v3877, 0.0
        %v4006 = vmax.f32 %v3878, 0.0
        %v4007 = vmax.f32 %v3879, 0.0
        %v4008 = vmax.f32 %v3880, 0.0
        %v4009 = vmax.f32 %v3881, 0.0
        %v4010 = vmax.f32 %v3882, 0.0
        %v4011 = vmax.f32 %v3883, 0.0
        %v4012 = vmax.f32 %v3884, 0.0
        %v4013 = vmax.f32 %v3885, 0.0
        %v4014 = vmax.f32 %v3886, 0.0
        %v4015 = vmax.f32 %v3887, 0.0
        %v4016 = vmax.f32 %v3888, 0.0
        %v4017 = vmax.f32 %v3889, 0.0
        %v4018 = vmax.f32 %v3890, 0.0
        %v4019 = vmax.f32 %v3891, 0.0
        %v4020 = vmax.f32 %v3892, 0.0
        %v4021 = vmax.f32 %v3893, 0.0
        %v4022 = vmax.f32 %v3894, 0.0
        %v4023 = vmax.f32 %v3895, 0.0
        %v4024 = vmax.f32 %v3896, 0.0
        %v4025 = vmax.f32 %v3897, 0.0
        %v4026 = vmax.f32 %v3898, 0.0
        %v4027 = vmax.f32 %v3899, 0.0
        %v4028 = vmax.f32 %v3900, 0.0
        %v4029 = vmax.f32 %v3901, 0.0
        %v4030 = vmax.f32 %v3902, 0.0
        %v4031 = vmax.f32 %v3903, 0.0
        %v4032 = vmax.f32 %v3904, 0.0
        %v4033 = vmax.f32 %v3905, 0.0
        %v4034 = vmax.f32 %v3906, 0.0
        %v4035 = vmax.f32 %v3907, 0.0
        %v4036 = vmax.f32 %v3908, 0.0
        %v4037 = vmax.f32 %v3909, 0.0
        %v4038 = vmax.f32 %v3910, 0.0
        %v4039 = vmax.f32 %v3911, 0.0
        %v4040 = vmax.f32 %v3912, 0.0
        %v4041 = vmax.f32 %v3913, 0.0
        %v4042 = vmax.f32 %v3914, 0.0
        %v4043 = vmax.f32 %v3915, 0.0
        %v4044 = vmax.f32 %v3916, 0.0
        %v4045 = vmax.f32 %v3917, 0.0
        %v4046 = vmax.f32 %v3918, 0.0
        %v4047 = vmax.f32 %v3919, 0.0
        %v4048 = vmax.f32 %v3920, 0.0
        %v4049 = vmax.f32 %v3921, 0.0
        %v4050 = vmax.f32 %v3922, 0.0
        %v4051 = vmax.f32 %v3923, 0.0
        %v4052 = vmax.f32 %v3924, 0.0
        %v4053 = vmax.f32 %v3925, 0.0
        %v4054 = vmax.f32 %v3926, 0.0
        %v4055 = vmax.f32 %v3927, 0.0
        %v4056 = vmax.f32 %v3928, 0.0
        %v4057 = vmax.f32 %v3929, 0.0
        %v4058 = vmax.f32 %v3930, 0.0
        %v4059 = vmax.f32 %v3931, 0.0
        %v4060 = vmax.f32 %v3932, 0.0
        %v4061 = vmax.f32 %v3933, 0.0
        %v4062 = vmax.f32 %v3934, 0.0
        %v4063 = vmax.f32 %v3935, 0.0
        %v4064 = vmax.f32 %v3936, 0.0
        %v4065 = vmax.f32 %v3937, 0.0
        %v4066 = vmax.f32 %v3938, 0.0
        %v4067 = vmax.f32 %v3939, 0.0
        %v4068 = vmax.f32 %v3940, 0.0
        %v4069 = vmax.f32 %v3941, 0.0
        %v4070 = vmax.f32 %v3942, 0.0
        %v4071 = vmax.f32 %v3943, 0.0
        %v4072 = vmax.f32 %v3944, 0.0
        %v4073 = vmax.f32 %v3945, 0.0
        %v4074 = vmax.f32 %v3946, 0.0
        %v4075 = vmax.f32 %v3947, 0.0
        %v4076 = vmax.f32 %v3948, 0.0
        %v4077 = vmax.f32 %v3949, 0.0
        %v4078 = vmax.f32 %v3950, 0.0
        %v4079 = vmax.f32 %v3951, 0.0
        %v4080 = vmax.f32 %v3952, 0.0
        %v4081 = vmax.f32 %v3953, 0.0
        %v4082 = vmax.f32 %v3954, 0.0
        %v4083 = vmax.f32 %v3955, 0.0
        %v4084 = vmax.f32 %v3956, 0.0
        %v4085 = vmax.f32 %v3957, 0.0
        %v4086 = vmax.f32 %v3958, 0.0
        %v4087 = vmax.f32 %v3959, 0.0
        %v4088 = vmax.f32 %v3960, 0.0
        %v4089 = vmax.f32 %v3961, 0.0
        %v4090 = vmax.f32 %v3962, 0.0
        %v4091 = vmax.f32 %v3963, 0.0
        %v4092 = vmax.f32 %v3964, 0.0
        %v4093 = vmax.f32 %v3965, 0.0
        %v4094 = vmax.f32 %v3966, 0.0
        %v4095 = vmax.f32 %v3967, 0.0
        %v4096 = vmax.f32 %v3968, 0.0
        %v4097 = vmax.f32 %v3969, 0.0
        %v4098 = vmax.f32 %v3970, 0.0
        %v4099 = vmax.f32 %v3971, 0.0
        %v4100 = vmax.f32 %v3972, 0.0
        %v4101 = vmax.f32 %v3973, 0.0
        %v4102 = vmax.f32 %v3974, 0.0
        %v4103 = vmax.f32 %v3975, 0.0
        %v4104 = vmax.f32 %v3976, 0.0
        %v4105 = vmax.f32 %v3977, 0.0
        %v4106 = vmax.f32 %v3978, 0.0
        %v4107 = vmax.f32 %v3979, 0.0
        %v4108 = vmax.f32 %v3980, 0.0
        %v4109 = vmax.f32 %v3981, 0.0
        %v4110 = vmax.f32 %v3982, 0.0
        %v4111 = vmax.f32 %v3983, 0.0
        %v4112 = vmax.f32 %v3984, 0.0
        %v4113 = vmax.f32 %v3985, 0.0
        %v4114 = vmax.f32 %v3986, 0.0
        %v4115 = vmax.f32 %v3987, 0.0
        %v4116 = vmax.f32 %v3988, 0.0
        %v4117 = vmax.f32 %v3989, 0.0
        %v4118 = vmax.f32 %v3990, 0.0
        %v4119 = vmax.f32 %v3991, 0.0
        %v4120 = vmax.f32 %v3992, 0.0
        %v4121 = vmax.f32 %v3993, 0.0
        %v4122 = vmax.f32 %v3994, 0.0
        %v4123 = vmax.f32 %v3995, 0.0
        %v4124 = vmax.f32 %v3996, 0.0
        %v4125 = vmax.f32 %v3997, 0.0
        %v4126 = vpack.c.bf16 %v3999, %v3998
        %v4127 = vpack.c.bf16 %v4001, %v4000
        %v4128 = vpack.c.bf16 %v4003, %v4002
        %v4129 = vpack.c.bf16 %v4005, %v4004
        %v4130 = vpack.c.bf16 %v4007, %v4006
        %v4131 = vpack.c.bf16 %v4009, %v4008
        %v4132 = vpack.c.bf16 %v4011, %v4010
        %v4133 = vpack.c.bf16 %v4013, %v4012
        %v4134 = vpack.c.bf16 %v4015, %v4014
        %v4135 = vpack.c.bf16 %v4017, %v4016
        %v4136 = vpack.c.bf16 %v4019, %v4018
        %v4137 = vpack.c.bf16 %v4021, %v4020
        %v4138 = vpack.c.bf16 %v4023, %v4022
        %v4139 = vpack.c.bf16 %v4025, %v4024
        %v4140 = vpack.c.bf16 %v4027, %v4026
        %v4141 = vpack.c.bf16 %v4029, %v4028
        %v4142 = vpack.c.bf16 %v4031, %v4030
        %v4143 = vpack.c.bf16 %v4033, %v4032
        %v4144 = vpack.c.bf16 %v4035, %v4034
        %v4145 = vpack.c.bf16 %v4037, %v4036
        %v4146 = vpack.c.bf16 %v4039, %v4038
        %v4147 = vpack.c.bf16 %v4041, %v4040
        %v4148 = vpack.c.bf16 %v4043, %v4042
        %v4149 = vpack.c.bf16 %v4045, %v4044
        %v4150 = vpack.c.bf16 %v4047, %v4046
        %v4151 = vpack.c.bf16 %v4049, %v4048
        %v4152 = vpack.c.bf16 %v4051, %v4050
        %v4153 = vpack.c.bf16 %v4053, %v4052
        %v4154 = vpack.c.bf16 %v4055, %v4054
        %v4155 = vpack.c.bf16 %v4057, %v4056
        %v4156 = vpack.c.bf16 %v4059, %v4058
        %v4157 = vpack.c.bf16 %v4061, %v4060
        %v4158 = vpack.c.bf16 %v4063, %v4062
        %v4159 = vpack.c.bf16 %v4065, %v4064
        %v4160 = vpack.c.bf16 %v4067, %v4066
        %v4161 = vpack.c.bf16 %v4069, %v4068
        %v4162 = vpack.c.bf16 %v4071, %v4070
        %v4163 = vpack.c.bf16 %v4073, %v4072
        %v4164 = vpack.c.bf16 %v4075, %v4074
        %v4165 = vpack.c.bf16 %v4077, %v4076
        %v4166 = vpack.c.bf16 %v4079, %v4078
        %v4167 = vpack.c.bf16 %v4081, %v4080
        %v4168 = vpack.c.bf16 %v4083, %v4082
        %v4169 = vpack.c.bf16 %v4085, %v4084
        %v4170 = vpack.c.bf16 %v4087, %v4086
        %v4171 = vpack.c.bf16 %v4089, %v4088
        %v4172 = vpack.c.bf16 %v4091, %v4090
        %v4173 = vpack.c.bf16 %v4093, %v4092
        %v4174 = vpack.c.bf16 %v4095, %v4094
        %v4175 = vpack.c.bf16 %v4097, %v4096
        %v4176 = vpack.c.bf16 %v4099, %v4098
        %v4177 = vpack.c.bf16 %v4101, %v4100
        %v4178 = vpack.c.bf16 %v4103, %v4102
        %v4179 = vpack.c.bf16 %v4105, %v4104
        %v4180 = vpack.c.bf16 %v4107, %v4106
        %v4181 = vpack.c.bf16 %v4109, %v4108
        %v4182 = vpack.c.bf16 %v4111, %v4110
        %v4183 = vpack.c.bf16 %v4113, %v4112
        %v4184 = vpack.c.bf16 %v4115, %v4114
        %v4185 = vpack.c.bf16 %v4117, %v4116
        %v4186 = vpack.c.bf16 %v4119, %v4118
        %v4187 = vpack.c.bf16 %v4121, %v4120
        %v4188 = vpack.c.bf16 %v4123, %v4122
        %v4189 = vpack.c.bf16 %v4125, %v4124
        %v4254 = vunpack.c.l.b16 %v4126
        %v4255 = vunpack.c.h.b16 %v4126
        %v4256 = vunpack.c.l.b16 %v4127
        %v4257 = vunpack.c.h.b16 %v4127
        %v4258 = vunpack.c.l.b16 %v4128
        %v4259 = vunpack.c.h.b16 %v4128
        %v4260 = vunpack.c.l.b16 %v4129
        %v4261 = vunpack.c.h.b16 %v4129
        %v4262 = vunpack.c.l.b16 %v4130
        %v4263 = vunpack.c.h.b16 %v4130
        %v4264 = vunpack.c.l.b16 %v4131
        %v4265 = vunpack.c.h.b16 %v4131
        %v4266 = vunpack.c.l.b16 %v4132
        %v4267 = vunpack.c.h.b16 %v4132
        %v4268 = vunpack.c.l.b16 %v4133
        %v4269 = vunpack.c.h.b16 %v4133
        %v4270 = vunpack.c.l.b16 %v4134
        %v4271 = vunpack.c.h.b16 %v4134
        %v4272 = vunpack.c.l.b16 %v4135
        %v4273 = vunpack.c.h.b16 %v4135
        %v4274 = vunpack.c.l.b16 %v4136
        %v4275 = vunpack.c.h.b16 %v4136
        %v4276 = vunpack.c.l.b16 %v4137
        %v4277 = vunpack.c.h.b16 %v4137
        %v4278 = vunpack.c.l.b16 %v4138
        %v4279 = vunpack.c.h.b16 %v4138
        %v4280 = vunpack.c.l.b16 %v4139
        %v4281 = vunpack.c.h.b16 %v4139
        %v4282 = vunpack.c.l.b16 %v4140
        %v4283 = vunpack.c.h.b16 %v4140
        %v4284 = vunpack.c.l.b16 %v4141
        %v4285 = vunpack.c.h.b16 %v4141
        %v4286 = vunpack.c.l.b16 %v4142
        %v4287 = vunpack.c.h.b16 %v4142
        %v4288 = vunpack.c.l.b16 %v4143
        %v4289 = vunpack.c.h.b16 %v4143
        %v4290 = vunpack.c.l.b16 %v4144
        %v4291 = vunpack.c.h.b16 %v4144
        %v4292 = vunpack.c.l.b16 %v4145
        %v4293 = vunpack.c.h.b16 %v4145
        %v4294 = vunpack.c.l.b16 %v4146
        %v4295 = vunpack.c.h.b16 %v4146
        %v4296 = vunpack.c.l.b16 %v4147
        %v4297 = vunpack.c.h.b16 %v4147
        %v4298 = vunpack.c.l.b16 %v4148
        %v4299 = vunpack.c.h.b16 %v4148
        %v4300 = vunpack.c.l.b16 %v4149
        %v4301 = vunpack.c.h.b16 %v4149
        %v4302 = vunpack.c.l.b16 %v4150
        %v4303 = vunpack.c.h.b16 %v4150
        %v4304 = vunpack.c.l.b16 %v4151
        %v4305 = vunpack.c.h.b16 %v4151
        %v4306 = vunpack.c.l.b16 %v4152
        %v4307 = vunpack.c.h.b16 %v4152
        %v4308 = vunpack.c.l.b16 %v4153
        %v4309 = vunpack.c.h.b16 %v4153
        %v4310 = vunpack.c.l.b16 %v4154
        %v4311 = vunpack.c.h.b16 %v4154
        %v4312 = vunpack.c.l.b16 %v4155
        %v4313 = vunpack.c.h.b16 %v4155
        %v4314 = vunpack.c.l.b16 %v4156
        %v4315 = vunpack.c.h.b16 %v4156
        %v4316 = vunpack.c.l.b16 %v4157
        %v4317 = vunpack.c.h.b16 %v4157
        %v4318 = vunpack.c.l.b16 %v4158
        %v4319 = vunpack.c.h.b16 %v4158
        %v4320 = vunpack.c.l.b16 %v4159
        %v4321 = vunpack.c.h.b16 %v4159
        %v4322 = vunpack.c.l.b16 %v4160
        %v4323 = vunpack.c.h.b16 %v4160
        %v4324 = vunpack.c.l.b16 %v4161
        %v4325 = vunpack.c.h.b16 %v4161
        %v4326 = vunpack.c.l.b16 %v4162
        %v4327 = vunpack.c.h.b16 %v4162
        %v4328 = vunpack.c.l.b16 %v4163
        %v4329 = vunpack.c.h.b16 %v4163
        %v4330 = vunpack.c.l.b16 %v4164
        %v4331 = vunpack.c.h.b16 %v4164
        %v4332 = vunpack.c.l.b16 %v4165
        %v4333 = vunpack.c.h.b16 %v4165
        %v4334 = vunpack.c.l.b16 %v4166
        %v4335 = vunpack.c.h.b16 %v4166
        %v4336 = vunpack.c.l.b16 %v4167
        %v4337 = vunpack.c.h.b16 %v4167
        %v4338 = vunpack.c.l.b16 %v4168
        %v4339 = vunpack.c.h.b16 %v4168
        %v4340 = vunpack.c.l.b16 %v4169
        %v4341 = vunpack.c.h.b16 %v4169
        %v4342 = vunpack.c.l.b16 %v4170
        %v4343 = vunpack.c.h.b16 %v4170
        %v4344 = vunpack.c.l.b16 %v4171
        %v4345 = vunpack.c.h.b16 %v4171
        %v4346 = vunpack.c.l.b16 %v4172
        %v4347 = vunpack.c.h.b16 %v4172
        %v4348 = vunpack.c.l.b16 %v4173
        %v4349 = vunpack.c.h.b16 %v4173
        %v4350 = vunpack.c.l.b16 %v4174
        %v4351 = vunpack.c.h.b16 %v4174
        %v4352 = vunpack.c.l.b16 %v4175
        %v4353 = vunpack.c.h.b16 %v4175
        %v4354 = vunpack.c.l.b16 %v4176
        %v4355 = vunpack.c.h.b16 %v4176
        %v4356 = vunpack.c.l.b16 %v4177
        %v4357 = vunpack.c.h.b16 %v4177
        %v4358 = vunpack.c.l.b16 %v4178
        %v4359 = vunpack.c.h.b16 %v4178
        %v4360 = vunpack.c.l.b16 %v4179
        %v4361 = vunpack.c.h.b16 %v4179
        %v4362 = vunpack.c.l.b16 %v4180
        %v4363 = vunpack.c.h.b16 %v4180
        %v4364 = vunpack.c.l.b16 %v4181
        %v4365 = vunpack.c.h.b16 %v4181
        %v4366 = vunpack.c.l.b16 %v4182
        %v4367 = vunpack.c.h.b16 %v4182
        %v4368 = vunpack.c.l.b16 %v4183
        %v4369 = vunpack.c.h.b16 %v4183
        %v4370 = vunpack.c.l.b16 %v4184
        %v4371 = vunpack.c.h.b16 %v4184
        %v4372 = vunpack.c.l.b16 %v4185
        %v4373 = vunpack.c.h.b16 %v4185
        %v4374 = vunpack.c.l.b16 %v4186
        %v4375 = vunpack.c.h.b16 %v4186
        %v4376 = vunpack.c.l.b16 %v4187
        %v4377 = vunpack.c.h.b16 %v4187
        %v4378 = vunpack.c.l.b16 %v4188
        %v4379 = vunpack.c.h.b16 %v4188
        %v4380 = vunpack.c.l.b16 %v4189
        %v4381 = vunpack.c.h.b16 %v4189
        %v4382 = vpack.c.b16 %v4254, %v4254
        %v4383 = vpack.c.b16 %v4255, %v4255
        %v4384 = vpack.c.b16 %v4256, %v4256
        %v4385 = vpack.c.b16 %v4257, %v4257
        %v4386 = vpack.c.b16 %v4258, %v4258
        %v4387 = vpack.c.b16 %v4259, %v4259
        %v4388 = vpack.c.b16 %v4260, %v4260
        %v4389 = vpack.c.b16 %v4261, %v4261
        %v4390 = vpack.c.b16 %v4262, %v4262
        %v4391 = vpack.c.b16 %v4263, %v4263
        %v4392 = vpack.c.b16 %v4264, %v4264
        %v4393 = vpack.c.b16 %v4265, %v4265
        %v4394 = vpack.c.b16 %v4266, %v4266
        %v4395 = vpack.c.b16 %v4267, %v4267
        %v4396 = vpack.c.b16 %v4268, %v4268
        %v4397 = vpack.c.b16 %v4269, %v4269
        %v4398 = vpack.c.b16 %v4270, %v4270
        %v4399 = vpack.c.b16 %v4271, %v4271
        %v4400 = vpack.c.b16 %v4272, %v4272
        %v4401 = vpack.c.b16 %v4273, %v4273
        %v4402 = vpack.c.b16 %v4274, %v4274
        %v4403 = vpack.c.b16 %v4275, %v4275
        %v4404 = vpack.c.b16 %v4276, %v4276
        %v4405 = vpack.c.b16 %v4277, %v4277
        %v4406 = vpack.c.b16 %v4278, %v4278
        %v4407 = vpack.c.b16 %v4279, %v4279
        %v4408 = vpack.c.b16 %v4280, %v4280
        %v4409 = vpack.c.b16 %v4281, %v4281
        %v4410 = vpack.c.b16 %v4282, %v4282
        %v4411 = vpack.c.b16 %v4283, %v4283
        %v4412 = vpack.c.b16 %v4284, %v4284
        %v4413 = vpack.c.b16 %v4285, %v4285
        %v4414 = vpack.c.b16 %v4286, %v4286
        %v4415 = vpack.c.b16 %v4287, %v4287
        %v4416 = vpack.c.b16 %v4288, %v4288
        %v4417 = vpack.c.b16 %v4289, %v4289
        %v4418 = vpack.c.b16 %v4290, %v4290
        %v4419 = vpack.c.b16 %v4291, %v4291
        %v4420 = vpack.c.b16 %v4292, %v4292
        %v4421 = vpack.c.b16 %v4293, %v4293
        %v4422 = vpack.c.b16 %v4294, %v4294
        %v4423 = vpack.c.b16 %v4295, %v4295
        %v4424 = vpack.c.b16 %v4296, %v4296
        %v4425 = vpack.c.b16 %v4297, %v4297
        %v4426 = vpack.c.b16 %v4298, %v4298
        %v4427 = vpack.c.b16 %v4299, %v4299
        %v4428 = vpack.c.b16 %v4300, %v4300
        %v4429 = vpack.c.b16 %v4301, %v4301
        %v4430 = vpack.c.b16 %v4302, %v4302
        %v4431 = vpack.c.b16 %v4303, %v4303
        %v4432 = vpack.c.b16 %v4304, %v4304
        %v4433 = vpack.c.b16 %v4305, %v4305
        %v4434 = vpack.c.b16 %v4306, %v4306
        %v4435 = vpack.c.b16 %v4307, %v4307
        %v4436 = vpack.c.b16 %v4308, %v4308
        %v4437 = vpack.c.b16 %v4309, %v4309
        %v4438 = vpack.c.b16 %v4310, %v4310
        %v4439 = vpack.c.b16 %v4311, %v4311
        %v4440 = vpack.c.b16 %v4312, %v4312
        %v4441 = vpack.c.b16 %v4313, %v4313
        %v4442 = vpack.c.b16 %v4314, %v4314
        %v4443 = vpack.c.b16 %v4315, %v4315
        %v4444 = vpack.c.b16 %v4316, %v4316
        %v4445 = vpack.c.b16 %v4317, %v4317
        %v4446 = vpack.c.b16 %v4318, %v4318
        %v4447 = vpack.c.b16 %v4319, %v4319
        %v4448 = vpack.c.b16 %v4320, %v4320
        %v4449 = vpack.c.b16 %v4321, %v4321
        %v4450 = vpack.c.b16 %v4322, %v4322
        %v4451 = vpack.c.b16 %v4323, %v4323
        %v4452 = vpack.c.b16 %v4324, %v4324
        %v4453 = vpack.c.b16 %v4325, %v4325
        %v4454 = vpack.c.b16 %v4326, %v4326
        %v4455 = vpack.c.b16 %v4327, %v4327
        %v4456 = vpack.c.b16 %v4328, %v4328
        %v4457 = vpack.c.b16 %v4329, %v4329
        %v4458 = vpack.c.b16 %v4330, %v4330
        %v4459 = vpack.c.b16 %v4331, %v4331
        %v4460 = vpack.c.b16 %v4332, %v4332
        %v4461 = vpack.c.b16 %v4333, %v4333
        %v4462 = vpack.c.b16 %v4334, %v4334
        %v4463 = vpack.c.b16 %v4335, %v4335
        %v4464 = vpack.c.b16 %v4336, %v4336
        %v4465 = vpack.c.b16 %v4337, %v4337
        %v4466 = vpack.c.b16 %v4338, %v4338
        %v4467 = vpack.c.b16 %v4339, %v4339
        %v4468 = vpack.c.b16 %v4340, %v4340
        %v4469 = vpack.c.b16 %v4341, %v4341
        %v4470 = vpack.c.b16 %v4342, %v4342
        %v4471 = vpack.c.b16 %v4343, %v4343
        %v4472 = vpack.c.b16 %v4344, %v4344
        %v4473 = vpack.c.b16 %v4345, %v4345
        %v4474 = vpack.c.b16 %v4346, %v4346
        %v4475 = vpack.c.b16 %v4347, %v4347
        %v4476 = vpack.c.b16 %v4348, %v4348
        %v4477 = vpack.c.b16 %v4349, %v4349
        %v4478 = vpack.c.b16 %v4350, %v4350
        %v4479 = vpack.c.b16 %v4351, %v4351
        %v4480 = vpack.c.b16 %v4352, %v4352
        %v4481 = vpack.c.b16 %v4353, %v4353
        %v4482 = vpack.c.b16 %v4354, %v4354
        %v4483 = vpack.c.b16 %v4355, %v4355
        %v4484 = vpack.c.b16 %v4356, %v4356
        %v4485 = vpack.c.b16 %v4357, %v4357
        %v4486 = vpack.c.b16 %v4358, %v4358
        %v4487 = vpack.c.b16 %v4359, %v4359
        %v4488 = vpack.c.b16 %v4360, %v4360
        %v4489 = vpack.c.b16 %v4361, %v4361
        %v4490 = vpack.c.b16 %v4362, %v4362
        %v4491 = vpack.c.b16 %v4363, %v4363
        %v4492 = vpack.c.b16 %v4364, %v4364
        %v4493 = vpack.c.b16 %v4365, %v4365
        %v4494 = vpack.c.b16 %v4366, %v4366
        %v4495 = vpack.c.b16 %v4367, %v4367
        %v4496 = vpack.c.b16 %v4368, %v4368
        %v4497 = vpack.c.b16 %v4369, %v4369
        %v4498 = vpack.c.b16 %v4370, %v4370
        %v4499 = vpack.c.b16 %v4371, %v4371
        %v4500 = vpack.c.b16 %v4372, %v4372
        %v4501 = vpack.c.b16 %v4373, %v4373
        %v4502 = vpack.c.b16 %v4374, %v4374
        %v4503 = vpack.c.b16 %v4375, %v4375
        %v4504 = vpack.c.b16 %v4376, %v4376
        %v4505 = vpack.c.b16 %v4377, %v4377
        %v4506 = vpack.c.b16 %v4378, %v4378
        %v4507 = vpack.c.b16 %v4379, %v4379
        %v4508 = vpack.c.b16 %v4380, %v4380
        %v4509 = vpack.c.b16 %v4381, %v4381
        %4638 = vst [vmem:[%s442] sm:$0xf] %v4382
        %4639 = vst [vmem:[%s442 + $0x4] sm:$0xf] %v4383
        %4640 = vst [vmem:[%s442 + $0x8] sm:$0xf] %v4384
        %4641 = vst [vmem:[%s442 + $0xc] sm:$0xf] %v4385
        %4642 = vst [vmem:[%s442 + $0x10] sm:$0xf] %v4386
        %4643 = vst [vmem:[%s442 + $0x14] sm:$0xf] %v4387
        %4644 = vst [vmem:[%s442 + $0x18] sm:$0xf] %v4388
        %4645 = vst [vmem:[%s442 + $0x1c] sm:$0xf] %v4389
        %4646 = vst [vmem:[%s442 + $0x20] sm:$0xf] %v4390
        %4647 = vst [vmem:[%s442 + $0x24] sm:$0xf] %v4391
        %4648 = vst [vmem:[%s442 + $0x28] sm:$0xf] %v4392
        %4649 = vst [vmem:[%s442 + $0x2c] sm:$0xf] %v4393
        %4650 = vst [vmem:[%s442 + $0x30] sm:$0xf] %v4394
        %4651 = vst [vmem:[%s442 + $0x34] sm:$0xf] %v4395
        %4652 = vst [vmem:[%s442 + $0x38] sm:$0xf] %v4396
        %4653 = vst [vmem:[%s442 + $0x3c] sm:$0xf] %v4397
        %4654 = vst [vmem:[%s442 + $0x40] sm:$0xf] %v4398
        %4655 = vst [vmem:[%s442 + $0x44] sm:$0xf] %v4399
        %4656 = vst [vmem:[%s442 + $0x48] sm:$0xf] %v4400
        %4657 = vst [vmem:[%s442 + $0x4c] sm:$0xf] %v4401
        %4658 = vst [vmem:[%s442 + $0x50] sm:$0xf] %v4402
        %4659 = vst [vmem:[%s442 + $0x54] sm:$0xf] %v4403
        %4660 = vst [vmem:[%s442 + $0x58] sm:$0xf] %v4404
        %4661 = vst [vmem:[%s442 + $0x5c] sm:$0xf] %v4405
        %4662 = vst [vmem:[%s442 + $0x60] sm:$0xf] %v4406
        %4663 = vst [vmem:[%s442 + $0x64] sm:$0xf] %v4407
        %4664 = vst [vmem:[%s442 + $0x68] sm:$0xf] %v4408
        %4665 = vst [vmem:[%s442 + $0x6c] sm:$0xf] %v4409
        %4666 = vst [vmem:[%s442 + $0x70] sm:$0xf] %v4410
        %4667 = vst [vmem:[%s442 + $0x74] sm:$0xf] %v4411
        %4668 = vst [vmem:[%s442 + $0x78] sm:$0xf] %v4412
        %4669 = vst [vmem:[%s442 + $0x7c] sm:$0xf] %v4413
        %4670 = vst [vmem:[%s442 + $0x80] sm:$0xf] %v4414
        %4671 = vst [vmem:[%s442 + $0x84] sm:$0xf] %v4415
        %4672 = vst [vmem:[%s442 + $0x88] sm:$0xf] %v4416
        %4673 = vst [vmem:[%s442 + $0x8c] sm:$0xf] %v4417
        %4674 = vst [vmem:[%s442 + $0x90] sm:$0xf] %v4418
        %4675 = vst [vmem:[%s442 + $0x94] sm:$0xf] %v4419
        %4676 = vst [vmem:[%s442 + $0x98] sm:$0xf] %v4420
        %4677 = vst [vmem:[%s442 + $0x9c] sm:$0xf] %v4421
        %4678 = vst [vmem:[%s442 + $0xa0] sm:$0xf] %v4422
        %4679 = vst [vmem:[%s442 + $0xa4] sm:$0xf] %v4423
        %4680 = vst [vmem:[%s442 + $0xa8] sm:$0xf] %v4424
        %4681 = vst [vmem:[%s442 + $0xac] sm:$0xf] %v4425
        %4682 = vst [vmem:[%s442 + $0xb0] sm:$0xf] %v4426
        %4683 = vst [vmem:[%s442 + $0xb4] sm:$0xf] %v4427
        %4684 = vst [vmem:[%s442 + $0xb8] sm:$0xf] %v4428
        %4685 = vst [vmem:[%s442 + $0xbc] sm:$0xf] %v4429
        %4686 = vst [vmem:[%s442 + $0xc0] sm:$0xf] %v4430
        %4687 = vst [vmem:[%s442 + $0xc4] sm:$0xf] %v4431
        %4688 = vst [vmem:[%s442 + $0xc8] sm:$0xf] %v4432
        %4689 = vst [vmem:[%s442 + $0xcc] sm:$0xf] %v4433
        %4690 = vst [vmem:[%s442 + $0xd0] sm:$0xf] %v4434
        %4691 = vst [vmem:[%s442 + $0xd4] sm:$0xf] %v4435
        %4692 = vst [vmem:[%s442 + $0xd8] sm:$0xf] %v4436
        %4693 = vst [vmem:[%s442 + $0xdc] sm:$0xf] %v4437
        %4694 = vst [vmem:[%s442 + $0xe0] sm:$0xf] %v4438
        %4695 = vst [vmem:[%s442 + $0xe4] sm:$0xf] %v4439
        %4696 = vst [vmem:[%s442 + $0xe8] sm:$0xf] %v4440
        %4697 = vst [vmem:[%s442 + $0xec] sm:$0xf] %v4441
        %4698 = vst [vmem:[%s442 + $0xf0] sm:$0xf] %v4442
        %4699 = vst [vmem:[%s442 + $0xf4] sm:$0xf] %v4443
        %4700 = vst [vmem:[%s442 + $0xf8] sm:$0xf] %v4444
        %4701 = vst [vmem:[%s442 + $0xfc] sm:$0xf] %v4445
        %4702 = vst [vmem:[%s442 + $0x100] sm:$0xf] %v4446
        %4703 = vst [vmem:[%s442 + $0x104] sm:$0xf] %v4447
        %4704 = vst [vmem:[%s442 + $0x108] sm:$0xf] %v4448
        %4705 = vst [vmem:[%s442 + $0x10c] sm:$0xf] %v4449
        %4706 = vst [vmem:[%s442 + $0x110] sm:$0xf] %v4450
        %4707 = vst [vmem:[%s442 + $0x114] sm:$0xf] %v4451
        %4708 = vst [vmem:[%s442 + $0x118] sm:$0xf] %v4452
        %4709 = vst [vmem:[%s442 + $0x11c] sm:$0xf] %v4453
        %4710 = vst [vmem:[%s442 + $0x120] sm:$0xf] %v4454
        %4711 = vst [vmem:[%s442 + $0x124] sm:$0xf] %v4455
        %4712 = vst [vmem:[%s442 + $0x128] sm:$0xf] %v4456
        %4713 = vst [vmem:[%s442 + $0x12c] sm:$0xf] %v4457
        %4714 = vst [vmem:[%s442 + $0x130] sm:$0xf] %v4458
        %4715 = vst [vmem:[%s442 + $0x134] sm:$0xf] %v4459
        %4716 = vst [vmem:[%s442 + $0x138] sm:$0xf] %v4460
        %4717 = vst [vmem:[%s442 + $0x13c] sm:$0xf] %v4461
        %4718 = vst [vmem:[%s442 + $0x140] sm:$0xf] %v4462
        %4719 = vst [vmem:[%s442 + $0x144] sm:$0xf] %v4463
        %4720 = vst [vmem:[%s442 + $0x148] sm:$0xf] %v4464
        %4721 = vst [vmem:[%s442 + $0x14c] sm:$0xf] %v4465
        %4722 = vst [vmem:[%s442 + $0x150] sm:$0xf] %v4466
        %4723 = vst [vmem:[%s442 + $0x154] sm:$0xf] %v4467
        %4724 = vst [vmem:[%s442 + $0x158] sm:$0xf] %v4468
        %4725 = vst [vmem:[%s442 + $0x15c] sm:$0xf] %v4469
        %4726 = vst [vmem:[%s442 + $0x160] sm:$0xf] %v4470
        %4727 = vst [vmem:[%s442 + $0x164] sm:$0xf] %v4471
        %4728 = vst [vmem:[%s442 + $0x168] sm:$0xf] %v4472
        %4729 = vst [vmem:[%s442 + $0x16c] sm:$0xf] %v4473
        %4730 = vst [vmem:[%s442 + $0x170] sm:$0xf] %v4474
        %4731 = vst [vmem:[%s442 + $0x174] sm:$0xf] %v4475
        %4732 = vst [vmem:[%s442 + $0x178] sm:$0xf] %v4476
        %4733 = vst [vmem:[%s442 + $0x17c] sm:$0xf] %v4477
        %4734 = vst [vmem:[%s442 + $0x180] sm:$0xf] %v4478
        %4735 = vst [vmem:[%s442 + $0x184] sm:$0xf] %v4479
        %4736 = vst [vmem:[%s442 + $0x188] sm:$0xf] %v4480
        %4737 = vst [vmem:[%s442 + $0x18c] sm:$0xf] %v4481
        %4738 = vst [vmem:[%s442 + $0x190] sm:$0xf] %v4482
        %4739 = vst [vmem:[%s442 + $0x194] sm:$0xf] %v4483
        %4740 = vst [vmem:[%s442 + $0x198] sm:$0xf] %v4484
        %4741 = vst [vmem:[%s442 + $0x19c] sm:$0xf] %v4485
        %4742 = vst [vmem:[%s442 + $0x1a0] sm:$0xf] %v4486
        %4743 = vst [vmem:[%s442 + $0x1a4] sm:$0xf] %v4487
        %4744 = vst [vmem:[%s442 + $0x1a8] sm:$0xf] %v4488
        %4745 = vst [vmem:[%s442 + $0x1ac] sm:$0xf] %v4489
        %4746 = vst [vmem:[%s442 + $0x1b0] sm:$0xf] %v4490
        %4747 = vst [vmem:[%s442 + $0x1b4] sm:$0xf] %v4491
        %4748 = vst [vmem:[%s442 + $0x1b8] sm:$0xf] %v4492
        %4749 = vst [vmem:[%s442 + $0x1bc] sm:$0xf] %v4493
        %4750 = vst [vmem:[%s442 + $0x1c0] sm:$0xf] %v4494
        %4751 = vst [vmem:[%s442 + $0x1c4] sm:$0xf] %v4495
        %4752 = vst [vmem:[%s442 + $0x1c8] sm:$0xf] %v4496
        %4753 = vst [vmem:[%s442 + $0x1cc] sm:$0xf] %v4497
        %4754 = vst [vmem:[%s442 + $0x1d0] sm:$0xf] %v4498
        %4755 = vst [vmem:[%s442 + $0x1d4] sm:$0xf] %v4499
        %4756 = vst [vmem:[%s442 + $0x1d8] sm:$0xf] %v4500
        %4757 = vst [vmem:[%s442 + $0x1dc] sm:$0xf] %v4501
        %4758 = vst [vmem:[%s442 + $0x1e0] sm:$0xf] %v4502
        %4759 = vst [vmem:[%s442 + $0x1e4] sm:$0xf] %v4503
        %4760 = vst [vmem:[%s442 + $0x1e8] sm:$0xf] %v4504
        %4761 = vst [vmem:[%s442 + $0x1ec] sm:$0xf] %v4505
        %4762 = vst [vmem:[%s442 + $0x1f0] sm:$0xf] %v4506
        %4763 = vst [vmem:[%s442 + $0x1f4] sm:$0xf] %v4507
        %4764 = vst [vmem:[%s442 + $0x1f8] sm:$0xf] %v4508
        %4765 = vst [vmem:[%s442 + $0x1fc] sm:$0xf] %v4509
        %s4766 = sand.u32 %s204, 1
        %s4767 = sand.u32 %s204, 1
        %s4768 = smul.addr %s4767, 512
        %s4769 = scalar_lea.vmem [#allocation10], %s4768
        // Predicated region
        $region65: #{vit_decoder_forward.5} parent=43 // pred_check
          %p4770 = pneg %p214
        $region66: #{vit_decoder_forward.5} parent=43 // pred_check_branch
          %4772 = sbr.rel (%p4770) target = $region68
        $region67: #{vit_decoder_forward.5} parent=43 // pred_region
          %s4773 = smul.addr %s30, 256
          %s4774 = sadd.s32 %s31, %s4773
          %s4775 = smul.addr %s4774, 4
          %s4776 = scalar_lea.vmem %s6, %s4775
          // Predicated region
          $region69: #{vit_decoder_forward.5} parent=67 // pred_check
            _
          $region70: #{vit_decoder_forward.5} parent=67 // pred_check_branch
            %4778 = sbr.rel (0) target = $region72
          $region71: #{vit_decoder_forward.5} parent=67 // pred_region
            // Predicated region
            $region73: #{vit_decoder_forward.5} parent=71 // pred_check
              _
            $region74: #{vit_decoder_forward.5} parent=71 // pred_check_branch
              %4780 = sbr.rel target = $region76
            $region75: #{vit_decoder_forward.5} parent=71 // pred_region
              // Predicated region
              $region88: #{vit_decoder_forward.5} parent=75 // pred_check
                _
              $region89: #{vit_decoder_forward.5} parent=75 // pred_check_branch
                %5050 = sbr.rel (0) target = $region91
              $region90: #{vit_decoder_forward.5} parent=75 // pred_region
                loop: start=0, step=1, limit=1
                $region92: #{vit_decoder_forward.5} parent=90 // loop_pre_header
                  _
                $region93: #{vit_decoder_forward.5} parent=90 // loop_header
                  %s5052 = sphi 0, %s5056
                  %p5053 = scmp.ge.s32.totalorder %s5052, 1
                  %s5057 = sphi %s4769, %s4769
                  %s5058 = sphi %s4776, %s4776
                $region94: #{vit_decoder_forward.5} parent=90 // loop_header_branch
                  %5055 = sbr.rel (%p5053) target = $region98
                $region95: #{vit_decoder_forward.5} parent=90 // loop_body
                  _
                $region96: #{vit_decoder_forward.5} parent=90 // loop_footer
                  %s5056 = sadd.s32 1, %s5052
                $region97: #{vit_decoder_forward.5} parent=90 // loop_footer_branch
                  %5051 = sbr.rel target = $region93
                $region98: #{vit_decoder_forward.5} parent=90 // loop_exit
                  _
                %s5060 = ssub.s32 16, 1
                loop: start=0, step=1, limit=1
                $region99: #{vit_decoder_forward.5} parent=90 // loop_pre_header
                  _
                $region100: #{vit_decoder_forward.5} parent=90 // loop_header
                  %s5062 = sphi 0, %s5066
                  %p5063 = scmp.ge.s32.totalorder %s5062, 1
                  %s5067 = sphi %s4769, %s4769
                  %s5068 = sphi %s4776, %s4776
                $region101: #{vit_decoder_forward.5} parent=90 // loop_header_branch
                  %5065 = sbr.rel (%p5063) target = $region105
                $region102: #{vit_decoder_forward.5} parent=90 // loop_body
                  %v5069 = vld [vmem:[%s5067] sm:%s5060]
                  %5070 = vst [vmem:[%s5068] sm:%s5060] %v5069
                  %v5071 = vld [vmem:[%s5067 + $0x4] sm:%s5060]
                  %5072 = vst [vmem:[%s5068 + $0x8] sm:%s5060] %v5071
                  %v5073 = vld [vmem:[%s5067 + $0x8] sm:%s5060]
                  %5074 = vst [vmem:[%s5068 + $0x10] sm:%s5060] %v5073
                  %v5075 = vld [vmem:[%s5067 + $0xc] sm:%s5060]
                  %5076 = vst [vmem:[%s5068 + $0x18] sm:%s5060] %v5075
                  %v5077 = vld [vmem:[%s5067 + $0x10] sm:%s5060]
                  %5078 = vst [vmem:[%s5068 + $0x20] sm:%s5060] %v5077
                  %v5079 = vld [vmem:[%s5067 + $0x14] sm:%s5060]
                  %5080 = vst [vmem:[%s5068 + $0x28] sm:%s5060] %v5079
                  %v5081 = vld [vmem:[%s5067 + $0x18] sm:%s5060]
                  %5082 = vst [vmem:[%s5068 + $0x30] sm:%s5060] %v5081
                  %v5083 = vld [vmem:[%s5067 + $0x1c] sm:%s5060]
                  %5084 = vst [vmem:[%s5068 + $0x38] sm:%s5060] %v5083
                  %v5085 = vld [vmem:[%s5067 + $0x20] sm:%s5060]
                  %5086 = vst [vmem:[%s5068 + $0x40] sm:%s5060] %v5085
                  %v5087 = vld [vmem:[%s5067 + $0x24] sm:%s5060]
                  %5088 = vst [vmem:[%s5068 + $0x48] sm:%s5060] %v5087
                  %v5089 = vld [vmem:[%s5067 + $0x28] sm:%s5060]
                  %5090 = vst [vmem:[%s5068 + $0x50] sm:%s5060] %v5089
                  %v5091 = vld [vmem:[%s5067 + $0x2c] sm:%s5060]
                  %5092 = vst [vmem:[%s5068 + $0x58] sm:%s5060] %v5091
                  %v5093 = vld [vmem:[%s5067 + $0x30] sm:%s5060]
                  %5094 = vst [vmem:[%s5068 + $0x60] sm:%s5060] %v5093
                  %v5095 = vld [vmem:[%s5067 + $0x34] sm:%s5060]
                  %5096 = vst [vmem:[%s5068 + $0x68] sm:%s5060] %v5095
                  %v5097 = vld [vmem:[%s5067 + $0x38] sm:%s5060]
                  %5098 = vst [vmem:[%s5068 + $0x70] sm:%s5060] %v5097
                  %v5099 = vld [vmem:[%s5067 + $0x3c] sm:%s5060]
                  %5100 = vst [vmem:[%s5068 + $0x78] sm:%s5060] %v5099
                  %v5101 = vld [vmem:[%s5067 + $0x40] sm:%s5060]
                  %5102 = vst [vmem:[%s5068 + $0x80] sm:%s5060] %v5101
                  %v5103 = vld [vmem:[%s5067 + $0x44] sm:%s5060]
                  %5104 = vst [vmem:[%s5068 + $0x88] sm:%s5060] %v5103
                  %v5105 = vld [vmem:[%s5067 + $0x48] sm:%s5060]
                  %5106 = vst [vmem:[%s5068 + $0x90] sm:%s5060] %v5105
                  %v5107 = vld [vmem:[%s5067 + $0x4c] sm:%s5060]
                  %5108 = vst [vmem:[%s5068 + $0x98] sm:%s5060] %v5107
                  %v5109 = vld [vmem:[%s5067 + $0x50] sm:%s5060]
                  %5110 = vst [vmem:[%s5068 + $0xa0] sm:%s5060] %v5109
                  %v5111 = vld [vmem:[%s5067 + $0x54] sm:%s5060]
                  %5112 = vst [vmem:[%s5068 + $0xa8] sm:%s5060] %v5111
                  %v5113 = vld [vmem:[%s5067 + $0x58] sm:%s5060]
                  %5114 = vst [vmem:[%s5068 + $0xb0] sm:%s5060] %v5113
                  %v5115 = vld [vmem:[%s5067 + $0x5c] sm:%s5060]
                  %5116 = vst [vmem:[%s5068 + $0xb8] sm:%s5060] %v5115
                  %v5117 = vld [vmem:[%s5067 + $0x60] sm:%s5060]
                  %5118 = vst [vmem:[%s5068 + $0xc0] sm:%s5060] %v5117
                  %v5119 = vld [vmem:[%s5067 + $0x64] sm:%s5060]
                  %5120 = vst [vmem:[%s5068 + $0xc8] sm:%s5060] %v5119
                  %v5121 = vld [vmem:[%s5067 + $0x68] sm:%s5060]
                  %5122 = vst [vmem:[%s5068 + $0xd0] sm:%s5060] %v5121
                  %v5123 = vld [vmem:[%s5067 + $0x6c] sm:%s5060]
                  %5124 = vst [vmem:[%s5068 + $0xd8] sm:%s5060] %v5123
                  %v5125 = vld [vmem:[%s5067 + $0x70] sm:%s5060]
                  %5126 = vst [vmem:[%s5068 + $0xe0] sm:%s5060] %v5125
                  %v5127 = vld [vmem:[%s5067 + $0x74] sm:%s5060]
                  %5128 = vst [vmem:[%s5068 + $0xe8] sm:%s5060] %v5127
                  %v5129 = vld [vmem:[%s5067 + $0x78] sm:%s5060]
                  %5130 = vst [vmem:[%s5068 + $0xf0] sm:%s5060] %v5129
                  %v5131 = vld [vmem:[%s5067 + $0x7c] sm:%s5060]
                  %5132 = vst [vmem:[%s5068 + $0xf8] sm:%s5060] %v5131
                  %v5133 = vld [vmem:[%s5067 + $0x80] sm:%s5060]
                  %5134 = vst [vmem:[%s5068 + $0x100] sm:%s5060] %v5133
                  %v5135 = vld [vmem:[%s5067 + $0x84] sm:%s5060]
                  %5136 = vst [vmem:[%s5068 + $0x108] sm:%s5060] %v5135
                  %v5137 = vld [vmem:[%s5067 + $0x88] sm:%s5060]
                  %5138 = vst [vmem:[%s5068 + $0x110] sm:%s5060] %v5137
                  %v5139 = vld [vmem:[%s5067 + $0x8c] sm:%s5060]
                  %5140 = vst [vmem:[%s5068 + $0x118] sm:%s5060] %v5139
                  %v5141 = vld [vmem:[%s5067 + $0x90] sm:%s5060]
                  %5142 = vst [vmem:[%s5068 + $0x120] sm:%s5060] %v5141
                  %v5143 = vld [vmem:[%s5067 + $0x94] sm:%s5060]
                  %5144 = vst [vmem:[%s5068 + $0x128] sm:%s5060] %v5143
                  %v5145 = vld [vmem:[%s5067 + $0x98] sm:%s5060]
                  %5146 = vst [vmem:[%s5068 + $0x130] sm:%s5060] %v5145
                  %v5147 = vld [vmem:[%s5067 + $0x9c] sm:%s5060]
                  %5148 = vst [vmem:[%s5068 + $0x138] sm:%s5060] %v5147
                  %v5149 = vld [vmem:[%s5067 + $0xa0] sm:%s5060]
                  %5150 = vst [vmem:[%s5068 + $0x140] sm:%s5060] %v5149
                  %v5151 = vld [vmem:[%s5067 + $0xa4] sm:%s5060]
                  %5152 = vst [vmem:[%s5068 + $0x148] sm:%s5060] %v5151
                  %v5153 = vld [vmem:[%s5067 + $0xa8] sm:%s5060]
                  %5154 = vst [vmem:[%s5068 + $0x150] sm:%s5060] %v5153
                  %v5155 = vld [vmem:[%s5067 + $0xac] sm:%s5060]
                  %5156 = vst [vmem:[%s5068 + $0x158] sm:%s5060] %v5155
                  %v5157 = vld [vmem:[%s5067 + $0xb0] sm:%s5060]
                  %5158 = vst [vmem:[%s5068 + $0x160] sm:%s5060] %v5157
                  %v5159 = vld [vmem:[%s5067 + $0xb4] sm:%s5060]
                  %5160 = vst [vmem:[%s5068 + $0x168] sm:%s5060] %v5159
                  %v5161 = vld [vmem:[%s5067 + $0xb8] sm:%s5060]
                  %5162 = vst [vmem:[%s5068 + $0x170] sm:%s5060] %v5161
                  %v5163 = vld [vmem:[%s5067 + $0xbc] sm:%s5060]
                  %5164 = vst [vmem:[%s5068 + $0x178] sm:%s5060] %v5163
                  %v5165 = vld [vmem:[%s5067 + $0xc0] sm:%s5060]
                  %5166 = vst [vmem:[%s5068 + $0x180] sm:%s5060] %v5165
                  %v5167 = vld [vmem:[%s5067 + $0xc4] sm:%s5060]
                  %5168 = vst [vmem:[%s5068 + $0x188] sm:%s5060] %v5167
                  %v5169 = vld [vmem:[%s5067 + $0xc8] sm:%s5060]
                  %5170 = vst [vmem:[%s5068 + $0x190] sm:%s5060] %v5169
                  %v5171 = vld [vmem:[%s5067 + $0xcc] sm:%s5060]
                  %5172 = vst [vmem:[%s5068 + $0x198] sm:%s5060] %v5171
                  %v5173 = vld [vmem:[%s5067 + $0xd0] sm:%s5060]
                  %5174 = vst [vmem:[%s5068 + $0x1a0] sm:%s5060] %v5173
                  %v5175 = vld [vmem:[%s5067 + $0xd4] sm:%s5060]
                  %5176 = vst [vmem:[%s5068 + $0x1a8] sm:%s5060] %v5175
                  %v5177 = vld [vmem:[%s5067 + $0xd8] sm:%s5060]
                  %5178 = vst [vmem:[%s5068 + $0x1b0] sm:%s5060] %v5177
                  %v5179 = vld [vmem:[%s5067 + $0xdc] sm:%s5060]
                  %5180 = vst [vmem:[%s5068 + $0x1b8] sm:%s5060] %v5179
                  %v5181 = vld [vmem:[%s5067 + $0xe0] sm:%s5060]
                  %5182 = vst [vmem:[%s5068 + $0x1c0] sm:%s5060] %v5181
                  %v5183 = vld [vmem:[%s5067 + $0xe4] sm:%s5060]
                  %5184 = vst [vmem:[%s5068 + $0x1c8] sm:%s5060] %v5183
                  %v5185 = vld [vmem:[%s5067 + $0xe8] sm:%s5060]
                  %5186 = vst [vmem:[%s5068 + $0x1d0] sm:%s5060] %v5185
                  %v5187 = vld [vmem:[%s5067 + $0xec] sm:%s5060]
                  %5188 = vst [vmem:[%s5068 + $0x1d8] sm:%s5060] %v5187
                  %v5189 = vld [vmem:[%s5067 + $0xf0] sm:%s5060]
                  %5190 = vst [vmem:[%s5068 + $0x1e0] sm:%s5060] %v5189
                  %v5191 = vld [vmem:[%s5067 + $0xf4] sm:%s5060]
                  %5192 = vst [vmem:[%s5068 + $0x1e8] sm:%s5060] %v5191
                  %v5193 = vld [vmem:[%s5067 + $0xf8] sm:%s5060]
                  %5194 = vst [vmem:[%s5068 + $0x1f0] sm:%s5060] %v5193
                  %v5195 = vld [vmem:[%s5067 + $0xfc] sm:%s5060]
                  %5196 = vst [vmem:[%s5068 + $0x1f8] sm:%s5060] %v5195
                  %v5197 = vld [vmem:[%s5067 + $0x100] sm:%s5060]
                  %5198 = vst [vmem:[%s5068 + $0x200] sm:%s5060] %v5197
                  %v5199 = vld [vmem:[%s5067 + $0x104] sm:%s5060]
                  %5200 = vst [vmem:[%s5068 + $0x208] sm:%s5060] %v5199
                  %v5201 = vld [vmem:[%s5067 + $0x108] sm:%s5060]
                  %5202 = vst [vmem:[%s5068 + $0x210] sm:%s5060] %v5201
                  %v5203 = vld [vmem:[%s5067 + $0x10c] sm:%s5060]
                  %5204 = vst [vmem:[%s5068 + $0x218] sm:%s5060] %v5203
                  %v5205 = vld [vmem:[%s5067 + $0x110] sm:%s5060]
                  %5206 = vst [vmem:[%s5068 + $0x220] sm:%s5060] %v5205
                  %v5207 = vld [vmem:[%s5067 + $0x114] sm:%s5060]
                  %5208 = vst [vmem:[%s5068 + $0x228] sm:%s5060] %v5207
                  %v5209 = vld [vmem:[%s5067 + $0x118] sm:%s5060]
                  %5210 = vst [vmem:[%s5068 + $0x230] sm:%s5060] %v5209
                  %v5211 = vld [vmem:[%s5067 + $0x11c] sm:%s5060]
                  %5212 = vst [vmem:[%s5068 + $0x238] sm:%s5060] %v5211
                  %v5213 = vld [vmem:[%s5067 + $0x120] sm:%s5060]
                  %5214 = vst [vmem:[%s5068 + $0x240] sm:%s5060] %v5213
                  %v5215 = vld [vmem:[%s5067 + $0x124] sm:%s5060]
                  %5216 = vst [vmem:[%s5068 + $0x248] sm:%s5060] %v5215
                  %v5217 = vld [vmem:[%s5067 + $0x128] sm:%s5060]
                  %5218 = vst [vmem:[%s5068 + $0x250] sm:%s5060] %v5217
                  %v5219 = vld [vmem:[%s5067 + $0x12c] sm:%s5060]
                  %5220 = vst [vmem:[%s5068 + $0x258] sm:%s5060] %v5219
                  %v5221 = vld [vmem:[%s5067 + $0x130] sm:%s5060]
                  %5222 = vst [vmem:[%s5068 + $0x260] sm:%s5060] %v5221
                  %v5223 = vld [vmem:[%s5067 + $0x134] sm:%s5060]
                  %5224 = vst [vmem:[%s5068 + $0x268] sm:%s5060] %v5223
                  %v5225 = vld [vmem:[%s5067 + $0x138] sm:%s5060]
                  %5226 = vst [vmem:[%s5068 + $0x270] sm:%s5060] %v5225
                  %v5227 = vld [vmem:[%s5067 + $0x13c] sm:%s5060]
                  %5228 = vst [vmem:[%s5068 + $0x278] sm:%s5060] %v5227
                  %v5229 = vld [vmem:[%s5067 + $0x140] sm:%s5060]
                  %5230 = vst [vmem:[%s5068 + $0x280] sm:%s5060] %v5229
                  %v5231 = vld [vmem:[%s5067 + $0x144] sm:%s5060]
                  %5232 = vst [vmem:[%s5068 + $0x288] sm:%s5060] %v5231
                  %v5233 = vld [vmem:[%s5067 + $0x148] sm:%s5060]
                  %5234 = vst [vmem:[%s5068 + $0x290] sm:%s5060] %v5233
                  %v5235 = vld [vmem:[%s5067 + $0x14c] sm:%s5060]
                  %5236 = vst [vmem:[%s5068 + $0x298] sm:%s5060] %v5235
                  %v5237 = vld [vmem:[%s5067 + $0x150] sm:%s5060]
                  %5238 = vst [vmem:[%s5068 + $0x2a0] sm:%s5060] %v5237
                  %v5239 = vld [vmem:[%s5067 + $0x154] sm:%s5060]
                  %5240 = vst [vmem:[%s5068 + $0x2a8] sm:%s5060] %v5239
                  %v5241 = vld [vmem:[%s5067 + $0x158] sm:%s5060]
                  %5242 = vst [vmem:[%s5068 + $0x2b0] sm:%s5060] %v5241
                  %v5243 = vld [vmem:[%s5067 + $0x15c] sm:%s5060]
                  %5244 = vst [vmem:[%s5068 + $0x2b8] sm:%s5060] %v5243
                  %v5245 = vld [vmem:[%s5067 + $0x160] sm:%s5060]
                  %5246 = vst [vmem:[%s5068 + $0x2c0] sm:%s5060] %v5245
                  %v5247 = vld [vmem:[%s5067 + $0x164] sm:%s5060]
                  %5248 = vst [vmem:[%s5068 + $0x2c8] sm:%s5060] %v5247
                  %v5249 = vld [vmem:[%s5067 + $0x168] sm:%s5060]
                  %5250 = vst [vmem:[%s5068 + $0x2d0] sm:%s5060] %v5249
                  %v5251 = vld [vmem:[%s5067 + $0x16c] sm:%s5060]
                  %5252 = vst [vmem:[%s5068 + $0x2d8] sm:%s5060] %v5251
                  %v5253 = vld [vmem:[%s5067 + $0x170] sm:%s5060]
                  %5254 = vst [vmem:[%s5068 + $0x2e0] sm:%s5060] %v5253
                  %v5255 = vld [vmem:[%s5067 + $0x174] sm:%s5060]
                  %5256 = vst [vmem:[%s5068 + $0x2e8] sm:%s5060] %v5255
                  %v5257 = vld [vmem:[%s5067 + $0x178] sm:%s5060]
                  %5258 = vst [vmem:[%s5068 + $0x2f0] sm:%s5060] %v5257
                  %v5259 = vld [vmem:[%s5067 + $0x17c] sm:%s5060]
                  %5260 = vst [vmem:[%s5068 + $0x2f8] sm:%s5060] %v5259
                  %v5261 = vld [vmem:[%s5067 + $0x180] sm:%s5060]
                  %5262 = vst [vmem:[%s5068 + $0x300] sm:%s5060] %v5261
                  %v5263 = vld [vmem:[%s5067 + $0x184] sm:%s5060]
                  %5264 = vst [vmem:[%s5068 + $0x308] sm:%s5060] %v5263
                  %v5265 = vld [vmem:[%s5067 + $0x188] sm:%s5060]
                  %5266 = vst [vmem:[%s5068 + $0x310] sm:%s5060] %v5265
                  %v5267 = vld [vmem:[%s5067 + $0x18c] sm:%s5060]
                  %5268 = vst [vmem:[%s5068 + $0x318] sm:%s5060] %v5267
                  %v5269 = vld [vmem:[%s5067 + $0x190] sm:%s5060]
                  %5270 = vst [vmem:[%s5068 + $0x320] sm:%s5060] %v5269
                  %v5271 = vld [vmem:[%s5067 + $0x194] sm:%s5060]
                  %5272 = vst [vmem:[%s5068 + $0x328] sm:%s5060] %v5271
                  %v5273 = vld [vmem:[%s5067 + $0x198] sm:%s5060]
                  %5274 = vst [vmem:[%s5068 + $0x330] sm:%s5060] %v5273
                  %v5275 = vld [vmem:[%s5067 + $0x19c] sm:%s5060]
                  %5276 = vst [vmem:[%s5068 + $0x338] sm:%s5060] %v5275
                  %v5277 = vld [vmem:[%s5067 + $0x1a0] sm:%s5060]
                  %5278 = vst [vmem:[%s5068 + $0x340] sm:%s5060] %v5277
                  %v5279 = vld [vmem:[%s5067 + $0x1a4] sm:%s5060]
                  %5280 = vst [vmem:[%s5068 + $0x348] sm:%s5060] %v5279
                  %v5281 = vld [vmem:[%s5067 + $0x1a8] sm:%s5060]
                  %5282 = vst [vmem:[%s5068 + $0x350] sm:%s5060] %v5281
                  %v5283 = vld [vmem:[%s5067 + $0x1ac] sm:%s5060]
                  %5284 = vst [vmem:[%s5068 + $0x358] sm:%s5060] %v5283
                  %v5285 = vld [vmem:[%s5067 + $0x1b0] sm:%s5060]
                  %5286 = vst [vmem:[%s5068 + $0x360] sm:%s5060] %v5285
                  %v5287 = vld [vmem:[%s5067 + $0x1b4] sm:%s5060]
                  %5288 = vst [vmem:[%s5068 + $0x368] sm:%s5060] %v5287
                  %v5289 = vld [vmem:[%s5067 + $0x1b8] sm:%s5060]
                  %5290 = vst [vmem:[%s5068 + $0x370] sm:%s5060] %v5289
                  %v5291 = vld [vmem:[%s5067 + $0x1bc] sm:%s5060]
                  %5292 = vst [vmem:[%s5068 + $0x378] sm:%s5060] %v5291
                  %v5293 = vld [vmem:[%s5067 + $0x1c0] sm:%s5060]
                  %5294 = vst [vmem:[%s5068 + $0x380] sm:%s5060] %v5293
                  %v5295 = vld [vmem:[%s5067 + $0x1c4] sm:%s5060]
                  %5296 = vst [vmem:[%s5068 + $0x388] sm:%s5060] %v5295
                  %v5297 = vld [vmem:[%s5067 + $0x1c8] sm:%s5060]
                  %5298 = vst [vmem:[%s5068 + $0x390] sm:%s5060] %v5297
                  %v5299 = vld [vmem:[%s5067 + $0x1cc] sm:%s5060]
                  %5300 = vst [vmem:[%s5068 + $0x398] sm:%s5060] %v5299
                  %v5301 = vld [vmem:[%s5067 + $0x1d0] sm:%s5060]
                  %5302 = vst [vmem:[%s5068 + $0x3a0] sm:%s5060] %v5301
                  %v5303 = vld [vmem:[%s5067 + $0x1d4] sm:%s5060]
                  %5304 = vst [vmem:[%s5068 + $0x3a8] sm:%s5060] %v5303
                  %v5305 = vld [vmem:[%s5067 + $0x1d8] sm:%s5060]
                  %5306 = vst [vmem:[%s5068 + $0x3b0] sm:%s5060] %v5305
                  %v5307 = vld [vmem:[%s5067 + $0x1dc] sm:%s5060]
                  %5308 = vst [vmem:[%s5068 + $0x3b8] sm:%s5060] %v5307
                  %v5309 = vld [vmem:[%s5067 + $0x1e0] sm:%s5060]
                  %5310 = vst [vmem:[%s5068 + $0x3c0] sm:%s5060] %v5309
                  %v5311 = vld [vmem:[%s5067 + $0x1e4] sm:%s5060]
                  %5312 = vst [vmem:[%s5068 + $0x3c8] sm:%s5060] %v5311
                  %v5313 = vld [vmem:[%s5067 + $0x1e8] sm:%s5060]
                  %5314 = vst [vmem:[%s5068 + $0x3d0] sm:%s5060] %v5313
                  %v5315 = vld [vmem:[%s5067 + $0x1ec] sm:%s5060]
                  %5316 = vst [vmem:[%s5068 + $0x3d8] sm:%s5060] %v5315
                  %v5317 = vld [vmem:[%s5067 + $0x1f0] sm:%s5060]
                  %5318 = vst [vmem:[%s5068 + $0x3e0] sm:%s5060] %v5317
                  %v5319 = vld [vmem:[%s5067 + $0x1f4] sm:%s5060]
                  %5320 = vst [vmem:[%s5068 + $0x3e8] sm:%s5060] %v5319
                  %v5321 = vld [vmem:[%s5067 + $0x1f8] sm:%s5060]
                  %5322 = vst [vmem:[%s5068 + $0x3f0] sm:%s5060] %v5321
                  %v5323 = vld [vmem:[%s5067 + $0x1fc] sm:%s5060]
                  %5324 = vst [vmem:[%s5068 + $0x3f8] sm:%s5060] %v5323
                $region103: #{vit_decoder_forward.5} parent=90 // loop_footer
                  %s5066 = sadd.s32 1, %s5062
                $region104: #{vit_decoder_forward.5} parent=90 // loop_footer_branch
                  %5061 = sbr.rel target = $region100
                $region105: #{vit_decoder_forward.5} parent=90 // loop_exit
                  _
              $region91: #{vit_decoder_forward.5} parent=75 // pred_fallthru
                _
            $region76: #{vit_decoder_forward.5} parent=71 // pred_fallthru
              _
            // Predicated region
            $region77: #{vit_decoder_forward.5} parent=71 // pred_check
              _
            $region78: #{vit_decoder_forward.5} parent=71 // pred_check_branch
              %4782 = sbr.rel (0) target = $region80
            $region79: #{vit_decoder_forward.5} parent=71 // pred_region
              %s4784 = ssub.s32 16, 1
              loop: start=0, step=1, limit=1
              $region81: #{vit_decoder_forward.5} parent=79 // loop_pre_header
                _
              $region82: #{vit_decoder_forward.5} parent=79 // loop_header
                %s4786 = sphi 0, %s4790
                %p4787 = scmp.ge.s32.totalorder %s4786, 1
                %s4791 = sphi %s4769, %s4769
                %s4792 = sphi %s4776, %s4776
              $region83: #{vit_decoder_forward.5} parent=79 // loop_header_branch
                %4789 = sbr.rel (%p4787) target = $region87
              $region84: #{vit_decoder_forward.5} parent=79 // loop_body
                %v4793 = vld [vmem:[%s4791] sm:%s4784]
                %4794 = vst [vmem:[%s4792] sm:%s4784] %v4793
                %v4795 = vld [vmem:[%s4791 + $0x4] sm:%s4784]
                %4796 = vst [vmem:[%s4792 + $0x8] sm:%s4784] %v4795
                %v4797 = vld [vmem:[%s4791 + $0x8] sm:%s4784]
                %4798 = vst [vmem:[%s4792 + $0x10] sm:%s4784] %v4797
                %v4799 = vld [vmem:[%s4791 + $0xc] sm:%s4784]
                %4800 = vst [vmem:[%s4792 + $0x18] sm:%s4784] %v4799
                %v4801 = vld [vmem:[%s4791 + $0x10] sm:%s4784]
                %4802 = vst [vmem:[%s4792 + $0x20] sm:%s4784] %v4801
                %v4803 = vld [vmem:[%s4791 + $0x14] sm:%s4784]
                %4804 = vst [vmem:[%s4792 + $0x28] sm:%s4784] %v4803
                %v4805 = vld [vmem:[%s4791 + $0x18] sm:%s4784]
                %4806 = vst [vmem:[%s4792 + $0x30] sm:%s4784] %v4805
                %v4807 = vld [vmem:[%s4791 + $0x1c] sm:%s4784]
                %4808 = vst [vmem:[%s4792 + $0x38] sm:%s4784] %v4807
                %v4809 = vld [vmem:[%s4791 + $0x20] sm:%s4784]
                %4810 = vst [vmem:[%s4792 + $0x40] sm:%s4784] %v4809
                %v4811 = vld [vmem:[%s4791 + $0x24] sm:%s4784]
                %4812 = vst [vmem:[%s4792 + $0x48] sm:%s4784] %v4811
                %v4813 = vld [vmem:[%s4791 + $0x28] sm:%s4784]
                %4814 = vst [vmem:[%s4792 + $0x50] sm:%s4784] %v4813
                %v4815 = vld [vmem:[%s4791 + $0x2c] sm:%s4784]
                %4816 = vst [vmem:[%s4792 + $0x58] sm:%s4784] %v4815
                %v4817 = vld [vmem:[%s4791 + $0x30] sm:%s4784]
                %4818 = vst [vmem:[%s4792 + $0x60] sm:%s4784] %v4817
                %v4819 = vld [vmem:[%s4791 + $0x34] sm:%s4784]
                %4820 = vst [vmem:[%s4792 + $0x68] sm:%s4784] %v4819
                %v4821 = vld [vmem:[%s4791 + $0x38] sm:%s4784]
                %4822 = vst [vmem:[%s4792 + $0x70] sm:%s4784] %v4821
                %v4823 = vld [vmem:[%s4791 + $0x3c] sm:%s4784]
                %4824 = vst [vmem:[%s4792 + $0x78] sm:%s4784] %v4823
                %v4825 = vld [vmem:[%s4791 + $0x40] sm:%s4784]
                %4826 = vst [vmem:[%s4792 + $0x80] sm:%s4784] %v4825
                %v4827 = vld [vmem:[%s4791 + $0x44] sm:%s4784]
                %4828 = vst [vmem:[%s4792 + $0x88] sm:%s4784] %v4827
                %v4829 = vld [vmem:[%s4791 + $0x48] sm:%s4784]
                %4830 = vst [vmem:[%s4792 + $0x90] sm:%s4784] %v4829
                %v4831 = vld [vmem:[%s4791 + $0x4c] sm:%s4784]
                %4832 = vst [vmem:[%s4792 + $0x98] sm:%s4784] %v4831
                %v4833 = vld [vmem:[%s4791 + $0x50] sm:%s4784]
                %4834 = vst [vmem:[%s4792 + $0xa0] sm:%s4784] %v4833
                %v4835 = vld [vmem:[%s4791 + $0x54] sm:%s4784]
                %4836 = vst [vmem:[%s4792 + $0xa8] sm:%s4784] %v4835
                %v4837 = vld [vmem:[%s4791 + $0x58] sm:%s4784]
                %4838 = vst [vmem:[%s4792 + $0xb0] sm:%s4784] %v4837
                %v4839 = vld [vmem:[%s4791 + $0x5c] sm:%s4784]
                %4840 = vst [vmem:[%s4792 + $0xb8] sm:%s4784] %v4839
                %v4841 = vld [vmem:[%s4791 + $0x60] sm:%s4784]
                %4842 = vst [vmem:[%s4792 + $0xc0] sm:%s4784] %v4841
                %v4843 = vld [vmem:[%s4791 + $0x64] sm:%s4784]
                %4844 = vst [vmem:[%s4792 + $0xc8] sm:%s4784] %v4843
                %v4845 = vld [vmem:[%s4791 + $0x68] sm:%s4784]
                %4846 = vst [vmem:[%s4792 + $0xd0] sm:%s4784] %v4845
                %v4847 = vld [vmem:[%s4791 + $0x6c] sm:%s4784]
                %4848 = vst [vmem:[%s4792 + $0xd8] sm:%s4784] %v4847
                %v4849 = vld [vmem:[%s4791 + $0x70] sm:%s4784]
                %4850 = vst [vmem:[%s4792 + $0xe0] sm:%s4784] %v4849
                %v4851 = vld [vmem:[%s4791 + $0x74] sm:%s4784]
                %4852 = vst [vmem:[%s4792 + $0xe8] sm:%s4784] %v4851
                %v4853 = vld [vmem:[%s4791 + $0x78] sm:%s4784]
                %4854 = vst [vmem:[%s4792 + $0xf0] sm:%s4784] %v4853
                %v4855 = vld [vmem:[%s4791 + $0x7c] sm:%s4784]
                %4856 = vst [vmem:[%s4792 + $0xf8] sm:%s4784] %v4855
                %v4857 = vld [vmem:[%s4791 + $0x80] sm:%s4784]
                %4858 = vst [vmem:[%s4792 + $0x100] sm:%s4784] %v4857
                %v4859 = vld [vmem:[%s4791 + $0x84] sm:%s4784]
                %4860 = vst [vmem:[%s4792 + $0x108] sm:%s4784] %v4859
                %v4861 = vld [vmem:[%s4791 + $0x88] sm:%s4784]
                %4862 = vst [vmem:[%s4792 + $0x110] sm:%s4784] %v4861
                %v4863 = vld [vmem:[%s4791 + $0x8c] sm:%s4784]
                %4864 = vst [vmem:[%s4792 + $0x118] sm:%s4784] %v4863
                %v4865 = vld [vmem:[%s4791 + $0x90] sm:%s4784]
                %4866 = vst [vmem:[%s4792 + $0x120] sm:%s4784] %v4865
                %v4867 = vld [vmem:[%s4791 + $0x94] sm:%s4784]
                %4868 = vst [vmem:[%s4792 + $0x128] sm:%s4784] %v4867
                %v4869 = vld [vmem:[%s4791 + $0x98] sm:%s4784]
                %4870 = vst [vmem:[%s4792 + $0x130] sm:%s4784] %v4869
                %v4871 = vld [vmem:[%s4791 + $0x9c] sm:%s4784]
                %4872 = vst [vmem:[%s4792 + $0x138] sm:%s4784] %v4871
                %v4873 = vld [vmem:[%s4791 + $0xa0] sm:%s4784]
                %4874 = vst [vmem:[%s4792 + $0x140] sm:%s4784] %v4873
                %v4875 = vld [vmem:[%s4791 + $0xa4] sm:%s4784]
                %4876 = vst [vmem:[%s4792 + $0x148] sm:%s4784] %v4875
                %v4877 = vld [vmem:[%s4791 + $0xa8] sm:%s4784]
                %4878 = vst [vmem:[%s4792 + $0x150] sm:%s4784] %v4877
                %v4879 = vld [vmem:[%s4791 + $0xac] sm:%s4784]
                %4880 = vst [vmem:[%s4792 + $0x158] sm:%s4784] %v4879
                %v4881 = vld [vmem:[%s4791 + $0xb0] sm:%s4784]
                %4882 = vst [vmem:[%s4792 + $0x160] sm:%s4784] %v4881
                %v4883 = vld [vmem:[%s4791 + $0xb4] sm:%s4784]
                %4884 = vst [vmem:[%s4792 + $0x168] sm:%s4784] %v4883
                %v4885 = vld [vmem:[%s4791 + $0xb8] sm:%s4784]
                %4886 = vst [vmem:[%s4792 + $0x170] sm:%s4784] %v4885
                %v4887 = vld [vmem:[%s4791 + $0xbc] sm:%s4784]
                %4888 = vst [vmem:[%s4792 + $0x178] sm:%s4784] %v4887
                %v4889 = vld [vmem:[%s4791 + $0xc0] sm:%s4784]
                %4890 = vst [vmem:[%s4792 + $0x180] sm:%s4784] %v4889
                %v4891 = vld [vmem:[%s4791 + $0xc4] sm:%s4784]
                %4892 = vst [vmem:[%s4792 + $0x188] sm:%s4784] %v4891
                %v4893 = vld [vmem:[%s4791 + $0xc8] sm:%s4784]
                %4894 = vst [vmem:[%s4792 + $0x190] sm:%s4784] %v4893
                %v4895 = vld [vmem:[%s4791 + $0xcc] sm:%s4784]
                %4896 = vst [vmem:[%s4792 + $0x198] sm:%s4784] %v4895
                %v4897 = vld [vmem:[%s4791 + $0xd0] sm:%s4784]
                %4898 = vst [vmem:[%s4792 + $0x1a0] sm:%s4784] %v4897
                %v4899 = vld [vmem:[%s4791 + $0xd4] sm:%s4784]
                %4900 = vst [vmem:[%s4792 + $0x1a8] sm:%s4784] %v4899
                %v4901 = vld [vmem:[%s4791 + $0xd8] sm:%s4784]
                %4902 = vst [vmem:[%s4792 + $0x1b0] sm:%s4784] %v4901
                %v4903 = vld [vmem:[%s4791 + $0xdc] sm:%s4784]
                %4904 = vst [vmem:[%s4792 + $0x1b8] sm:%s4784] %v4903
                %v4905 = vld [vmem:[%s4791 + $0xe0] sm:%s4784]
                %4906 = vst [vmem:[%s4792 + $0x1c0] sm:%s4784] %v4905
                %v4907 = vld [vmem:[%s4791 + $0xe4] sm:%s4784]
                %4908 = vst [vmem:[%s4792 + $0x1c8] sm:%s4784] %v4907
                %v4909 = vld [vmem:[%s4791 + $0xe8] sm:%s4784]
                %4910 = vst [vmem:[%s4792 + $0x1d0] sm:%s4784] %v4909
                %v4911 = vld [vmem:[%s4791 + $0xec] sm:%s4784]
                %4912 = vst [vmem:[%s4792 + $0x1d8] sm:%s4784] %v4911
                %v4913 = vld [vmem:[%s4791 + $0xf0] sm:%s4784]
                %4914 = vst [vmem:[%s4792 + $0x1e0] sm:%s4784] %v4913
                %v4915 = vld [vmem:[%s4791 + $0xf4] sm:%s4784]
                %4916 = vst [vmem:[%s4792 + $0x1e8] sm:%s4784] %v4915
                %v4917 = vld [vmem:[%s4791 + $0xf8] sm:%s4784]
                %4918 = vst [vmem:[%s4792 + $0x1f0] sm:%s4784] %v4917
                %v4919 = vld [vmem:[%s4791 + $0xfc] sm:%s4784]
                %4920 = vst [vmem:[%s4792 + $0x1f8] sm:%s4784] %v4919
                %v4921 = vld [vmem:[%s4791 + $0x100] sm:%s4784]
                %4922 = vst [vmem:[%s4792 + $0x200] sm:%s4784] %v4921
                %v4923 = vld [vmem:[%s4791 + $0x104] sm:%s4784]
                %4924 = vst [vmem:[%s4792 + $0x208] sm:%s4784] %v4923
                %v4925 = vld [vmem:[%s4791 + $0x108] sm:%s4784]
                %4926 = vst [vmem:[%s4792 + $0x210] sm:%s4784] %v4925
                %v4927 = vld [vmem:[%s4791 + $0x10c] sm:%s4784]
                %4928 = vst [vmem:[%s4792 + $0x218] sm:%s4784] %v4927
                %v4929 = vld [vmem:[%s4791 + $0x110] sm:%s4784]
                %4930 = vst [vmem:[%s4792 + $0x220] sm:%s4784] %v4929
                %v4931 = vld [vmem:[%s4791 + $0x114] sm:%s4784]
                %4932 = vst [vmem:[%s4792 + $0x228] sm:%s4784] %v4931
                %v4933 = vld [vmem:[%s4791 + $0x118] sm:%s4784]
                %4934 = vst [vmem:[%s4792 + $0x230] sm:%s4784] %v4933
                %v4935 = vld [vmem:[%s4791 + $0x11c] sm:%s4784]
                %4936 = vst [vmem:[%s4792 + $0x238] sm:%s4784] %v4935
                %v4937 = vld [vmem:[%s4791 + $0x120] sm:%s4784]
                %4938 = vst [vmem:[%s4792 + $0x240] sm:%s4784] %v4937
                %v4939 = vld [vmem:[%s4791 + $0x124] sm:%s4784]
                %4940 = vst [vmem:[%s4792 + $0x248] sm:%s4784] %v4939
                %v4941 = vld [vmem:[%s4791 + $0x128] sm:%s4784]
                %4942 = vst [vmem:[%s4792 + $0x250] sm:%s4784] %v4941
                %v4943 = vld [vmem:[%s4791 + $0x12c] sm:%s4784]
                %4944 = vst [vmem:[%s4792 + $0x258] sm:%s4784] %v4943
                %v4945 = vld [vmem:[%s4791 + $0x130] sm:%s4784]
                %4946 = vst [vmem:[%s4792 + $0x260] sm:%s4784] %v4945
                %v4947 = vld [vmem:[%s4791 + $0x134] sm:%s4784]
                %4948 = vst [vmem:[%s4792 + $0x268] sm:%s4784] %v4947
                %v4949 = vld [vmem:[%s4791 + $0x138] sm:%s4784]
                %4950 = vst [vmem:[%s4792 + $0x270] sm:%s4784] %v4949
                %v4951 = vld [vmem:[%s4791 + $0x13c] sm:%s4784]
                %4952 = vst [vmem:[%s4792 + $0x278] sm:%s4784] %v4951
                %v4953 = vld [vmem:[%s4791 + $0x140] sm:%s4784]
                %4954 = vst [vmem:[%s4792 + $0x280] sm:%s4784] %v4953
                %v4955 = vld [vmem:[%s4791 + $0x144] sm:%s4784]
                %4956 = vst [vmem:[%s4792 + $0x288] sm:%s4784] %v4955
                %v4957 = vld [vmem:[%s4791 + $0x148] sm:%s4784]
                %4958 = vst [vmem:[%s4792 + $0x290] sm:%s4784] %v4957
                %v4959 = vld [vmem:[%s4791 + $0x14c] sm:%s4784]
                %4960 = vst [vmem:[%s4792 + $0x298] sm:%s4784] %v4959
                %v4961 = vld [vmem:[%s4791 + $0x150] sm:%s4784]
                %4962 = vst [vmem:[%s4792 + $0x2a0] sm:%s4784] %v4961
                %v4963 = vld [vmem:[%s4791 + $0x154] sm:%s4784]
                %4964 = vst [vmem:[%s4792 + $0x2a8] sm:%s4784] %v4963
                %v4965 = vld [vmem:[%s4791 + $0x158] sm:%s4784]
                %4966 = vst [vmem:[%s4792 + $0x2b0] sm:%s4784] %v4965
                %v4967 = vld [vmem:[%s4791 + $0x15c] sm:%s4784]
                %4968 = vst [vmem:[%s4792 + $0x2b8] sm:%s4784] %v4967
                %v4969 = vld [vmem:[%s4791 + $0x160] sm:%s4784]
                %4970 = vst [vmem:[%s4792 + $0x2c0] sm:%s4784] %v4969
                %v4971 = vld [vmem:[%s4791 + $0x164] sm:%s4784]
                %4972 = vst [vmem:[%s4792 + $0x2c8] sm:%s4784] %v4971
                %v4973 = vld [vmem:[%s4791 + $0x168] sm:%s4784]
                %4974 = vst [vmem:[%s4792 + $0x2d0] sm:%s4784] %v4973
                %v4975 = vld [vmem:[%s4791 + $0x16c] sm:%s4784]
                %4976 = vst [vmem:[%s4792 + $0x2d8] sm:%s4784] %v4975
                %v4977 = vld [vmem:[%s4791 + $0x170] sm:%s4784]
                %4978 = vst [vmem:[%s4792 + $0x2e0] sm:%s4784] %v4977
                %v4979 = vld [vmem:[%s4791 + $0x174] sm:%s4784]
                %4980 = vst [vmem:[%s4792 + $0x2e8] sm:%s4784] %v4979
                %v4981 = vld [vmem:[%s4791 + $0x178] sm:%s4784]
                %4982 = vst [vmem:[%s4792 + $0x2f0] sm:%s4784] %v4981
                %v4983 = vld [vmem:[%s4791 + $0x17c] sm:%s4784]
                %4984 = vst [vmem:[%s4792 + $0x2f8] sm:%s4784] %v4983
                %v4985 = vld [vmem:[%s4791 + $0x180] sm:%s4784]
                %4986 = vst [vmem:[%s4792 + $0x300] sm:%s4784] %v4985
                %v4987 = vld [vmem:[%s4791 + $0x184] sm:%s4784]
                %4988 = vst [vmem:[%s4792 + $0x308] sm:%s4784] %v4987
                %v4989 = vld [vmem:[%s4791 + $0x188] sm:%s4784]
                %4990 = vst [vmem:[%s4792 + $0x310] sm:%s4784] %v4989
                %v4991 = vld [vmem:[%s4791 + $0x18c] sm:%s4784]
                %4992 = vst [vmem:[%s4792 + $0x318] sm:%s4784] %v4991
                %v4993 = vld [vmem:[%s4791 + $0x190] sm:%s4784]
                %4994 = vst [vmem:[%s4792 + $0x320] sm:%s4784] %v4993
                %v4995 = vld [vmem:[%s4791 + $0x194] sm:%s4784]
                %4996 = vst [vmem:[%s4792 + $0x328] sm:%s4784] %v4995
                %v4997 = vld [vmem:[%s4791 + $0x198] sm:%s4784]
                %4998 = vst [vmem:[%s4792 + $0x330] sm:%s4784] %v4997
                %v4999 = vld [vmem:[%s4791 + $0x19c] sm:%s4784]
                %5000 = vst [vmem:[%s4792 + $0x338] sm:%s4784] %v4999
                %v5001 = vld [vmem:[%s4791 + $0x1a0] sm:%s4784]
                %5002 = vst [vmem:[%s4792 + $0x340] sm:%s4784] %v5001
                %v5003 = vld [vmem:[%s4791 + $0x1a4] sm:%s4784]
                %5004 = vst [vmem:[%s4792 + $0x348] sm:%s4784] %v5003
                %v5005 = vld [vmem:[%s4791 + $0x1a8] sm:%s4784]
                %5006 = vst [vmem:[%s4792 + $0x350] sm:%s4784] %v5005
                %v5007 = vld [vmem:[%s4791 + $0x1ac] sm:%s4784]
                %5008 = vst [vmem:[%s4792 + $0x358] sm:%s4784] %v5007
                %v5009 = vld [vmem:[%s4791 + $0x1b0] sm:%s4784]
                %5010 = vst [vmem:[%s4792 + $0x360] sm:%s4784] %v5009
                %v5011 = vld [vmem:[%s4791 + $0x1b4] sm:%s4784]
                %5012 = vst [vmem:[%s4792 + $0x368] sm:%s4784] %v5011
                %v5013 = vld [vmem:[%s4791 + $0x1b8] sm:%s4784]
                %5014 = vst [vmem:[%s4792 + $0x370] sm:%s4784] %v5013
                %v5015 = vld [vmem:[%s4791 + $0x1bc] sm:%s4784]
                %5016 = vst [vmem:[%s4792 + $0x378] sm:%s4784] %v5015
                %v5017 = vld [vmem:[%s4791 + $0x1c0] sm:%s4784]
                %5018 = vst [vmem:[%s4792 + $0x380] sm:%s4784] %v5017
                %v5019 = vld [vmem:[%s4791 + $0x1c4] sm:%s4784]
                %5020 = vst [vmem:[%s4792 + $0x388] sm:%s4784] %v5019
                %v5021 = vld [vmem:[%s4791 + $0x1c8] sm:%s4784]
                %5022 = vst [vmem:[%s4792 + $0x390] sm:%s4784] %v5021
                %v5023 = vld [vmem:[%s4791 + $0x1cc] sm:%s4784]
                %5024 = vst [vmem:[%s4792 + $0x398] sm:%s4784] %v5023
                %v5025 = vld [vmem:[%s4791 + $0x1d0] sm:%s4784]
                %5026 = vst [vmem:[%s4792 + $0x3a0] sm:%s4784] %v5025
                %v5027 = vld [vmem:[%s4791 + $0x1d4] sm:%s4784]
                %5028 = vst [vmem:[%s4792 + $0x3a8] sm:%s4784] %v5027
                %v5029 = vld [vmem:[%s4791 + $0x1d8] sm:%s4784]
                %5030 = vst [vmem:[%s4792 + $0x3b0] sm:%s4784] %v5029
                %v5031 = vld [vmem:[%s4791 + $0x1dc] sm:%s4784]
                %5032 = vst [vmem:[%s4792 + $0x3b8] sm:%s4784] %v5031
                %v5033 = vld [vmem:[%s4791 + $0x1e0] sm:%s4784]
                %5034 = vst [vmem:[%s4792 + $0x3c0] sm:%s4784] %v5033
                %v5035 = vld [vmem:[%s4791 + $0x1e4] sm:%s4784]
                %5036 = vst [vmem:[%s4792 + $0x3c8] sm:%s4784] %v5035
                %v5037 = vld [vmem:[%s4791 + $0x1e8] sm:%s4784]
                %5038 = vst [vmem:[%s4792 + $0x3d0] sm:%s4784] %v5037
                %v5039 = vld [vmem:[%s4791 + $0x1ec] sm:%s4784]
                %5040 = vst [vmem:[%s4792 + $0x3d8] sm:%s4784] %v5039
                %v5041 = vld [vmem:[%s4791 + $0x1f0] sm:%s4784]
                %5042 = vst [vmem:[%s4792 + $0x3e0] sm:%s4784] %v5041
                %v5043 = vld [vmem:[%s4791 + $0x1f4] sm:%s4784]
                %5044 = vst [vmem:[%s4792 + $0x3e8] sm:%s4784] %v5043
                %v5045 = vld [vmem:[%s4791 + $0x1f8] sm:%s4784]
                %5046 = vst [vmem:[%s4792 + $0x3f0] sm:%s4784] %v5045
                %v5047 = vld [vmem:[%s4791 + $0x1fc] sm:%s4784]
                %5048 = vst [vmem:[%s4792 + $0x3f8] sm:%s4784] %v5047
              $region85: #{vit_decoder_forward.5} parent=79 // loop_footer
                %s4790 = sadd.s32 1, %s4786
              $region86: #{vit_decoder_forward.5} parent=79 // loop_footer_branch
                %4785 = sbr.rel target = $region82
              $region87: #{vit_decoder_forward.5} parent=79 // loop_exit
                _
            $region80: #{vit_decoder_forward.5} parent=71 // pred_fallthru
              _
          $region72: #{vit_decoder_forward.5} parent=67 // pred_fallthru
            _
          %5325 = vnop
        $region68: #{vit_decoder_forward.5} parent=43 // pred_fallthru
          _
      $region44: #{vit_decoder_forward.5} parent=5 // pred_fallthru
        _
      %p5326 = scmp.le.s32.totalorder 2, %s21
      // Predicated region
      $region106: #{vit_decoder_forward.5} parent=5 // pred_check
        %p5327 = pneg %p5326
      $region107: #{vit_decoder_forward.5} parent=5 // pred_check_branch
        %5329 = sbr.rel (%p5327) target = $region109
      $region108: #{vit_decoder_forward.5} parent=5 // pred_region
        %s5330 = ssub.s32 %s21, 2
        // Predicated region
        $region110: #{vit_decoder_forward.5} parent=108 // pred_check
          %p5331 = pneg %p220
        $region111: #{vit_decoder_forward.5} parent=108 // pred_check_branch
          %5333 = sbr.rel (%p5331) target = $region113
        $region112: #{vit_decoder_forward.5} parent=108 // pred_region
          %s5334 = sand.u32 %s205, 1
          %s5335 = sand.u32 %s205, 1
          %s5336 = smul.addr %s5335, 512
          %s5337 = scalar_lea.vmem [#allocation10], %s5336
        $region113: #{vit_decoder_forward.5} parent=108 // pred_fallthru
          _
      $region109: #{vit_decoder_forward.5} parent=5 // pred_fallthru
        _
    $region6: #{vit_decoder_forward.5} parent=1 // loop_footer
      %s25 = sadd.s32 1, %s21
    $region7: #{vit_decoder_forward.5} parent=1 // loop_footer_branch
      %20 = sbr.rel target = $region3
    $region8: #{vit_decoder_forward.5} parent=1 // loop_exit
      _
    %5338 = vsyncpa [#allocation3], 1
    %s5339 = scalar_lea.sflag [#allocation3], 1
    %5340 = vsyncpa %s5339, 1
    %5341 = vsyncpa [#allocation5], 1
    %s5342 = scalar_lea.sflag [#allocation5], 1
    %5343 = vsyncpa %s5342, 1
    %5344 = vsyncpa [#allocation8], 1
    %s5345 = scalar_lea.sflag [#allocation8], 1
    %5346 = vsyncpa %s5345, 1

</llo_original>
